<compile_context>
chip_gen: v5e
topology: v5e:2x2
jax: 0.10.0
libtpu: 0.0.40
codegen_flags: <defaults>
</compile_context>

<pallas_src>
import functools

import jax
import jax.numpy as jnp
from jax.experimental import pallas as pl
from jax.experimental.pallas import tpu as pltpu


def _pdu_fused_kernel(ia_ref, i_ref, w1_ref, b1_ref, w2_ref, b2_ref,
                      w3_ref, b3_ref, o_ref, xpad, h1pad, h2pad, *, H, W, C):
    HW = H * W

    def im2col(ref):
        # padded (H+2, W+2, cin) scratch -> (H*W, 9*cin): one matmul per conv.
        cin = ref.shape[-1]
        cols = []
        for k in range(9):
            dy, dx = k // 3, k % 3
            cols.append(ref[dy:dy + H, dx:dx + W, :].reshape(HW, cin))
        return jnp.concatenate(cols, axis=1)

    # Zero-padded halos live in VMEM scratch (no HBM padding round trips).
    xpad[...] = jnp.zeros_like(xpad)
    h1pad[...] = jnp.zeros_like(h1pad)
    h2pad[...] = jnp.zeros_like(h2pad)
    xpad[1:H + 1, 1:W + 1, :] = ia_ref[0].astype(xpad.dtype)

    # Stage 1: merged conv on I_alpha -> [h1 | T]  (single K = 9*64 matmul).
    xcol = im2col(xpad).astype(jnp.bfloat16)                    # (HW, 576)
    s1 = jnp.dot(xcol, w1_ref[...],
                 preferred_element_type=jnp.float32) + b1_ref[...]   # (HW, 2C) f32
    h1 = jnp.maximum(s1[:, :C], 0.0)                            # ReLU branch
    t_cf = jax.nn.sigmoid(s1[:, C:]).T                          # (C, HW) lane-dense
    h1pad[1:H + 1, 1:W + 1, :] = h1.astype(h1pad.dtype).reshape(H, W, C)

    # Stage 2: conv(h1) + ReLU.
    x2 = im2col(h1pad).astype(jnp.bfloat16)                     # (HW, 9C)
    s2 = jnp.dot(x2, w2_ref[...],
                 preferred_element_type=jnp.float32) + b2_ref[...]
    h2 = jnp.maximum(s2, 0.0)
    h2pad[1:H + 1, 1:W + 1, :] = h2.astype(h2pad.dtype).reshape(H, W, C)

    # Stage 3: conv(h2) + sigmoid -> A_infinity (lane-dense).
    x3 = im2col(h2pad).astype(jnp.bfloat16)
    s3 = jnp.dot(x3, w3_ref[...],
                 preferred_element_type=jnp.float32) + b3_ref[...]
    a_cf = jax.nn.sigmoid(s3).T                                 # (C, HW)

    # PDU combine, channel-first so every VPU op and the store are lane-dense.
    i_cf = i_ref[0]                                             # (C, HW)
    denom = a_cf - i_cf + t_cf + 1e-7
    j = t_cf * a_cf * pl.reciprocal(denom, approx=True)
    o_ref[0] = jnp.clip(j, 0.0, 1.0)


def pdu_forward(params, I_alpha_nchw, I_nchw, delta_I_nchw):
    """Inputs in PyTorch NCHW; returns j in NCHW."""
    n, cin, h, w = I_alpha_nchw.shape
    c = I_nchw.shape[1]
    hw = h * w
    _ = delta_I_nchw  # consumed only by the (unavailable) real td subnetwork

    # Conv input: NHWC (channels feed the matmul K dim), shipped as bf16.
    ia = jnp.transpose(I_alpha_nchw, (0, 2, 3, 1)).astype(jnp.bfloat16)
    # Hazy image stays channel-first (lane-dense epilogue layout); free reshape.
    i_cf = I_nchw.reshape(n, c, hw).astype(jnp.float32)

    # Weight slabs: (9*cin, cout), lane-dense, built once here.
    # conv1 (ka) and the td stand-in conv share the I_alpha im2col -> merge cout.
    w1 = jnp.concatenate([params["w1"], params["w3"]], axis=-1)
    w1 = w1.reshape(9 * cin, 2 * c).astype(jnp.bfloat16)
    b1 = jnp.concatenate([params["b1"], params["b3"]]).reshape(1, 2 * c).astype(jnp.float32)
    w2 = params["w2"].reshape(9 * c, c).astype(jnp.bfloat16)
    b2 = params["b2"].reshape(1, c).astype(jnp.float32)
    w3 = params["w_last"].reshape(9 * c, c).astype(jnp.bfloat16)
    b3 = params["b_last"].reshape(1, c).astype(jnp.float32)

    kernel = functools.partial(_pdu_fused_kernel, H=h, W=w, C=c)
    out = pl.pallas_call(
        kernel,
        out_shape=jax.ShapeDtypeStruct((n, c, hw), jnp.float32),
        grid_spec=pltpu.PrefetchScalarGridSpec(
            num_scalar_prefetch=0,
            grid=(n,),
            in_specs=[
                pl.BlockSpec((1, h, w, cin), lambda b: (b, 0, 0, 0)),
                pl.BlockSpec((1, c, hw), lambda b: (b, 0, 0)),
                pl.BlockSpec((9 * cin, 2 * c), lambda b: (0, 0)),
                pl.BlockSpec((1, 2 * c), lambda b: (0, 0)),
                pl.BlockSpec((9 * c, c), lambda b: (0, 0)),
                pl.BlockSpec((1, c), lambda b: (0, 0)),
                pl.BlockSpec((9 * c, c), lambda b: (0, 0)),
                pl.BlockSpec((1, c), lambda b: (0, 0)),
            ],
            out_specs=pl.BlockSpec((1, c, hw), lambda b: (b, 0, 0)),
            scratch_shapes=[
                pltpu.VMEM((h + 2, w + 2, cin), jnp.float32),   # padded I_alpha
                pltpu.VMEM((h + 2, w + 2, c), jnp.float32),     # padded h1
                pltpu.VMEM((h + 2, w + 2, c), jnp.float32),     # padded h2
            ],
        ),
        compiler_params=pltpu.CompilerParams(dimension_semantics=("parallel",)),
    )(ia, i_cf, w1, b1, w2, b2, w3, b3)

    # (N, C, H*W) -> (N, C, H, W): pure reshape, no transpose.
    return out.reshape(n, c, h, w)


def init_pdu_params(channel, key):
    """Deterministic synthetic parameters matching the module's shapes (HWIO)."""
    ks = jax.random.split(key, 8)
    s = 0.1
    return {
        # ka branch: Conv2d(64->ch) / Conv2d(ch->ch) / Conv2d(ch->ch), 3x3, bias=True
        "w1": jax.random.normal(ks[0], (3, 3, 64, channel), jnp.float32) * s,
        "b1": jax.random.normal(ks[1], (channel,), jnp.float32) * s,
        "w2": jax.random.normal(ks[2], (3, 3, channel, channel), jnp.float32) * s,
        "b2": jax.random.normal(ks[3], (channel,), jnp.float32) * s,
        "w3": jax.random.normal(ks[4], (3, 3, 64, channel), jnp.float32) * s,  # td stand-in
        "b3": jax.random.normal(ks[5], (channel,), jnp.float32) * s,
        "w_last": jax.random.normal(ks[6], (3, 3, channel, channel), jnp.float32) * s,
        "b_last": jax.random.normal(ks[7], (channel,), jnp.float32) * s,
    }


if __name__ == "__main__":
    key = jax.random.PRNGKey(0)
    k_par, k1, k2, k3 = jax.random.split(key, 4)

    N, H, W = 2, 16, 16
    CHANNEL = 4

    params = init_pdu_params(CHANNEL, k_par)

    I_alpha = jax.random.normal(k1, (N, 64, H, W), jnp.float32)          # features
    I = jax.random.uniform(k2, (N, CHANNEL, H, W), jnp.float32)          # hazy image
    delta_I = jax.random.normal(k3, (N, CHANNEL, H, W), jnp.float32) * 0.1

    j = pdu_forward(params, I_alpha, I, delta_I)
    j = jax.block_until_ready(j)

    assert j.shape == (N, CHANNEL, H, W)
    assert bool(jnp.all(jnp.isfinite(j)))
    assert bool(jnp.all(j >= 0.0)) and bool(jnp.all(j <= 1.0))
    print("KERNEL_OK")
</pallas_src>

<mosaic_0001>
module attributes {stable_mosaic.version = 11 : i64} {
  func.func @_pdu_fused_kernel(%arg0: i32, %arg1: memref<1x16x16x64xbf16, #tpu.memory_space<vmem>>, %arg2: memref<1x4x256xf32, #tpu.memory_space<vmem>>, %arg3: memref<576x8xbf16, #tpu.memory_space<vmem>>, %arg4: memref<1x8xf32, #tpu.memory_space<vmem>>, %arg5: memref<36x4xbf16, #tpu.memory_space<vmem>>, %arg6: memref<1x4xf32, #tpu.memory_space<vmem>>, %arg7: memref<36x4xbf16, #tpu.memory_space<vmem>>, %arg8: memref<1x4xf32, #tpu.memory_space<vmem>>, %arg9: memref<1x4x256xf32, #tpu.memory_space<vmem>>, %arg10: memref<18x18x64xf32, #tpu.memory_space<vmem>>, %arg11: memref<18x18x4xf32, #tpu.memory_space<vmem>>, %arg12: memref<18x18x4xf32, #tpu.memory_space<vmem>>) attributes {dimension_semantics = [#tpu.dimension_semantics<parallel>], iteration_bounds = array<i64: 2>, scalar_prefetch = 0 : i64, scratch_operands = 3 : i64, tpu.core_type = #tpu.core_type<tc>, window_params = [{transform_indices = @transform_0, window_bounds = array<i64: 1, 16, 16, 64>}, {transform_indices = @transform_1, window_bounds = array<i64: 1, 4, 256>}, {pipeline_mode = #tpu.pipeline_mode<synchronous>, transform_indices = @transform_2, window_bounds = array<i64: 576, 8>}, {pipeline_mode = #tpu.pipeline_mode<synchronous>, transform_indices = @transform_3, window_bounds = array<i64: 1, 8>}, {pipeline_mode = #tpu.pipeline_mode<synchronous>, transform_indices = @transform_4, window_bounds = array<i64: 36, 4>}, {pipeline_mode = #tpu.pipeline_mode<synchronous>, transform_indices = @transform_5, window_bounds = array<i64: 1, 4>}, {pipeline_mode = #tpu.pipeline_mode<synchronous>, transform_indices = @transform_6, window_bounds = array<i64: 36, 4>}, {pipeline_mode = #tpu.pipeline_mode<synchronous>, transform_indices = @transform_7, window_bounds = array<i64: 1, 4>}, {transform_indices = @transform_8, window_bounds = array<i64: 1, 4, 256>}]} {
    %cst = arith.constant 0.000000e+00 : f32
    %0 = vector.broadcast %cst : f32 to vector<18x18x64xf32>
    %c0 = arith.constant 0 : index
    %c0_0 = arith.constant 0 : index
    %c0_1 = arith.constant 0 : index
    %1 = vector.load %arg10[%c0, %c0_0, %c0_1] : memref<18x18x64xf32, #tpu.memory_space<vmem>>, vector<18x18x64xf32>
    tpu.vector_store %arg10[%c0, %c0_0, %c0_1], %0 {strides = array<i32>} : memref<18x18x64xf32, #tpu.memory_space<vmem>>, vector<18x18x64xf32>,
    %cst_2 = arith.constant 0.000000e+00 : f32
    %2 = vector.broadcast %cst_2 : f32 to vector<18x18x4xf32>
    %c0_3 = arith.constant 0 : index
    %c0_4 = arith.constant 0 : index
    %c0_5 = arith.constant 0 : index
    %3 = vector.load %arg11[%c0_3, %c0_4, %c0_5] : memref<18x18x4xf32, #tpu.memory_space<vmem>>, vector<18x18x4xf32>
    tpu.vector_store %arg11[%c0_3, %c0_4, %c0_5], %2 {strides = array<i32>} : memref<18x18x4xf32, #tpu.memory_space<vmem>>, vector<18x18x4xf32>,
    %cst_6 = arith.constant 0.000000e+00 : f32
    %4 = vector.broadcast %cst_6 : f32 to vector<18x18x4xf32>
    %c0_7 = arith.constant 0 : index
    %c0_8 = arith.constant 0 : index
    %c0_9 = arith.constant 0 : index
    %5 = vector.load %arg12[%c0_7, %c0_8, %c0_9] : memref<18x18x4xf32, #tpu.memory_space<vmem>>, vector<18x18x4xf32>
    tpu.vector_store %arg12[%c0_7, %c0_8, %c0_9], %4 {strides = array<i32>} : memref<18x18x4xf32, #tpu.memory_space<vmem>>, vector<18x18x4xf32>,
    %c0_10 = arith.constant 0 : index
    %c0_11 = arith.constant 0 : index
    %c0_12 = arith.constant 0 : index
    %c0_13 = arith.constant 0 : index
    %6 = vector.load %arg1[%c0_10, %c0_11, %c0_12, %c0_13] : memref<1x16x16x64xbf16, #tpu.memory_space<vmem>>, vector<1x16x16x64xbf16>
    %7 = vector.shape_cast %6 : vector<1x16x16x64xbf16> to vector<16x16x64xbf16>
    %8 = arith.extf %7 : vector<16x16x64xbf16> to vector<16x16x64xf32>
    %c1 = arith.constant 1 : index
    %c1_14 = arith.constant 1 : index
    %c0_15 = arith.constant 0 : index
    %9 = vector.load %arg10[%c1, %c1_14, %c0_15] : memref<18x18x64xf32, #tpu.memory_space<vmem>>, vector<16x16x64xf32>
    tpu.vector_store %arg10[%c1, %c1_14, %c0_15], %8 {strides = array<i32>} : memref<18x18x64xf32, #tpu.memory_space<vmem>>, vector<16x16x64xf32>,
    %c0_16 = arith.constant 0 : index
    %c0_17 = arith.constant 0 : index
    %c0_18 = arith.constant 0 : index
    %10 = vector.load %arg10[%c0_16, %c0_17, %c0_18] : memref<18x18x64xf32, #tpu.memory_space<vmem>>, vector<16x16x64xf32>
    %11 = vector.shape_cast %10 : vector<16x16x64xf32> to vector<256x64xf32>
    %c0_19 = arith.constant 0 : index
    %c1_20 = arith.constant 1 : index
    %c0_21 = arith.constant 0 : index
    %12 = vector.load %arg10[%c0_19, %c1_20, %c0_21] : memref<18x18x64xf32, #tpu.memory_space<vmem>>, vector<16x16x64xf32>
    %13 = vector.shape_cast %12 : vector<16x16x64xf32> to vector<256x64xf32>
    %c0_22 = arith.constant 0 : index
    %c2 = arith.constant 2 : index
    %c0_23 = arith.constant 0 : index
    %14 = vector.load %arg10[%c0_22, %c2, %c0_23] : memref<18x18x64xf32, #tpu.memory_space<vmem>>, vector<16x16x64xf32>
    %15 = vector.shape_cast %14 : vector<16x16x64xf32> to vector<256x64xf32>
    %c1_24 = arith.constant 1 : index
    %c0_25 = arith.constant 0 : index
    %c0_26 = arith.constant 0 : index
    %16 = vector.load %arg10[%c1_24, %c0_25, %c0_26] : memref<18x18x64xf32, #tpu.memory_space<vmem>>, vector<16x16x64xf32>
    %17 = vector.shape_cast %16 : vector<16x16x64xf32> to vector<256x64xf32>
    %c1_27 = arith.constant 1 : index
    %c1_28 = arith.constant 1 : index
    %c0_29 = arith.constant 0 : index
    %18 = vector.load %arg10[%c1_27, %c1_28, %c0_29] : memref<18x18x64xf32, #tpu.memory_space<vmem>>, vector<16x16x64xf32>
    %19 = vector.shape_cast %18 : vector<16x16x64xf32> to vector<256x64xf32>
    %c1_30 = arith.constant 1 : index
    %c2_31 = arith.constant 2 : index
    %c0_32 = arith.constant 0 : index
    %20 = vector.load %arg10[%c1_30, %c2_31, %c0_32] : memref<18x18x64xf32, #tpu.memory_space<vmem>>, vector<16x16x64xf32>
    %21 = vector.shape_cast %20 : vector<16x16x64xf32> to vector<256x64xf32>
    %c2_33 = arith.constant 2 : index
    %c0_34 = arith.constant 0 : index
    %c0_35 = arith.constant 0 : index
    %22 = vector.load %arg10[%c2_33, %c0_34, %c0_35] : memref<18x18x64xf32, #tpu.memory_space<vmem>>, vector<16x16x64xf32>
    %23 = vector.shape_cast %22 : vector<16x16x64xf32> to vector<256x64xf32>
    %c2_36 = arith.constant 2 : index
    %c1_37 = arith.constant 1 : index
    %c0_38 = arith.constant 0 : index
    %24 = vector.load %arg10[%c2_36, %c1_37, %c0_38] : memref<18x18x64xf32, #tpu.memory_space<vmem>>, vector<16x16x64xf32>
    %25 = vector.shape_cast %24 : vector<16x16x64xf32> to vector<256x64xf32>
    %c2_39 = arith.constant 2 : index
    %c2_40 = arith.constant 2 : index
    %c0_41 = arith.constant 0 : index
    %26 = vector.load %arg10[%c2_39, %c2_40, %c0_41] : memref<18x18x64xf32, #tpu.memory_space<vmem>>, vector<16x16x64xf32>
    %27 = vector.shape_cast %26 : vector<16x16x64xf32> to vector<256x64xf32>
    %28 = tpu.concatenate %11, %13, %15, %17, %19, %21, %23, %25, %27 in 1 : vector<256x64xf32>, vector<256x64xf32>, vector<256x64xf32>, vector<256x64xf32>, vector<256x64xf32>, vector<256x64xf32>, vector<256x64xf32>, vector<256x64xf32>, vector<256x64xf32> -> vector<256x576xf32>
    %29 = arith.truncf %28 : vector<256x576xf32> to vector<256x576xbf16>
    %c0_42 = arith.constant 0 : index
    %c0_43 = arith.constant 0 : index
    %30 = vector.load %arg3[%c0_42, %c0_43] : memref<576x8xbf16, #tpu.memory_space<vmem>>, vector<576x8xbf16>
    %cst_44 = arith.constant dense<0.000000e+00> : vector<256x8xf32>
    %31 = tpu.matmul %29, %30, %cst_44 {dimension_numbers = #tpu.dot_dimension_numbers<[1], [0], [0], [1], [0, 0, 1, 1], [], []>} : vector<256x576xbf16>, vector<576x8xbf16>, vector<256x8xf32> -> vector<256x8xf32>
    %c0_45 = arith.constant 0 : index
    %c0_46 = arith.constant 0 : index
    %32 = vector.load %arg4[%c0_45, %c0_46] : memref<1x8xf32, #tpu.memory_space<vmem>>, vector<1x8xf32>
    %33 = vector.broadcast %32 : vector<1x8xf32> to vector<256x8xf32>
    %34 = arith.addf %31, %33 : vector<256x8xf32>
    %35 = vector.extract_strided_slice %34 {offsets = [0, 0], sizes = [256, 4], strides = [1, 1]} : vector<256x8xf32> to vector<256x4xf32>
    %cst_47 = arith.constant 0.000000e+00 : f32
    %36 = vector.broadcast %cst_47 : f32 to vector<256x4xf32>
    %37 = arith.maximumf %35, %36 : vector<256x4xf32>
    %38 = vector.extract_strided_slice %34 {offsets = [0, 4], sizes = [256, 4], strides = [1, 1]} : vector<256x8xf32> to vector<256x4xf32>
    %39 = arith.negf %38 : vector<256x4xf32>
    %40 = math.exp %39 : vector<256x4xf32>
    %cst_48 = arith.constant 1.000000e+00 : f32
    %41 = vector.broadcast %cst_48 : f32 to vector<256x4xf32>
    %42 = arith.addf %41, %40 : vector<256x4xf32>
    %43 = arith.divf %41, %42 : vector<256x4xf32>
    %44 = tpu.transpose %43, [1, 0] : vector<256x4xf32> -> vector<4x256xf32>
    %45 = vector.shape_cast %37 : vector<256x4xf32> to vector<16x16x4xf32>
    %c1_49 = arith.constant 1 : index
    %c1_50 = arith.constant 1 : index
    %c0_51 = arith.constant 0 : index
    %46 = vector.load %arg11[%c1_49, %c1_50, %c0_51] : memref<18x18x4xf32, #tpu.memory_space<vmem>>, vector<16x16x4xf32>
    tpu.vector_store %arg11[%c1_49, %c1_50, %c0_51], %45 {strides = array<i32>} : memref<18x18x4xf32, #tpu.memory_space<vmem>>, vector<16x16x4xf32>,
    %c0_52 = arith.constant 0 : index
    %c0_53 = arith.constant 0 : index
    %c0_54 = arith.constant 0 : index
    %47 = vector.load %arg11[%c0_52, %c0_53, %c0_54] : memref<18x18x4xf32, #tpu.memory_space<vmem>>, vector<16x16x4xf32>
    %48 = vector.shape_cast %47 : vector<16x16x4xf32> to vector<256x4xf32>
    %c0_55 = arith.constant 0 : index
    %c1_56 = arith.constant 1 : index
    %c0_57 = arith.constant 0 : index
    %49 = vector.load %arg11[%c0_55, %c1_56, %c0_57] : memref<18x18x4xf32, #tpu.memory_space<vmem>>, vector<16x16x4xf32>
    %50 = vector.shape_cast %49 : vector<16x16x4xf32> to vector<256x4xf32>
    %c0_58 = arith.constant 0 : index
    %c2_59 = arith.constant 2 : index
    %c0_60 = arith.constant 0 : index
    %51 = vector.load %arg11[%c0_58, %c2_59, %c0_60] : memref<18x18x4xf32, #tpu.memory_space<vmem>>, vector<16x16x4xf32>
    %52 = vector.shape_cast %51 : vector<16x16x4xf32> to vector<256x4xf32>
    %c1_61 = arith.constant 1 : index
    %c0_62 = arith.constant 0 : index
    %c0_63 = arith.constant 0 : index
    %53 = vector.load %arg11[%c1_61, %c0_62, %c0_63] : memref<18x18x4xf32, #tpu.memory_space<vmem>>, vector<16x16x4xf32>
    %54 = vector.shape_cast %53 : vector<16x16x4xf32> to vector<256x4xf32>
    %c1_64 = arith.constant 1 : index
    %c1_65 = arith.constant 1 : index
    %c0_66 = arith.constant 0 : index
    %55 = vector.load %arg11[%c1_64, %c1_65, %c0_66] : memref<18x18x4xf32, #tpu.memory_space<vmem>>, vector<16x16x4xf32>
    %56 = vector.shape_cast %55 : vector<16x16x4xf32> to vector<256x4xf32>
    %c1_67 = arith.constant 1 : index
    %c2_68 = arith.constant 2 : index
    %c0_69 = arith.constant 0 : index
    %57 = vector.load %arg11[%c1_67, %c2_68, %c0_69] : memref<18x18x4xf32, #tpu.memory_space<vmem>>, vector<16x16x4xf32>
    %58 = vector.shape_cast %57 : vector<16x16x4xf32> to vector<256x4xf32>
    %c2_70 = arith.constant 2 : index
    %c0_71 = arith.constant 0 : index
    %c0_72 = arith.constant 0 : index
    %59 = vector.load %arg11[%c2_70, %c0_71, %c0_72] : memref<18x18x4xf32, #tpu.memory_space<vmem>>, vector<16x16x4xf32>
    %60 = vector.shape_cast %59 : vector<16x16x4xf32> to vector<256x4xf32>
    %c2_73 = arith.constant 2 : index
    %c1_74 = arith.constant 1 : index
    %c0_75 = arith.constant 0 : index
    %61 = vector.load %arg11[%c2_73, %c1_74, %c0_75] : memref<18x18x4xf32, #tpu.memory_space<vmem>>, vector<16x16x4xf32>
    %62 = vector.shape_cast %61 : vector<16x16x4xf32> to vector<256x4xf32>
    %c2_76 = arith.constant 2 : index
    %c2_77 = arith.constant 2 : index
    %c0_78 = arith.constant 0 : index
    %63 = vector.load %arg11[%c2_76, %c2_77, %c0_78] : memref<18x18x4xf32, #tpu.memory_space<vmem>>, vector<16x16x4xf32>
    %64 = vector.shape_cast %63 : vector<16x16x4xf32> to vector<256x4xf32>
    %65 = tpu.concatenate %48, %50, %52, %54, %56, %58, %60, %62, %64 in 1 : vector<256x4xf32>, vector<256x4xf32>, vector<256x4xf32>, vector<256x4xf32>, vector<256x4xf32>, vector<256x4xf32>, vector<256x4xf32>, vector<256x4xf32>, vector<256x4xf32> -> vector<256x36xf32>
    %66 = arith.truncf %65 : vector<256x36xf32> to vector<256x36xbf16>
    %c0_79 = arith.constant 0 : index
    %c0_80 = arith.constant 0 : index
    %67 = vector.load %arg5[%c0_79, %c0_80] : memref<36x4xbf16, #tpu.memory_space<vmem>>, vector<36x4xbf16>
    %cst_81 = arith.constant dense<0.000000e+00> : vector<256x4xf32>
    %68 = tpu.matmul %66, %67, %cst_81 {dimension_numbers = #tpu.dot_dimension_numbers<[1], [0], [0], [1], [0, 0, 1, 1], [], []>} : vector<256x36xbf16>, vector<36x4xbf16>, vector<256x4xf32> -> vector<256x4xf32>
    %c0_82 = arith.constant 0 : index
    %c0_83 = arith.constant 0 : index
    %69 = vector.load %arg6[%c0_82, %c0_83] : memref<1x4xf32, #tpu.memory_space<vmem>>, vector<1x4xf32>
    %70 = vector.broadcast %69 : vector<1x4xf32> to vector<256x4xf32>
    %71 = arith.addf %68, %70 : vector<256x4xf32>
    %cst_84 = arith.constant 0.000000e+00 : f32
    %72 = vector.broadcast %cst_84 : f32 to vector<256x4xf32>
    %73 = arith.maximumf %71, %72 : vector<256x4xf32>
    %74 = vector.shape_cast %73 : vector<256x4xf32> to vector<16x16x4xf32>
    %c1_85 = arith.constant 1 : index
    %c1_86 = arith.constant 1 : index
    %c0_87 = arith.constant 0 : index
    %75 = vector.load %arg12[%c1_85, %c1_86, %c0_87] : memref<18x18x4xf32, #tpu.memory_space<vmem>>, vector<16x16x4xf32>
    tpu.vector_store %arg12[%c1_85, %c1_86, %c0_87], %74 {strides = array<i32>} : memref<18x18x4xf32, #tpu.memory_space<vmem>>, vector<16x16x4xf32>,
    %c0_88 = arith.constant 0 : index
    %c0_89 = arith.constant 0 : index
    %c0_90 = arith.constant 0 : index
    %76 = vector.load %arg12[%c0_88, %c0_89, %c0_90] : memref<18x18x4xf32, #tpu.memory_space<vmem>>, vector<16x16x4xf32>
    %77 = vector.shape_cast %76 : vector<16x16x4xf32> to vector<256x4xf32>
    %c0_91 = arith.constant 0 : index
    %c1_92 = arith.constant 1 : index
    %c0_93 = arith.constant 0 : index
    %78 = vector.load %arg12[%c0_91, %c1_92, %c0_93] : memref<18x18x4xf32, #tpu.memory_space<vmem>>, vector<16x16x4xf32>
    %79 = vector.shape_cast %78 : vector<16x16x4xf32> to vector<256x4xf32>
    %c0_94 = arith.constant 0 : index
    %c2_95 = arith.constant 2 : index
    %c0_96 = arith.constant 0 : index
    %80 = vector.load %arg12[%c0_94, %c2_95, %c0_96] : memref<18x18x4xf32, #tpu.memory_space<vmem>>, vector<16x16x4xf32>
    %81 = vector.shape_cast %80 : vector<16x16x4xf32> to vector<256x4xf32>
    %c1_97 = arith.constant 1 : index
    %c0_98 = arith.constant 0 : index
    %c0_99 = arith.constant 0 : index
    %82 = vector.load %arg12[%c1_97, %c0_98, %c0_99] : memref<18x18x4xf32, #tpu.memory_space<vmem>>, vector<16x16x4xf32>
    %83 = vector.shape_cast %82 : vector<16x16x4xf32> to vector<256x4xf32>
    %c1_100 = arith.constant 1 : index
    %c1_101 = arith.constant 1 : index
    %c0_102 = arith.constant 0 : index
    %84 = vector.load %arg12[%c1_100, %c1_101, %c0_102] : memref<18x18x4xf32, #tpu.memory_space<vmem>>, vector<16x16x4xf32>
    %85 = vector.shape_cast %84 : vector<16x16x4xf32> to vector<256x4xf32>
    %c1_103 = arith.constant 1 : index
    %c2_104 = arith.constant 2 : index
    %c0_105 = arith.constant 0 : index
    %86 = vector.load %arg12[%c1_103, %c2_104, %c0_105] : memref<18x18x4xf32, #tpu.memory_space<vmem>>, vector<16x16x4xf32>
    %87 = vector.shape_cast %86 : vector<16x16x4xf32> to vector<256x4xf32>
    %c2_106 = arith.constant 2 : index
    %c0_107 = arith.constant 0 : index
    %c0_108 = arith.constant 0 : index
    %88 = vector.load %arg12[%c2_106, %c0_107, %c0_108] : memref<18x18x4xf32, #tpu.memory_space<vmem>>, vector<16x16x4xf32>
    %89 = vector.shape_cast %88 : vector<16x16x4xf32> to vector<256x4xf32>
    %c2_109 = arith.constant 2 : index
    %c1_110 = arith.constant 1 : index
    %c0_111 = arith.constant 0 : index
    %90 = vector.load %arg12[%c2_109, %c1_110, %c0_111] : memref<18x18x4xf32, #tpu.memory_space<vmem>>, vector<16x16x4xf32>
    %91 = vector.shape_cast %90 : vector<16x16x4xf32> to vector<256x4xf32>
    %c2_112 = arith.constant 2 : index
    %c2_113 = arith.constant 2 : index
    %c0_114 = arith.constant 0 : index
    %92 = vector.load %arg12[%c2_112, %c2_113, %c0_114] : memref<18x18x4xf32, #tpu.memory_space<vmem>>, vector<16x16x4xf32>
    %93 = vector.shape_cast %92 : vector<16x16x4xf32> to vector<256x4xf32>
    %94 = tpu.concatenate %77, %79, %81, %83, %85, %87, %89, %91, %93 in 1 : vector<256x4xf32>, vector<256x4xf32>, vector<256x4xf32>, vector<256x4xf32>, vector<256x4xf32>, vector<256x4xf32>, vector<256x4xf32>, vector<256x4xf32>, vector<256x4xf32> -> vector<256x36xf32>
    %95 = arith.truncf %94 : vector<256x36xf32> to vector<256x36xbf16>
    %c0_115 = arith.constant 0 : index
    %c0_116 = arith.constant 0 : index
    %96 = vector.load %arg7[%c0_115, %c0_116] : memref<36x4xbf16, #tpu.memory_space<vmem>>, vector<36x4xbf16>
    %cst_117 = arith.constant dense<0.000000e+00> : vector<256x4xf32>
    %97 = tpu.matmul %95, %96, %cst_117 {dimension_numbers = #tpu.dot_dimension_numbers<[1], [0], [0], [1], [0, 0, 1, 1], [], []>} : vector<256x36xbf16>, vector<36x4xbf16>, vector<256x4xf32> -> vector<256x4xf32>
    %c0_118 = arith.constant 0 : index
    %c0_119 = arith.constant 0 : index
    %98 = vector.load %arg8[%c0_118, %c0_119] : memref<1x4xf32, #tpu.memory_space<vmem>>, vector<1x4xf32>
    %99 = vector.broadcast %98 : vector<1x4xf32> to vector<256x4xf32>
    %100 = arith.addf %97, %99 : vector<256x4xf32>
    %101 = arith.negf %100 : vector<256x4xf32>
    %102 = math.exp %101 : vector<256x4xf32>
    %cst_120 = arith.constant 1.000000e+00 : f32
    %103 = vector.broadcast %cst_120 : f32 to vector<256x4xf32>
    %104 = arith.addf %103, %102 : vector<256x4xf32>
    %105 = arith.divf %103, %104 : vector<256x4xf32>
    %106 = tpu.transpose %105, [1, 0] : vector<256x4xf32> -> vector<4x256xf32>
    %c0_121 = arith.constant 0 : index
    %c0_122 = arith.constant 0 : index
    %c0_123 = arith.constant 0 : index
    %107 = vector.load %arg2[%c0_121, %c0_122, %c0_123] : memref<1x4x256xf32, #tpu.memory_space<vmem>>, vector<1x4x256xf32>
    %108 = vector.shape_cast %107 : vector<1x4x256xf32> to vector<4x256xf32>
    %109 = arith.subf %106, %108 : vector<4x256xf32>
    %110 = arith.addf %109, %44 : vector<4x256xf32>
    %cst_124 = arith.constant 1.000000e-07 : f32
    %111 = vector.broadcast %cst_124 : f32 to vector<4x256xf32>
    %112 = arith.addf %110, %111 : vector<4x256xf32>
    %113 = arith.mulf %44, %106 : vector<4x256xf32>
    %114 = tpu.reciprocal %112 {approx = true} : vector<4x256xf32> -> vector<4x256xf32>
    %115 = arith.mulf %113, %114 : vector<4x256xf32>
    %cst_125 = arith.constant 0.000000e+00 : f32
    %cst_126 = arith.constant 1.000000e+00 : f32
    %116 = vector.broadcast %cst_125 : f32 to vector<4x256xf32>
    %117 = arith.maximumf %116, %115 : vector<4x256xf32>
    %118 = vector.broadcast %cst_126 : f32 to vector<4x256xf32>
    %119 = arith.minimumf %118, %117 : vector<4x256xf32>
    %c0_127 = arith.constant 0 : index
    %c0_128 = arith.constant 0 : index
    %c0_129 = arith.constant 0 : index
    %120 = vector.load %arg9[%c0_127, %c0_128, %c0_129] : memref<1x4x256xf32, #tpu.memory_space<vmem>>, vector<1x4x256xf32>
    %121 = vector.shape_cast %120 : vector<1x4x256xf32> to vector<4x256xf32>
    %122 = vector.shape_cast %119 : vector<4x256xf32> to vector<1x4x256xf32>
    tpu.vector_store %arg9[%c0_127, %c0_128, %c0_129], %122 {strides = array<i32>} : memref<1x4x256xf32, #tpu.memory_space<vmem>>, vector<1x4x256xf32>,
    return
  }
  func.func @transform_0(%arg0: i32) -> (i32, i32, i32, i32) {
    %c0_i32 = arith.constant 0 : i32
    %c0_i32_0 = arith.constant 0 : i32
    %c0_i32_1 = arith.constant 0 : i32
    %c0_i32_2 = arith.constant 0 : i32
    return %arg0, %c0_i32, %c0_i32_0, %c0_i32_1 : i32, i32, i32, i32
  }
  func.func @transform_1(%arg0: i32) -> (i32, i32, i32) {
    %c0_i32 = arith.constant 0 : i32
    %c0_i32_0 = arith.constant 0 : i32
    %c0_i32_1 = arith.constant 0 : i32
    return %arg0, %c0_i32, %c0_i32_0 : i32, i32, i32
  }
  func.func @transform_2(%arg0: i32) -> (i32, i32) {
    %c0_i32 = arith.constant 0 : i32
    %c0_i32_0 = arith.constant 0 : i32
    %c0_i32_1 = arith.constant 0 : i32
    return %c0_i32, %c0_i32_0 : i32, i32
  }
  func.func @transform_3(%arg0: i32) -> (i32, i32) {
    %c0_i32 = arith.constant 0 : i32
    %c0_i32_0 = arith.constant 0 : i32
    %c0_i32_1 = arith.constant 0 : i32
    return %c0_i32, %c0_i32_0 : i32, i32
  }
  func.func @transform_4(%arg0: i32) -> (i32, i32) {
    %c0_i32 = arith.constant 0 : i32
    %c0_i32_0 = arith.constant 0 : i32
    %c0_i32_1 = arith.constant 0 : i32
    return %c0_i32, %c0_i32_0 : i32, i32
  }
  func.func @transform_5(%arg0: i32) -> (i32, i32) {
    %c0_i32 = arith.constant 0 : i32
    %c0_i32_0 = arith.constant 0 : i32
    %c0_i32_1 = arith.constant 0 : i32
    return %c0_i32, %c0_i32_0 : i32, i32
  }
  func.func @transform_6(%arg0: i32) -> (i32, i32) {
    %c0_i32 = arith.constant 0 : i32
    %c0_i32_0 = arith.constant 0 : i32
    %c0_i32_1 = arith.constant 0 : i32
    return %c0_i32, %c0_i32_0 : i32, i32
  }
  func.func @transform_7(%arg0: i32) -> (i32, i32) {
    %c0_i32 = arith.constant 0 : i32
    %c0_i32_0 = arith.constant 0 : i32
    %c0_i32_1 = arith.constant 0 : i32
    return %c0_i32, %c0_i32_0 : i32, i32
  }
  func.func @transform_8(%arg0: i32) -> (i32, i32, i32) {
    %c0_i32 = arith.constant 0 : i32
    %c0_i32_0 = arith.constant 0 : i32
    %c0_i32_1 = arith.constant 0 : i32
    return %arg0, %c0_i32, %c0_i32_0 : i32, i32, i32
  }
}

</mosaic_0001>

<llo_original>
// kernel: tpu_custom_call.1
$region0: #{tpu_custom_call.1}
  #allocation0 [shape = 'u32[]', space=smem, size = 0x4, offset = 0x4, fixed_abs, tag = 'smem constant byte address 0x4 - core index']
  #allocation1 [shape = 'u32[72,128]{1,0:T(1,128)}', space=vmem, size = 0x9000, scoped, tag = 'internal scratch']
  #allocation2 [shape = 'f32[18,18,64]{2,1,0:T(8,128)}', space=vmem, size = 0x36000, scoped, tag = 'scratch operand']
  #allocation3 [shape = 'f32[18,18,4]{2,1,0:T(8,128)}', space=vmem, size = 0x36000, scoped, tag = 'scratch operand']
  #allocation4 [shape = 'f32[18,18,4]{2,1,0:T(8,128)}', space=vmem, size = 0x36000, scoped, tag = 'scratch operand']
  %s0 = inlined_call_operand.vmem [shape: bf16[2,16,16,64], index: 0, kind: input, shape index: {}]
  %s1 = inlined_call_operand.vmem [shape: f32[2,4,256], index: 1, kind: input, shape index: {}]
  %s2 = inlined_call_operand.vmem [shape: bf16[576,8], index: 2, kind: input, shape index: {}]
  %s3 = inlined_call_operand.vmem [shape: f32[1,8], index: 3, kind: input, shape index: {}]
  %s4 = inlined_call_operand.vmem [shape: bf16[36,4], index: 4, kind: input, shape index: {}]
  %s5 = inlined_call_operand.vmem [shape: f32[1,4], index: 5, kind: input, shape index: {}]
  %s6 = inlined_call_operand.vmem [shape: bf16[36,4], index: 6, kind: input, shape index: {}]
  %s7 = inlined_call_operand.vmem [shape: f32[1,4], index: 7, kind: input, shape index: {}]
  %s8 = inlined_call_operand.hbm [shape: f32[2,4,256], index: 8, kind: output, shape index: {}]
  %s9 = sld [smem:[#allocation0]]
  $region65: #{tpu_custom_call.1} parent=0
    _
  %s11 = ssub.s32 1, %s9
  %s12 = scalar_select 0, %s11, %s9
  $region1: #{tpu_custom_call.1} parent=0
    #allocation5 [shape = 'u8[8192]{0}', space=vmem, size = 0x2000, scoped, tag = 'output window, operand 0']
    #allocation6 [shape = 's32[2]{0}', space=sflag, size = 0x8, scoped, tag = 'scoped memory for tpu_custom_call.1']
    %13 = vsyncpa [#allocation6], 0
    %s14 = scalar_lea.sflag [#allocation6], 1
    %15 = vsyncpa %s14, 0
    loop: start=0, step=1, limit=4
    $region2: #{tpu_custom_call.1} parent=1 // loop_pre_header
      _
    $region3: #{tpu_custom_call.1} parent=1 // loop_header
      %s17 = sphi 0, %s21
      %p18 = scmp.ge.s32.totalorder %s17, 4
      %s27 = sphi 0, %s29
      %s30 = sphi 0, %s27
      %s31 = sphi 0, %s30
      %s47 = sphi 0, %s31
      %s53 = sphi 0, %s55
      %s56 = sphi 0, %s53
      %s57 = sphi 0, %s56
      %s73 = sphi 0, %s57
      %s77 = sphi 0, %s77
      %s79 = sphi 0, %s77
      %s80 = sphi 0, %s79
      %s94 = sphi 0, %s80
      %s98 = sphi 0, %s98
      %s100 = sphi 0, %s98
      %s101 = sphi 0, %s100
      %s115 = sphi 0, %s101
      %s119 = sphi 0, %s119
      %s121 = sphi 0, %s119
      %s122 = sphi 0, %s121
      %s136 = sphi 0, %s122
      %s140 = sphi 0, %s140
      %s142 = sphi 0, %s140
      %s143 = sphi 0, %s142
      %s157 = sphi 0, %s143
      %s161 = sphi 0, %s161
      %s163 = sphi 0, %s161
      %s164 = sphi 0, %s163
      %s178 = sphi 0, %s164
      %s182 = sphi 0, %s182
      %s184 = sphi 0, %s182
      %s185 = sphi 0, %s184
      %s199 = sphi 0, %s185
      %s205 = sphi 0, %s207
      %s208 = sphi 0, %s205
      %s209 = sphi 0, %s208
      %s225 = sphi 0, %s209
    $region4: #{tpu_custom_call.1} parent=1 // loop_header_branch
      %20 = sbr.rel (%p18) target = $region8
    $region5: #{tpu_custom_call.1} parent=1 // loop_body
      %s22 = ssub.s32 %s17, 1
      %s23 = ssub.s32 %s17, 2
      %s24 = sadd.s32 %s17, 1
      %s25 = ssub.s32 %s17, %s24
      %p26 = scmp.eq.s32.totalorder %s25, 0
      %s28 = sadd.s32 %s27, 1
      %s29 = scalar_select %p26, %s27, %s28
      %p32 = pneg %p26
      %p33 = scmp.eq.s32.totalorder %s17, 1
      %p34 = por %p32, %p33
      %p35 = scmp.ne.s32.totalorder %s27, %s30
      %p36 = scmp.eq.s32.totalorder %s17, 0
      %p37 = por %p35, %p36
      %p38 = scmp.ne.s32.totalorder %s27, %s30
      %p39 = scmp.eq.s32.totalorder %s22, 1
      %p40 = por %p38, %p39
      %p41 = scmp.ne.s32.totalorder %s30, %s31
      %p42 = scmp.eq.s32.totalorder %s22, 0
      %p43 = por %p41, %p42
      %p44 = scmp.ne.s32.totalorder %s30, %s31
      %p45 = scmp.eq.s32.totalorder %s23, 1
      %p46 = por %p44, %p45
      %p48 = scmp.ne.s32.totalorder %s31, %s47
      %p49 = scmp.eq.s32.totalorder %s23, 0
      %p50 = por %p48, %p49
      %s51 = ssub.s32 %s17, %s24
      %p52 = scmp.eq.s32.totalorder %s51, 0
      %s54 = sadd.s32 %s53, 1
      %s55 = scalar_select %p52, %s53, %s54
      %p58 = pneg %p52
      %p59 = scmp.eq.s32.totalorder %s17, 1
      %p60 = por %p58, %p59
      %p61 = scmp.ne.s32.totalorder %s53, %s56
      %p62 = scmp.eq.s32.totalorder %s17, 0
      %p63 = por %p61, %p62
      %p64 = scmp.ne.s32.totalorder %s53, %s56
      %p65 = scmp.eq.s32.totalorder %s22, 1
      %p66 = por %p64, %p65
      %p67 = scmp.ne.s32.totalorder %s56, %s57
      %p68 = scmp.eq.s32.totalorder %s22, 0
      %p69 = por %p67, %p68
      %p70 = scmp.ne.s32.totalorder %s56, %s57
      %p71 = scmp.eq.s32.totalorder %s23, 1
      %p72 = por %p70, %p71
      %p74 = scmp.ne.s32.totalorder %s57, %s73
      %p75 = scmp.eq.s32.totalorder %s23, 0
      %p76 = por %p74, %p75
      %s78 = sadd.s32 %s77, 1
      %p81 = scmp.eq.s32.totalorder %s17, 1
      %p82 = scmp.ne.s32.totalorder %s77, %s79
      %p83 = scmp.eq.s32.totalorder %s17, 0
      %p84 = por %p82, %p83
      %p85 = scmp.ne.s32.totalorder %s77, %s79
      %p86 = scmp.eq.s32.totalorder %s22, 1
      %p87 = por %p85, %p86
      %p88 = scmp.ne.s32.totalorder %s79, %s80
      %p89 = scmp.eq.s32.totalorder %s22, 0
      %p90 = por %p88, %p89
      %p91 = scmp.ne.s32.totalorder %s79, %s80
      %p92 = scmp.eq.s32.totalorder %s23, 1
      %p93 = por %p91, %p92
      %p95 = scmp.ne.s32.totalorder %s80, %s94
      %p96 = scmp.eq.s32.totalorder %s23, 0
      %p97 = por %p95, %p96
      %s99 = sadd.s32 %s98, 1
      %p102 = scmp.eq.s32.totalorder %s17, 1
      %p103 = scmp.ne.s32.totalorder %s98, %s100
      %p104 = scmp.eq.s32.totalorder %s17, 0
      %p105 = por %p103, %p104
      %p106 = scmp.ne.s32.totalorder %s98, %s100
      %p107 = scmp.eq.s32.totalorder %s22, 1
      %p108 = por %p106, %p107
      %p109 = scmp.ne.s32.totalorder %s100, %s101
      %p110 = scmp.eq.s32.totalorder %s22, 0
      %p111 = por %p109, %p110
      %p112 = scmp.ne.s32.totalorder %s100, %s101
      %p113 = scmp.eq.s32.totalorder %s23, 1
      %p114 = por %p112, %p113
      %p116 = scmp.ne.s32.totalorder %s101, %s115
      %p117 = scmp.eq.s32.totalorder %s23, 0
      %p118 = por %p116, %p117
      %s120 = sadd.s32 %s119, 1
      %p123 = scmp.eq.s32.totalorder %s17, 1
      %p124 = scmp.ne.s32.totalorder %s119, %s121
      %p125 = scmp.eq.s32.totalorder %s17, 0
      %p126 = por %p124, %p125
      %p127 = scmp.ne.s32.totalorder %s119, %s121
      %p128 = scmp.eq.s32.totalorder %s22, 1
      %p129 = por %p127, %p128
      %p130 = scmp.ne.s32.totalorder %s121, %s122
      %p131 = scmp.eq.s32.totalorder %s22, 0
      %p132 = por %p130, %p131
      %p133 = scmp.ne.s32.totalorder %s121, %s122
      %p134 = scmp.eq.s32.totalorder %s23, 1
      %p135 = por %p133, %p134
      %p137 = scmp.ne.s32.totalorder %s122, %s136
      %p138 = scmp.eq.s32.totalorder %s23, 0
      %p139 = por %p137, %p138
      %s141 = sadd.s32 %s140, 1
      %p144 = scmp.eq.s32.totalorder %s17, 1
      %p145 = scmp.ne.s32.totalorder %s140, %s142
      %p146 = scmp.eq.s32.totalorder %s17, 0
      %p147 = por %p145, %p146
      %p148 = scmp.ne.s32.totalorder %s140, %s142
      %p149 = scmp.eq.s32.totalorder %s22, 1
      %p150 = por %p148, %p149
      %p151 = scmp.ne.s32.totalorder %s142, %s143
      %p152 = scmp.eq.s32.totalorder %s22, 0
      %p153 = por %p151, %p152
      %p154 = scmp.ne.s32.totalorder %s142, %s143
      %p155 = scmp.eq.s32.totalorder %s23, 1
      %p156 = por %p154, %p155
      %p158 = scmp.ne.s32.totalorder %s143, %s157
      %p159 = scmp.eq.s32.totalorder %s23, 0
      %p160 = por %p158, %p159
      %s162 = sadd.s32 %s161, 1
      %p165 = scmp.eq.s32.totalorder %s17, 1
      %p166 = scmp.ne.s32.totalorder %s161, %s163
      %p167 = scmp.eq.s32.totalorder %s17, 0
      %p168 = por %p166, %p167
      %p169 = scmp.ne.s32.totalorder %s161, %s163
      %p170 = scmp.eq.s32.totalorder %s22, 1
      %p171 = por %p169, %p170
      %p172 = scmp.ne.s32.totalorder %s163, %s164
      %p173 = scmp.eq.s32.totalorder %s22, 0
      %p174 = por %p172, %p173
      %p175 = scmp.ne.s32.totalorder %s163, %s164
      %p176 = scmp.eq.s32.totalorder %s23, 1
      %p177 = por %p175, %p176
      %p179 = scmp.ne.s32.totalorder %s164, %s178
      %p180 = scmp.eq.s32.totalorder %s23, 0
      %p181 = por %p179, %p180
      %s183 = sadd.s32 %s182, 1
      %p186 = scmp.eq.s32.totalorder %s17, 1
      %p187 = scmp.ne.s32.totalorder %s182, %s184
      %p188 = scmp.eq.s32.totalorder %s17, 0
      %p189 = por %p187, %p188
      %p190 = scmp.ne.s32.totalorder %s182, %s184
      %p191 = scmp.eq.s32.totalorder %s22, 1
      %p192 = por %p190, %p191
      %p193 = scmp.ne.s32.totalorder %s184, %s185
      %p194 = scmp.eq.s32.totalorder %s22, 0
      %p195 = por %p193, %p194
      %p196 = scmp.ne.s32.totalorder %s184, %s185
      %p197 = scmp.eq.s32.totalorder %s23, 1
      %p198 = por %p196, %p197
      %p200 = scmp.ne.s32.totalorder %s185, %s199
      %p201 = scmp.eq.s32.totalorder %s23, 0
      %p202 = por %p200, %p201
      %s203 = ssub.s32 %s17, %s24
      %p204 = scmp.eq.s32.totalorder %s203, 0
      %s206 = sadd.s32 %s205, 1
      %s207 = scalar_select %p204, %s205, %s206
      %p210 = pneg %p204
      %p211 = scmp.eq.s32.totalorder %s17, 1
      %p212 = por %p210, %p211
      %p213 = scmp.ne.s32.totalorder %s205, %s208
      %p214 = scmp.eq.s32.totalorder %s17, 0
      %p215 = por %p213, %p214
      %p216 = scmp.ne.s32.totalorder %s205, %s208
      %p217 = scmp.eq.s32.totalorder %s22, 1
      %p218 = por %p216, %p217
      %p219 = scmp.ne.s32.totalorder %s208, %s209
      %p220 = scmp.eq.s32.totalorder %s22, 0
      %p221 = por %p219, %p220
      %p222 = scmp.ne.s32.totalorder %s208, %s209
      %p223 = scmp.eq.s32.totalorder %s23, 1
      %p224 = por %p222, %p223
      %p226 = scmp.ne.s32.totalorder %s209, %s225
      %p227 = scmp.eq.s32.totalorder %s23, 0
      %p228 = por %p226, %p227
      %p229 = scmp.le.s32.totalorder 1, %s17
      %p230 = scmp.lt.s32.totalorder %s17, 3
      %p231 = pnand %p229, %p230
      %p232 = pneg %p231
      // Predicated region
      $region9: #{tpu_custom_call.1} parent=5 // pred_check
        _
      $region10: #{tpu_custom_call.1} parent=5 // pred_check_branch
        %234 = sbr.rel (%p231) target = $region12
      $region11: #{tpu_custom_call.1} parent=5 // pred_region
        %s235 = ssub.s32 %s17, 1
        // Predicated region
        $region13: #{tpu_custom_call.1} parent=11 // pred_check
          %p236 = pneg %p90
        $region14: #{tpu_custom_call.1} parent=11 // pred_check_branch
          %238 = sbr.rel (%p236) target = $region16
        $region15: #{tpu_custom_call.1} parent=11 // pred_region
          _
        $region16: #{tpu_custom_call.1} parent=11 // pred_fallthru
          _
        // Predicated region
        $region17: #{tpu_custom_call.1} parent=11 // pred_check
          %p239 = pneg %p111
        $region18: #{tpu_custom_call.1} parent=11 // pred_check_branch
          %241 = sbr.rel (%p239) target = $region20
        $region19: #{tpu_custom_call.1} parent=11 // pred_region
          _
        $region20: #{tpu_custom_call.1} parent=11 // pred_fallthru
          _
        // Predicated region
        $region21: #{tpu_custom_call.1} parent=11 // pred_check
          %p242 = pneg %p132
        $region22: #{tpu_custom_call.1} parent=11 // pred_check_branch
          %244 = sbr.rel (%p242) target = $region24
        $region23: #{tpu_custom_call.1} parent=11 // pred_region
          _
        $region24: #{tpu_custom_call.1} parent=11 // pred_fallthru
          _
        // Predicated region
        $region25: #{tpu_custom_call.1} parent=11 // pred_check
          %p245 = pneg %p153
        $region26: #{tpu_custom_call.1} parent=11 // pred_check_branch
          %247 = sbr.rel (%p245) target = $region28
        $region27: #{tpu_custom_call.1} parent=11 // pred_region
          _
        $region28: #{tpu_custom_call.1} parent=11 // pred_fallthru
          _
        // Predicated region
        $region29: #{tpu_custom_call.1} parent=11 // pred_check
          %p248 = pneg %p174
        $region30: #{tpu_custom_call.1} parent=11 // pred_check_branch
          %250 = sbr.rel (%p248) target = $region32
        $region31: #{tpu_custom_call.1} parent=11 // pred_region
          _
        $region32: #{tpu_custom_call.1} parent=11 // pred_fallthru
          _
        // Predicated region
        $region33: #{tpu_custom_call.1} parent=11 // pred_check
          %p251 = pneg %p195
        $region34: #{tpu_custom_call.1} parent=11 // pred_check_branch
          %253 = sbr.rel (%p251) target = $region36
        $region35: #{tpu_custom_call.1} parent=11 // pred_region
          _
        $region36: #{tpu_custom_call.1} parent=11 // pred_fallthru
          _
      $region12: #{tpu_custom_call.1} parent=5 // pred_fallthru
        _
      %p254 = scmp.lt.s32.totalorder %s17, 2
      // Predicated region
      $region37: #{tpu_custom_call.1} parent=5 // pred_check
        %p255 = pneg %p254
      $region38: #{tpu_custom_call.1} parent=5 // pred_check_branch
        %257 = sbr.rel (%p255) target = $region40
      $region39: #{tpu_custom_call.1} parent=5 // pred_region
        // Predicated region
        $region41: #{tpu_custom_call.1} parent=39 // pred_check
          %p258 = pneg %p37
        $region42: #{tpu_custom_call.1} parent=39 // pred_check_branch
          %260 = sbr.rel (%p258) target = $region44
        $region43: #{tpu_custom_call.1} parent=39 // pred_region
          %p261 = scmp.lt.s32.totalorder %s17, 1
          %s262 = scalar_select %p261, %s17, 1
          %s263 = smul.addr %s262, 32
          %s264 = smul.addr %s263, 4
          %s265 = scalar_lea.vmem %s0, %s264
        $region44: #{tpu_custom_call.1} parent=39 // pred_fallthru
          _
        // Predicated region
        $region45: #{tpu_custom_call.1} parent=39 // pred_check
          %p266 = pneg %p63
        $region46: #{tpu_custom_call.1} parent=39 // pred_check_branch
          %268 = sbr.rel (%p266) target = $region48
        $region47: #{tpu_custom_call.1} parent=39 // pred_region
          %p269 = scmp.lt.s32.totalorder %s17, 1
          %s270 = scalar_select %p269, %s17, 1
          %s271 = smul.addr %s270, 2
          %s272 = smul.addr %s271, 4
          %s273 = scalar_lea.vmem %s1, %s272
        $region48: #{tpu_custom_call.1} parent=39 // pred_fallthru
          _
      $region40: #{tpu_custom_call.1} parent=5 // pred_fallthru
        _
      %p274 = scmp.le.s32.totalorder 1, %s17
      %p275 = scmp.lt.s32.totalorder %s17, 3
      %p276 = pnand %p274, %p275
      %p277 = pneg %p276
      // Predicated region
      $region49: #{tpu_custom_call.1} parent=5 // pred_check
        _
      $region50: #{tpu_custom_call.1} parent=5 // pred_check_branch
        %279 = sbr.rel (%p276) target = $region52
      $region51: #{tpu_custom_call.1} parent=5 // pred_region
        %s280 = ssub.s32 %s17, 1
        %p281 = scmp.lt.s32.totalorder %s22, 1
        %s282 = scalar_select %p281, %s22, 1
        %s283 = smul.addr %s282, 32
        %s284 = smul.addr %s283, 4
        %s285 = scalar_lea.vmem %s0, %s284
        %p286 = pneg %p43
        %p287 = pneg %p40
        %p288 = scmp.lt.s32.totalorder %s22, 1
        %s289 = scalar_select %p288, %s22, 1
        %s290 = smul.addr %s289, 2
        %s291 = smul.addr %s290, 4
        %s292 = scalar_lea.vmem %s1, %s291
        %p293 = pneg %p69
        %p294 = pneg %p66
        %p295 = pneg %p90
        %p296 = pneg %p87
        %p297 = pneg %p111
        %p298 = pneg %p108
        %p299 = pneg %p132
        %p300 = pneg %p129
        %p301 = pneg %p153
        %p302 = pneg %p150
        %p303 = pneg %p174
        %p304 = pneg %p171
        %p305 = pneg %p195
        %p306 = pneg %p192
        %p307 = pneg %p221
        %p308 = pneg %p218
        %s309 = sand.u32 %s208, 1
        %s310 = scalar_lea.sflag [#allocation6], %s309
        %s311 = sand.u32 %s208, 1
        %s312 = smul.addr %s311, 8
        %s313 = scalar_lea.vmem [#allocation5], %s312
        %p314 = scmp.lt.s32.totalorder %s22, 1
        %s315 = scalar_select %p314, %s22, 1
        %s316 = smul.addr %s315, 32
        %s317 = smul.addr %s316, 4
        %s318 = scalar_lea.vmem %s0, %s317
        %p319 = scmp.lt.s32.totalorder %s22, 1
        %s320 = scalar_select %p319, %s22, 1
        %s321 = smul.addr %s320, 2
        %s322 = smul.addr %s321, 4
        %s323 = scalar_lea.vmem %s1, %s322
        %vm325 = vcmask 523264
        %326 = vst.msk [vmem:[#allocation2] sm:$0xff] %vm325, 0.0
        %327 = vst.msk [vmem:[#allocation2 + $0x8] sm:$0xff] %vm325, 0.0
        %vm328 = vcmask 517120
        %329 = vst.msk [vmem:[#allocation2 + $0x10] sm:$0x3] %vm328, 0.0
        %330 = vst.msk [vmem:[#allocation2 + $0x18] sm:$0xff] %vm325, 0.0
        %331 = vst.msk [vmem:[#allocation2 + $0x20] sm:$0xff] %vm325, 0.0
        %332 = vst.msk [vmem:[#allocation2 + $0x28] sm:$0x3] %vm328, 0.0
        %333 = vst.msk [vmem:[#allocation2 + $0x30] sm:$0xff] %vm325, 0.0
        %334 = vst.msk [vmem:[#allocation2 + $0x38] sm:$0xff] %vm325, 0.0
        %335 = vst.msk [vmem:[#allocation2 + $0x40] sm:$0x3] %vm328, 0.0
        %336 = vst.msk [vmem:[#allocation2 + $0x48] sm:$0xff] %vm325, 0.0
        %337 = vst.msk [vmem:[#allocation2 + $0x50] sm:$0xff] %vm325, 0.0
        %338 = vst.msk [vmem:[#allocation2 + $0x58] sm:$0x3] %vm328, 0.0
        %339 = vst.msk [vmem:[#allocation2 + $0x60] sm:$0xff] %vm325, 0.0
        %340 = vst.msk [vmem:[#allocation2 + $0x68] sm:$0xff] %vm325, 0.0
        %341 = vst.msk [vmem:[#allocation2 + $0x70] sm:$0x3] %vm328, 0.0
        %342 = vst.msk [vmem:[#allocation2 + $0x78] sm:$0xff] %vm325, 0.0
        %343 = vst.msk [vmem:[#allocation2 + $0x80] sm:$0xff] %vm325, 0.0
        %344 = vst.msk [vmem:[#allocation2 + $0x88] sm:$0x3] %vm328, 0.0
        %345 = vst.msk [vmem:[#allocation2 + $0x90] sm:$0xff] %vm325, 0.0
        %346 = vst.msk [vmem:[#allocation2 + $0x98] sm:$0xff] %vm325, 0.0
        %347 = vst.msk [vmem:[#allocation2 + $0xa0] sm:$0x3] %vm328, 0.0
        %348 = vst.msk [vmem:[#allocation2 + $0xa8] sm:$0xff] %vm325, 0.0
        %349 = vst.msk [vmem:[#allocation2 + $0xb0] sm:$0xff] %vm325, 0.0
        %350 = vst.msk [vmem:[#allocation2 + $0xb8] sm:$0x3] %vm328, 0.0
        %351 = vst.msk [vmem:[#allocation2 + $0xc0] sm:$0xff] %vm325, 0.0
        %352 = vst.msk [vmem:[#allocation2 + $0xc8] sm:$0xff] %vm325, 0.0
        %353 = vst.msk [vmem:[#allocation2 + $0xd0] sm:$0x3] %vm328, 0.0
        %354 = vst.msk [vmem:[#allocation2 + $0xd8] sm:$0xff] %vm325, 0.0
        %355 = vst.msk [vmem:[#allocation2 + $0xe0] sm:$0xff] %vm325, 0.0
        %356 = vst.msk [vmem:[#allocation2 + $0xe8] sm:$0x3] %vm328, 0.0
        %357 = vst.msk [vmem:[#allocation2 + $0xf0] sm:$0xff] %vm325, 0.0
        %358 = vst.msk [vmem:[#allocation2 + $0xf8] sm:$0xff] %vm325, 0.0
        %359 = vst.msk [vmem:[#allocation2 + $0x100] sm:$0x3] %vm328, 0.0
        %360 = vst.msk [vmem:[#allocation2 + $0x108] sm:$0xff] %vm325, 0.0
        %361 = vst.msk [vmem:[#allocation2 + $0x110] sm:$0xff] %vm325, 0.0
        %362 = vst.msk [vmem:[#allocation2 + $0x118] sm:$0x3] %vm328, 0.0
        %363 = vst.msk [vmem:[#allocation2 + $0x120] sm:$0xff] %vm325, 0.0
        %364 = vst.msk [vmem:[#allocation2 + $0x128] sm:$0xff] %vm325, 0.0
        %365 = vst.msk [vmem:[#allocation2 + $0x130] sm:$0x3] %vm328, 0.0
        %366 = vst.msk [vmem:[#allocation2 + $0x138] sm:$0xff] %vm325, 0.0
        %367 = vst.msk [vmem:[#allocation2 + $0x140] sm:$0xff] %vm325, 0.0
        %368 = vst.msk [vmem:[#allocation2 + $0x148] sm:$0x3] %vm328, 0.0
        %369 = vst.msk [vmem:[#allocation2 + $0x150] sm:$0xff] %vm325, 0.0
        %370 = vst.msk [vmem:[#allocation2 + $0x158] sm:$0xff] %vm325, 0.0
        %371 = vst.msk [vmem:[#allocation2 + $0x160] sm:$0x3] %vm328, 0.0
        %372 = vst.msk [vmem:[#allocation2 + $0x168] sm:$0xff] %vm325, 0.0
        %373 = vst.msk [vmem:[#allocation2 + $0x170] sm:$0xff] %vm325, 0.0
        %374 = vst.msk [vmem:[#allocation2 + $0x178] sm:$0x3] %vm328, 0.0
        %375 = vst.msk [vmem:[#allocation2 + $0x180] sm:$0xff] %vm325, 0.0
        %376 = vst.msk [vmem:[#allocation2 + $0x188] sm:$0xff] %vm325, 0.0
        %377 = vst.msk [vmem:[#allocation2 + $0x190] sm:$0x3] %vm328, 0.0
        %378 = vst.msk [vmem:[#allocation2 + $0x198] sm:$0xff] %vm325, 0.0
        %379 = vst.msk [vmem:[#allocation2 + $0x1a0] sm:$0xff] %vm325, 0.0
        %380 = vst.msk [vmem:[#allocation2 + $0x1a8] sm:$0x3] %vm328, 0.0
        %vm381 = vcmask 31744
        %382 = vst.msk [vmem:[#allocation3] sm:$0xff] %vm381, 0.0
        %383 = vst.msk [vmem:[#allocation3 + $0x8] sm:$0xff] %vm381, 0.0
        %vm384 = vcmask 25600
        %385 = vst.msk [vmem:[#allocation3 + $0x10] sm:$0x3] %vm384, 0.0
        %386 = vst.msk [vmem:[#allocation3 + $0x18] sm:$0xff] %vm381, 0.0
        %387 = vst.msk [vmem:[#allocation3 + $0x20] sm:$0xff] %vm381, 0.0
        %388 = vst.msk [vmem:[#allocation3 + $0x28] sm:$0x3] %vm384, 0.0
        %389 = vst.msk [vmem:[#allocation3 + $0x30] sm:$0xff] %vm381, 0.0
        %390 = vst.msk [vmem:[#allocation3 + $0x38] sm:$0xff] %vm381, 0.0
        %391 = vst.msk [vmem:[#allocation3 + $0x40] sm:$0x3] %vm384, 0.0
        %392 = vst.msk [vmem:[#allocation3 + $0x48] sm:$0xff] %vm381, 0.0
        %393 = vst.msk [vmem:[#allocation3 + $0x50] sm:$0xff] %vm381, 0.0
        %394 = vst.msk [vmem:[#allocation3 + $0x58] sm:$0x3] %vm384, 0.0
        %395 = vst.msk [vmem:[#allocation3 + $0x60] sm:$0xff] %vm381, 0.0
        %396 = vst.msk [vmem:[#allocation3 + $0x68] sm:$0xff] %vm381, 0.0
        %397 = vst.msk [vmem:[#allocation3 + $0x70] sm:$0x3] %vm384, 0.0
        %398 = vst.msk [vmem:[#allocation3 + $0x78] sm:$0xff] %vm381, 0.0
        %399 = vst.msk [vmem:[#allocation3 + $0x80] sm:$0xff] %vm381, 0.0
        %400 = vst.msk [vmem:[#allocation3 + $0x88] sm:$0x3] %vm384, 0.0
        %401 = vst.msk [vmem:[#allocation3 + $0x90] sm:$0xff] %vm381, 0.0
        %402 = vst.msk [vmem:[#allocation3 + $0x98] sm:$0xff] %vm381, 0.0
        %403 = vst.msk [vmem:[#allocation3 + $0xa0] sm:$0x3] %vm384, 0.0
        %404 = vst.msk [vmem:[#allocation3 + $0xa8] sm:$0xff] %vm381, 0.0
        %405 = vst.msk [vmem:[#allocation3 + $0xb0] sm:$0xff] %vm381, 0.0
        %406 = vst.msk [vmem:[#allocation3 + $0xb8] sm:$0x3] %vm384, 0.0
        %407 = vst.msk [vmem:[#allocation3 + $0xc0] sm:$0xff] %vm381, 0.0
        %408 = vst.msk [vmem:[#allocation3 + $0xc8] sm:$0xff] %vm381, 0.0
        %409 = vst.msk [vmem:[#allocation3 + $0xd0] sm:$0x3] %vm384, 0.0
        %410 = vst.msk [vmem:[#allocation3 + $0xd8] sm:$0xff] %vm381, 0.0
        %411 = vst.msk [vmem:[#allocation3 + $0xe0] sm:$0xff] %vm381, 0.0
        %412 = vst.msk [vmem:[#allocation3 + $0xe8] sm:$0x3] %vm384, 0.0
        %413 = vst.msk [vmem:[#allocation3 + $0xf0] sm:$0xff] %vm381, 0.0
        %414 = vst.msk [vmem:[#allocation3 + $0xf8] sm:$0xff] %vm381, 0.0
        %415 = vst.msk [vmem:[#allocation3 + $0x100] sm:$0x3] %vm384, 0.0
        %416 = vst.msk [vmem:[#allocation3 + $0x108] sm:$0xff] %vm381, 0.0
        %417 = vst.msk [vmem:[#allocation3 + $0x110] sm:$0xff] %vm381, 0.0
        %418 = vst.msk [vmem:[#allocation3 + $0x118] sm:$0x3] %vm384, 0.0
        %419 = vst.msk [vmem:[#allocation3 + $0x120] sm:$0xff] %vm381, 0.0
        %420 = vst.msk [vmem:[#allocation3 + $0x128] sm:$0xff] %vm381, 0.0
        %421 = vst.msk [vmem:[#allocation3 + $0x130] sm:$0x3] %vm384, 0.0
        %422 = vst.msk [vmem:[#allocation3 + $0x138] sm:$0xff] %vm381, 0.0
        %423 = vst.msk [vmem:[#allocation3 + $0x140] sm:$0xff] %vm381, 0.0
        %424 = vst.msk [vmem:[#allocation3 + $0x148] sm:$0x3] %vm384, 0.0
        %425 = vst.msk [vmem:[#allocation3 + $0x150] sm:$0xff] %vm381, 0.0
        %426 = vst.msk [vmem:[#allocation3 + $0x158] sm:$0xff] %vm381, 0.0
        %427 = vst.msk [vmem:[#allocation3 + $0x160] sm:$0x3] %vm384, 0.0
        %428 = vst.msk [vmem:[#allocation3 + $0x168] sm:$0xff] %vm381, 0.0
        %429 = vst.msk [vmem:[#allocation3 + $0x170] sm:$0xff] %vm381, 0.0
        %430 = vst.msk [vmem:[#allocation3 + $0x178] sm:$0x3] %vm384, 0.0
        %431 = vst.msk [vmem:[#allocation3 + $0x180] sm:$0xff] %vm381, 0.0
        %432 = vst.msk [vmem:[#allocation3 + $0x188] sm:$0xff] %vm381, 0.0
        %433 = vst.msk [vmem:[#allocation3 + $0x190] sm:$0x3] %vm384, 0.0
        %434 = vst.msk [vmem:[#allocation3 + $0x198] sm:$0xff] %vm381, 0.0
        %435 = vst.msk [vmem:[#allocation3 + $0x1a0] sm:$0xff] %vm381, 0.0
        %436 = vst.msk [vmem:[#allocation3 + $0x1a8] sm:$0x3] %vm384, 0.0
        %437 = vst.msk [vmem:[#allocation4] sm:$0xff] %vm381, 0.0
        %438 = vst.msk [vmem:[#allocation4 + $0x8] sm:$0xff] %vm381, 0.0
        %439 = vst.msk [vmem:[#allocation4 + $0x10] sm:$0x3] %vm384, 0.0
        %440 = vst.msk [vmem:[#allocation4 + $0x18] sm:$0xff] %vm381, 0.0
        %441 = vst.msk [vmem:[#allocation4 + $0x20] sm:$0xff] %vm381, 0.0
        %442 = vst.msk [vmem:[#allocation4 + $0x28] sm:$0x3] %vm384, 0.0
        %443 = vst.msk [vmem:[#allocation4 + $0x30] sm:$0xff] %vm381, 0.0
        %444 = vst.msk [vmem:[#allocation4 + $0x38] sm:$0xff] %vm381, 0.0
        %445 = vst.msk [vmem:[#allocation4 + $0x40] sm:$0x3] %vm384, 0.0
        %446 = vst.msk [vmem:[#allocation4 + $0x48] sm:$0xff] %vm381, 0.0
        %447 = vst.msk [vmem:[#allocation4 + $0x50] sm:$0xff] %vm381, 0.0
        %448 = vst.msk [vmem:[#allocation4 + $0x58] sm:$0x3] %vm384, 0.0
        %449 = vst.msk [vmem:[#allocation4 + $0x60] sm:$0xff] %vm381, 0.0
        %450 = vst.msk [vmem:[#allocation4 + $0x68] sm:$0xff] %vm381, 0.0
        %451 = vst.msk [vmem:[#allocation4 + $0x70] sm:$0x3] %vm384, 0.0
        %452 = vst.msk [vmem:[#allocation4 + $0x78] sm:$0xff] %vm381, 0.0
        %453 = vst.msk [vmem:[#allocation4 + $0x80] sm:$0xff] %vm381, 0.0
        %454 = vst.msk [vmem:[#allocation4 + $0x88] sm:$0x3] %vm384, 0.0
        %455 = vst.msk [vmem:[#allocation4 + $0x90] sm:$0xff] %vm381, 0.0
        %456 = vst.msk [vmem:[#allocation4 + $0x98] sm:$0xff] %vm381, 0.0
        %457 = vst.msk [vmem:[#allocation4 + $0xa0] sm:$0x3] %vm384, 0.0
        %458 = vst.msk [vmem:[#allocation4 + $0xa8] sm:$0xff] %vm381, 0.0
        %459 = vst.msk [vmem:[#allocation4 + $0xb0] sm:$0xff] %vm381, 0.0
        %460 = vst.msk [vmem:[#allocation4 + $0xb8] sm:$0x3] %vm384, 0.0
        %461 = vst.msk [vmem:[#allocation4 + $0xc0] sm:$0xff] %vm381, 0.0
        %462 = vst.msk [vmem:[#allocation4 + $0xc8] sm:$0xff] %vm381, 0.0
        %463 = vst.msk [vmem:[#allocation4 + $0xd0] sm:$0x3] %vm384, 0.0
        %464 = vst.msk [vmem:[#allocation4 + $0xd8] sm:$0xff] %vm381, 0.0
        %465 = vst.msk [vmem:[#allocation4 + $0xe0] sm:$0xff] %vm381, 0.0
        %466 = vst.msk [vmem:[#allocation4 + $0xe8] sm:$0x3] %vm384, 0.0
        %467 = vst.msk [vmem:[#allocation4 + $0xf0] sm:$0xff] %vm381, 0.0
        %468 = vst.msk [vmem:[#allocation4 + $0xf8] sm:$0xff] %vm381, 0.0
        %469 = vst.msk [vmem:[#allocation4 + $0x100] sm:$0x3] %vm384, 0.0
        %470 = vst.msk [vmem:[#allocation4 + $0x108] sm:$0xff] %vm381, 0.0
        %471 = vst.msk [vmem:[#allocation4 + $0x110] sm:$0xff] %vm381, 0.0
        %472 = vst.msk [vmem:[#allocation4 + $0x118] sm:$0x3] %vm384, 0.0
        %473 = vst.msk [vmem:[#allocation4 + $0x120] sm:$0xff] %vm381, 0.0
        %474 = vst.msk [vmem:[#allocation4 + $0x128] sm:$0xff] %vm381, 0.0
        %475 = vst.msk [vmem:[#allocation4 + $0x130] sm:$0x3] %vm384, 0.0
        %476 = vst.msk [vmem:[#allocation4 + $0x138] sm:$0xff] %vm381, 0.0
        %477 = vst.msk [vmem:[#allocation4 + $0x140] sm:$0xff] %vm381, 0.0
        %478 = vst.msk [vmem:[#allocation4 + $0x148] sm:$0x3] %vm384, 0.0
        %479 = vst.msk [vmem:[#allocation4 + $0x150] sm:$0xff] %vm381, 0.0
        %480 = vst.msk [vmem:[#allocation4 + $0x158] sm:$0xff] %vm381, 0.0
        %481 = vst.msk [vmem:[#allocation4 + $0x160] sm:$0x3] %vm384, 0.0
        %482 = vst.msk [vmem:[#allocation4 + $0x168] sm:$0xff] %vm381, 0.0
        %483 = vst.msk [vmem:[#allocation4 + $0x170] sm:$0xff] %vm381, 0.0
        %484 = vst.msk [vmem:[#allocation4 + $0x178] sm:$0x3] %vm384, 0.0
        %485 = vst.msk [vmem:[#allocation4 + $0x180] sm:$0xff] %vm381, 0.0
        %486 = vst.msk [vmem:[#allocation4 + $0x188] sm:$0xff] %vm381, 0.0
        %487 = vst.msk [vmem:[#allocation4 + $0x190] sm:$0x3] %vm384, 0.0
        %488 = vst.msk [vmem:[#allocation4 + $0x198] sm:$0xff] %vm381, 0.0
        %489 = vst.msk [vmem:[#allocation4 + $0x1a0] sm:$0xff] %vm381, 0.0
        %490 = vst.msk [vmem:[#allocation4 + $0x1a8] sm:$0x3] %vm384, 0.0
        %v491 = vld [vmem:[%s318] sm:$0xf]
        %v492 = vld [vmem:[%s318 + $0x4] sm:$0xf]
        %v493 = vld [vmem:[%s318 + $0x8] sm:$0xf]
        %v494 = vld [vmem:[%s318 + $0xc] sm:$0xf]
        %v495 = vld [vmem:[%s318 + $0x10] sm:$0xf]
        %v496 = vld [vmem:[%s318 + $0x14] sm:$0xf]
        %v497 = vld [vmem:[%s318 + $0x18] sm:$0xf]
        %v498 = vld [vmem:[%s318 + $0x1c] sm:$0xf]
        %v499 = vld [vmem:[%s318 + $0x20] sm:$0xf]
        %v500 = vld [vmem:[%s318 + $0x24] sm:$0xf]
        %v501 = vld [vmem:[%s318 + $0x28] sm:$0xf]
        %v502 = vld [vmem:[%s318 + $0x2c] sm:$0xf]
        %v503 = vld [vmem:[%s318 + $0x30] sm:$0xf]
        %v504 = vld [vmem:[%s318 + $0x34] sm:$0xf]
        %v505 = vld [vmem:[%s318 + $0x38] sm:$0xf]
        %v506 = vld [vmem:[%s318 + $0x3c] sm:$0xf]
        %v507 = vld [vmem:[%s318 + $0x40] sm:$0xf]
        %v508 = vld [vmem:[%s318 + $0x44] sm:$0xf]
        %v509 = vld [vmem:[%s318 + $0x48] sm:$0xf]
        %v510 = vld [vmem:[%s318 + $0x4c] sm:$0xf]
        %v511 = vld [vmem:[%s318 + $0x50] sm:$0xf]
        %v512 = vld [vmem:[%s318 + $0x54] sm:$0xf]
        %v513 = vld [vmem:[%s318 + $0x58] sm:$0xf]
        %v514 = vld [vmem:[%s318 + $0x5c] sm:$0xf]
        %v515 = vld [vmem:[%s318 + $0x60] sm:$0xf]
        %v516 = vld [vmem:[%s318 + $0x64] sm:$0xf]
        %v517 = vld [vmem:[%s318 + $0x68] sm:$0xf]
        %v518 = vld [vmem:[%s318 + $0x6c] sm:$0xf]
        %v519 = vld [vmem:[%s318 + $0x70] sm:$0xf]
        %v520 = vld [vmem:[%s318 + $0x74] sm:$0xf]
        %v521 = vld [vmem:[%s318 + $0x78] sm:$0xf]
        %v522 = vld [vmem:[%s318 + $0x7c] sm:$0xf]
        %v523 = vunpack.c.l.bf16 %v491
        %v524 = vunpack.c.l.bf16 %v492
        %v525 = vunpack.c.l.bf16 %v493
        %v526 = vunpack.c.l.bf16 %v494
        %v527 = vunpack.c.l.bf16 %v495
        %v528 = vunpack.c.l.bf16 %v496
        %v529 = vunpack.c.l.bf16 %v497
        %v530 = vunpack.c.l.bf16 %v498
        %v531 = vunpack.c.l.bf16 %v499
        %v532 = vunpack.c.l.bf16 %v500
        %v533 = vunpack.c.l.bf16 %v501
        %v534 = vunpack.c.l.bf16 %v502
        %v535 = vunpack.c.l.bf16 %v503
        %v536 = vunpack.c.l.bf16 %v504
        %v537 = vunpack.c.l.bf16 %v505
        %v538 = vunpack.c.l.bf16 %v506
        %v539 = vunpack.c.l.bf16 %v507
        %v540 = vunpack.c.l.bf16 %v508
        %v541 = vunpack.c.l.bf16 %v509
        %v542 = vunpack.c.l.bf16 %v510
        %v543 = vunpack.c.l.bf16 %v511
        %v544 = vunpack.c.l.bf16 %v512
        %v545 = vunpack.c.l.bf16 %v513
        %v546 = vunpack.c.l.bf16 %v514
        %v547 = vunpack.c.l.bf16 %v515
        %v548 = vunpack.c.l.bf16 %v516
        %v549 = vunpack.c.l.bf16 %v517
        %v550 = vunpack.c.l.bf16 %v518
        %v551 = vunpack.c.l.bf16 %v519
        %v552 = vunpack.c.l.bf16 %v520
        %v553 = vunpack.c.l.bf16 %v521
        %v554 = vunpack.c.l.bf16 %v522
        %s555 = scalar_lea.vmem [#allocation2], 24
        %556 = vst.msk [vmem:[%s555 + $0x1] sm:$0xff] %vm325, %v523
        %557 = vst.msk [vmem:[%s555 + $0x9] sm:$0xff] %vm325, %v524
        %558 = vst.msk [vmem:[%s555 + $0x19] sm:$0xff] %vm325, %v525
        %559 = vst.msk [vmem:[%s555 + $0x21] sm:$0xff] %vm325, %v526
        %560 = vst.msk [vmem:[%s555 + $0x31] sm:$0xff] %vm325, %v527
        %561 = vst.msk [vmem:[%s555 + $0x39] sm:$0xff] %vm325, %v528
        %562 = vst.msk [vmem:[%s555 + $0x49] sm:$0xff] %vm325, %v529
        %563 = vst.msk [vmem:[%s555 + $0x51] sm:$0xff] %vm325, %v530
        %564 = vst.msk [vmem:[%s555 + $0x61] sm:$0xff] %vm325, %v531
        %565 = vst.msk [vmem:[%s555 + $0x69] sm:$0xff] %vm325, %v532
        %566 = vst.msk [vmem:[%s555 + $0x79] sm:$0xff] %vm325, %v533
        %567 = vst.msk [vmem:[%s555 + $0x81] sm:$0xff] %vm325, %v534
        %568 = vst.msk [vmem:[%s555 + $0x91] sm:$0xff] %vm325, %v535
        %569 = vst.msk [vmem:[%s555 + $0x99] sm:$0xff] %vm325, %v536
        %570 = vst.msk [vmem:[%s555 + $0xa9] sm:$0xff] %vm325, %v537
        %571 = vst.msk [vmem:[%s555 + $0xb1] sm:$0xff] %vm325, %v538
        %572 = vst.msk [vmem:[%s555 + $0xc1] sm:$0xff] %vm325, %v539
        %573 = vst.msk [vmem:[%s555 + $0xc9] sm:$0xff] %vm325, %v540
        %574 = vst.msk [vmem:[%s555 + $0xd9] sm:$0xff] %vm325, %v541
        %575 = vst.msk [vmem:[%s555 + $0xe1] sm:$0xff] %vm325, %v542
        %576 = vst.msk [vmem:[%s555 + $0xf1] sm:$0xff] %vm325, %v543
        %577 = vst.msk [vmem:[%s555 + $0xf9] sm:$0xff] %vm325, %v544
        %578 = vst.msk [vmem:[%s555 + $0x109] sm:$0xff] %vm325, %v545
        %579 = vst.msk [vmem:[%s555 + $0x111] sm:$0xff] %vm325, %v546
        %580 = vst.msk [vmem:[%s555 + $0x121] sm:$0xff] %vm325, %v547
        %581 = vst.msk [vmem:[%s555 + $0x129] sm:$0xff] %vm325, %v548
        %582 = vst.msk [vmem:[%s555 + $0x139] sm:$0xff] %vm325, %v549
        %583 = vst.msk [vmem:[%s555 + $0x141] sm:$0xff] %vm325, %v550
        %584 = vst.msk [vmem:[%s555 + $0x151] sm:$0xff] %vm325, %v551
        %585 = vst.msk [vmem:[%s555 + $0x159] sm:$0xff] %vm325, %v552
        %586 = vst.msk [vmem:[%s555 + $0x169] sm:$0xff] %vm325, %v553
        %587 = vst.msk [vmem:[%s555 + $0x171] sm:$0xff] %vm325, %v554
        %v588 = vld [vmem:[#allocation2] sm:$0xff]
        %v589 = vld [vmem:[#allocation2 + $0x8] sm:$0xff]
        %v590 = vld [vmem:[#allocation2 + $0x18] sm:$0xff]
        %v591 = vld [vmem:[#allocation2 + $0x20] sm:$0xff]
        %v592 = vld [vmem:[#allocation2 + $0x30] sm:$0xff]
        %v593 = vld [vmem:[#allocation2 + $0x38] sm:$0xff]
        %v594 = vld [vmem:[#allocation2 + $0x48] sm:$0xff]
        %v595 = vld [vmem:[#allocation2 + $0x50] sm:$0xff]
        %v596 = vld [vmem:[#allocation2 + $0x60] sm:$0xff]
        %v597 = vld [vmem:[#allocation2 + $0x68] sm:$0xff]
        %v598 = vld [vmem:[#allocation2 + $0x78] sm:$0xff]
        %v599 = vld [vmem:[#allocation2 + $0x80] sm:$0xff]
        %v600 = vld [vmem:[#allocation2 + $0x90] sm:$0xff]
        %v601 = vld [vmem:[#allocation2 + $0x98] sm:$0xff]
        %v602 = vld [vmem:[#allocation2 + $0xa8] sm:$0xff]
        %v603 = vld [vmem:[#allocation2 + $0xb0] sm:$0xff]
        %v604 = vld [vmem:[#allocation2 + $0xc0] sm:$0xff]
        %v605 = vld [vmem:[#allocation2 + $0xc8] sm:$0xff]
        %v606 = vld [vmem:[#allocation2 + $0xd8] sm:$0xff]
        %v607 = vld [vmem:[#allocation2 + $0xe0] sm:$0xff]
        %v608 = vld [vmem:[#allocation2 + $0xf0] sm:$0xff]
        %v609 = vld [vmem:[#allocation2 + $0xf8] sm:$0xff]
        %v610 = vld [vmem:[#allocation2 + $0x108] sm:$0xff]
        %v611 = vld [vmem:[#allocation2 + $0x110] sm:$0xff]
        %v612 = vld [vmem:[#allocation2 + $0x120] sm:$0xff]
        %v613 = vld [vmem:[#allocation2 + $0x128] sm:$0xff]
        %v614 = vld [vmem:[#allocation2 + $0x138] sm:$0xff]
        %v615 = vld [vmem:[#allocation2 + $0x140] sm:$0xff]
        %v616 = vld [vmem:[#allocation2 + $0x150] sm:$0xff]
        %v617 = vld [vmem:[#allocation2 + $0x158] sm:$0xff]
        %v618 = vld [vmem:[#allocation2 + $0x168] sm:$0xff]
        %v619 = vld [vmem:[#allocation2 + $0x170] sm:$0xff]
        %v620 = vld [vmem:[#allocation2 + $0x1] sm:$0xff]
        %v621 = vld [vmem:[#allocation2 + $0x9] sm:$0xff]
        %v622 = vld [vmem:[#allocation2 + $0x19] sm:$0xff]
        %v623 = vld [vmem:[#allocation2 + $0x21] sm:$0xff]
        %v624 = vld [vmem:[#allocation2 + $0x31] sm:$0xff]
        %v625 = vld [vmem:[#allocation2 + $0x39] sm:$0xff]
        %v626 = vld [vmem:[#allocation2 + $0x49] sm:$0xff]
        %v627 = vld [vmem:[#allocation2 + $0x51] sm:$0xff]
        %v628 = vld [vmem:[#allocation2 + $0x61] sm:$0xff]
        %v629 = vld [vmem:[#allocation2 + $0x69] sm:$0xff]
        %v630 = vld [vmem:[#allocation2 + $0x79] sm:$0xff]
        %v631 = vld [vmem:[#allocation2 + $0x81] sm:$0xff]
        %v632 = vld [vmem:[#allocation2 + $0x91] sm:$0xff]
        %v633 = vld [vmem:[#allocation2 + $0x99] sm:$0xff]
        %v634 = vld [vmem:[#allocation2 + $0xa9] sm:$0xff]
        %v635 = vld [vmem:[#allocation2 + $0xb1] sm:$0xff]
        %v636 = vld [vmem:[#allocation2 + $0xc1] sm:$0xff]
        %v637 = vld [vmem:[#allocation2 + $0xc9] sm:$0xff]
        %v638 = vld [vmem:[#allocation2 + $0xd9] sm:$0xff]
        %v639 = vld [vmem:[#allocation2 + $0xe1] sm:$0xff]
        %v640 = vld [vmem:[#allocation2 + $0xf1] sm:$0xff]
        %v641 = vld [vmem:[#allocation2 + $0xf9] sm:$0xff]
        %v642 = vld [vmem:[#allocation2 + $0x109] sm:$0xff]
        %v643 = vld [vmem:[#allocation2 + $0x111] sm:$0xff]
        %v644 = vld [vmem:[#allocation2 + $0x121] sm:$0xff]
        %v645 = vld [vmem:[#allocation2 + $0x129] sm:$0xff]
        %v646 = vld [vmem:[#allocation2 + $0x139] sm:$0xff]
        %v647 = vld [vmem:[#allocation2 + $0x141] sm:$0xff]
        %v648 = vld [vmem:[#allocation2 + $0x151] sm:$0xff]
        %v649 = vld [vmem:[#allocation2 + $0x159] sm:$0xff]
        %v650 = vld [vmem:[#allocation2 + $0x169] sm:$0xff]
        %v651 = vld [vmem:[#allocation2 + $0x171] sm:$0xff]
        %v652 = vld [vmem:[#allocation2 + $0x2] sm:$0xff]
        %v653 = vld [vmem:[#allocation2 + $0xa] sm:$0xff]
        %v654 = vld [vmem:[#allocation2 + $0x1a] sm:$0xff]
        %v655 = vld [vmem:[#allocation2 + $0x22] sm:$0xff]
        %v656 = vld [vmem:[#allocation2 + $0x32] sm:$0xff]
        %v657 = vld [vmem:[#allocation2 + $0x3a] sm:$0xff]
        %v658 = vld [vmem:[#allocation2 + $0x4a] sm:$0xff]
        %v659 = vld [vmem:[#allocation2 + $0x52] sm:$0xff]
        %v660 = vld [vmem:[#allocation2 + $0x62] sm:$0xff]
        %v661 = vld [vmem:[#allocation2 + $0x6a] sm:$0xff]
        %v662 = vld [vmem:[#allocation2 + $0x7a] sm:$0xff]
        %v663 = vld [vmem:[#allocation2 + $0x82] sm:$0xff]
        %v664 = vld [vmem:[#allocation2 + $0x92] sm:$0xff]
        %v665 = vld [vmem:[#allocation2 + $0x9a] sm:$0xff]
        %v666 = vld [vmem:[#allocation2 + $0xaa] sm:$0xff]
        %v667 = vld [vmem:[#allocation2 + $0xb2] sm:$0xff]
        %v668 = vld [vmem:[#allocation2 + $0xc2] sm:$0xff]
        %v669 = vld [vmem:[#allocation2 + $0xca] sm:$0xff]
        %v670 = vld [vmem:[#allocation2 + $0xda] sm:$0xff]
        %v671 = vld [vmem:[#allocation2 + $0xe2] sm:$0xff]
        %v672 = vld [vmem:[#allocation2 + $0xf2] sm:$0xff]
        %v673 = vld [vmem:[#allocation2 + $0xfa] sm:$0xff]
        %v674 = vld [vmem:[#allocation2 + $0x10a] sm:$0xff]
        %v675 = vld [vmem:[#allocation2 + $0x112] sm:$0xff]
        %v676 = vld [vmem:[#allocation2 + $0x122] sm:$0xff]
        %v677 = vld [vmem:[#allocation2 + $0x12a] sm:$0xff]
        %v678 = vld [vmem:[#allocation2 + $0x13a] sm:$0xff]
        %v679 = vld [vmem:[#allocation2 + $0x142] sm:$0xff]
        %v680 = vld [vmem:[#allocation2 + $0x152] sm:$0xff]
        %v681 = vld [vmem:[#allocation2 + $0x15a] sm:$0xff]
        %v682 = vld [vmem:[#allocation2 + $0x16a] sm:$0xff]
        %v683 = vld [vmem:[#allocation2 + $0x172] sm:$0xff]
        %v684 = vld [vmem:[%s555] sm:$0xff]
        %v685 = vld [vmem:[%s555 + $0x8] sm:$0xff]
        %v686 = vld [vmem:[%s555 + $0x18] sm:$0xff]
        %v687 = vld [vmem:[%s555 + $0x20] sm:$0xff]
        %v688 = vld [vmem:[%s555 + $0x30] sm:$0xff]
        %v689 = vld [vmem:[%s555 + $0x38] sm:$0xff]
        %v690 = vld [vmem:[%s555 + $0x48] sm:$0xff]
        %v691 = vld [vmem:[%s555 + $0x50] sm:$0xff]
        %v692 = vld [vmem:[%s555 + $0x60] sm:$0xff]
        %v693 = vld [vmem:[%s555 + $0x68] sm:$0xff]
        %v694 = vld [vmem:[%s555 + $0x78] sm:$0xff]
        %v695 = vld [vmem:[%s555 + $0x80] sm:$0xff]
        %v696 = vld [vmem:[%s555 + $0x90] sm:$0xff]
        %v697 = vld [vmem:[%s555 + $0x98] sm:$0xff]
        %v698 = vld [vmem:[%s555 + $0xa8] sm:$0xff]
        %v699 = vld [vmem:[%s555 + $0xb0] sm:$0xff]
        %v700 = vld [vmem:[%s555 + $0xc0] sm:$0xff]
        %v701 = vld [vmem:[%s555 + $0xc8] sm:$0xff]
        %v702 = vld [vmem:[%s555 + $0xd8] sm:$0xff]
        %v703 = vld [vmem:[%s555 + $0xe0] sm:$0xff]
        %v704 = vld [vmem:[%s555 + $0xf0] sm:$0xff]
        %v705 = vld [vmem:[%s555 + $0xf8] sm:$0xff]
        %v706 = vld [vmem:[%s555 + $0x108] sm:$0xff]
        %v707 = vld [vmem:[%s555 + $0x110] sm:$0xff]
        %v708 = vld [vmem:[%s555 + $0x120] sm:$0xff]
        %v709 = vld [vmem:[%s555 + $0x128] sm:$0xff]
        %v710 = vld [vmem:[%s555 + $0x138] sm:$0xff]
        %v711 = vld [vmem:[%s555 + $0x140] sm:$0xff]
        %v712 = vld [vmem:[%s555 + $0x150] sm:$0xff]
        %v713 = vld [vmem:[%s555 + $0x158] sm:$0xff]
        %v714 = vld [vmem:[%s555 + $0x168] sm:$0xff]
        %v715 = vld [vmem:[%s555 + $0x170] sm:$0xff]
        %v716 = vld [vmem:[%s555 + $0x1] sm:$0xff]
        %v717 = vld [vmem:[%s555 + $0x9] sm:$0xff]
        %v718 = vld [vmem:[%s555 + $0x19] sm:$0xff]
        %v719 = vld [vmem:[%s555 + $0x21] sm:$0xff]
        %v720 = vld [vmem:[%s555 + $0x31] sm:$0xff]
        %v721 = vld [vmem:[%s555 + $0x39] sm:$0xff]
        %v722 = vld [vmem:[%s555 + $0x49] sm:$0xff]
        %v723 = vld [vmem:[%s555 + $0x51] sm:$0xff]
        %v724 = vld [vmem:[%s555 + $0x61] sm:$0xff]
        %v725 = vld [vmem:[%s555 + $0x69] sm:$0xff]
        %v726 = vld [vmem:[%s555 + $0x79] sm:$0xff]
        %v727 = vld [vmem:[%s555 + $0x81] sm:$0xff]
        %v728 = vld [vmem:[%s555 + $0x91] sm:$0xff]
        %v729 = vld [vmem:[%s555 + $0x99] sm:$0xff]
        %v730 = vld [vmem:[%s555 + $0xa9] sm:$0xff]
        %v731 = vld [vmem:[%s555 + $0xb1] sm:$0xff]
        %v732 = vld [vmem:[%s555 + $0xc1] sm:$0xff]
        %v733 = vld [vmem:[%s555 + $0xc9] sm:$0xff]
        %v734 = vld [vmem:[%s555 + $0xd9] sm:$0xff]
        %v735 = vld [vmem:[%s555 + $0xe1] sm:$0xff]
        %v736 = vld [vmem:[%s555 + $0xf1] sm:$0xff]
        %v737 = vld [vmem:[%s555 + $0xf9] sm:$0xff]
        %v738 = vld [vmem:[%s555 + $0x109] sm:$0xff]
        %v739 = vld [vmem:[%s555 + $0x111] sm:$0xff]
        %v740 = vld [vmem:[%s555 + $0x121] sm:$0xff]
        %v741 = vld [vmem:[%s555 + $0x129] sm:$0xff]
        %v742 = vld [vmem:[%s555 + $0x139] sm:$0xff]
        %v743 = vld [vmem:[%s555 + $0x141] sm:$0xff]
        %v744 = vld [vmem:[%s555 + $0x151] sm:$0xff]
        %v745 = vld [vmem:[%s555 + $0x159] sm:$0xff]
        %v746 = vld [vmem:[%s555 + $0x169] sm:$0xff]
        %v747 = vld [vmem:[%s555 + $0x171] sm:$0xff]
        %v748 = vld [vmem:[%s555 + $0x2] sm:$0xff]
        %v749 = vld [vmem:[%s555 + $0xa] sm:$0xff]
        %v750 = vld [vmem:[%s555 + $0x1a] sm:$0xff]
        %v751 = vld [vmem:[%s555 + $0x22] sm:$0xff]
        %v752 = vld [vmem:[%s555 + $0x32] sm:$0xff]
        %v753 = vld [vmem:[%s555 + $0x3a] sm:$0xff]
        %v754 = vld [vmem:[%s555 + $0x4a] sm:$0xff]
        %v755 = vld [vmem:[%s555 + $0x52] sm:$0xff]
        %v756 = vld [vmem:[%s555 + $0x62] sm:$0xff]
        %v757 = vld [vmem:[%s555 + $0x6a] sm:$0xff]
        %v758 = vld [vmem:[%s555 + $0x7a] sm:$0xff]
        %v759 = vld [vmem:[%s555 + $0x82] sm:$0xff]
        %v760 = vld [vmem:[%s555 + $0x92] sm:$0xff]
        %v761 = vld [vmem:[%s555 + $0x9a] sm:$0xff]
        %v762 = vld [vmem:[%s555 + $0xaa] sm:$0xff]
        %v763 = vld [vmem:[%s555 + $0xb2] sm:$0xff]
        %v764 = vld [vmem:[%s555 + $0xc2] sm:$0xff]
        %v765 = vld [vmem:[%s555 + $0xca] sm:$0xff]
        %v766 = vld [vmem:[%s555 + $0xda] sm:$0xff]
        %v767 = vld [vmem:[%s555 + $0xe2] sm:$0xff]
        %v768 = vld [vmem:[%s555 + $0xf2] sm:$0xff]
        %v769 = vld [vmem:[%s555 + $0xfa] sm:$0xff]
        %v770 = vld [vmem:[%s555 + $0x10a] sm:$0xff]
        %v771 = vld [vmem:[%s555 + $0x112] sm:$0xff]
        %v772 = vld [vmem:[%s555 + $0x122] sm:$0xff]
        %v773 = vld [vmem:[%s555 + $0x12a] sm:$0xff]
        %v774 = vld [vmem:[%s555 + $0x13a] sm:$0xff]
        %v775 = vld [vmem:[%s555 + $0x142] sm:$0xff]
        %v776 = vld [vmem:[%s555 + $0x152] sm:$0xff]
        %v777 = vld [vmem:[%s555 + $0x15a] sm:$0xff]
        %v778 = vld [vmem:[%s555 + $0x16a] sm:$0xff]
        %v779 = vld [vmem:[%s555 + $0x172] sm:$0xff]
        %s780 = scalar_lea.vmem [#allocation2], 48
        %v781 = vld [vmem:[%s780] sm:$0xff]
        %v782 = vld [vmem:[%s780 + $0x8] sm:$0xff]
        %v783 = vld [vmem:[%s780 + $0x18] sm:$0xff]
        %v784 = vld [vmem:[%s780 + $0x20] sm:$0xff]
        %v785 = vld [vmem:[%s780 + $0x30] sm:$0xff]
        %v786 = vld [vmem:[%s780 + $0x38] sm:$0xff]
        %v787 = vld [vmem:[%s780 + $0x48] sm:$0xff]
        %v788 = vld [vmem:[%s780 + $0x50] sm:$0xff]
        %v789 = vld [vmem:[%s780 + $0x60] sm:$0xff]
        %v790 = vld [vmem:[%s780 + $0x68] sm:$0xff]
        %v791 = vld [vmem:[%s780 + $0x78] sm:$0xff]
        %v792 = vld [vmem:[%s780 + $0x80] sm:$0xff]
        %v793 = vld [vmem:[%s780 + $0x90] sm:$0xff]
        %v794 = vld [vmem:[%s780 + $0x98] sm:$0xff]
        %v795 = vld [vmem:[%s780 + $0xa8] sm:$0xff]
        %v796 = vld [vmem:[%s780 + $0xb0] sm:$0xff]
        %v797 = vld [vmem:[%s780 + $0xc0] sm:$0xff]
        %v798 = vld [vmem:[%s780 + $0xc8] sm:$0xff]
        %v799 = vld [vmem:[%s780 + $0xd8] sm:$0xff]
        %v800 = vld [vmem:[%s780 + $0xe0] sm:$0xff]
        %v801 = vld [vmem:[%s780 + $0xf0] sm:$0xff]
        %v802 = vld [vmem:[%s780 + $0xf8] sm:$0xff]
        %v803 = vld [vmem:[%s780 + $0x108] sm:$0xff]
        %v804 = vld [vmem:[%s780 + $0x110] sm:$0xff]
        %v805 = vld [vmem:[%s780 + $0x120] sm:$0xff]
        %v806 = vld [vmem:[%s780 + $0x128] sm:$0xff]
        %v807 = vld [vmem:[%s780 + $0x138] sm:$0xff]
        %v808 = vld [vmem:[%s780 + $0x140] sm:$0xff]
        %v809 = vld [vmem:[%s780 + $0x150] sm:$0xff]
        %v810 = vld [vmem:[%s780 + $0x158] sm:$0xff]
        %v811 = vld [vmem:[%s780 + $0x168] sm:$0xff]
        %v812 = vld [vmem:[%s780 + $0x170] sm:$0xff]
        %v813 = vld [vmem:[%s780 + $0x1] sm:$0xff]
        %v814 = vld [vmem:[%s780 + $0x9] sm:$0xff]
        %v815 = vld [vmem:[%s780 + $0x19] sm:$0xff]
        %v816 = vld [vmem:[%s780 + $0x21] sm:$0xff]
        %v817 = vld [vmem:[%s780 + $0x31] sm:$0xff]
        %v818 = vld [vmem:[%s780 + $0x39] sm:$0xff]
        %v819 = vld [vmem:[%s780 + $0x49] sm:$0xff]
        %v820 = vld [vmem:[%s780 + $0x51] sm:$0xff]
        %v821 = vld [vmem:[%s780 + $0x61] sm:$0xff]
        %v822 = vld [vmem:[%s780 + $0x69] sm:$0xff]
        %v823 = vld [vmem:[%s780 + $0x79] sm:$0xff]
        %v824 = vld [vmem:[%s780 + $0x81] sm:$0xff]
        %v825 = vld [vmem:[%s780 + $0x91] sm:$0xff]
        %v826 = vld [vmem:[%s780 + $0x99] sm:$0xff]
        %v827 = vld [vmem:[%s780 + $0xa9] sm:$0xff]
        %v828 = vld [vmem:[%s780 + $0xb1] sm:$0xff]
        %v829 = vld [vmem:[%s780 + $0xc1] sm:$0xff]
        %v830 = vld [vmem:[%s780 + $0xc9] sm:$0xff]
        %v831 = vld [vmem:[%s780 + $0xd9] sm:$0xff]
        %v832 = vld [vmem:[%s780 + $0xe1] sm:$0xff]
        %v833 = vld [vmem:[%s780 + $0xf1] sm:$0xff]
        %v834 = vld [vmem:[%s780 + $0xf9] sm:$0xff]
        %v835 = vld [vmem:[%s780 + $0x109] sm:$0xff]
        %v836 = vld [vmem:[%s780 + $0x111] sm:$0xff]
        %v837 = vld [vmem:[%s780 + $0x121] sm:$0xff]
        %v838 = vld [vmem:[%s780 + $0x129] sm:$0xff]
        %v839 = vld [vmem:[%s780 + $0x139] sm:$0xff]
        %v840 = vld [vmem:[%s780 + $0x141] sm:$0xff]
        %v841 = vld [vmem:[%s780 + $0x151] sm:$0xff]
        %v842 = vld [vmem:[%s780 + $0x159] sm:$0xff]
        %v843 = vld [vmem:[%s780 + $0x169] sm:$0xff]
        %v844 = vld [vmem:[%s780 + $0x171] sm:$0xff]
        %v845 = vld [vmem:[%s780 + $0x2] sm:$0xff]
        %v846 = vld [vmem:[%s780 + $0xa] sm:$0xff]
        %v847 = vld [vmem:[%s780 + $0x1a] sm:$0xff]
        %v848 = vld [vmem:[%s780 + $0x22] sm:$0xff]
        %v849 = vld [vmem:[%s780 + $0x32] sm:$0xff]
        %v850 = vld [vmem:[%s780 + $0x3a] sm:$0xff]
        %v851 = vld [vmem:[%s780 + $0x4a] sm:$0xff]
        %v852 = vld [vmem:[%s780 + $0x52] sm:$0xff]
        %v853 = vld [vmem:[%s780 + $0x62] sm:$0xff]
        %v854 = vld [vmem:[%s780 + $0x6a] sm:$0xff]
        %v855 = vld [vmem:[%s780 + $0x7a] sm:$0xff]
        %v856 = vld [vmem:[%s780 + $0x82] sm:$0xff]
        %v857 = vld [vmem:[%s780 + $0x92] sm:$0xff]
        %v858 = vld [vmem:[%s780 + $0x9a] sm:$0xff]
        %v859 = vld [vmem:[%s780 + $0xaa] sm:$0xff]
        %v860 = vld [vmem:[%s780 + $0xb2] sm:$0xff]
        %v861 = vld [vmem:[%s780 + $0xc2] sm:$0xff]
        %v862 = vld [vmem:[%s780 + $0xca] sm:$0xff]
        %v863 = vld [vmem:[%s780 + $0xda] sm:$0xff]
        %v864 = vld [vmem:[%s780 + $0xe2] sm:$0xff]
        %v865 = vld [vmem:[%s780 + $0xf2] sm:$0xff]
        %v866 = vld [vmem:[%s780 + $0xfa] sm:$0xff]
        %v867 = vld [vmem:[%s780 + $0x10a] sm:$0xff]
        %v868 = vld [vmem:[%s780 + $0x112] sm:$0xff]
        %v869 = vld [vmem:[%s780 + $0x122] sm:$0xff]
        %v870 = vld [vmem:[%s780 + $0x12a] sm:$0xff]
        %v871 = vld [vmem:[%s780 + $0x13a] sm:$0xff]
        %v872 = vld [vmem:[%s780 + $0x142] sm:$0xff]
        %v873 = vld [vmem:[%s780 + $0x152] sm:$0xff]
        %v874 = vld [vmem:[%s780 + $0x15a] sm:$0xff]
        %v875 = vld [vmem:[%s780 + $0x16a] sm:$0xff]
        %v876 = vld [vmem:[%s780 + $0x172] sm:$0xff]
        %909 = vrot.lane.b32.xlu0 %v620, 64
        %v910 = vpop.permute.xlu0 %909
        %911 = vrot.lane.b32.xlu0 %v621, 64
        %v912 = vpop.permute.xlu0 %911
        %913 = vrot.lane.b32.xlu0 %v622, 64
        %v914 = vpop.permute.xlu0 %913
        %915 = vrot.lane.b32.xlu0 %v623, 64
        %v916 = vpop.permute.xlu0 %915
        %917 = vrot.lane.b32.xlu0 %v624, 64
        %v918 = vpop.permute.xlu0 %917
        %919 = vrot.lane.b32.xlu0 %v625, 64
        %v920 = vpop.permute.xlu0 %919
        %921 = vrot.lane.b32.xlu0 %v626, 64
        %v922 = vpop.permute.xlu0 %921
        %923 = vrot.lane.b32.xlu0 %v627, 64
        %v924 = vpop.permute.xlu0 %923
        %925 = vrot.lane.b32.xlu0 %v628, 64
        %v926 = vpop.permute.xlu0 %925
        %927 = vrot.lane.b32.xlu0 %v629, 64
        %v928 = vpop.permute.xlu0 %927
        %929 = vrot.lane.b32.xlu0 %v630, 64
        %v930 = vpop.permute.xlu0 %929
        %931 = vrot.lane.b32.xlu0 %v631, 64
        %v932 = vpop.permute.xlu0 %931
        %933 = vrot.lane.b32.xlu0 %v632, 64
        %v934 = vpop.permute.xlu0 %933
        %935 = vrot.lane.b32.xlu0 %v633, 64
        %v936 = vpop.permute.xlu0 %935
        %937 = vrot.lane.b32.xlu0 %v634, 64
        %v938 = vpop.permute.xlu0 %937
        %939 = vrot.lane.b32.xlu0 %v635, 64
        %v940 = vpop.permute.xlu0 %939
        %941 = vrot.lane.b32.xlu0 %v636, 64
        %v942 = vpop.permute.xlu0 %941
        %943 = vrot.lane.b32.xlu0 %v637, 64
        %v944 = vpop.permute.xlu0 %943
        %945 = vrot.lane.b32.xlu0 %v638, 64
        %v946 = vpop.permute.xlu0 %945
        %947 = vrot.lane.b32.xlu0 %v639, 64
        %v948 = vpop.permute.xlu0 %947
        %949 = vrot.lane.b32.xlu0 %v640, 64
        %v950 = vpop.permute.xlu0 %949
        %951 = vrot.lane.b32.xlu0 %v641, 64
        %v952 = vpop.permute.xlu0 %951
        %953 = vrot.lane.b32.xlu0 %v642, 64
        %v954 = vpop.permute.xlu0 %953
        %955 = vrot.lane.b32.xlu0 %v643, 64
        %v956 = vpop.permute.xlu0 %955
        %957 = vrot.lane.b32.xlu0 %v644, 64
        %v958 = vpop.permute.xlu0 %957
        %959 = vrot.lane.b32.xlu0 %v645, 64
        %v960 = vpop.permute.xlu0 %959
        %961 = vrot.lane.b32.xlu0 %v646, 64
        %v962 = vpop.permute.xlu0 %961
        %963 = vrot.lane.b32.xlu0 %v647, 64
        %v964 = vpop.permute.xlu0 %963
        %965 = vrot.lane.b32.xlu0 %v648, 64
        %v966 = vpop.permute.xlu0 %965
        %967 = vrot.lane.b32.xlu0 %v649, 64
        %v968 = vpop.permute.xlu0 %967
        %969 = vrot.lane.b32.xlu0 %v650, 64
        %v970 = vpop.permute.xlu0 %969
        %971 = vrot.lane.b32.xlu0 %v651, 64
        %v972 = vpop.permute.xlu0 %971
        %1037 = vrot.lane.b32.xlu0 %v684, 64
        %v1038 = vpop.permute.xlu0 %1037
        %1039 = vrot.lane.b32.xlu0 %v685, 64
        %v1040 = vpop.permute.xlu0 %1039
        %1041 = vrot.lane.b32.xlu0 %v686, 64
        %v1042 = vpop.permute.xlu0 %1041
        %1043 = vrot.lane.b32.xlu0 %v687, 64
        %v1044 = vpop.permute.xlu0 %1043
        %1045 = vrot.lane.b32.xlu0 %v688, 64
        %v1046 = vpop.permute.xlu0 %1045
        %1047 = vrot.lane.b32.xlu0 %v689, 64
        %v1048 = vpop.permute.xlu0 %1047
        %1049 = vrot.lane.b32.xlu0 %v690, 64
        %v1050 = vpop.permute.xlu0 %1049
        %1051 = vrot.lane.b32.xlu0 %v691, 64
        %v1052 = vpop.permute.xlu0 %1051
        %1053 = vrot.lane.b32.xlu0 %v692, 64
        %v1054 = vpop.permute.xlu0 %1053
        %1055 = vrot.lane.b32.xlu0 %v693, 64
        %v1056 = vpop.permute.xlu0 %1055
        %1057 = vrot.lane.b32.xlu0 %v694, 64
        %v1058 = vpop.permute.xlu0 %1057
        %1059 = vrot.lane.b32.xlu0 %v695, 64
        %v1060 = vpop.permute.xlu0 %1059
        %1061 = vrot.lane.b32.xlu0 %v696, 64
        %v1062 = vpop.permute.xlu0 %1061
        %1063 = vrot.lane.b32.xlu0 %v697, 64
        %v1064 = vpop.permute.xlu0 %1063
        %1065 = vrot.lane.b32.xlu0 %v698, 64
        %v1066 = vpop.permute.xlu0 %1065
        %1067 = vrot.lane.b32.xlu0 %v699, 64
        %v1068 = vpop.permute.xlu0 %1067
        %1069 = vrot.lane.b32.xlu0 %v700, 64
        %v1070 = vpop.permute.xlu0 %1069
        %1071 = vrot.lane.b32.xlu0 %v701, 64
        %v1072 = vpop.permute.xlu0 %1071
        %1073 = vrot.lane.b32.xlu0 %v702, 64
        %v1074 = vpop.permute.xlu0 %1073
        %1075 = vrot.lane.b32.xlu0 %v703, 64
        %v1076 = vpop.permute.xlu0 %1075
        %1077 = vrot.lane.b32.xlu0 %v704, 64
        %v1078 = vpop.permute.xlu0 %1077
        %1079 = vrot.lane.b32.xlu0 %v705, 64
        %v1080 = vpop.permute.xlu0 %1079
        %1081 = vrot.lane.b32.xlu0 %v706, 64
        %v1082 = vpop.permute.xlu0 %1081
        %1083 = vrot.lane.b32.xlu0 %v707, 64
        %v1084 = vpop.permute.xlu0 %1083
        %1085 = vrot.lane.b32.xlu0 %v708, 64
        %v1086 = vpop.permute.xlu0 %1085
        %1087 = vrot.lane.b32.xlu0 %v709, 64
        %v1088 = vpop.permute.xlu0 %1087
        %1089 = vrot.lane.b32.xlu0 %v710, 64
        %v1090 = vpop.permute.xlu0 %1089
        %1091 = vrot.lane.b32.xlu0 %v711, 64
        %v1092 = vpop.permute.xlu0 %1091
        %1093 = vrot.lane.b32.xlu0 %v712, 64
        %v1094 = vpop.permute.xlu0 %1093
        %1095 = vrot.lane.b32.xlu0 %v713, 64
        %v1096 = vpop.permute.xlu0 %1095
        %1097 = vrot.lane.b32.xlu0 %v714, 64
        %v1098 = vpop.permute.xlu0 %1097
        %1099 = vrot.lane.b32.xlu0 %v715, 64
        %v1100 = vpop.permute.xlu0 %1099
        %1165 = vrot.lane.b32.xlu0 %v748, 64
        %v1166 = vpop.permute.xlu0 %1165
        %1167 = vrot.lane.b32.xlu0 %v749, 64
        %v1168 = vpop.permute.xlu0 %1167
        %1169 = vrot.lane.b32.xlu0 %v750, 64
        %v1170 = vpop.permute.xlu0 %1169
        %1171 = vrot.lane.b32.xlu0 %v751, 64
        %v1172 = vpop.permute.xlu0 %1171
        %1173 = vrot.lane.b32.xlu0 %v752, 64
        %v1174 = vpop.permute.xlu0 %1173
        %1175 = vrot.lane.b32.xlu0 %v753, 64
        %v1176 = vpop.permute.xlu0 %1175
        %1177 = vrot.lane.b32.xlu0 %v754, 64
        %v1178 = vpop.permute.xlu0 %1177
        %1179 = vrot.lane.b32.xlu0 %v755, 64
        %v1180 = vpop.permute.xlu0 %1179
        %1181 = vrot.lane.b32.xlu0 %v756, 64
        %v1182 = vpop.permute.xlu0 %1181
        %1183 = vrot.lane.b32.xlu0 %v757, 64
        %v1184 = vpop.permute.xlu0 %1183
        %1185 = vrot.lane.b32.xlu0 %v758, 64
        %v1186 = vpop.permute.xlu0 %1185
        %1187 = vrot.lane.b32.xlu0 %v759, 64
        %v1188 = vpop.permute.xlu0 %1187
        %1189 = vrot.lane.b32.xlu0 %v760, 64
        %v1190 = vpop.permute.xlu0 %1189
        %1191 = vrot.lane.b32.xlu0 %v761, 64
        %v1192 = vpop.permute.xlu0 %1191
        %1193 = vrot.lane.b32.xlu0 %v762, 64
        %v1194 = vpop.permute.xlu0 %1193
        %1195 = vrot.lane.b32.xlu0 %v763, 64
        %v1196 = vpop.permute.xlu0 %1195
        %1197 = vrot.lane.b32.xlu0 %v764, 64
        %v1198 = vpop.permute.xlu0 %1197
        %1199 = vrot.lane.b32.xlu0 %v765, 64
        %v1200 = vpop.permute.xlu0 %1199
        %1201 = vrot.lane.b32.xlu0 %v766, 64
        %v1202 = vpop.permute.xlu0 %1201
        %1203 = vrot.lane.b32.xlu0 %v767, 64
        %v1204 = vpop.permute.xlu0 %1203
        %1205 = vrot.lane.b32.xlu0 %v768, 64
        %v1206 = vpop.permute.xlu0 %1205
        %1207 = vrot.lane.b32.xlu0 %v769, 64
        %v1208 = vpop.permute.xlu0 %1207
        %1209 = vrot.lane.b32.xlu0 %v770, 64
        %v1210 = vpop.permute.xlu0 %1209
        %1211 = vrot.lane.b32.xlu0 %v771, 64
        %v1212 = vpop.permute.xlu0 %1211
        %1213 = vrot.lane.b32.xlu0 %v772, 64
        %v1214 = vpop.permute.xlu0 %1213
        %1215 = vrot.lane.b32.xlu0 %v773, 64
        %v1216 = vpop.permute.xlu0 %1215
        %1217 = vrot.lane.b32.xlu0 %v774, 64
        %v1218 = vpop.permute.xlu0 %1217
        %1219 = vrot.lane.b32.xlu0 %v775, 64
        %v1220 = vpop.permute.xlu0 %1219
        %1221 = vrot.lane.b32.xlu0 %v776, 64
        %v1222 = vpop.permute.xlu0 %1221
        %1223 = vrot.lane.b32.xlu0 %v777, 64
        %v1224 = vpop.permute.xlu0 %1223
        %1225 = vrot.lane.b32.xlu0 %v778, 64
        %v1226 = vpop.permute.xlu0 %1225
        %1227 = vrot.lane.b32.xlu0 %v779, 64
        %v1228 = vpop.permute.xlu0 %1227
        %1293 = vrot.lane.b32.xlu0 %v813, 64
        %v1294 = vpop.permute.xlu0 %1293
        %1295 = vrot.lane.b32.xlu0 %v814, 64
        %v1296 = vpop.permute.xlu0 %1295
        %1297 = vrot.lane.b32.xlu0 %v815, 64
        %v1298 = vpop.permute.xlu0 %1297
        %1299 = vrot.lane.b32.xlu0 %v816, 64
        %v1300 = vpop.permute.xlu0 %1299
        %1301 = vrot.lane.b32.xlu0 %v817, 64
        %v1302 = vpop.permute.xlu0 %1301
        %1303 = vrot.lane.b32.xlu0 %v818, 64
        %v1304 = vpop.permute.xlu0 %1303
        %1305 = vrot.lane.b32.xlu0 %v819, 64
        %v1306 = vpop.permute.xlu0 %1305
        %1307 = vrot.lane.b32.xlu0 %v820, 64
        %v1308 = vpop.permute.xlu0 %1307
        %1309 = vrot.lane.b32.xlu0 %v821, 64
        %v1310 = vpop.permute.xlu0 %1309
        %1311 = vrot.lane.b32.xlu0 %v822, 64
        %v1312 = vpop.permute.xlu0 %1311
        %1313 = vrot.lane.b32.xlu0 %v823, 64
        %v1314 = vpop.permute.xlu0 %1313
        %1315 = vrot.lane.b32.xlu0 %v824, 64
        %v1316 = vpop.permute.xlu0 %1315
        %1317 = vrot.lane.b32.xlu0 %v825, 64
        %v1318 = vpop.permute.xlu0 %1317
        %1319 = vrot.lane.b32.xlu0 %v826, 64
        %v1320 = vpop.permute.xlu0 %1319
        %1321 = vrot.lane.b32.xlu0 %v827, 64
        %v1322 = vpop.permute.xlu0 %1321
        %1323 = vrot.lane.b32.xlu0 %v828, 64
        %v1324 = vpop.permute.xlu0 %1323
        %1325 = vrot.lane.b32.xlu0 %v829, 64
        %v1326 = vpop.permute.xlu0 %1325
        %1327 = vrot.lane.b32.xlu0 %v830, 64
        %v1328 = vpop.permute.xlu0 %1327
        %1329 = vrot.lane.b32.xlu0 %v831, 64
        %v1330 = vpop.permute.xlu0 %1329
        %1331 = vrot.lane.b32.xlu0 %v832, 64
        %v1332 = vpop.permute.xlu0 %1331
        %1333 = vrot.lane.b32.xlu0 %v833, 64
        %v1334 = vpop.permute.xlu0 %1333
        %1335 = vrot.lane.b32.xlu0 %v834, 64
        %v1336 = vpop.permute.xlu0 %1335
        %1337 = vrot.lane.b32.xlu0 %v835, 64
        %v1338 = vpop.permute.xlu0 %1337
        %1339 = vrot.lane.b32.xlu0 %v836, 64
        %v1340 = vpop.permute.xlu0 %1339
        %1341 = vrot.lane.b32.xlu0 %v837, 64
        %v1342 = vpop.permute.xlu0 %1341
        %1343 = vrot.lane.b32.xlu0 %v838, 64
        %v1344 = vpop.permute.xlu0 %1343
        %1345 = vrot.lane.b32.xlu0 %v839, 64
        %v1346 = vpop.permute.xlu0 %1345
        %1347 = vrot.lane.b32.xlu0 %v840, 64
        %v1348 = vpop.permute.xlu0 %1347
        %1349 = vrot.lane.b32.xlu0 %v841, 64
        %v1350 = vpop.permute.xlu0 %1349
        %1351 = vrot.lane.b32.xlu0 %v842, 64
        %v1352 = vpop.permute.xlu0 %1351
        %1353 = vrot.lane.b32.xlu0 %v843, 64
        %v1354 = vpop.permute.xlu0 %1353
        %1355 = vrot.lane.b32.xlu0 %v844, 64
        %v1356 = vpop.permute.xlu0 %1355
        %v1389 = vsel %vm325, %v588, %v910
        %v1390 = vsel %vm325, %v589, %v912
        %v1391 = vsel %vm325, %v590, %v914
        %v1392 = vsel %vm325, %v591, %v916
        %v1393 = vsel %vm325, %v592, %v918
        %v1394 = vsel %vm325, %v593, %v920
        %v1395 = vsel %vm325, %v594, %v922
        %v1396 = vsel %vm325, %v595, %v924
        %v1397 = vsel %vm325, %v596, %v926
        %v1398 = vsel %vm325, %v597, %v928
        %v1399 = vsel %vm325, %v598, %v930
        %v1400 = vsel %vm325, %v599, %v932
        %v1401 = vsel %vm325, %v600, %v934
        %v1402 = vsel %vm325, %v601, %v936
        %v1403 = vsel %vm325, %v602, %v938
        %v1404 = vsel %vm325, %v603, %v940
        %v1405 = vsel %vm325, %v604, %v942
        %v1406 = vsel %vm325, %v605, %v944
        %v1407 = vsel %vm325, %v606, %v946
        %v1408 = vsel %vm325, %v607, %v948
        %v1409 = vsel %vm325, %v608, %v950
        %v1410 = vsel %vm325, %v609, %v952
        %v1411 = vsel %vm325, %v610, %v954
        %v1412 = vsel %vm325, %v611, %v956
        %v1413 = vsel %vm325, %v612, %v958
        %v1414 = vsel %vm325, %v613, %v960
        %v1415 = vsel %vm325, %v614, %v962
        %v1416 = vsel %vm325, %v615, %v964
        %v1417 = vsel %vm325, %v616, %v966
        %v1418 = vsel %vm325, %v617, %v968
        %v1419 = vsel %vm325, %v618, %v970
        %v1420 = vsel %vm325, %v619, %v972
        %v1421 = vsel %vm325, %v652, %v1038
        %v1422 = vsel %vm325, %v653, %v1040
        %v1423 = vsel %vm325, %v654, %v1042
        %v1424 = vsel %vm325, %v655, %v1044
        %v1425 = vsel %vm325, %v656, %v1046
        %v1426 = vsel %vm325, %v657, %v1048
        %v1427 = vsel %vm325, %v658, %v1050
        %v1428 = vsel %vm325, %v659, %v1052
        %v1429 = vsel %vm325, %v660, %v1054
        %v1430 = vsel %vm325, %v661, %v1056
        %v1431 = vsel %vm325, %v662, %v1058
        %v1432 = vsel %vm325, %v663, %v1060
        %v1433 = vsel %vm325, %v664, %v1062
        %v1434 = vsel %vm325, %v665, %v1064
        %v1435 = vsel %vm325, %v666, %v1066
        %v1436 = vsel %vm325, %v667, %v1068
        %v1437 = vsel %vm325, %v668, %v1070
        %v1438 = vsel %vm325, %v669, %v1072
        %v1439 = vsel %vm325, %v670, %v1074
        %v1440 = vsel %vm325, %v671, %v1076
        %v1441 = vsel %vm325, %v672, %v1078
        %v1442 = vsel %vm325, %v673, %v1080
        %v1443 = vsel %vm325, %v674, %v1082
        %v1444 = vsel %vm325, %v675, %v1084
        %v1445 = vsel %vm325, %v676, %v1086
        %v1446 = vsel %vm325, %v677, %v1088
        %v1447 = vsel %vm325, %v678, %v1090
        %v1448 = vsel %vm325, %v679, %v1092
        %v1449 = vsel %vm325, %v680, %v1094
        %v1450 = vsel %vm325, %v681, %v1096
        %v1451 = vsel %vm325, %v682, %v1098
        %v1452 = vsel %vm325, %v683, %v1100
        %v1453 = vsel %vm325, %v716, %v1166
        %v1454 = vsel %vm325, %v717, %v1168
        %v1455 = vsel %vm325, %v718, %v1170
        %v1456 = vsel %vm325, %v719, %v1172
        %v1457 = vsel %vm325, %v720, %v1174
        %v1458 = vsel %vm325, %v721, %v1176
        %v1459 = vsel %vm325, %v722, %v1178
        %v1460 = vsel %vm325, %v723, %v1180
        %v1461 = vsel %vm325, %v724, %v1182
        %v1462 = vsel %vm325, %v725, %v1184
        %v1463 = vsel %vm325, %v726, %v1186
        %v1464 = vsel %vm325, %v727, %v1188
        %v1465 = vsel %vm325, %v728, %v1190
        %v1466 = vsel %vm325, %v729, %v1192
        %v1467 = vsel %vm325, %v730, %v1194
        %v1468 = vsel %vm325, %v731, %v1196
        %v1469 = vsel %vm325, %v732, %v1198
        %v1470 = vsel %vm325, %v733, %v1200
        %v1471 = vsel %vm325, %v734, %v1202
        %v1472 = vsel %vm325, %v735, %v1204
        %v1473 = vsel %vm325, %v736, %v1206
        %v1474 = vsel %vm325, %v737, %v1208
        %v1475 = vsel %vm325, %v738, %v1210
        %v1476 = vsel %vm325, %v739, %v1212
        %v1477 = vsel %vm325, %v740, %v1214
        %v1478 = vsel %vm325, %v741, %v1216
        %v1479 = vsel %vm325, %v742, %v1218
        %v1480 = vsel %vm325, %v743, %v1220
        %v1481 = vsel %vm325, %v744, %v1222
        %v1482 = vsel %vm325, %v745, %v1224
        %v1483 = vsel %vm325, %v746, %v1226
        %v1484 = vsel %vm325, %v747, %v1228
        %v1485 = vsel %vm325, %v781, %v1294
        %v1486 = vsel %vm325, %v782, %v1296
        %v1487 = vsel %vm325, %v783, %v1298
        %v1488 = vsel %vm325, %v784, %v1300
        %v1489 = vsel %vm325, %v785, %v1302
        %v1490 = vsel %vm325, %v786, %v1304
        %v1491 = vsel %vm325, %v787, %v1306
        %v1492 = vsel %vm325, %v788, %v1308
        %v1493 = vsel %vm325, %v789, %v1310
        %v1494 = vsel %vm325, %v790, %v1312
        %v1495 = vsel %vm325, %v791, %v1314
        %v1496 = vsel %vm325, %v792, %v1316
        %v1497 = vsel %vm325, %v793, %v1318
        %v1498 = vsel %vm325, %v794, %v1320
        %v1499 = vsel %vm325, %v795, %v1322
        %v1500 = vsel %vm325, %v796, %v1324
        %v1501 = vsel %vm325, %v797, %v1326
        %v1502 = vsel %vm325, %v798, %v1328
        %v1503 = vsel %vm325, %v799, %v1330
        %v1504 = vsel %vm325, %v800, %v1332
        %v1505 = vsel %vm325, %v801, %v1334
        %v1506 = vsel %vm325, %v802, %v1336
        %v1507 = vsel %vm325, %v803, %v1338
        %v1508 = vsel %vm325, %v804, %v1340
        %v1509 = vsel %vm325, %v805, %v1342
        %v1510 = vsel %vm325, %v806, %v1344
        %v1511 = vsel %vm325, %v807, %v1346
        %v1512 = vsel %vm325, %v808, %v1348
        %v1513 = vsel %vm325, %v809, %v1350
        %v1514 = vsel %vm325, %v810, %v1352
        %v1515 = vsel %vm325, %v811, %v1354
        %v1516 = vsel %vm325, %v812, %v1356
        %v1517 = vpack.c.bf16 %v1390, %v1389
        %v1518 = vpack.c.bf16 %v1422, %v1421
        %v1519 = vpack.c.bf16 %v1454, %v1453
        %v1520 = vpack.c.bf16 %v1486, %v1485
        %v1521 = vpack.c.bf16 %v846, %v845
        %v1522 = vpack.c.bf16 %v1392, %v1391
        %v1523 = vpack.c.bf16 %v1424, %v1423
        %v1524 = vpack.c.bf16 %v1456, %v1455
        %v1525 = vpack.c.bf16 %v1488, %v1487
        %v1526 = vpack.c.bf16 %v848, %v847
        %v1527 = vpack.c.bf16 %v1394, %v1393
        %v1528 = vpack.c.bf16 %v1426, %v1425
        %v1529 = vpack.c.bf16 %v1458, %v1457
        %v1530 = vpack.c.bf16 %v1490, %v1489
        %v1531 = vpack.c.bf16 %v850, %v849
        %v1532 = vpack.c.bf16 %v1396, %v1395
        %v1533 = vpack.c.bf16 %v1428, %v1427
        %v1534 = vpack.c.bf16 %v1460, %v1459
        %v1535 = vpack.c.bf16 %v1492, %v1491
        %v1536 = vpack.c.bf16 %v852, %v851
        %v1537 = vpack.c.bf16 %v1398, %v1397
        %v1538 = vpack.c.bf16 %v1430, %v1429
        %v1539 = vpack.c.bf16 %v1462, %v1461
        %v1540 = vpack.c.bf16 %v1494, %v1493
        %v1541 = vpack.c.bf16 %v854, %v853
        %v1542 = vpack.c.bf16 %v1400, %v1399
        %v1543 = vpack.c.bf16 %v1432, %v1431
        %v1544 = vpack.c.bf16 %v1464, %v1463
        %v1545 = vpack.c.bf16 %v1496, %v1495
        %v1546 = vpack.c.bf16 %v856, %v855
        %v1547 = vpack.c.bf16 %v1402, %v1401
        %v1548 = vpack.c.bf16 %v1434, %v1433
        %v1549 = vpack.c.bf16 %v1466, %v1465
        %v1550 = vpack.c.bf16 %v1498, %v1497
        %v1551 = vpack.c.bf16 %v858, %v857
        %v1552 = vpack.c.bf16 %v1404, %v1403
        %v1553 = vpack.c.bf16 %v1436, %v1435
        %v1554 = vpack.c.bf16 %v1468, %v1467
        %v1555 = vpack.c.bf16 %v1500, %v1499
        %v1556 = vpack.c.bf16 %v860, %v859
        %v1557 = vpack.c.bf16 %v1406, %v1405
        %v1558 = vpack.c.bf16 %v1438, %v1437
        %v1559 = vpack.c.bf16 %v1470, %v1469
        %v1560 = vpack.c.bf16 %v1502, %v1501
        %v1561 = vpack.c.bf16 %v862, %v861
        %v1562 = vpack.c.bf16 %v1408, %v1407
        %v1563 = vpack.c.bf16 %v1440, %v1439
        %v1564 = vpack.c.bf16 %v1472, %v1471
        %v1565 = vpack.c.bf16 %v1504, %v1503
        %v1566 = vpack.c.bf16 %v864, %v863
        %v1567 = vpack.c.bf16 %v1410, %v1409
        %v1568 = vpack.c.bf16 %v1442, %v1441
        %v1569 = vpack.c.bf16 %v1474, %v1473
        %v1570 = vpack.c.bf16 %v1506, %v1505
        %v1571 = vpack.c.bf16 %v866, %v865
        %v1572 = vpack.c.bf16 %v1412, %v1411
        %v1573 = vpack.c.bf16 %v1444, %v1443
        %v1574 = vpack.c.bf16 %v1476, %v1475
        %v1575 = vpack.c.bf16 %v1508, %v1507
        %v1576 = vpack.c.bf16 %v868, %v867
        %v1577 = vpack.c.bf16 %v1414, %v1413
        %v1578 = vpack.c.bf16 %v1446, %v1445
        %v1579 = vpack.c.bf16 %v1478, %v1477
        %v1580 = vpack.c.bf16 %v1510, %v1509
        %v1581 = vpack.c.bf16 %v870, %v869
        %v1582 = vpack.c.bf16 %v1416, %v1415
        %v1583 = vpack.c.bf16 %v1448, %v1447
        %v1584 = vpack.c.bf16 %v1480, %v1479
        %v1585 = vpack.c.bf16 %v1512, %v1511
        %v1586 = vpack.c.bf16 %v872, %v871
        %v1587 = vpack.c.bf16 %v1418, %v1417
        %v1588 = vpack.c.bf16 %v1450, %v1449
        %v1589 = vpack.c.bf16 %v1482, %v1481
        %v1590 = vpack.c.bf16 %v1514, %v1513
        %v1591 = vpack.c.bf16 %v874, %v873
        %v1592 = vpack.c.bf16 %v1420, %v1419
        %v1593 = vpack.c.bf16 %v1452, %v1451
        %v1594 = vpack.c.bf16 %v1484, %v1483
        %v1595 = vpack.c.bf16 %v1516, %v1515
        %v1596 = vpack.c.bf16 %v876, %v875
        %v1597 = vld [vmem:[%s2] sm:$0xf]
        %v1598 = vld [vmem:[%s2 + $0x4] sm:$0xf]
        %v1599 = vld [vmem:[%s2 + $0x8] sm:$0xf]
        %v1600 = vld [vmem:[%s2 + $0xc] sm:$0xf]
        %v1601 = vld [vmem:[%s2 + $0x10] sm:$0xf]
        %v1602 = vld [vmem:[%s2 + $0x14] sm:$0xf]
        %v1603 = vld [vmem:[%s2 + $0x18] sm:$0xf]
        %v1604 = vld [vmem:[%s2 + $0x1c] sm:$0xf]
        %v1605 = vld [vmem:[%s2 + $0x20] sm:$0xf]
        %v1606 = vld [vmem:[%s2 + $0x24] sm:$0xf]
        %v1607 = vld [vmem:[%s2 + $0x28] sm:$0xf]
        %v1608 = vld [vmem:[%s2 + $0x2c] sm:$0xf]
        %v1609 = vld [vmem:[%s2 + $0x30] sm:$0xf]
        %v1610 = vld [vmem:[%s2 + $0x34] sm:$0xf]
        %v1611 = vld [vmem:[%s2 + $0x38] sm:$0xf]
        %v1612 = vld [vmem:[%s2 + $0x3c] sm:$0xf]
        %v1613 = vld [vmem:[%s2 + $0x40] sm:$0xf]
        %v1614 = vld [vmem:[%s2 + $0x44] sm:$0xf]
        %v1615 = vld [vmem:[%s2 + $0x48] sm:$0xf]
        %v1616 = vld [vmem:[%s2 + $0x4c] sm:$0xf]
        %v1617 = vld [vmem:[%s2 + $0x50] sm:$0xf]
        %v1618 = vld [vmem:[%s2 + $0x54] sm:$0xf]
        %v1619 = vld [vmem:[%s2 + $0x58] sm:$0xf]
        %v1620 = vld [vmem:[%s2 + $0x5c] sm:$0xf]
        %v1621 = vld [vmem:[%s2 + $0x60] sm:$0xf]
        %v1622 = vld [vmem:[%s2 + $0x64] sm:$0xf]
        %v1623 = vld [vmem:[%s2 + $0x68] sm:$0xf]
        %v1624 = vld [vmem:[%s2 + $0x6c] sm:$0xf]
        %v1625 = vld [vmem:[%s2 + $0x70] sm:$0xf]
        %v1626 = vld [vmem:[%s2 + $0x74] sm:$0xf]
        %v1627 = vld [vmem:[%s2 + $0x78] sm:$0xf]
        %v1628 = vld [vmem:[%s2 + $0x7c] sm:$0xf]
        %v1629 = vld [vmem:[%s2 + $0x80] sm:$0xf]
        %v1630 = vld [vmem:[%s2 + $0x84] sm:$0xf]
        %v1631 = vld [vmem:[%s2 + $0x88] sm:$0xf]
        %v1632 = vld [vmem:[%s2 + $0x8c] sm:$0xf]
        %v1633 = vld [vmem:[%s2 + $0x90] sm:$0xf]
        %v1634 = vld [vmem:[%s2 + $0x94] sm:$0xf]
        %v1635 = vld [vmem:[%s2 + $0x98] sm:$0xf]
        %v1636 = vld [vmem:[%s2 + $0x9c] sm:$0xf]
        %v1637 = vld [vmem:[%s2 + $0xa0] sm:$0xf]
        %v1638 = vld [vmem:[%s2 + $0xa4] sm:$0xf]
        %v1639 = vld [vmem:[%s2 + $0xa8] sm:$0xf]
        %v1640 = vld [vmem:[%s2 + $0xac] sm:$0xf]
        %v1641 = vld [vmem:[%s2 + $0xb0] sm:$0xf]
        %v1642 = vld [vmem:[%s2 + $0xb4] sm:$0xf]
        %v1643 = vld [vmem:[%s2 + $0xb8] sm:$0xf]
        %v1644 = vld [vmem:[%s2 + $0xbc] sm:$0xf]
        %v1645 = vld [vmem:[%s2 + $0xc0] sm:$0xf]
        %v1646 = vld [vmem:[%s2 + $0xc4] sm:$0xf]
        %v1647 = vld [vmem:[%s2 + $0xc8] sm:$0xf]
        %v1648 = vld [vmem:[%s2 + $0xcc] sm:$0xf]
        %v1649 = vld [vmem:[%s2 + $0xd0] sm:$0xf]
        %v1650 = vld [vmem:[%s2 + $0xd4] sm:$0xf]
        %v1651 = vld [vmem:[%s2 + $0xd8] sm:$0xf]
        %v1652 = vld [vmem:[%s2 + $0xdc] sm:$0xf]
        %v1653 = vld [vmem:[%s2 + $0xe0] sm:$0xf]
        %v1654 = vld [vmem:[%s2 + $0xe4] sm:$0xf]
        %v1655 = vld [vmem:[%s2 + $0xe8] sm:$0xf]
        %v1656 = vld [vmem:[%s2 + $0xec] sm:$0xf]
        %v1657 = vld [vmem:[%s2 + $0xf0] sm:$0xf]
        %v1658 = vld [vmem:[%s2 + $0xf4] sm:$0xf]
        %v1659 = vld [vmem:[%s2 + $0xf8] sm:$0xf]
        %v1660 = vld [vmem:[%s2 + $0xfc] sm:$0xf]
        %v1661 = vld [vmem:[%s2 + $0x100] sm:$0xf]
        %v1662 = vld [vmem:[%s2 + $0x104] sm:$0xf]
        %v1663 = vld [vmem:[%s2 + $0x108] sm:$0xf]
        %v1664 = vld [vmem:[%s2 + $0x10c] sm:$0xf]
        %v1665 = vld [vmem:[%s2 + $0x110] sm:$0xf]
        %v1666 = vld [vmem:[%s2 + $0x114] sm:$0xf]
        %v1667 = vld [vmem:[%s2 + $0x118] sm:$0xf]
        %v1668 = vld [vmem:[%s2 + $0x11c] sm:$0xf]
        %v1669 = vld [vmem:[%s3] sm:$0x1]
        %v1671 = vperm.slane %v1669, 0
        %v1745 = vunpack.c.l.b16 %v1597
        %v1746 = vunpack.c.l.b16 %v1598
        %v1747 = vunpack.c.l.b16 %v1599
        %v1748 = vunpack.c.l.b16 %v1600
        %v1749 = vunpack.c.l.b16 %v1601
        %v1750 = vunpack.c.l.b16 %v1602
        %v1751 = vunpack.c.l.b16 %v1603
        %v1752 = vunpack.c.l.b16 %v1604
        %v1753 = vunpack.c.l.b16 %v1605
        %v1754 = vunpack.c.l.b16 %v1606
        %v1755 = vunpack.c.l.b16 %v1607
        %v1756 = vunpack.c.l.b16 %v1608
        %v1757 = vunpack.c.l.b16 %v1609
        %v1758 = vunpack.c.l.b16 %v1610
        %v1759 = vunpack.c.l.b16 %v1611
        %v1760 = vunpack.c.l.b16 %v1612
        %v1761 = vunpack.c.l.b16 %v1613
        %v1762 = vunpack.c.l.b16 %v1614
        %v1763 = vunpack.c.l.b16 %v1615
        %v1764 = vunpack.c.l.b16 %v1616
        %v1765 = vunpack.c.l.b16 %v1617
        %v1766 = vunpack.c.l.b16 %v1618
        %v1767 = vunpack.c.l.b16 %v1619
        %v1768 = vunpack.c.l.b16 %v1620
        %v1769 = vunpack.c.l.b16 %v1621
        %v1770 = vunpack.c.l.b16 %v1622
        %v1771 = vunpack.c.l.b16 %v1623
        %v1772 = vunpack.c.l.b16 %v1624
        %v1773 = vunpack.c.l.b16 %v1625
        %v1774 = vunpack.c.l.b16 %v1626
        %v1775 = vunpack.c.l.b16 %v1627
        %v1776 = vunpack.c.l.b16 %v1628
        %v1777 = vunpack.c.l.b16 %v1629
        %v1778 = vunpack.c.l.b16 %v1630
        %v1779 = vunpack.c.l.b16 %v1631
        %v1780 = vunpack.c.l.b16 %v1632
        %v1781 = vunpack.c.l.b16 %v1633
        %v1782 = vunpack.c.l.b16 %v1634
        %v1783 = vunpack.c.l.b16 %v1635
        %v1784 = vunpack.c.l.b16 %v1636
        %v1785 = vunpack.c.l.b16 %v1637
        %v1786 = vunpack.c.l.b16 %v1638
        %v1787 = vunpack.c.l.b16 %v1639
        %v1788 = vunpack.c.l.b16 %v1640
        %v1789 = vunpack.c.l.b16 %v1641
        %v1790 = vunpack.c.l.b16 %v1642
        %v1791 = vunpack.c.l.b16 %v1643
        %v1792 = vunpack.c.l.b16 %v1644
        %v1793 = vunpack.c.l.b16 %v1645
        %v1794 = vunpack.c.l.b16 %v1646
        %v1795 = vunpack.c.l.b16 %v1647
        %v1796 = vunpack.c.l.b16 %v1648
        %v1797 = vunpack.c.l.b16 %v1649
        %v1798 = vunpack.c.l.b16 %v1650
        %v1799 = vunpack.c.l.b16 %v1651
        %v1800 = vunpack.c.l.b16 %v1652
        %v1801 = vunpack.c.l.b16 %v1653
        %v1802 = vunpack.c.l.b16 %v1654
        %v1803 = vunpack.c.l.b16 %v1655
        %v1804 = vunpack.c.l.b16 %v1656
        %v1805 = vunpack.c.l.b16 %v1657
        %v1806 = vunpack.c.l.b16 %v1658
        %v1807 = vunpack.c.l.b16 %v1659
        %v1808 = vunpack.c.l.b16 %v1660
        %v1809 = vunpack.c.l.b16 %v1661
        %v1810 = vunpack.c.l.b16 %v1662
        %v1811 = vunpack.c.l.b16 %v1663
        %v1812 = vunpack.c.l.b16 %v1664
        %v1813 = vunpack.c.l.b16 %v1665
        %v1814 = vunpack.c.l.b16 %v1666
        %v1815 = vunpack.c.l.b16 %v1667
        %v1816 = vunpack.c.l.b16 %v1668
        %v1817 = vpack.c.b16 %v1746, %v1745
        %v1818 = vpack.c.b16 %v1748, %v1747
        %v1819 = vpack.c.b16 %v1750, %v1749
        %v1820 = vpack.c.b16 %v1752, %v1751
        %v1821 = vpack.c.b16 %v1754, %v1753
        %v1822 = vpack.c.b16 %v1756, %v1755
        %v1823 = vpack.c.b16 %v1758, %v1757
        %v1824 = vpack.c.b16 %v1760, %v1759
        %v1825 = vpack.c.b16 %v1762, %v1761
        %v1826 = vpack.c.b16 %v1764, %v1763
        %v1827 = vpack.c.b16 %v1766, %v1765
        %v1828 = vpack.c.b16 %v1768, %v1767
        %v1829 = vpack.c.b16 %v1770, %v1769
        %v1830 = vpack.c.b16 %v1772, %v1771
        %v1831 = vpack.c.b16 %v1774, %v1773
        %v1832 = vpack.c.b16 %v1776, %v1775
        %v1833 = vpack.c.b16 %v1778, %v1777
        %v1834 = vpack.c.b16 %v1780, %v1779
        %v1835 = vpack.c.b16 %v1782, %v1781
        %v1836 = vpack.c.b16 %v1784, %v1783
        %v1837 = vpack.c.b16 %v1786, %v1785
        %v1838 = vpack.c.b16 %v1788, %v1787
        %v1839 = vpack.c.b16 %v1790, %v1789
        %v1840 = vpack.c.b16 %v1792, %v1791
        %v1841 = vpack.c.b16 %v1794, %v1793
        %v1842 = vpack.c.b16 %v1796, %v1795
        %v1843 = vpack.c.b16 %v1798, %v1797
        %v1844 = vpack.c.b16 %v1800, %v1799
        %v1845 = vpack.c.b16 %v1802, %v1801
        %v1846 = vpack.c.b16 %v1804, %v1803
        %v1847 = vpack.c.b16 %v1806, %v1805
        %v1848 = vpack.c.b16 %v1808, %v1807
        %v1849 = vpack.c.b16 %v1810, %v1809
        %v1850 = vpack.c.b16 %v1812, %v1811
        %v1851 = vpack.c.b16 %v1814, %v1813
        %v1852 = vpack.c.b16 %v1816, %v1815
        %v1890 = vsel %vm325, %v1521, 0
        %v1893 = vsel %vm325, %v1526, 0
        %v1896 = vsel %vm325, %v1531, 0
        %v1899 = vsel %vm325, %v1536, 0
        %v1902 = vsel %vm325, %v1541, 0
        %v1905 = vsel %vm325, %v1546, 0
        %v1908 = vsel %vm325, %v1551, 0
        %v1911 = vsel %vm325, %v1556, 0
        %v1914 = vsel %vm325, %v1561, 0
        %v1917 = vsel %vm325, %v1566, 0
        %v1920 = vsel %vm325, %v1571, 0
        %v1923 = vsel %vm325, %v1576, 0
        %v1926 = vsel %vm325, %v1581, 0
        %v1929 = vsel %vm325, %v1586, 0
        %v1932 = vsel %vm325, %v1591, 0
        %v1935 = vsel %vm325, %v1596, 0
        %1937 = vmatpush.bf16.msra.mxu0 %v1824
        %1938 = vmatpush.bf16.msra.mxu0 %v1823
        %1939 = vmatpush.bf16.msra.mxu0 %v1822
        %1940 = vmatpush.bf16.msra.mxu0 %v1821
        %1941 = vmatpush.bf16.msra.mxu0 %v1820
        %1942 = vmatpush.bf16.msra.mxu0 %v1819
        %1943 = vmatpush.bf16.msra.mxu0 %v1818
        %1944 = vmatpush.bf16.msra.mxu0 %v1817
        %1945 = vmatmul.bf16.gmra.mxu0 %v1517
        %v1946 = vpop.f32.mrf.mxu0
        %v1947 = vadd.f32 %v1671, %v1946
        %v1948 = vpop.f32.mrf.mxu0
        %v1949 = vadd.f32 %v1671, %v1948
        %1950 = vmatmul.bf16.gmra.mxu0 %v1522
        %v1951 = vpop.f32.mrf.mxu0
        %v1952 = vadd.f32 %v1671, %v1951
        %v1953 = vpop.f32.mrf.mxu0
        %v1954 = vadd.f32 %v1671, %v1953
        %1955 = vmatmul.bf16.gmra.mxu0 %v1527
        %v1956 = vpop.f32.mrf.mxu0
        %v1957 = vadd.f32 %v1671, %v1956
        %v1958 = vpop.f32.mrf.mxu0
        %v1959 = vadd.f32 %v1671, %v1958
        %1960 = vmatmul.bf16.gmra.mxu0 %v1532
        %v1961 = vpop.f32.mrf.mxu0
        %v1962 = vadd.f32 %v1671, %v1961
        %v1963 = vpop.f32.mrf.mxu0
        %v1964 = vadd.f32 %v1671, %v1963
        %1965 = vmatmul.bf16.gmra.mxu0 %v1537
        %v1966 = vpop.f32.mrf.mxu0
        %v1967 = vadd.f32 %v1671, %v1966
        %v1968 = vpop.f32.mrf.mxu0
        %v1969 = vadd.f32 %v1671, %v1968
        %1970 = vmatmul.bf16.gmra.mxu0 %v1542
        %v1971 = vpop.f32.mrf.mxu0
        %v1972 = vadd.f32 %v1671, %v1971
        %v1973 = vpop.f32.mrf.mxu0
        %v1974 = vadd.f32 %v1671, %v1973
        %1975 = vmatmul.bf16.gmra.mxu0 %v1547
        %v1976 = vpop.f32.mrf.mxu0
        %v1977 = vadd.f32 %v1671, %v1976
        %v1978 = vpop.f32.mrf.mxu0
        %v1979 = vadd.f32 %v1671, %v1978
        %1980 = vmatmul.bf16.gmra.mxu0 %v1552
        %v1981 = vpop.f32.mrf.mxu0
        %v1982 = vadd.f32 %v1671, %v1981
        %v1983 = vpop.f32.mrf.mxu0
        %v1984 = vadd.f32 %v1671, %v1983
        %1985 = vmatmul.bf16.gmra.mxu0 %v1557
        %v1986 = vpop.f32.mrf.mxu0
        %v1987 = vadd.f32 %v1671, %v1986
        %v1988 = vpop.f32.mrf.mxu0
        %v1989 = vadd.f32 %v1671, %v1988
        %1990 = vmatmul.bf16.gmra.mxu0 %v1562
        %v1991 = vpop.f32.mrf.mxu0
        %v1992 = vadd.f32 %v1671, %v1991
        %v1993 = vpop.f32.mrf.mxu0
        %v1994 = vadd.f32 %v1671, %v1993
        %1995 = vmatmul.bf16.gmra.mxu0 %v1567
        %v1996 = vpop.f32.mrf.mxu0
        %v1997 = vadd.f32 %v1671, %v1996
        %v1998 = vpop.f32.mrf.mxu0
        %v1999 = vadd.f32 %v1671, %v1998
        %2000 = vmatmul.bf16.gmra.mxu0 %v1572
        %v2001 = vpop.f32.mrf.mxu0
        %v2002 = vadd.f32 %v1671, %v2001
        %v2003 = vpop.f32.mrf.mxu0
        %v2004 = vadd.f32 %v1671, %v2003
        %2005 = vmatmul.bf16.gmra.mxu0 %v1577
        %v2006 = vpop.f32.mrf.mxu0
        %v2007 = vadd.f32 %v1671, %v2006
        %v2008 = vpop.f32.mrf.mxu0
        %v2009 = vadd.f32 %v1671, %v2008
        %2010 = vmatmul.bf16.gmra.mxu0 %v1582
        %v2011 = vpop.f32.mrf.mxu0
        %v2012 = vadd.f32 %v1671, %v2011
        %v2013 = vpop.f32.mrf.mxu0
        %v2014 = vadd.f32 %v1671, %v2013
        %2015 = vmatmul.bf16.gmra.mxu0 %v1587
        %v2016 = vpop.f32.mrf.mxu0
        %v2017 = vadd.f32 %v1671, %v2016
        %v2018 = vpop.f32.mrf.mxu0
        %v2019 = vadd.f32 %v1671, %v2018
        %2020 = vmatmul.bf16.gmra.mxu0 %v1592
        %v2021 = vpop.f32.mrf.mxu0
        %v2022 = vadd.f32 %v1671, %v2021
        %v2023 = vpop.f32.mrf.mxu0
        %v2024 = vadd.f32 %v1671, %v2023
        %2025 = vdwg.mxu0
        %2026 = vmatpush.bf16.msra.mxu0 %v1832
        %2027 = vmatpush.bf16.msra.mxu0 %v1831
        %2028 = vmatpush.bf16.msra.mxu0 %v1830
        %2029 = vmatpush.bf16.msra.mxu0 %v1829
        %2030 = vmatpush.bf16.msra.mxu0 %v1828
        %2031 = vmatpush.bf16.msra.mxu0 %v1827
        %2032 = vmatpush.bf16.msra.mxu0 %v1826
        %2033 = vmatpush.bf16.msra.mxu0 %v1825
        %2034 = vmatmul.bf16.gmra.mxu0 %v1518
        %v2035 = vpop.f32.mrf.mxu0
        %v2036 = vadd.f32 %v1947, %v2035
        %v2037 = vpop.f32.mrf.mxu0
        %v2038 = vadd.f32 %v1949, %v2037
        %2039 = vmatmul.bf16.gmra.mxu0 %v1523
        %v2040 = vpop.f32.mrf.mxu0
        %v2041 = vadd.f32 %v1952, %v2040
        %v2042 = vpop.f32.mrf.mxu0
        %v2043 = vadd.f32 %v1954, %v2042
        %2044 = vmatmul.bf16.gmra.mxu0 %v1528
        %v2045 = vpop.f32.mrf.mxu0
        %v2046 = vadd.f32 %v1957, %v2045
        %v2047 = vpop.f32.mrf.mxu0
        %v2048 = vadd.f32 %v1959, %v2047
        %2049 = vmatmul.bf16.gmra.mxu0 %v1533
        %v2050 = vpop.f32.mrf.mxu0
        %v2051 = vadd.f32 %v1962, %v2050
        %v2052 = vpop.f32.mrf.mxu0
        %v2053 = vadd.f32 %v1964, %v2052
        %2054 = vmatmul.bf16.gmra.mxu0 %v1538
        %v2055 = vpop.f32.mrf.mxu0
        %v2056 = vadd.f32 %v1967, %v2055
        %v2057 = vpop.f32.mrf.mxu0
        %v2058 = vadd.f32 %v1969, %v2057
        %2059 = vmatmul.bf16.gmra.mxu0 %v1543
        %v2060 = vpop.f32.mrf.mxu0
        %v2061 = vadd.f32 %v1972, %v2060
        %v2062 = vpop.f32.mrf.mxu0
        %v2063 = vadd.f32 %v1974, %v2062
        %2064 = vmatmul.bf16.gmra.mxu0 %v1548
        %v2065 = vpop.f32.mrf.mxu0
        %v2066 = vadd.f32 %v1977, %v2065
        %v2067 = vpop.f32.mrf.mxu0
        %v2068 = vadd.f32 %v1979, %v2067
        %2069 = vmatmul.bf16.gmra.mxu0 %v1553
        %v2070 = vpop.f32.mrf.mxu0
        %v2071 = vadd.f32 %v1982, %v2070
        %v2072 = vpop.f32.mrf.mxu0
        %v2073 = vadd.f32 %v1984, %v2072
        %2074 = vmatmul.bf16.gmra.mxu0 %v1558
        %v2075 = vpop.f32.mrf.mxu0
        %v2076 = vadd.f32 %v1987, %v2075
        %v2077 = vpop.f32.mrf.mxu0
        %v2078 = vadd.f32 %v1989, %v2077
        %2079 = vmatmul.bf16.gmra.mxu0 %v1563
        %v2080 = vpop.f32.mrf.mxu0
        %v2081 = vadd.f32 %v1992, %v2080
        %v2082 = vpop.f32.mrf.mxu0
        %v2083 = vadd.f32 %v1994, %v2082
        %2084 = vmatmul.bf16.gmra.mxu0 %v1568
        %v2085 = vpop.f32.mrf.mxu0
        %v2086 = vadd.f32 %v1997, %v2085
        %v2087 = vpop.f32.mrf.mxu0
        %v2088 = vadd.f32 %v1999, %v2087
        %2089 = vmatmul.bf16.gmra.mxu0 %v1573
        %v2090 = vpop.f32.mrf.mxu0
        %v2091 = vadd.f32 %v2002, %v2090
        %v2092 = vpop.f32.mrf.mxu0
        %v2093 = vadd.f32 %v2004, %v2092
        %2094 = vmatmul.bf16.gmra.mxu0 %v1578
        %v2095 = vpop.f32.mrf.mxu0
        %v2096 = vadd.f32 %v2007, %v2095
        %v2097 = vpop.f32.mrf.mxu0
        %v2098 = vadd.f32 %v2009, %v2097
        %2099 = vmatmul.bf16.gmra.mxu0 %v1583
        %v2100 = vpop.f32.mrf.mxu0
        %v2101 = vadd.f32 %v2012, %v2100
        %v2102 = vpop.f32.mrf.mxu0
        %v2103 = vadd.f32 %v2014, %v2102
        %2104 = vmatmul.bf16.gmra.mxu0 %v1588
        %v2105 = vpop.f32.mrf.mxu0
        %v2106 = vadd.f32 %v2017, %v2105
        %v2107 = vpop.f32.mrf.mxu0
        %v2108 = vadd.f32 %v2019, %v2107
        %2109 = vmatmul.bf16.gmra.mxu0 %v1593
        %v2110 = vpop.f32.mrf.mxu0
        %v2111 = vadd.f32 %v2022, %v2110
        %v2112 = vpop.f32.mrf.mxu0
        %v2113 = vadd.f32 %v2024, %v2112
        %2114 = vdwg.mxu0
        %2115 = vmatpush.bf16.msra.mxu0 %v1840
        %2116 = vmatpush.bf16.msra.mxu0 %v1839
        %2117 = vmatpush.bf16.msra.mxu0 %v1838
        %2118 = vmatpush.bf16.msra.mxu0 %v1837
        %2119 = vmatpush.bf16.msra.mxu0 %v1836
        %2120 = vmatpush.bf16.msra.mxu0 %v1835
        %2121 = vmatpush.bf16.msra.mxu0 %v1834
        %2122 = vmatpush.bf16.msra.mxu0 %v1833
        %2123 = vmatmul.bf16.gmra.mxu0 %v1519
        %v2124 = vpop.f32.mrf.mxu0
        %v2125 = vadd.f32 %v2036, %v2124
        %v2126 = vpop.f32.mrf.mxu0
        %v2127 = vadd.f32 %v2038, %v2126
        %2128 = vmatmul.bf16.gmra.mxu0 %v1524
        %v2129 = vpop.f32.mrf.mxu0
        %v2130 = vadd.f32 %v2041, %v2129
        %v2131 = vpop.f32.mrf.mxu0
        %v2132 = vadd.f32 %v2043, %v2131
        %2133 = vmatmul.bf16.gmra.mxu0 %v1529
        %v2134 = vpop.f32.mrf.mxu0
        %v2135 = vadd.f32 %v2046, %v2134
        %v2136 = vpop.f32.mrf.mxu0
        %v2137 = vadd.f32 %v2048, %v2136
        %2138 = vmatmul.bf16.gmra.mxu0 %v1534
        %v2139 = vpop.f32.mrf.mxu0
        %v2140 = vadd.f32 %v2051, %v2139
        %v2141 = vpop.f32.mrf.mxu0
        %v2142 = vadd.f32 %v2053, %v2141
        %2143 = vmatmul.bf16.gmra.mxu0 %v1539
        %v2144 = vpop.f32.mrf.mxu0
        %v2145 = vadd.f32 %v2056, %v2144
        %v2146 = vpop.f32.mrf.mxu0
        %v2147 = vadd.f32 %v2058, %v2146
        %2148 = vmatmul.bf16.gmra.mxu0 %v1544
        %v2149 = vpop.f32.mrf.mxu0
        %v2150 = vadd.f32 %v2061, %v2149
        %v2151 = vpop.f32.mrf.mxu0
        %v2152 = vadd.f32 %v2063, %v2151
        %2153 = vmatmul.bf16.gmra.mxu0 %v1549
        %v2154 = vpop.f32.mrf.mxu0
        %v2155 = vadd.f32 %v2066, %v2154
        %v2156 = vpop.f32.mrf.mxu0
        %v2157 = vadd.f32 %v2068, %v2156
        %2158 = vmatmul.bf16.gmra.mxu0 %v1554
        %v2159 = vpop.f32.mrf.mxu0
        %v2160 = vadd.f32 %v2071, %v2159
        %v2161 = vpop.f32.mrf.mxu0
        %v2162 = vadd.f32 %v2073, %v2161
        %2163 = vmatmul.bf16.gmra.mxu0 %v1559
        %v2164 = vpop.f32.mrf.mxu0
        %v2165 = vadd.f32 %v2076, %v2164
        %v2166 = vpop.f32.mrf.mxu0
        %v2167 = vadd.f32 %v2078, %v2166
        %2168 = vmatmul.bf16.gmra.mxu0 %v1564
        %v2169 = vpop.f32.mrf.mxu0
        %v2170 = vadd.f32 %v2081, %v2169
        %v2171 = vpop.f32.mrf.mxu0
        %v2172 = vadd.f32 %v2083, %v2171
        %2173 = vmatmul.bf16.gmra.mxu0 %v1569
        %v2174 = vpop.f32.mrf.mxu0
        %v2175 = vadd.f32 %v2086, %v2174
        %v2176 = vpop.f32.mrf.mxu0
        %v2177 = vadd.f32 %v2088, %v2176
        %2178 = vmatmul.bf16.gmra.mxu0 %v1574
        %v2179 = vpop.f32.mrf.mxu0
        %v2180 = vadd.f32 %v2091, %v2179
        %v2181 = vpop.f32.mrf.mxu0
        %v2182 = vadd.f32 %v2093, %v2181
        %2183 = vmatmul.bf16.gmra.mxu0 %v1579
        %v2184 = vpop.f32.mrf.mxu0
        %v2185 = vadd.f32 %v2096, %v2184
        %v2186 = vpop.f32.mrf.mxu0
        %v2187 = vadd.f32 %v2098, %v2186
        %2188 = vmatmul.bf16.gmra.mxu0 %v1584
        %v2189 = vpop.f32.mrf.mxu0
        %v2190 = vadd.f32 %v2101, %v2189
        %v2191 = vpop.f32.mrf.mxu0
        %v2192 = vadd.f32 %v2103, %v2191
        %2193 = vmatmul.bf16.gmra.mxu0 %v1589
        %v2194 = vpop.f32.mrf.mxu0
        %v2195 = vadd.f32 %v2106, %v2194
        %v2196 = vpop.f32.mrf.mxu0
        %v2197 = vadd.f32 %v2108, %v2196
        %2198 = vmatmul.bf16.gmra.mxu0 %v1594
        %v2199 = vpop.f32.mrf.mxu0
        %v2200 = vadd.f32 %v2111, %v2199
        %v2201 = vpop.f32.mrf.mxu0
        %v2202 = vadd.f32 %v2113, %v2201
        %2203 = vdwg.mxu0
        %2204 = vmatpush.bf16.msra.mxu0 %v1848
        %2205 = vmatpush.bf16.msra.mxu0 %v1847
        %2206 = vmatpush.bf16.msra.mxu0 %v1846
        %2207 = vmatpush.bf16.msra.mxu0 %v1845
        %2208 = vmatpush.bf16.msra.mxu0 %v1844
        %2209 = vmatpush.bf16.msra.mxu0 %v1843
        %2210 = vmatpush.bf16.msra.mxu0 %v1842
        %2211 = vmatpush.bf16.msra.mxu0 %v1841
        %2212 = vmatmul.bf16.gmra.mxu0 %v1520
        %v2213 = vpop.f32.mrf.mxu0
        %v2214 = vadd.f32 %v2125, %v2213
        %v2215 = vpop.f32.mrf.mxu0
        %v2216 = vadd.f32 %v2127, %v2215
        %2217 = vmatmul.bf16.gmra.mxu0 %v1525
        %v2218 = vpop.f32.mrf.mxu0
        %v2219 = vadd.f32 %v2130, %v2218
        %v2220 = vpop.f32.mrf.mxu0
        %v2221 = vadd.f32 %v2132, %v2220
        %2222 = vmatmul.bf16.gmra.mxu0 %v1530
        %v2223 = vpop.f32.mrf.mxu0
        %v2224 = vadd.f32 %v2135, %v2223
        %v2225 = vpop.f32.mrf.mxu0
        %v2226 = vadd.f32 %v2137, %v2225
        %2227 = vmatmul.bf16.gmra.mxu0 %v1535
        %v2228 = vpop.f32.mrf.mxu0
        %v2229 = vadd.f32 %v2140, %v2228
        %v2230 = vpop.f32.mrf.mxu0
        %v2231 = vadd.f32 %v2142, %v2230
        %2232 = vmatmul.bf16.gmra.mxu0 %v1540
        %v2233 = vpop.f32.mrf.mxu0
        %v2234 = vadd.f32 %v2145, %v2233
        %v2235 = vpop.f32.mrf.mxu0
        %v2236 = vadd.f32 %v2147, %v2235
        %2237 = vmatmul.bf16.gmra.mxu0 %v1545
        %v2238 = vpop.f32.mrf.mxu0
        %v2239 = vadd.f32 %v2150, %v2238
        %v2240 = vpop.f32.mrf.mxu0
        %v2241 = vadd.f32 %v2152, %v2240
        %2242 = vmatmul.bf16.gmra.mxu0 %v1550
        %v2243 = vpop.f32.mrf.mxu0
        %v2244 = vadd.f32 %v2155, %v2243
        %v2245 = vpop.f32.mrf.mxu0
        %v2246 = vadd.f32 %v2157, %v2245
        %2247 = vmatmul.bf16.gmra.mxu0 %v1555
        %v2248 = vpop.f32.mrf.mxu0
        %v2249 = vadd.f32 %v2160, %v2248
        %v2250 = vpop.f32.mrf.mxu0
        %v2251 = vadd.f32 %v2162, %v2250
        %2252 = vmatmul.bf16.gmra.mxu0 %v1560
        %v2253 = vpop.f32.mrf.mxu0
        %v2254 = vadd.f32 %v2165, %v2253
        %v2255 = vpop.f32.mrf.mxu0
        %v2256 = vadd.f32 %v2167, %v2255
        %2257 = vmatmul.bf16.gmra.mxu0 %v1565
        %v2258 = vpop.f32.mrf.mxu0
        %v2259 = vadd.f32 %v2170, %v2258
        %v2260 = vpop.f32.mrf.mxu0
        %v2261 = vadd.f32 %v2172, %v2260
        %2262 = vmatmul.bf16.gmra.mxu0 %v1570
        %v2263 = vpop.f32.mrf.mxu0
        %v2264 = vadd.f32 %v2175, %v2263
        %v2265 = vpop.f32.mrf.mxu0
        %v2266 = vadd.f32 %v2177, %v2265
        %2267 = vmatmul.bf16.gmra.mxu0 %v1575
        %v2268 = vpop.f32.mrf.mxu0
        %v2269 = vadd.f32 %v2180, %v2268
        %v2270 = vpop.f32.mrf.mxu0
        %v2271 = vadd.f32 %v2182, %v2270
        %2272 = vmatmul.bf16.gmra.mxu0 %v1580
        %v2273 = vpop.f32.mrf.mxu0
        %v2274 = vadd.f32 %v2185, %v2273
        %v2275 = vpop.f32.mrf.mxu0
        %v2276 = vadd.f32 %v2187, %v2275
        %2277 = vmatmul.bf16.gmra.mxu0 %v1585
        %v2278 = vpop.f32.mrf.mxu0
        %v2279 = vadd.f32 %v2190, %v2278
        %v2280 = vpop.f32.mrf.mxu0
        %v2281 = vadd.f32 %v2192, %v2280
        %2282 = vmatmul.bf16.gmra.mxu0 %v1590
        %v2283 = vpop.f32.mrf.mxu0
        %v2284 = vadd.f32 %v2195, %v2283
        %v2285 = vpop.f32.mrf.mxu0
        %v2286 = vadd.f32 %v2197, %v2285
        %2287 = vmatmul.bf16.gmra.mxu0 %v1595
        %v2288 = vpop.f32.mrf.mxu0
        %v2289 = vadd.f32 %v2200, %v2288
        %v2290 = vpop.f32.mrf.mxu0
        %v2291 = vadd.f32 %v2202, %v2290
        %2292 = vdwg.mxu0
        %2293 = vmatpush.bf16.msra.mxu0 0
        %2294 = vmatpush.bf16.msra.mxu0 0
        %2295 = vmatpush.bf16.msra.mxu0 0
        %2296 = vmatpush.bf16.msra.mxu0 0
        %2297 = vmatpush.bf16.msra.mxu0 %v1852
        %2298 = vmatpush.bf16.msra.mxu0 %v1851
        %2299 = vmatpush.bf16.msra.mxu0 %v1850
        %2300 = vmatpush.bf16.msra.mxu0 %v1849
        %2301 = vmatmul.bf16.gmra.mxu0 %v1890
        %v2302 = vpop.f32.mrf.mxu0
        %v2303 = vadd.f32 %v2214, %v2302
        %v2304 = vpop.f32.mrf.mxu0
        %v2305 = vadd.f32 %v2216, %v2304
        %2306 = vmatmul.bf16.gmra.mxu0 %v1893
        %v2307 = vpop.f32.mrf.mxu0
        %v2308 = vadd.f32 %v2219, %v2307
        %v2309 = vpop.f32.mrf.mxu0
        %v2310 = vadd.f32 %v2221, %v2309
        %2311 = vmatmul.bf16.gmra.mxu0 %v1896
        %v2312 = vpop.f32.mrf.mxu0
        %v2313 = vadd.f32 %v2224, %v2312
        %v2314 = vpop.f32.mrf.mxu0
        %v2315 = vadd.f32 %v2226, %v2314
        %2316 = vmatmul.bf16.gmra.mxu0 %v1899
        %v2317 = vpop.f32.mrf.mxu0
        %v2318 = vadd.f32 %v2229, %v2317
        %v2319 = vpop.f32.mrf.mxu0
        %v2320 = vadd.f32 %v2231, %v2319
        %2321 = vmatmul.bf16.gmra.mxu0 %v1902
        %v2322 = vpop.f32.mrf.mxu0
        %v2323 = vadd.f32 %v2234, %v2322
        %v2324 = vpop.f32.mrf.mxu0
        %v2325 = vadd.f32 %v2236, %v2324
        %2326 = vmatmul.bf16.gmra.mxu0 %v1905
        %v2327 = vpop.f32.mrf.mxu0
        %v2328 = vadd.f32 %v2239, %v2327
        %v2329 = vpop.f32.mrf.mxu0
        %v2330 = vadd.f32 %v2241, %v2329
        %2331 = vmatmul.bf16.gmra.mxu0 %v1908
        %v2332 = vpop.f32.mrf.mxu0
        %v2333 = vadd.f32 %v2244, %v2332
        %v2334 = vpop.f32.mrf.mxu0
        %v2335 = vadd.f32 %v2246, %v2334
        %2336 = vmatmul.bf16.gmra.mxu0 %v1911
        %v2337 = vpop.f32.mrf.mxu0
        %v2338 = vadd.f32 %v2249, %v2337
        %v2339 = vpop.f32.mrf.mxu0
        %v2340 = vadd.f32 %v2251, %v2339
        %2341 = vmatmul.bf16.gmra.mxu0 %v1914
        %v2342 = vpop.f32.mrf.mxu0
        %v2343 = vadd.f32 %v2254, %v2342
        %v2344 = vpop.f32.mrf.mxu0
        %v2345 = vadd.f32 %v2256, %v2344
        %2346 = vmatmul.bf16.gmra.mxu0 %v1917
        %v2347 = vpop.f32.mrf.mxu0
        %v2348 = vadd.f32 %v2259, %v2347
        %v2349 = vpop.f32.mrf.mxu0
        %v2350 = vadd.f32 %v2261, %v2349
        %2351 = vmatmul.bf16.gmra.mxu0 %v1920
        %v2352 = vpop.f32.mrf.mxu0
        %v2353 = vadd.f32 %v2264, %v2352
        %v2354 = vpop.f32.mrf.mxu0
        %v2355 = vadd.f32 %v2266, %v2354
        %2356 = vmatmul.bf16.gmra.mxu0 %v1923
        %v2357 = vpop.f32.mrf.mxu0
        %v2358 = vadd.f32 %v2269, %v2357
        %v2359 = vpop.f32.mrf.mxu0
        %v2360 = vadd.f32 %v2271, %v2359
        %2361 = vmatmul.bf16.gmra.mxu0 %v1926
        %v2362 = vpop.f32.mrf.mxu0
        %v2363 = vadd.f32 %v2274, %v2362
        %v2364 = vpop.f32.mrf.mxu0
        %v2365 = vadd.f32 %v2276, %v2364
        %2366 = vmatmul.bf16.gmra.mxu0 %v1929
        %v2367 = vpop.f32.mrf.mxu0
        %v2368 = vadd.f32 %v2279, %v2367
        %v2369 = vpop.f32.mrf.mxu0
        %v2370 = vadd.f32 %v2281, %v2369
        %2371 = vmatmul.bf16.gmra.mxu0 %v1932
        %v2372 = vpop.f32.mrf.mxu0
        %v2373 = vadd.f32 %v2284, %v2372
        %v2374 = vpop.f32.mrf.mxu0
        %v2375 = vadd.f32 %v2286, %v2374
        %2376 = vmatmul.bf16.gmra.mxu0 %v1935
        %v2377 = vpop.f32.mrf.mxu0
        %v2378 = vadd.f32 %v2289, %v2377
        %v2379 = vpop.f32.mrf.mxu0
        %v2380 = vadd.f32 %v2291, %v2379
        %2381 = vdwg.mxu0
        %v2382 = vmax.f32 %v2303, 0.0
        %v2383 = vmax.f32 %v2305, 0.0
        %v2384 = vmax.f32 %v2308, 0.0
        %v2385 = vmax.f32 %v2310, 0.0
        %v2386 = vmax.f32 %v2313, 0.0
        %v2387 = vmax.f32 %v2315, 0.0
        %v2388 = vmax.f32 %v2318, 0.0
        %v2389 = vmax.f32 %v2320, 0.0
        %v2390 = vmax.f32 %v2323, 0.0
        %v2391 = vmax.f32 %v2325, 0.0
        %v2392 = vmax.f32 %v2328, 0.0
        %v2393 = vmax.f32 %v2330, 0.0
        %v2394 = vmax.f32 %v2333, 0.0
        %v2395 = vmax.f32 %v2335, 0.0
        %v2396 = vmax.f32 %v2338, 0.0
        %v2397 = vmax.f32 %v2340, 0.0
        %v2398 = vmax.f32 %v2343, 0.0
        %v2399 = vmax.f32 %v2345, 0.0
        %v2400 = vmax.f32 %v2348, 0.0
        %v2401 = vmax.f32 %v2350, 0.0
        %v2402 = vmax.f32 %v2353, 0.0
        %v2403 = vmax.f32 %v2355, 0.0
        %v2404 = vmax.f32 %v2358, 0.0
        %v2405 = vmax.f32 %v2360, 0.0
        %v2406 = vmax.f32 %v2363, 0.0
        %v2407 = vmax.f32 %v2365, 0.0
        %v2408 = vmax.f32 %v2368, 0.0
        %v2409 = vmax.f32 %v2370, 0.0
        %v2410 = vmax.f32 %v2373, 0.0
        %v2411 = vmax.f32 %v2375, 0.0
        %v2412 = vmax.f32 %v2378, 0.0
        %v2413 = vmax.f32 %v2380, 0.0
        %v2414 = vxor.u32 %v2303, 2147483648
        %v2415 = vxor.u32 %v2305, 2147483648
        %v2416 = vxor.u32 %v2308, 2147483648
        %v2417 = vxor.u32 %v2310, 2147483648
        %v2418 = vxor.u32 %v2313, 2147483648
        %v2419 = vxor.u32 %v2315, 2147483648
        %v2420 = vxor.u32 %v2318, 2147483648
        %v2421 = vxor.u32 %v2320, 2147483648
        %v2422 = vxor.u32 %v2323, 2147483648
        %v2423 = vxor.u32 %v2325, 2147483648
        %v2424 = vxor.u32 %v2328, 2147483648
        %v2425 = vxor.u32 %v2330, 2147483648
        %v2426 = vxor.u32 %v2333, 2147483648
        %v2427 = vxor.u32 %v2335, 2147483648
        %v2428 = vxor.u32 %v2338, 2147483648
        %v2429 = vxor.u32 %v2340, 2147483648
        %v2430 = vxor.u32 %v2343, 2147483648
        %v2431 = vxor.u32 %v2345, 2147483648
        %v2432 = vxor.u32 %v2348, 2147483648
        %v2433 = vxor.u32 %v2350, 2147483648
        %v2434 = vxor.u32 %v2353, 2147483648
        %v2435 = vxor.u32 %v2355, 2147483648
        %v2436 = vxor.u32 %v2358, 2147483648
        %v2437 = vxor.u32 %v2360, 2147483648
        %v2438 = vxor.u32 %v2363, 2147483648
        %v2439 = vxor.u32 %v2365, 2147483648
        %v2440 = vxor.u32 %v2368, 2147483648
        %v2441 = vxor.u32 %v2370, 2147483648
        %v2442 = vxor.u32 %v2373, 2147483648
        %v2443 = vxor.u32 %v2375, 2147483648
        %v2444 = vxor.u32 %v2378, 2147483648
        %v2445 = vxor.u32 %v2380, 2147483648
        %v2446 = vmul.f32 %v2414, 1.442695
        %v2447 = vpow.pop %v2446
        %v2448 = vmul.f32 %v2415, 1.442695
        %v2449 = vpow.pop %v2448
        %v2450 = vmul.f32 %v2416, 1.442695
        %v2451 = vpow.pop %v2450
        %v2452 = vmul.f32 %v2417, 1.442695
        %v2453 = vpow.pop %v2452
        %v2454 = vmul.f32 %v2418, 1.442695
        %v2455 = vpow.pop %v2454
        %v2456 = vmul.f32 %v2419, 1.442695
        %v2457 = vpow.pop %v2456
        %v2458 = vmul.f32 %v2420, 1.442695
        %v2459 = vpow.pop %v2458
        %v2460 = vmul.f32 %v2421, 1.442695
        %v2461 = vpow.pop %v2460
        %v2462 = vmul.f32 %v2422, 1.442695
        %v2463 = vpow.pop %v2462
        %v2464 = vmul.f32 %v2423, 1.442695
        %v2465 = vpow.pop %v2464
        %v2466 = vmul.f32 %v2424, 1.442695
        %v2467 = vpow.pop %v2466
        %v2468 = vmul.f32 %v2425, 1.442695
        %v2469 = vpow.pop %v2468
        %v2470 = vmul.f32 %v2426, 1.442695
        %v2471 = vpow.pop %v2470
        %v2472 = vmul.f32 %v2427, 1.442695
        %v2473 = vpow.pop %v2472
        %v2474 = vmul.f32 %v2428, 1.442695
        %v2475 = vpow.pop %v2474
        %v2476 = vmul.f32 %v2429, 1.442695
        %v2477 = vpow.pop %v2476
        %v2478 = vmul.f32 %v2430, 1.442695
        %v2479 = vpow.pop %v2478
        %v2480 = vmul.f32 %v2431, 1.442695
        %v2481 = vpow.pop %v2480
        %v2482 = vmul.f32 %v2432, 1.442695
        %v2483 = vpow.pop %v2482
        %v2484 = vmul.f32 %v2433, 1.442695
        %v2485 = vpow.pop %v2484
        %v2486 = vmul.f32 %v2434, 1.442695
        %v2487 = vpow.pop %v2486
        %v2488 = vmul.f32 %v2435, 1.442695
        %v2489 = vpow.pop %v2488
        %v2490 = vmul.f32 %v2436, 1.442695
        %v2491 = vpow.pop %v2490
        %v2492 = vmul.f32 %v2437, 1.442695
        %v2493 = vpow.pop %v2492
        %v2494 = vmul.f32 %v2438, 1.442695
        %v2495 = vpow.pop %v2494
        %v2496 = vmul.f32 %v2439, 1.442695
        %v2497 = vpow.pop %v2496
        %v2498 = vmul.f32 %v2440, 1.442695
        %v2499 = vpow.pop %v2498
        %v2500 = vmul.f32 %v2441, 1.442695
        %v2501 = vpow.pop %v2500
        %v2502 = vmul.f32 %v2442, 1.442695
        %v2503 = vpow.pop %v2502
        %v2504 = vmul.f32 %v2443, 1.442695
        %v2505 = vpow.pop %v2504
        %v2506 = vmul.f32 %v2444, 1.442695
        %v2507 = vpow.pop %v2506
        %v2508 = vmul.f32 %v2445, 1.442695
        %v2509 = vpow.pop %v2508
        %v2510 = vadd.f32 %v2447, 1.0
        %v2511 = vadd.f32 %v2449, 1.0
        %v2512 = vadd.f32 %v2451, 1.0
        %v2513 = vadd.f32 %v2453, 1.0
        %v2514 = vadd.f32 %v2455, 1.0
        %v2515 = vadd.f32 %v2457, 1.0
        %v2516 = vadd.f32 %v2459, 1.0
        %v2517 = vadd.f32 %v2461, 1.0
        %v2518 = vadd.f32 %v2463, 1.0
        %v2519 = vadd.f32 %v2465, 1.0
        %v2520 = vadd.f32 %v2467, 1.0
        %v2521 = vadd.f32 %v2469, 1.0
        %v2522 = vadd.f32 %v2471, 1.0
        %v2523 = vadd.f32 %v2473, 1.0
        %v2524 = vadd.f32 %v2475, 1.0
        %v2525 = vadd.f32 %v2477, 1.0
        %v2526 = vadd.f32 %v2479, 1.0
        %v2527 = vadd.f32 %v2481, 1.0
        %v2528 = vadd.f32 %v2483, 1.0
        %v2529 = vadd.f32 %v2485, 1.0
        %v2530 = vadd.f32 %v2487, 1.0
        %v2531 = vadd.f32 %v2489, 1.0
        %v2532 = vadd.f32 %v2491, 1.0
        %v2533 = vadd.f32 %v2493, 1.0
        %v2534 = vadd.f32 %v2495, 1.0
        %v2535 = vadd.f32 %v2497, 1.0
        %v2536 = vadd.f32 %v2499, 1.0
        %v2537 = vadd.f32 %v2501, 1.0
        %v2538 = vadd.f32 %v2503, 1.0
        %v2539 = vadd.f32 %v2505, 1.0
        %v2540 = vadd.f32 %v2507, 1.0
        %v2541 = vadd.f32 %v2509, 1.0
        %v2542 = vrcp.pop %v2510
        %v2543 = vmul.f32 %v2510, %v2542
        %v2544 = vsub.f32 1.0, %v2543
        %v2545 = vmul.f32 %v2542, %v2544
        %v2546 = vadd.f32 %v2542, %v2545
        %vm2547 = vweird.f32 %v2510
        %vm2548 = vweird.f32 %v2542
        %vm2549 = vmor %vm2547, %vm2548
        %v2550 = vsel %vm2549, %v2542, %v2546
        %v2551 = vand.u32 2147483647, %v2510
        %vm2552 = vcmp.eq.f32.partialorder %v2551, 8.507059e+37
        %v2553 = vand.u32 %v2510, 2147483648
        %v2554 = vor.u32 1.1754944e-38, %v2553
        %v2555 = vsel %vm2552, %v2554, %v2550
        %v2556 = vmul.f32 1.0, %v2555
        %v2557 = vrcp.pop %v2511
        %v2558 = vmul.f32 %v2511, %v2557
        %v2559 = vsub.f32 1.0, %v2558
        %v2560 = vmul.f32 %v2557, %v2559
        %v2561 = vadd.f32 %v2557, %v2560
        %vm2562 = vweird.f32 %v2511
        %vm2563 = vweird.f32 %v2557
        %vm2564 = vmor %vm2562, %vm2563
        %v2565 = vsel %vm2564, %v2557, %v2561
        %v2566 = vand.u32 2147483647, %v2511
        %vm2567 = vcmp.eq.f32.partialorder %v2566, 8.507059e+37
        %v2568 = vand.u32 %v2511, 2147483648
        %v2569 = vor.u32 1.1754944e-38, %v2568
        %v2570 = vsel %vm2567, %v2569, %v2565
        %v2571 = vmul.f32 1.0, %v2570
        %v2572 = vrcp.pop %v2512
        %v2573 = vmul.f32 %v2512, %v2572
        %v2574 = vsub.f32 1.0, %v2573
        %v2575 = vmul.f32 %v2572, %v2574
        %v2576 = vadd.f32 %v2572, %v2575
        %vm2577 = vweird.f32 %v2512
        %vm2578 = vweird.f32 %v2572
        %vm2579 = vmor %vm2577, %vm2578
        %v2580 = vsel %vm2579, %v2572, %v2576
        %v2581 = vand.u32 2147483647, %v2512
        %vm2582 = vcmp.eq.f32.partialorder %v2581, 8.507059e+37
        %v2583 = vand.u32 %v2512, 2147483648
        %v2584 = vor.u32 1.1754944e-38, %v2583
        %v2585 = vsel %vm2582, %v2584, %v2580
        %v2586 = vmul.f32 1.0, %v2585
        %v2587 = vrcp.pop %v2513
        %v2588 = vmul.f32 %v2513, %v2587
        %v2589 = vsub.f32 1.0, %v2588
        %v2590 = vmul.f32 %v2587, %v2589
        %v2591 = vadd.f32 %v2587, %v2590
        %vm2592 = vweird.f32 %v2513
        %vm2593 = vweird.f32 %v2587
        %vm2594 = vmor %vm2592, %vm2593
        %v2595 = vsel %vm2594, %v2587, %v2591
        %v2596 = vand.u32 2147483647, %v2513
        %vm2597 = vcmp.eq.f32.partialorder %v2596, 8.507059e+37
        %v2598 = vand.u32 %v2513, 2147483648
        %v2599 = vor.u32 1.1754944e-38, %v2598
        %v2600 = vsel %vm2597, %v2599, %v2595
        %v2601 = vmul.f32 1.0, %v2600
        %v2602 = vrcp.pop %v2514
        %v2603 = vmul.f32 %v2514, %v2602
        %v2604 = vsub.f32 1.0, %v2603
        %v2605 = vmul.f32 %v2602, %v2604
        %v2606 = vadd.f32 %v2602, %v2605
        %vm2607 = vweird.f32 %v2514
        %vm2608 = vweird.f32 %v2602
        %vm2609 = vmor %vm2607, %vm2608
        %v2610 = vsel %vm2609, %v2602, %v2606
        %v2611 = vand.u32 2147483647, %v2514
        %vm2612 = vcmp.eq.f32.partialorder %v2611, 8.507059e+37
        %v2613 = vand.u32 %v2514, 2147483648
        %v2614 = vor.u32 1.1754944e-38, %v2613
        %v2615 = vsel %vm2612, %v2614, %v2610
        %v2616 = vmul.f32 1.0, %v2615
        %v2617 = vrcp.pop %v2515
        %v2618 = vmul.f32 %v2515, %v2617
        %v2619 = vsub.f32 1.0, %v2618
        %v2620 = vmul.f32 %v2617, %v2619
        %v2621 = vadd.f32 %v2617, %v2620
        %vm2622 = vweird.f32 %v2515
        %vm2623 = vweird.f32 %v2617
        %vm2624 = vmor %vm2622, %vm2623
        %v2625 = vsel %vm2624, %v2617, %v2621
        %v2626 = vand.u32 2147483647, %v2515
        %vm2627 = vcmp.eq.f32.partialorder %v2626, 8.507059e+37
        %v2628 = vand.u32 %v2515, 2147483648
        %v2629 = vor.u32 1.1754944e-38, %v2628
        %v2630 = vsel %vm2627, %v2629, %v2625
        %v2631 = vmul.f32 1.0, %v2630
        %v2632 = vrcp.pop %v2516
        %v2633 = vmul.f32 %v2516, %v2632
        %v2634 = vsub.f32 1.0, %v2633
        %v2635 = vmul.f32 %v2632, %v2634
        %v2636 = vadd.f32 %v2632, %v2635
        %vm2637 = vweird.f32 %v2516
        %vm2638 = vweird.f32 %v2632
        %vm2639 = vmor %vm2637, %vm2638
        %v2640 = vsel %vm2639, %v2632, %v2636
        %v2641 = vand.u32 2147483647, %v2516
        %vm2642 = vcmp.eq.f32.partialorder %v2641, 8.507059e+37
        %v2643 = vand.u32 %v2516, 2147483648
        %v2644 = vor.u32 1.1754944e-38, %v2643
        %v2645 = vsel %vm2642, %v2644, %v2640
        %v2646 = vmul.f32 1.0, %v2645
        %v2647 = vrcp.pop %v2517
        %v2648 = vmul.f32 %v2517, %v2647
        %v2649 = vsub.f32 1.0, %v2648
        %v2650 = vmul.f32 %v2647, %v2649
        %v2651 = vadd.f32 %v2647, %v2650
        %vm2652 = vweird.f32 %v2517
        %vm2653 = vweird.f32 %v2647
        %vm2654 = vmor %vm2652, %vm2653
        %v2655 = vsel %vm2654, %v2647, %v2651
        %v2656 = vand.u32 2147483647, %v2517
        %vm2657 = vcmp.eq.f32.partialorder %v2656, 8.507059e+37
        %v2658 = vand.u32 %v2517, 2147483648
        %v2659 = vor.u32 1.1754944e-38, %v2658
        %v2660 = vsel %vm2657, %v2659, %v2655
        %v2661 = vmul.f32 1.0, %v2660
        %v2662 = vrcp.pop %v2518
        %v2663 = vmul.f32 %v2518, %v2662
        %v2664 = vsub.f32 1.0, %v2663
        %v2665 = vmul.f32 %v2662, %v2664
        %v2666 = vadd.f32 %v2662, %v2665
        %vm2667 = vweird.f32 %v2518
        %vm2668 = vweird.f32 %v2662
        %vm2669 = vmor %vm2667, %vm2668
        %v2670 = vsel %vm2669, %v2662, %v2666
        %v2671 = vand.u32 2147483647, %v2518
        %vm2672 = vcmp.eq.f32.partialorder %v2671, 8.507059e+37
        %v2673 = vand.u32 %v2518, 2147483648
        %v2674 = vor.u32 1.1754944e-38, %v2673
        %v2675 = vsel %vm2672, %v2674, %v2670
        %v2676 = vmul.f32 1.0, %v2675
        %v2677 = vrcp.pop %v2519
        %v2678 = vmul.f32 %v2519, %v2677
        %v2679 = vsub.f32 1.0, %v2678
        %v2680 = vmul.f32 %v2677, %v2679
        %v2681 = vadd.f32 %v2677, %v2680
        %vm2682 = vweird.f32 %v2519
        %vm2683 = vweird.f32 %v2677
        %vm2684 = vmor %vm2682, %vm2683
        %v2685 = vsel %vm2684, %v2677, %v2681
        %v2686 = vand.u32 2147483647, %v2519
        %vm2687 = vcmp.eq.f32.partialorder %v2686, 8.507059e+37
        %v2688 = vand.u32 %v2519, 2147483648
        %v2689 = vor.u32 1.1754944e-38, %v2688
        %v2690 = vsel %vm2687, %v2689, %v2685
        %v2691 = vmul.f32 1.0, %v2690
        %v2692 = vrcp.pop %v2520
        %v2693 = vmul.f32 %v2520, %v2692
        %v2694 = vsub.f32 1.0, %v2693
        %v2695 = vmul.f32 %v2692, %v2694
        %v2696 = vadd.f32 %v2692, %v2695
        %vm2697 = vweird.f32 %v2520
        %vm2698 = vweird.f32 %v2692
        %vm2699 = vmor %vm2697, %vm2698
        %v2700 = vsel %vm2699, %v2692, %v2696
        %v2701 = vand.u32 2147483647, %v2520
        %vm2702 = vcmp.eq.f32.partialorder %v2701, 8.507059e+37
        %v2703 = vand.u32 %v2520, 2147483648
        %v2704 = vor.u32 1.1754944e-38, %v2703
        %v2705 = vsel %vm2702, %v2704, %v2700
        %v2706 = vmul.f32 1.0, %v2705
        %v2707 = vrcp.pop %v2521
        %v2708 = vmul.f32 %v2521, %v2707
        %v2709 = vsub.f32 1.0, %v2708
        %v2710 = vmul.f32 %v2707, %v2709
        %v2711 = vadd.f32 %v2707, %v2710
        %vm2712 = vweird.f32 %v2521
        %vm2713 = vweird.f32 %v2707
        %vm2714 = vmor %vm2712, %vm2713
        %v2715 = vsel %vm2714, %v2707, %v2711
        %v2716 = vand.u32 2147483647, %v2521
        %vm2717 = vcmp.eq.f32.partialorder %v2716, 8.507059e+37
        %v2718 = vand.u32 %v2521, 2147483648
        %v2719 = vor.u32 1.1754944e-38, %v2718
        %v2720 = vsel %vm2717, %v2719, %v2715
        %v2721 = vmul.f32 1.0, %v2720
        %v2722 = vrcp.pop %v2522
        %v2723 = vmul.f32 %v2522, %v2722
        %v2724 = vsub.f32 1.0, %v2723
        %v2725 = vmul.f32 %v2722, %v2724
        %v2726 = vadd.f32 %v2722, %v2725
        %vm2727 = vweird.f32 %v2522
        %vm2728 = vweird.f32 %v2722
        %vm2729 = vmor %vm2727, %vm2728
        %v2730 = vsel %vm2729, %v2722, %v2726
        %v2731 = vand.u32 2147483647, %v2522
        %vm2732 = vcmp.eq.f32.partialorder %v2731, 8.507059e+37
        %v2733 = vand.u32 %v2522, 2147483648
        %v2734 = vor.u32 1.1754944e-38, %v2733
        %v2735 = vsel %vm2732, %v2734, %v2730
        %v2736 = vmul.f32 1.0, %v2735
        %v2737 = vrcp.pop %v2523
        %v2738 = vmul.f32 %v2523, %v2737
        %v2739 = vsub.f32 1.0, %v2738
        %v2740 = vmul.f32 %v2737, %v2739
        %v2741 = vadd.f32 %v2737, %v2740
        %vm2742 = vweird.f32 %v2523
        %vm2743 = vweird.f32 %v2737
        %vm2744 = vmor %vm2742, %vm2743
        %v2745 = vsel %vm2744, %v2737, %v2741
        %v2746 = vand.u32 2147483647, %v2523
        %vm2747 = vcmp.eq.f32.partialorder %v2746, 8.507059e+37
        %v2748 = vand.u32 %v2523, 2147483648
        %v2749 = vor.u32 1.1754944e-38, %v2748
        %v2750 = vsel %vm2747, %v2749, %v2745
        %v2751 = vmul.f32 1.0, %v2750
        %v2752 = vrcp.pop %v2524
        %v2753 = vmul.f32 %v2524, %v2752
        %v2754 = vsub.f32 1.0, %v2753
        %v2755 = vmul.f32 %v2752, %v2754
        %v2756 = vadd.f32 %v2752, %v2755
        %vm2757 = vweird.f32 %v2524
        %vm2758 = vweird.f32 %v2752
        %vm2759 = vmor %vm2757, %vm2758
        %v2760 = vsel %vm2759, %v2752, %v2756
        %v2761 = vand.u32 2147483647, %v2524
        %vm2762 = vcmp.eq.f32.partialorder %v2761, 8.507059e+37
        %v2763 = vand.u32 %v2524, 2147483648
        %v2764 = vor.u32 1.1754944e-38, %v2763
        %v2765 = vsel %vm2762, %v2764, %v2760
        %v2766 = vmul.f32 1.0, %v2765
        %v2767 = vrcp.pop %v2525
        %v2768 = vmul.f32 %v2525, %v2767
        %v2769 = vsub.f32 1.0, %v2768
        %v2770 = vmul.f32 %v2767, %v2769
        %v2771 = vadd.f32 %v2767, %v2770
        %vm2772 = vweird.f32 %v2525
        %vm2773 = vweird.f32 %v2767
        %vm2774 = vmor %vm2772, %vm2773
        %v2775 = vsel %vm2774, %v2767, %v2771
        %v2776 = vand.u32 2147483647, %v2525
        %vm2777 = vcmp.eq.f32.partialorder %v2776, 8.507059e+37
        %v2778 = vand.u32 %v2525, 2147483648
        %v2779 = vor.u32 1.1754944e-38, %v2778
        %v2780 = vsel %vm2777, %v2779, %v2775
        %v2781 = vmul.f32 1.0, %v2780
        %v2782 = vrcp.pop %v2526
        %v2783 = vmul.f32 %v2526, %v2782
        %v2784 = vsub.f32 1.0, %v2783
        %v2785 = vmul.f32 %v2782, %v2784
        %v2786 = vadd.f32 %v2782, %v2785
        %vm2787 = vweird.f32 %v2526
        %vm2788 = vweird.f32 %v2782
        %vm2789 = vmor %vm2787, %vm2788
        %v2790 = vsel %vm2789, %v2782, %v2786
        %v2791 = vand.u32 2147483647, %v2526
        %vm2792 = vcmp.eq.f32.partialorder %v2791, 8.507059e+37
        %v2793 = vand.u32 %v2526, 2147483648
        %v2794 = vor.u32 1.1754944e-38, %v2793
        %v2795 = vsel %vm2792, %v2794, %v2790
        %v2796 = vmul.f32 1.0, %v2795
        %v2797 = vrcp.pop %v2527
        %v2798 = vmul.f32 %v2527, %v2797
        %v2799 = vsub.f32 1.0, %v2798
        %v2800 = vmul.f32 %v2797, %v2799
        %v2801 = vadd.f32 %v2797, %v2800
        %vm2802 = vweird.f32 %v2527
        %vm2803 = vweird.f32 %v2797
        %vm2804 = vmor %vm2802, %vm2803
        %v2805 = vsel %vm2804, %v2797, %v2801
        %v2806 = vand.u32 2147483647, %v2527
        %vm2807 = vcmp.eq.f32.partialorder %v2806, 8.507059e+37
        %v2808 = vand.u32 %v2527, 2147483648
        %v2809 = vor.u32 1.1754944e-38, %v2808
        %v2810 = vsel %vm2807, %v2809, %v2805
        %v2811 = vmul.f32 1.0, %v2810
        %v2812 = vrcp.pop %v2528
        %v2813 = vmul.f32 %v2528, %v2812
        %v2814 = vsub.f32 1.0, %v2813
        %v2815 = vmul.f32 %v2812, %v2814
        %v2816 = vadd.f32 %v2812, %v2815
        %vm2817 = vweird.f32 %v2528
        %vm2818 = vweird.f32 %v2812
        %vm2819 = vmor %vm2817, %vm2818
        %v2820 = vsel %vm2819, %v2812, %v2816
        %v2821 = vand.u32 2147483647, %v2528
        %vm2822 = vcmp.eq.f32.partialorder %v2821, 8.507059e+37
        %v2823 = vand.u32 %v2528, 2147483648
        %v2824 = vor.u32 1.1754944e-38, %v2823
        %v2825 = vsel %vm2822, %v2824, %v2820
        %v2826 = vmul.f32 1.0, %v2825
        %v2827 = vrcp.pop %v2529
        %v2828 = vmul.f32 %v2529, %v2827
        %v2829 = vsub.f32 1.0, %v2828
        %v2830 = vmul.f32 %v2827, %v2829
        %v2831 = vadd.f32 %v2827, %v2830
        %vm2832 = vweird.f32 %v2529
        %vm2833 = vweird.f32 %v2827
        %vm2834 = vmor %vm2832, %vm2833
        %v2835 = vsel %vm2834, %v2827, %v2831
        %v2836 = vand.u32 2147483647, %v2529
        %vm2837 = vcmp.eq.f32.partialorder %v2836, 8.507059e+37
        %v2838 = vand.u32 %v2529, 2147483648
        %v2839 = vor.u32 1.1754944e-38, %v2838
        %v2840 = vsel %vm2837, %v2839, %v2835
        %v2841 = vmul.f32 1.0, %v2840
        %v2842 = vrcp.pop %v2530
        %v2843 = vmul.f32 %v2530, %v2842
        %v2844 = vsub.f32 1.0, %v2843
        %v2845 = vmul.f32 %v2842, %v2844
        %v2846 = vadd.f32 %v2842, %v2845
        %vm2847 = vweird.f32 %v2530
        %vm2848 = vweird.f32 %v2842
        %vm2849 = vmor %vm2847, %vm2848
        %v2850 = vsel %vm2849, %v2842, %v2846
        %v2851 = vand.u32 2147483647, %v2530
        %vm2852 = vcmp.eq.f32.partialorder %v2851, 8.507059e+37
        %v2853 = vand.u32 %v2530, 2147483648
        %v2854 = vor.u32 1.1754944e-38, %v2853
        %v2855 = vsel %vm2852, %v2854, %v2850
        %v2856 = vmul.f32 1.0, %v2855
        %v2857 = vrcp.pop %v2531
        %v2858 = vmul.f32 %v2531, %v2857
        %v2859 = vsub.f32 1.0, %v2858
        %v2860 = vmul.f32 %v2857, %v2859
        %v2861 = vadd.f32 %v2857, %v2860
        %vm2862 = vweird.f32 %v2531
        %vm2863 = vweird.f32 %v2857
        %vm2864 = vmor %vm2862, %vm2863
        %v2865 = vsel %vm2864, %v2857, %v2861
        %v2866 = vand.u32 2147483647, %v2531
        %vm2867 = vcmp.eq.f32.partialorder %v2866, 8.507059e+37
        %v2868 = vand.u32 %v2531, 2147483648
        %v2869 = vor.u32 1.1754944e-38, %v2868
        %v2870 = vsel %vm2867, %v2869, %v2865
        %v2871 = vmul.f32 1.0, %v2870
        %v2872 = vrcp.pop %v2532
        %v2873 = vmul.f32 %v2532, %v2872
        %v2874 = vsub.f32 1.0, %v2873
        %v2875 = vmul.f32 %v2872, %v2874
        %v2876 = vadd.f32 %v2872, %v2875
        %vm2877 = vweird.f32 %v2532
        %vm2878 = vweird.f32 %v2872
        %vm2879 = vmor %vm2877, %vm2878
        %v2880 = vsel %vm2879, %v2872, %v2876
        %v2881 = vand.u32 2147483647, %v2532
        %vm2882 = vcmp.eq.f32.partialorder %v2881, 8.507059e+37
        %v2883 = vand.u32 %v2532, 2147483648
        %v2884 = vor.u32 1.1754944e-38, %v2883
        %v2885 = vsel %vm2882, %v2884, %v2880
        %v2886 = vmul.f32 1.0, %v2885
        %v2887 = vrcp.pop %v2533
        %v2888 = vmul.f32 %v2533, %v2887
        %v2889 = vsub.f32 1.0, %v2888
        %v2890 = vmul.f32 %v2887, %v2889
        %v2891 = vadd.f32 %v2887, %v2890
        %vm2892 = vweird.f32 %v2533
        %vm2893 = vweird.f32 %v2887
        %vm2894 = vmor %vm2892, %vm2893
        %v2895 = vsel %vm2894, %v2887, %v2891
        %v2896 = vand.u32 2147483647, %v2533
        %vm2897 = vcmp.eq.f32.partialorder %v2896, 8.507059e+37
        %v2898 = vand.u32 %v2533, 2147483648
        %v2899 = vor.u32 1.1754944e-38, %v2898
        %v2900 = vsel %vm2897, %v2899, %v2895
        %v2901 = vmul.f32 1.0, %v2900
        %v2902 = vrcp.pop %v2534
        %v2903 = vmul.f32 %v2534, %v2902
        %v2904 = vsub.f32 1.0, %v2903
        %v2905 = vmul.f32 %v2902, %v2904
        %v2906 = vadd.f32 %v2902, %v2905
        %vm2907 = vweird.f32 %v2534
        %vm2908 = vweird.f32 %v2902
        %vm2909 = vmor %vm2907, %vm2908
        %v2910 = vsel %vm2909, %v2902, %v2906
        %v2911 = vand.u32 2147483647, %v2534
        %vm2912 = vcmp.eq.f32.partialorder %v2911, 8.507059e+37
        %v2913 = vand.u32 %v2534, 2147483648
        %v2914 = vor.u32 1.1754944e-38, %v2913
        %v2915 = vsel %vm2912, %v2914, %v2910
        %v2916 = vmul.f32 1.0, %v2915
        %v2917 = vrcp.pop %v2535
        %v2918 = vmul.f32 %v2535, %v2917
        %v2919 = vsub.f32 1.0, %v2918
        %v2920 = vmul.f32 %v2917, %v2919
        %v2921 = vadd.f32 %v2917, %v2920
        %vm2922 = vweird.f32 %v2535
        %vm2923 = vweird.f32 %v2917
        %vm2924 = vmor %vm2922, %vm2923
        %v2925 = vsel %vm2924, %v2917, %v2921
        %v2926 = vand.u32 2147483647, %v2535
        %vm2927 = vcmp.eq.f32.partialorder %v2926, 8.507059e+37
        %v2928 = vand.u32 %v2535, 2147483648
        %v2929 = vor.u32 1.1754944e-38, %v2928
        %v2930 = vsel %vm2927, %v2929, %v2925
        %v2931 = vmul.f32 1.0, %v2930
        %v2932 = vrcp.pop %v2536
        %v2933 = vmul.f32 %v2536, %v2932
        %v2934 = vsub.f32 1.0, %v2933
        %v2935 = vmul.f32 %v2932, %v2934
        %v2936 = vadd.f32 %v2932, %v2935
        %vm2937 = vweird.f32 %v2536
        %vm2938 = vweird.f32 %v2932
        %vm2939 = vmor %vm2937, %vm2938
        %v2940 = vsel %vm2939, %v2932, %v2936
        %v2941 = vand.u32 2147483647, %v2536
        %vm2942 = vcmp.eq.f32.partialorder %v2941, 8.507059e+37
        %v2943 = vand.u32 %v2536, 2147483648
        %v2944 = vor.u32 1.1754944e-38, %v2943
        %v2945 = vsel %vm2942, %v2944, %v2940
        %v2946 = vmul.f32 1.0, %v2945
        %v2947 = vrcp.pop %v2537
        %v2948 = vmul.f32 %v2537, %v2947
        %v2949 = vsub.f32 1.0, %v2948
        %v2950 = vmul.f32 %v2947, %v2949
        %v2951 = vadd.f32 %v2947, %v2950
        %vm2952 = vweird.f32 %v2537
        %vm2953 = vweird.f32 %v2947
        %vm2954 = vmor %vm2952, %vm2953
        %v2955 = vsel %vm2954, %v2947, %v2951
        %v2956 = vand.u32 2147483647, %v2537
        %vm2957 = vcmp.eq.f32.partialorder %v2956, 8.507059e+37
        %v2958 = vand.u32 %v2537, 2147483648
        %v2959 = vor.u32 1.1754944e-38, %v2958
        %v2960 = vsel %vm2957, %v2959, %v2955
        %v2961 = vmul.f32 1.0, %v2960
        %v2962 = vrcp.pop %v2538
        %v2963 = vmul.f32 %v2538, %v2962
        %v2964 = vsub.f32 1.0, %v2963
        %v2965 = vmul.f32 %v2962, %v2964
        %v2966 = vadd.f32 %v2962, %v2965
        %vm2967 = vweird.f32 %v2538
        %vm2968 = vweird.f32 %v2962
        %vm2969 = vmor %vm2967, %vm2968
        %v2970 = vsel %vm2969, %v2962, %v2966
        %v2971 = vand.u32 2147483647, %v2538
        %vm2972 = vcmp.eq.f32.partialorder %v2971, 8.507059e+37
        %v2973 = vand.u32 %v2538, 2147483648
        %v2974 = vor.u32 1.1754944e-38, %v2973
        %v2975 = vsel %vm2972, %v2974, %v2970
        %v2976 = vmul.f32 1.0, %v2975
        %v2977 = vrcp.pop %v2539
        %v2978 = vmul.f32 %v2539, %v2977
        %v2979 = vsub.f32 1.0, %v2978
        %v2980 = vmul.f32 %v2977, %v2979
        %v2981 = vadd.f32 %v2977, %v2980
        %vm2982 = vweird.f32 %v2539
        %vm2983 = vweird.f32 %v2977
        %vm2984 = vmor %vm2982, %vm2983
        %v2985 = vsel %vm2984, %v2977, %v2981
        %v2986 = vand.u32 2147483647, %v2539
        %vm2987 = vcmp.eq.f32.partialorder %v2986, 8.507059e+37
        %v2988 = vand.u32 %v2539, 2147483648
        %v2989 = vor.u32 1.1754944e-38, %v2988
        %v2990 = vsel %vm2987, %v2989, %v2985
        %v2991 = vmul.f32 1.0, %v2990
        %v2992 = vrcp.pop %v2540
        %v2993 = vmul.f32 %v2540, %v2992
        %v2994 = vsub.f32 1.0, %v2993
        %v2995 = vmul.f32 %v2992, %v2994
        %v2996 = vadd.f32 %v2992, %v2995
        %vm2997 = vweird.f32 %v2540
        %vm2998 = vweird.f32 %v2992
        %vm2999 = vmor %vm2997, %vm2998
        %v3000 = vsel %vm2999, %v2992, %v2996
        %v3001 = vand.u32 2147483647, %v2540
        %vm3002 = vcmp.eq.f32.partialorder %v3001, 8.507059e+37
        %v3003 = vand.u32 %v2540, 2147483648
        %v3004 = vor.u32 1.1754944e-38, %v3003
        %v3005 = vsel %vm3002, %v3004, %v3000
        %v3006 = vmul.f32 1.0, %v3005
        %v3007 = vrcp.pop %v2541
        %v3008 = vmul.f32 %v2541, %v3007
        %v3009 = vsub.f32 1.0, %v3008
        %v3010 = vmul.f32 %v3007, %v3009
        %v3011 = vadd.f32 %v3007, %v3010
        %vm3012 = vweird.f32 %v2541
        %vm3013 = vweird.f32 %v3007
        %vm3014 = vmor %vm3012, %vm3013
        %v3015 = vsel %vm3014, %v3007, %v3011
        %v3016 = vand.u32 2147483647, %v2541
        %vm3017 = vcmp.eq.f32.partialorder %v3016, 8.507059e+37
        %v3018 = vand.u32 %v2541, 2147483648
        %v3019 = vor.u32 1.1754944e-38, %v3018
        %v3020 = vsel %vm3017, %v3019, %v3015
        %v3021 = vmul.f32 1.0, %v3020
        %3054 = vrot.lane.b32.xlu0 %v2556, 124
        %v3055 = vpop.permute.xlu0 %3054
        %3056 = vrot.lane.b32.xlu0 %v2571, 124
        %v3057 = vpop.permute.xlu0 %3056
        %3058 = vrot.lane.b32.xlu0 %v2586, 124
        %v3059 = vpop.permute.xlu0 %3058
        %3060 = vrot.lane.b32.xlu0 %v2601, 124
        %v3061 = vpop.permute.xlu0 %3060
        %3062 = vrot.lane.b32.xlu0 %v2616, 124
        %v3063 = vpop.permute.xlu0 %3062
        %3064 = vrot.lane.b32.xlu0 %v2631, 124
        %v3065 = vpop.permute.xlu0 %3064
        %3066 = vrot.lane.b32.xlu0 %v2646, 124
        %v3067 = vpop.permute.xlu0 %3066
        %3068 = vrot.lane.b32.xlu0 %v2661, 124
        %v3069 = vpop.permute.xlu0 %3068
        %3070 = vrot.lane.b32.xlu0 %v2676, 124
        %v3071 = vpop.permute.xlu0 %3070
        %3072 = vrot.lane.b32.xlu0 %v2691, 124
        %v3073 = vpop.permute.xlu0 %3072
        %3074 = vrot.lane.b32.xlu0 %v2706, 124
        %v3075 = vpop.permute.xlu0 %3074
        %3076 = vrot.lane.b32.xlu0 %v2721, 124
        %v3077 = vpop.permute.xlu0 %3076
        %3078 = vrot.lane.b32.xlu0 %v2736, 124
        %v3079 = vpop.permute.xlu0 %3078
        %3080 = vrot.lane.b32.xlu0 %v2751, 124
        %v3081 = vpop.permute.xlu0 %3080
        %3082 = vrot.lane.b32.xlu0 %v2766, 124
        %v3083 = vpop.permute.xlu0 %3082
        %3084 = vrot.lane.b32.xlu0 %v2781, 124
        %v3085 = vpop.permute.xlu0 %3084
        %3086 = vrot.lane.b32.xlu0 %v2796, 124
        %v3087 = vpop.permute.xlu0 %3086
        %3088 = vrot.lane.b32.xlu0 %v2811, 124
        %v3089 = vpop.permute.xlu0 %3088
        %3090 = vrot.lane.b32.xlu0 %v2826, 124
        %v3091 = vpop.permute.xlu0 %3090
        %3092 = vrot.lane.b32.xlu0 %v2841, 124
        %v3093 = vpop.permute.xlu0 %3092
        %3094 = vrot.lane.b32.xlu0 %v2856, 124
        %v3095 = vpop.permute.xlu0 %3094
        %3096 = vrot.lane.b32.xlu0 %v2871, 124
        %v3097 = vpop.permute.xlu0 %3096
        %3098 = vrot.lane.b32.xlu0 %v2886, 124
        %v3099 = vpop.permute.xlu0 %3098
        %3100 = vrot.lane.b32.xlu0 %v2901, 124
        %v3101 = vpop.permute.xlu0 %3100
        %3102 = vrot.lane.b32.xlu0 %v2916, 124
        %v3103 = vpop.permute.xlu0 %3102
        %3104 = vrot.lane.b32.xlu0 %v2931, 124
        %v3105 = vpop.permute.xlu0 %3104
        %3106 = vrot.lane.b32.xlu0 %v2946, 124
        %v3107 = vpop.permute.xlu0 %3106
        %3108 = vrot.lane.b32.xlu0 %v2961, 124
        %v3109 = vpop.permute.xlu0 %3108
        %3110 = vrot.lane.b32.xlu0 %v2976, 124
        %v3111 = vpop.permute.xlu0 %3110
        %3112 = vrot.lane.b32.xlu0 %v2991, 124
        %v3113 = vpop.permute.xlu0 %3112
        %3114 = vrot.lane.b32.xlu0 %v3006, 124
        %v3115 = vpop.permute.xlu0 %3114
        %3116 = vrot.lane.b32.xlu0 %v3021, 124
        %v3117 = vpop.permute.xlu0 %3116
        %3150 = vxpose.xlu0.b32.start [1/16] %v3055, 128
        %3151 = vxpose.xlu0.b32.cont [2/16] %v3057, 128
        %3152 = vxpose.xlu0.b32.cont [3/16] %v3059, 128
        %3153 = vxpose.xlu0.b32.cont [4/16] %v3061, 128
        %3154 = vxpose.xlu0.b32.cont [5/16] %v3063, 128
        %3155 = vxpose.xlu0.b32.cont [6/16] %v3065, 128
        %3156 = vxpose.xlu0.b32.cont [7/16] %v3067, 128
        %3157 = vxpose.xlu0.b32.cont [8/16] %v3069, 128
        %3158 = vxpose.xlu0.b32.cont [9/16] %v3071, 128
        %3159 = vxpose.xlu0.b32.cont [10/16] %v3073, 128
        %3160 = vxpose.xlu0.b32.cont [11/16] %v3075, 128
        %3161 = vxpose.xlu0.b32.cont [12/16] %v3077, 128
        %3162 = vxpose.xlu0.b32.cont [13/16] %v3079, 128
        %3163 = vxpose.xlu0.b32.cont [14/16] %v3081, 128
        %3164 = vxpose.xlu0.b32.cont [15/16] %v3083, 128
        %3165 = vxpose.xlu0.b32.end [16/16] %v3085, 128
        %v3166 = vpop.trf.xlu0
        %v3167 = vpop.trf.xlu0
        %v3168 = vpop.trf.xlu0
        %v3169 = vpop.trf.xlu0
        %v3170 = vpop.trf.xlu0
        %v3171 = vpop.trf.xlu0
        %v3172 = vpop.trf.xlu0
        %v3173 = vpop.trf.xlu0
        %v3174 = vpop.trf.xlu0
        %v3175 = vpop.trf.xlu0
        %v3176 = vpop.trf.xlu0
        %v3177 = vpop.trf.xlu0
        %v3178 = vpop.trf.xlu0
        %v3179 = vpop.trf.xlu0
        %v3180 = vpop.trf.xlu0
        %v3181 = vpop.trf.xlu0
        %3182 = vxpose.xlu0.b32.start [1/16] %v3087, 128
        %3183 = vxpose.xlu0.b32.cont [2/16] %v3089, 128
        %3184 = vxpose.xlu0.b32.cont [3/16] %v3091, 128
        %3185 = vxpose.xlu0.b32.cont [4/16] %v3093, 128
        %3186 = vxpose.xlu0.b32.cont [5/16] %v3095, 128
        %3187 = vxpose.xlu0.b32.cont [6/16] %v3097, 128
        %3188 = vxpose.xlu0.b32.cont [7/16] %v3099, 128
        %3189 = vxpose.xlu0.b32.cont [8/16] %v3101, 128
        %3190 = vxpose.xlu0.b32.cont [9/16] %v3103, 128
        %3191 = vxpose.xlu0.b32.cont [10/16] %v3105, 128
        %3192 = vxpose.xlu0.b32.cont [11/16] %v3107, 128
        %3193 = vxpose.xlu0.b32.cont [12/16] %v3109, 128
        %3194 = vxpose.xlu0.b32.cont [13/16] %v3111, 128
        %3195 = vxpose.xlu0.b32.cont [14/16] %v3113, 128
        %3196 = vxpose.xlu0.b32.cont [15/16] %v3115, 128
        %3197 = vxpose.xlu0.b32.end [16/16] %v3117, 128
        %v3198 = vpop.trf.xlu0
        %v3199 = vpop.trf.xlu0
        %v3200 = vpop.trf.xlu0
        %v3201 = vpop.trf.xlu0
        %v3202 = vpop.trf.xlu0
        %v3203 = vpop.trf.xlu0
        %v3204 = vpop.trf.xlu0
        %v3205 = vpop.trf.xlu0
        %v3206 = vpop.trf.xlu0
        %v3207 = vpop.trf.xlu0
        %v3208 = vpop.trf.xlu0
        %v3209 = vpop.trf.xlu0
        %v3210 = vpop.trf.xlu0
        %v3211 = vpop.trf.xlu0
        %v3212 = vpop.trf.xlu0
        %v3213 = vpop.trf.xlu0
        %s3214 = scalar_lea.vmem [#allocation3], 24
        %3215 = vst.msk [vmem:[%s3214 + $0x1] sm:$0xff] %vm381, %v2382
        %3216 = vst.msk [vmem:[%s3214 + $0x9] sm:$0xff] %vm381, %v2383
        %3217 = vst.msk [vmem:[%s3214 + $0x19] sm:$0xff] %vm381, %v2384
        %3218 = vst.msk [vmem:[%s3214 + $0x21] sm:$0xff] %vm381, %v2385
        %3219 = vst.msk [vmem:[%s3214 + $0x31] sm:$0xff] %vm381, %v2386
        %3220 = vst.msk [vmem:[%s3214 + $0x39] sm:$0xff] %vm381, %v2387
        %3221 = vst.msk [vmem:[%s3214 + $0x49] sm:$0xff] %vm381, %v2388
        %3222 = vst.msk [vmem:[%s3214 + $0x51] sm:$0xff] %vm381, %v2389
        %3223 = vst.msk [vmem:[%s3214 + $0x61] sm:$0xff] %vm381, %v2390
        %3224 = vst.msk [vmem:[%s3214 + $0x69] sm:$0xff] %vm381, %v2391
        %3225 = vst.msk [vmem:[%s3214 + $0x79] sm:$0xff] %vm381, %v2392
        %3226 = vst.msk [vmem:[%s3214 + $0x81] sm:$0xff] %vm381, %v2393
        %3227 = vst.msk [vmem:[%s3214 + $0x91] sm:$0xff] %vm381, %v2394
        %3228 = vst.msk [vmem:[%s3214 + $0x99] sm:$0xff] %vm381, %v2395
        %3229 = vst.msk [vmem:[%s3214 + $0xa9] sm:$0xff] %vm381, %v2396
        %3230 = vst.msk [vmem:[%s3214 + $0xb1] sm:$0xff] %vm381, %v2397
        %3231 = vst.msk [vmem:[%s3214 + $0xc1] sm:$0xff] %vm381, %v2398
        %3232 = vst.msk [vmem:[%s3214 + $0xc9] sm:$0xff] %vm381, %v2399
        %3233 = vst.msk [vmem:[%s3214 + $0xd9] sm:$0xff] %vm381, %v2400
        %3234 = vst.msk [vmem:[%s3214 + $0xe1] sm:$0xff] %vm381, %v2401
        %3235 = vst.msk [vmem:[%s3214 + $0xf1] sm:$0xff] %vm381, %v2402
        %3236 = vst.msk [vmem:[%s3214 + $0xf9] sm:$0xff] %vm381, %v2403
        %3237 = vst.msk [vmem:[%s3214 + $0x109] sm:$0xff] %vm381, %v2404
        %3238 = vst.msk [vmem:[%s3214 + $0x111] sm:$0xff] %vm381, %v2405
        %3239 = vst.msk [vmem:[%s3214 + $0x121] sm:$0xff] %vm381, %v2406
        %3240 = vst.msk [vmem:[%s3214 + $0x129] sm:$0xff] %vm381, %v2407
        %3241 = vst.msk [vmem:[%s3214 + $0x139] sm:$0xff] %vm381, %v2408
        %3242 = vst.msk [vmem:[%s3214 + $0x141] sm:$0xff] %vm381, %v2409
        %3243 = vst.msk [vmem:[%s3214 + $0x151] sm:$0xff] %vm381, %v2410
        %3244 = vst.msk [vmem:[%s3214 + $0x159] sm:$0xff] %vm381, %v2411
        %3245 = vst.msk [vmem:[%s3214 + $0x169] sm:$0xff] %vm381, %v2412
        %3246 = vst.msk [vmem:[%s3214 + $0x171] sm:$0xff] %vm381, %v2413
        %v3247 = vld [vmem:[#allocation3] sm:$0xff]
        %v3248 = vld [vmem:[#allocation3 + $0x8] sm:$0xff]
        %v3249 = vld [vmem:[#allocation3 + $0x18] sm:$0xff]
        %v3250 = vld [vmem:[#allocation3 + $0x20] sm:$0xff]
        %v3251 = vld [vmem:[#allocation3 + $0x30] sm:$0xff]
        %v3252 = vld [vmem:[#allocation3 + $0x38] sm:$0xff]
        %v3253 = vld [vmem:[#allocation3 + $0x48] sm:$0xff]
        %v3254 = vld [vmem:[#allocation3 + $0x50] sm:$0xff]
        %v3255 = vld [vmem:[#allocation3 + $0x60] sm:$0xff]
        %v3256 = vld [vmem:[#allocation3 + $0x68] sm:$0xff]
        %v3257 = vld [vmem:[#allocation3 + $0x78] sm:$0xff]
        %v3258 = vld [vmem:[#allocation3 + $0x80] sm:$0xff]
        %v3259 = vld [vmem:[#allocation3 + $0x90] sm:$0xff]
        %v3260 = vld [vmem:[#allocation3 + $0x98] sm:$0xff]
        %v3261 = vld [vmem:[#allocation3 + $0xa8] sm:$0xff]
        %v3262 = vld [vmem:[#allocation3 + $0xb0] sm:$0xff]
        %v3263 = vld [vmem:[#allocation3 + $0xc0] sm:$0xff]
        %v3264 = vld [vmem:[#allocation3 + $0xc8] sm:$0xff]
        %v3265 = vld [vmem:[#allocation3 + $0xd8] sm:$0xff]
        %v3266 = vld [vmem:[#allocation3 + $0xe0] sm:$0xff]
        %v3267 = vld [vmem:[#allocation3 + $0xf0] sm:$0xff]
        %v3268 = vld [vmem:[#allocation3 + $0xf8] sm:$0xff]
        %v3269 = vld [vmem:[#allocation3 + $0x108] sm:$0xff]
        %v3270 = vld [vmem:[#allocation3 + $0x110] sm:$0xff]
        %v3271 = vld [vmem:[#allocation3 + $0x120] sm:$0xff]
        %v3272 = vld [vmem:[#allocation3 + $0x128] sm:$0xff]
        %v3273 = vld [vmem:[#allocation3 + $0x138] sm:$0xff]
        %v3274 = vld [vmem:[#allocation3 + $0x140] sm:$0xff]
        %v3275 = vld [vmem:[#allocation3 + $0x150] sm:$0xff]
        %v3276 = vld [vmem:[#allocation3 + $0x158] sm:$0xff]
        %v3277 = vld [vmem:[#allocation3 + $0x168] sm:$0xff]
        %v3278 = vld [vmem:[#allocation3 + $0x170] sm:$0xff]
        %v3279 = vld [vmem:[#allocation3 + $0x1] sm:$0xff]
        %v3280 = vld [vmem:[#allocation3 + $0x9] sm:$0xff]
        %v3281 = vld [vmem:[#allocation3 + $0x19] sm:$0xff]
        %v3282 = vld [vmem:[#allocation3 + $0x21] sm:$0xff]
        %v3283 = vld [vmem:[#allocation3 + $0x31] sm:$0xff]
        %v3284 = vld [vmem:[#allocation3 + $0x39] sm:$0xff]
        %v3285 = vld [vmem:[#allocation3 + $0x49] sm:$0xff]
        %v3286 = vld [vmem:[#allocation3 + $0x51] sm:$0xff]
        %v3287 = vld [vmem:[#allocation3 + $0x61] sm:$0xff]
        %v3288 = vld [vmem:[#allocation3 + $0x69] sm:$0xff]
        %v3289 = vld [vmem:[#allocation3 + $0x79] sm:$0xff]
        %v3290 = vld [vmem:[#allocation3 + $0x81] sm:$0xff]
        %v3291 = vld [vmem:[#allocation3 + $0x91] sm:$0xff]
        %v3292 = vld [vmem:[#allocation3 + $0x99] sm:$0xff]
        %v3293 = vld [vmem:[#allocation3 + $0xa9] sm:$0xff]
        %v3294 = vld [vmem:[#allocation3 + $0xb1] sm:$0xff]
        %v3295 = vld [vmem:[#allocation3 + $0xc1] sm:$0xff]
        %v3296 = vld [vmem:[#allocation3 + $0xc9] sm:$0xff]
        %v3297 = vld [vmem:[#allocation3 + $0xd9] sm:$0xff]
        %v3298 = vld [vmem:[#allocation3 + $0xe1] sm:$0xff]
        %v3299 = vld [vmem:[#allocation3 + $0xf1] sm:$0xff]
        %v3300 = vld [vmem:[#allocation3 + $0xf9] sm:$0xff]
        %v3301 = vld [vmem:[#allocation3 + $0x109] sm:$0xff]
        %v3302 = vld [vmem:[#allocation3 + $0x111] sm:$0xff]
        %v3303 = vld [vmem:[#allocation3 + $0x121] sm:$0xff]
        %v3304 = vld [vmem:[#allocation3 + $0x129] sm:$0xff]
        %v3305 = vld [vmem:[#allocation3 + $0x139] sm:$0xff]
        %v3306 = vld [vmem:[#allocation3 + $0x141] sm:$0xff]
        %v3307 = vld [vmem:[#allocation3 + $0x151] sm:$0xff]
        %v3308 = vld [vmem:[#allocation3 + $0x159] sm:$0xff]
        %v3309 = vld [vmem:[#allocation3 + $0x169] sm:$0xff]
        %v3310 = vld [vmem:[#allocation3 + $0x171] sm:$0xff]
        %v3311 = vld [vmem:[#allocation3 + $0x2] sm:$0xff]
        %v3312 = vld [vmem:[#allocation3 + $0xa] sm:$0xff]
        %v3313 = vld [vmem:[#allocation3 + $0x1a] sm:$0xff]
        %v3314 = vld [vmem:[#allocation3 + $0x22] sm:$0xff]
        %v3315 = vld [vmem:[#allocation3 + $0x32] sm:$0xff]
        %v3316 = vld [vmem:[#allocation3 + $0x3a] sm:$0xff]
        %v3317 = vld [vmem:[#allocation3 + $0x4a] sm:$0xff]
        %v3318 = vld [vmem:[#allocation3 + $0x52] sm:$0xff]
        %v3319 = vld [vmem:[#allocation3 + $0x62] sm:$0xff]
        %v3320 = vld [vmem:[#allocation3 + $0x6a] sm:$0xff]
        %v3321 = vld [vmem:[#allocation3 + $0x7a] sm:$0xff]
        %v3322 = vld [vmem:[#allocation3 + $0x82] sm:$0xff]
        %v3323 = vld [vmem:[#allocation3 + $0x92] sm:$0xff]
        %v3324 = vld [vmem:[#allocation3 + $0x9a] sm:$0xff]
        %v3325 = vld [vmem:[#allocation3 + $0xaa] sm:$0xff]
        %v3326 = vld [vmem:[#allocation3 + $0xb2] sm:$0xff]
        %v3327 = vld [vmem:[#allocation3 + $0xc2] sm:$0xff]
        %v3328 = vld [vmem:[#allocation3 + $0xca] sm:$0xff]
        %v3329 = vld [vmem:[#allocation3 + $0xda] sm:$0xff]
        %v3330 = vld [vmem:[#allocation3 + $0xe2] sm:$0xff]
        %v3331 = vld [vmem:[#allocation3 + $0xf2] sm:$0xff]
        %v3332 = vld [vmem:[#allocation3 + $0xfa] sm:$0xff]
        %v3333 = vld [vmem:[#allocation3 + $0x10a] sm:$0xff]
        %v3334 = vld [vmem:[#allocation3 + $0x112] sm:$0xff]
        %v3335 = vld [vmem:[#allocation3 + $0x122] sm:$0xff]
        %v3336 = vld [vmem:[#allocation3 + $0x12a] sm:$0xff]
        %v3337 = vld [vmem:[#allocation3 + $0x13a] sm:$0xff]
        %v3338 = vld [vmem:[#allocation3 + $0x142] sm:$0xff]
        %v3339 = vld [vmem:[#allocation3 + $0x152] sm:$0xff]
        %v3340 = vld [vmem:[#allocation3 + $0x15a] sm:$0xff]
        %v3341 = vld [vmem:[#allocation3 + $0x16a] sm:$0xff]
        %v3342 = vld [vmem:[#allocation3 + $0x172] sm:$0xff]
        %v3343 = vld [vmem:[%s3214] sm:$0xff]
        %v3344 = vld [vmem:[%s3214 + $0x8] sm:$0xff]
        %v3345 = vld [vmem:[%s3214 + $0x18] sm:$0xff]
        %v3346 = vld [vmem:[%s3214 + $0x20] sm:$0xff]
        %v3347 = vld [vmem:[%s3214 + $0x30] sm:$0xff]
        %v3348 = vld [vmem:[%s3214 + $0x38] sm:$0xff]
        %v3349 = vld [vmem:[%s3214 + $0x48] sm:$0xff]
        %v3350 = vld [vmem:[%s3214 + $0x50] sm:$0xff]
        %v3351 = vld [vmem:[%s3214 + $0x60] sm:$0xff]
        %v3352 = vld [vmem:[%s3214 + $0x68] sm:$0xff]
        %v3353 = vld [vmem:[%s3214 + $0x78] sm:$0xff]
        %v3354 = vld [vmem:[%s3214 + $0x80] sm:$0xff]
        %v3355 = vld [vmem:[%s3214 + $0x90] sm:$0xff]
        %v3356 = vld [vmem:[%s3214 + $0x98] sm:$0xff]
        %v3357 = vld [vmem:[%s3214 + $0xa8] sm:$0xff]
        %v3358 = vld [vmem:[%s3214 + $0xb0] sm:$0xff]
        %v3359 = vld [vmem:[%s3214 + $0xc0] sm:$0xff]
        %v3360 = vld [vmem:[%s3214 + $0xc8] sm:$0xff]
        %v3361 = vld [vmem:[%s3214 + $0xd8] sm:$0xff]
        %v3362 = vld [vmem:[%s3214 + $0xe0] sm:$0xff]
        %v3363 = vld [vmem:[%s3214 + $0xf0] sm:$0xff]
        %v3364 = vld [vmem:[%s3214 + $0xf8] sm:$0xff]
        %v3365 = vld [vmem:[%s3214 + $0x108] sm:$0xff]
        %v3366 = vld [vmem:[%s3214 + $0x110] sm:$0xff]
        %v3367 = vld [vmem:[%s3214 + $0x120] sm:$0xff]
        %v3368 = vld [vmem:[%s3214 + $0x128] sm:$0xff]
        %v3369 = vld [vmem:[%s3214 + $0x138] sm:$0xff]
        %v3370 = vld [vmem:[%s3214 + $0x140] sm:$0xff]
        %v3371 = vld [vmem:[%s3214 + $0x150] sm:$0xff]
        %v3372 = vld [vmem:[%s3214 + $0x158] sm:$0xff]
        %v3373 = vld [vmem:[%s3214 + $0x168] sm:$0xff]
        %v3374 = vld [vmem:[%s3214 + $0x170] sm:$0xff]
        %v3375 = vld [vmem:[%s3214 + $0x1] sm:$0xff]
        %v3376 = vld [vmem:[%s3214 + $0x9] sm:$0xff]
        %v3377 = vld [vmem:[%s3214 + $0x19] sm:$0xff]
        %v3378 = vld [vmem:[%s3214 + $0x21] sm:$0xff]
        %v3379 = vld [vmem:[%s3214 + $0x31] sm:$0xff]
        %v3380 = vld [vmem:[%s3214 + $0x39] sm:$0xff]
        %v3381 = vld [vmem:[%s3214 + $0x49] sm:$0xff]
        %v3382 = vld [vmem:[%s3214 + $0x51] sm:$0xff]
        %v3383 = vld [vmem:[%s3214 + $0x61] sm:$0xff]
        %v3384 = vld [vmem:[%s3214 + $0x69] sm:$0xff]
        %v3385 = vld [vmem:[%s3214 + $0x79] sm:$0xff]
        %v3386 = vld [vmem:[%s3214 + $0x81] sm:$0xff]
        %v3387 = vld [vmem:[%s3214 + $0x91] sm:$0xff]
        %v3388 = vld [vmem:[%s3214 + $0x99] sm:$0xff]
        %v3389 = vld [vmem:[%s3214 + $0xa9] sm:$0xff]
        %v3390 = vld [vmem:[%s3214 + $0xb1] sm:$0xff]
        %v3391 = vld [vmem:[%s3214 + $0xc1] sm:$0xff]
        %v3392 = vld [vmem:[%s3214 + $0xc9] sm:$0xff]
        %v3393 = vld [vmem:[%s3214 + $0xd9] sm:$0xff]
        %v3394 = vld [vmem:[%s3214 + $0xe1] sm:$0xff]
        %v3395 = vld [vmem:[%s3214 + $0xf1] sm:$0xff]
        %v3396 = vld [vmem:[%s3214 + $0xf9] sm:$0xff]
        %v3397 = vld [vmem:[%s3214 + $0x109] sm:$0xff]
        %v3398 = vld [vmem:[%s3214 + $0x111] sm:$0xff]
        %v3399 = vld [vmem:[%s3214 + $0x121] sm:$0xff]
        %v3400 = vld [vmem:[%s3214 + $0x129] sm:$0xff]
        %v3401 = vld [vmem:[%s3214 + $0x139] sm:$0xff]
        %v3402 = vld [vmem:[%s3214 + $0x141] sm:$0xff]
        %v3403 = vld [vmem:[%s3214 + $0x151] sm:$0xff]
        %v3404 = vld [vmem:[%s3214 + $0x159] sm:$0xff]
        %v3405 = vld [vmem:[%s3214 + $0x169] sm:$0xff]
        %v3406 = vld [vmem:[%s3214 + $0x171] sm:$0xff]
        %v3407 = vld [vmem:[%s3214 + $0x2] sm:$0xff]
        %v3408 = vld [vmem:[%s3214 + $0xa] sm:$0xff]
        %v3409 = vld [vmem:[%s3214 + $0x1a] sm:$0xff]
        %v3410 = vld [vmem:[%s3214 + $0x22] sm:$0xff]
        %v3411 = vld [vmem:[%s3214 + $0x32] sm:$0xff]
        %v3412 = vld [vmem:[%s3214 + $0x3a] sm:$0xff]
        %v3413 = vld [vmem:[%s3214 + $0x4a] sm:$0xff]
        %v3414 = vld [vmem:[%s3214 + $0x52] sm:$0xff]
        %v3415 = vld [vmem:[%s3214 + $0x62] sm:$0xff]
        %v3416 = vld [vmem:[%s3214 + $0x6a] sm:$0xff]
        %v3417 = vld [vmem:[%s3214 + $0x7a] sm:$0xff]
        %v3418 = vld [vmem:[%s3214 + $0x82] sm:$0xff]
        %v3419 = vld [vmem:[%s3214 + $0x92] sm:$0xff]
        %v3420 = vld [vmem:[%s3214 + $0x9a] sm:$0xff]
        %v3421 = vld [vmem:[%s3214 + $0xaa] sm:$0xff]
        %v3422 = vld [vmem:[%s3214 + $0xb2] sm:$0xff]
        %v3423 = vld [vmem:[%s3214 + $0xc2] sm:$0xff]
        %v3424 = vld [vmem:[%s3214 + $0xca] sm:$0xff]
        %v3425 = vld [vmem:[%s3214 + $0xda] sm:$0xff]
        %v3426 = vld [vmem:[%s3214 + $0xe2] sm:$0xff]
        %v3427 = vld [vmem:[%s3214 + $0xf2] sm:$0xff]
        %v3428 = vld [vmem:[%s3214 + $0xfa] sm:$0xff]
        %v3429 = vld [vmem:[%s3214 + $0x10a] sm:$0xff]
        %v3430 = vld [vmem:[%s3214 + $0x112] sm:$0xff]
        %v3431 = vld [vmem:[%s3214 + $0x122] sm:$0xff]
        %v3432 = vld [vmem:[%s3214 + $0x12a] sm:$0xff]
        %v3433 = vld [vmem:[%s3214 + $0x13a] sm:$0xff]
        %v3434 = vld [vmem:[%s3214 + $0x142] sm:$0xff]
        %v3435 = vld [vmem:[%s3214 + $0x152] sm:$0xff]
        %v3436 = vld [vmem:[%s3214 + $0x15a] sm:$0xff]
        %v3437 = vld [vmem:[%s3214 + $0x16a] sm:$0xff]
        %v3438 = vld [vmem:[%s3214 + $0x172] sm:$0xff]
        %s3439 = scalar_lea.vmem [#allocation3], 48
        %v3440 = vld [vmem:[%s3439] sm:$0xff]
        %v3441 = vld [vmem:[%s3439 + $0x8] sm:$0xff]
        %v3442 = vld [vmem:[%s3439 + $0x18] sm:$0xff]
        %v3443 = vld [vmem:[%s3439 + $0x20] sm:$0xff]
        %v3444 = vld [vmem:[%s3439 + $0x30] sm:$0xff]
        %v3445 = vld [vmem:[%s3439 + $0x38] sm:$0xff]
        %v3446 = vld [vmem:[%s3439 + $0x48] sm:$0xff]
        %v3447 = vld [vmem:[%s3439 + $0x50] sm:$0xff]
        %v3448 = vld [vmem:[%s3439 + $0x60] sm:$0xff]
        %v3449 = vld [vmem:[%s3439 + $0x68] sm:$0xff]
        %v3450 = vld [vmem:[%s3439 + $0x78] sm:$0xff]
        %v3451 = vld [vmem:[%s3439 + $0x80] sm:$0xff]
        %v3452 = vld [vmem:[%s3439 + $0x90] sm:$0xff]
        %v3453 = vld [vmem:[%s3439 + $0x98] sm:$0xff]
        %v3454 = vld [vmem:[%s3439 + $0xa8] sm:$0xff]
        %v3455 = vld [vmem:[%s3439 + $0xb0] sm:$0xff]
        %v3456 = vld [vmem:[%s3439 + $0xc0] sm:$0xff]
        %v3457 = vld [vmem:[%s3439 + $0xc8] sm:$0xff]
        %v3458 = vld [vmem:[%s3439 + $0xd8] sm:$0xff]
        %v3459 = vld [vmem:[%s3439 + $0xe0] sm:$0xff]
        %v3460 = vld [vmem:[%s3439 + $0xf0] sm:$0xff]
        %v3461 = vld [vmem:[%s3439 + $0xf8] sm:$0xff]
        %v3462 = vld [vmem:[%s3439 + $0x108] sm:$0xff]
        %v3463 = vld [vmem:[%s3439 + $0x110] sm:$0xff]
        %v3464 = vld [vmem:[%s3439 + $0x120] sm:$0xff]
        %v3465 = vld [vmem:[%s3439 + $0x128] sm:$0xff]
        %v3466 = vld [vmem:[%s3439 + $0x138] sm:$0xff]
        %v3467 = vld [vmem:[%s3439 + $0x140] sm:$0xff]
        %v3468 = vld [vmem:[%s3439 + $0x150] sm:$0xff]
        %v3469 = vld [vmem:[%s3439 + $0x158] sm:$0xff]
        %v3470 = vld [vmem:[%s3439 + $0x168] sm:$0xff]
        %v3471 = vld [vmem:[%s3439 + $0x170] sm:$0xff]
        %v3472 = vld [vmem:[%s3439 + $0x1] sm:$0xff]
        %v3473 = vld [vmem:[%s3439 + $0x9] sm:$0xff]
        %v3474 = vld [vmem:[%s3439 + $0x19] sm:$0xff]
        %v3475 = vld [vmem:[%s3439 + $0x21] sm:$0xff]
        %v3476 = vld [vmem:[%s3439 + $0x31] sm:$0xff]
        %v3477 = vld [vmem:[%s3439 + $0x39] sm:$0xff]
        %v3478 = vld [vmem:[%s3439 + $0x49] sm:$0xff]
        %v3479 = vld [vmem:[%s3439 + $0x51] sm:$0xff]
        %v3480 = vld [vmem:[%s3439 + $0x61] sm:$0xff]
        %v3481 = vld [vmem:[%s3439 + $0x69] sm:$0xff]
        %v3482 = vld [vmem:[%s3439 + $0x79] sm:$0xff]
        %v3483 = vld [vmem:[%s3439 + $0x81] sm:$0xff]
        %v3484 = vld [vmem:[%s3439 + $0x91] sm:$0xff]
        %v3485 = vld [vmem:[%s3439 + $0x99] sm:$0xff]
        %v3486 = vld [vmem:[%s3439 + $0xa9] sm:$0xff]
        %v3487 = vld [vmem:[%s3439 + $0xb1] sm:$0xff]
        %v3488 = vld [vmem:[%s3439 + $0xc1] sm:$0xff]
        %v3489 = vld [vmem:[%s3439 + $0xc9] sm:$0xff]
        %v3490 = vld [vmem:[%s3439 + $0xd9] sm:$0xff]
        %v3491 = vld [vmem:[%s3439 + $0xe1] sm:$0xff]
        %v3492 = vld [vmem:[%s3439 + $0xf1] sm:$0xff]
        %v3493 = vld [vmem:[%s3439 + $0xf9] sm:$0xff]
        %v3494 = vld [vmem:[%s3439 + $0x109] sm:$0xff]
        %v3495 = vld [vmem:[%s3439 + $0x111] sm:$0xff]
        %v3496 = vld [vmem:[%s3439 + $0x121] sm:$0xff]
        %v3497 = vld [vmem:[%s3439 + $0x129] sm:$0xff]
        %v3498 = vld [vmem:[%s3439 + $0x139] sm:$0xff]
        %v3499 = vld [vmem:[%s3439 + $0x141] sm:$0xff]
        %v3500 = vld [vmem:[%s3439 + $0x151] sm:$0xff]
        %v3501 = vld [vmem:[%s3439 + $0x159] sm:$0xff]
        %v3502 = vld [vmem:[%s3439 + $0x169] sm:$0xff]
        %v3503 = vld [vmem:[%s3439 + $0x171] sm:$0xff]
        %v3504 = vld [vmem:[%s3439 + $0x2] sm:$0xff]
        %v3505 = vld [vmem:[%s3439 + $0xa] sm:$0xff]
        %v3506 = vld [vmem:[%s3439 + $0x1a] sm:$0xff]
        %v3507 = vld [vmem:[%s3439 + $0x22] sm:$0xff]
        %v3508 = vld [vmem:[%s3439 + $0x32] sm:$0xff]
        %v3509 = vld [vmem:[%s3439 + $0x3a] sm:$0xff]
        %v3510 = vld [vmem:[%s3439 + $0x4a] sm:$0xff]
        %v3511 = vld [vmem:[%s3439 + $0x52] sm:$0xff]
        %v3512 = vld [vmem:[%s3439 + $0x62] sm:$0xff]
        %v3513 = vld [vmem:[%s3439 + $0x6a] sm:$0xff]
        %v3514 = vld [vmem:[%s3439 + $0x7a] sm:$0xff]
        %v3515 = vld [vmem:[%s3439 + $0x82] sm:$0xff]
        %v3516 = vld [vmem:[%s3439 + $0x92] sm:$0xff]
        %v3517 = vld [vmem:[%s3439 + $0x9a] sm:$0xff]
        %v3518 = vld [vmem:[%s3439 + $0xaa] sm:$0xff]
        %v3519 = vld [vmem:[%s3439 + $0xb2] sm:$0xff]
        %v3520 = vld [vmem:[%s3439 + $0xc2] sm:$0xff]
        %v3521 = vld [vmem:[%s3439 + $0xca] sm:$0xff]
        %v3522 = vld [vmem:[%s3439 + $0xda] sm:$0xff]
        %v3523 = vld [vmem:[%s3439 + $0xe2] sm:$0xff]
        %v3524 = vld [vmem:[%s3439 + $0xf2] sm:$0xff]
        %v3525 = vld [vmem:[%s3439 + $0xfa] sm:$0xff]
        %v3526 = vld [vmem:[%s3439 + $0x10a] sm:$0xff]
        %v3527 = vld [vmem:[%s3439 + $0x112] sm:$0xff]
        %v3528 = vld [vmem:[%s3439 + $0x122] sm:$0xff]
        %v3529 = vld [vmem:[%s3439 + $0x12a] sm:$0xff]
        %v3530 = vld [vmem:[%s3439 + $0x13a] sm:$0xff]
        %v3531 = vld [vmem:[%s3439 + $0x142] sm:$0xff]
        %v3532 = vld [vmem:[%s3439 + $0x152] sm:$0xff]
        %v3533 = vld [vmem:[%s3439 + $0x15a] sm:$0xff]
        %v3534 = vld [vmem:[%s3439 + $0x16a] sm:$0xff]
        %v3535 = vld [vmem:[%s3439 + $0x172] sm:$0xff]
        %3568 = vrot.lane.b32.xlu0 %v3279, 4
        %v3569 = vpop.permute.xlu0 %3568
        %3570 = vrot.lane.b32.xlu0 %v3280, 4
        %v3571 = vpop.permute.xlu0 %3570
        %3572 = vrot.lane.b32.xlu0 %v3281, 4
        %v3573 = vpop.permute.xlu0 %3572
        %3574 = vrot.lane.b32.xlu0 %v3282, 4
        %v3575 = vpop.permute.xlu0 %3574
        %3576 = vrot.lane.b32.xlu0 %v3283, 4
        %v3577 = vpop.permute.xlu0 %3576
        %3578 = vrot.lane.b32.xlu0 %v3284, 4
        %v3579 = vpop.permute.xlu0 %3578
        %3580 = vrot.lane.b32.xlu0 %v3285, 4
        %v3581 = vpop.permute.xlu0 %3580
        %3582 = vrot.lane.b32.xlu0 %v3286, 4
        %v3583 = vpop.permute.xlu0 %3582
        %3584 = vrot.lane.b32.xlu0 %v3287, 4
        %v3585 = vpop.permute.xlu0 %3584
        %3586 = vrot.lane.b32.xlu0 %v3288, 4
        %v3587 = vpop.permute.xlu0 %3586
        %3588 = vrot.lane.b32.xlu0 %v3289, 4
        %v3589 = vpop.permute.xlu0 %3588
        %3590 = vrot.lane.b32.xlu0 %v3290, 4
        %v3591 = vpop.permute.xlu0 %3590
        %3592 = vrot.lane.b32.xlu0 %v3291, 4
        %v3593 = vpop.permute.xlu0 %3592
        %3594 = vrot.lane.b32.xlu0 %v3292, 4
        %v3595 = vpop.permute.xlu0 %3594
        %3596 = vrot.lane.b32.xlu0 %v3293, 4
        %v3597 = vpop.permute.xlu0 %3596
        %3598 = vrot.lane.b32.xlu0 %v3294, 4
        %v3599 = vpop.permute.xlu0 %3598
        %3600 = vrot.lane.b32.xlu0 %v3295, 4
        %v3601 = vpop.permute.xlu0 %3600
        %3602 = vrot.lane.b32.xlu0 %v3296, 4
        %v3603 = vpop.permute.xlu0 %3602
        %3604 = vrot.lane.b32.xlu0 %v3297, 4
        %v3605 = vpop.permute.xlu0 %3604
        %3606 = vrot.lane.b32.xlu0 %v3298, 4
        %v3607 = vpop.permute.xlu0 %3606
        %3608 = vrot.lane.b32.xlu0 %v3299, 4
        %v3609 = vpop.permute.xlu0 %3608
        %3610 = vrot.lane.b32.xlu0 %v3300, 4
        %v3611 = vpop.permute.xlu0 %3610
        %3612 = vrot.lane.b32.xlu0 %v3301, 4
        %v3613 = vpop.permute.xlu0 %3612
        %3614 = vrot.lane.b32.xlu0 %v3302, 4
        %v3615 = vpop.permute.xlu0 %3614
        %3616 = vrot.lane.b32.xlu0 %v3303, 4
        %v3617 = vpop.permute.xlu0 %3616
        %3618 = vrot.lane.b32.xlu0 %v3304, 4
        %v3619 = vpop.permute.xlu0 %3618
        %3620 = vrot.lane.b32.xlu0 %v3305, 4
        %v3621 = vpop.permute.xlu0 %3620
        %3622 = vrot.lane.b32.xlu0 %v3306, 4
        %v3623 = vpop.permute.xlu0 %3622
        %3624 = vrot.lane.b32.xlu0 %v3307, 4
        %v3625 = vpop.permute.xlu0 %3624
        %3626 = vrot.lane.b32.xlu0 %v3308, 4
        %v3627 = vpop.permute.xlu0 %3626
        %3628 = vrot.lane.b32.xlu0 %v3309, 4
        %v3629 = vpop.permute.xlu0 %3628
        %3630 = vrot.lane.b32.xlu0 %v3310, 4
        %v3631 = vpop.permute.xlu0 %3630
        %3696 = vrot.lane.b32.xlu0 %v3311, 8
        %v3697 = vpop.permute.xlu0 %3696
        %3698 = vrot.lane.b32.xlu0 %v3312, 8
        %v3699 = vpop.permute.xlu0 %3698
        %3700 = vrot.lane.b32.xlu0 %v3313, 8
        %v3701 = vpop.permute.xlu0 %3700
        %3702 = vrot.lane.b32.xlu0 %v3314, 8
        %v3703 = vpop.permute.xlu0 %3702
        %3704 = vrot.lane.b32.xlu0 %v3315, 8
        %v3705 = vpop.permute.xlu0 %3704
        %3706 = vrot.lane.b32.xlu0 %v3316, 8
        %v3707 = vpop.permute.xlu0 %3706
        %3708 = vrot.lane.b32.xlu0 %v3317, 8
        %v3709 = vpop.permute.xlu0 %3708
        %3710 = vrot.lane.b32.xlu0 %v3318, 8
        %v3711 = vpop.permute.xlu0 %3710
        %3712 = vrot.lane.b32.xlu0 %v3319, 8
        %v3713 = vpop.permute.xlu0 %3712
        %3714 = vrot.lane.b32.xlu0 %v3320, 8
        %v3715 = vpop.permute.xlu0 %3714
        %3716 = vrot.lane.b32.xlu0 %v3321, 8
        %v3717 = vpop.permute.xlu0 %3716
        %3718 = vrot.lane.b32.xlu0 %v3322, 8
        %v3719 = vpop.permute.xlu0 %3718
        %3720 = vrot.lane.b32.xlu0 %v3323, 8
        %v3721 = vpop.permute.xlu0 %3720
        %3722 = vrot.lane.b32.xlu0 %v3324, 8
        %v3723 = vpop.permute.xlu0 %3722
        %3724 = vrot.lane.b32.xlu0 %v3325, 8
        %v3725 = vpop.permute.xlu0 %3724
        %3726 = vrot.lane.b32.xlu0 %v3326, 8
        %v3727 = vpop.permute.xlu0 %3726
        %3728 = vrot.lane.b32.xlu0 %v3327, 8
        %v3729 = vpop.permute.xlu0 %3728
        %3730 = vrot.lane.b32.xlu0 %v3328, 8
        %v3731 = vpop.permute.xlu0 %3730
        %3732 = vrot.lane.b32.xlu0 %v3329, 8
        %v3733 = vpop.permute.xlu0 %3732
        %3734 = vrot.lane.b32.xlu0 %v3330, 8
        %v3735 = vpop.permute.xlu0 %3734
        %3736 = vrot.lane.b32.xlu0 %v3331, 8
        %v3737 = vpop.permute.xlu0 %3736
        %3738 = vrot.lane.b32.xlu0 %v3332, 8
        %v3739 = vpop.permute.xlu0 %3738
        %3740 = vrot.lane.b32.xlu0 %v3333, 8
        %v3741 = vpop.permute.xlu0 %3740
        %3742 = vrot.lane.b32.xlu0 %v3334, 8
        %v3743 = vpop.permute.xlu0 %3742
        %3744 = vrot.lane.b32.xlu0 %v3335, 8
        %v3745 = vpop.permute.xlu0 %3744
        %3746 = vrot.lane.b32.xlu0 %v3336, 8
        %v3747 = vpop.permute.xlu0 %3746
        %3748 = vrot.lane.b32.xlu0 %v3337, 8
        %v3749 = vpop.permute.xlu0 %3748
        %3750 = vrot.lane.b32.xlu0 %v3338, 8
        %v3751 = vpop.permute.xlu0 %3750
        %3752 = vrot.lane.b32.xlu0 %v3339, 8
        %v3753 = vpop.permute.xlu0 %3752
        %3754 = vrot.lane.b32.xlu0 %v3340, 8
        %v3755 = vpop.permute.xlu0 %3754
        %3756 = vrot.lane.b32.xlu0 %v3341, 8
        %v3757 = vpop.permute.xlu0 %3756
        %3758 = vrot.lane.b32.xlu0 %v3342, 8
        %v3759 = vpop.permute.xlu0 %3758
        %3824 = vrot.lane.b32.xlu0 %v3343, 12
        %v3825 = vpop.permute.xlu0 %3824
        %3826 = vrot.lane.b32.xlu0 %v3344, 12
        %v3827 = vpop.permute.xlu0 %3826
        %3828 = vrot.lane.b32.xlu0 %v3345, 12
        %v3829 = vpop.permute.xlu0 %3828
        %3830 = vrot.lane.b32.xlu0 %v3346, 12
        %v3831 = vpop.permute.xlu0 %3830
        %3832 = vrot.lane.b32.xlu0 %v3347, 12
        %v3833 = vpop.permute.xlu0 %3832
        %3834 = vrot.lane.b32.xlu0 %v3348, 12
        %v3835 = vpop.permute.xlu0 %3834
        %3836 = vrot.lane.b32.xlu0 %v3349, 12
        %v3837 = vpop.permute.xlu0 %3836
        %3838 = vrot.lane.b32.xlu0 %v3350, 12
        %v3839 = vpop.permute.xlu0 %3838
        %3840 = vrot.lane.b32.xlu0 %v3351, 12
        %v3841 = vpop.permute.xlu0 %3840
        %3842 = vrot.lane.b32.xlu0 %v3352, 12
        %v3843 = vpop.permute.xlu0 %3842
        %3844 = vrot.lane.b32.xlu0 %v3353, 12
        %v3845 = vpop.permute.xlu0 %3844
        %3846 = vrot.lane.b32.xlu0 %v3354, 12
        %v3847 = vpop.permute.xlu0 %3846
        %3848 = vrot.lane.b32.xlu0 %v3355, 12
        %v3849 = vpop.permute.xlu0 %3848
        %3850 = vrot.lane.b32.xlu0 %v3356, 12
        %v3851 = vpop.permute.xlu0 %3850
        %3852 = vrot.lane.b32.xlu0 %v3357, 12
        %v3853 = vpop.permute.xlu0 %3852
        %3854 = vrot.lane.b32.xlu0 %v3358, 12
        %v3855 = vpop.permute.xlu0 %3854
        %3856 = vrot.lane.b32.xlu0 %v3359, 12
        %v3857 = vpop.permute.xlu0 %3856
        %3858 = vrot.lane.b32.xlu0 %v3360, 12
        %v3859 = vpop.permute.xlu0 %3858
        %3860 = vrot.lane.b32.xlu0 %v3361, 12
        %v3861 = vpop.permute.xlu0 %3860
        %3862 = vrot.lane.b32.xlu0 %v3362, 12
        %v3863 = vpop.permute.xlu0 %3862
        %3864 = vrot.lane.b32.xlu0 %v3363, 12
        %v3865 = vpop.permute.xlu0 %3864
        %3866 = vrot.lane.b32.xlu0 %v3364, 12
        %v3867 = vpop.permute.xlu0 %3866
        %3868 = vrot.lane.b32.xlu0 %v3365, 12
        %v3869 = vpop.permute.xlu0 %3868
        %3870 = vrot.lane.b32.xlu0 %v3366, 12
        %v3871 = vpop.permute.xlu0 %3870
        %3872 = vrot.lane.b32.xlu0 %v3367, 12
        %v3873 = vpop.permute.xlu0 %3872
        %3874 = vrot.lane.b32.xlu0 %v3368, 12
        %v3875 = vpop.permute.xlu0 %3874
        %3876 = vrot.lane.b32.xlu0 %v3369, 12
        %v3877 = vpop.permute.xlu0 %3876
        %3878 = vrot.lane.b32.xlu0 %v3370, 12
        %v3879 = vpop.permute.xlu0 %3878
        %3880 = vrot.lane.b32.xlu0 %v3371, 12
        %v3881 = vpop.permute.xlu0 %3880
        %3882 = vrot.lane.b32.xlu0 %v3372, 12
        %v3883 = vpop.permute.xlu0 %3882
        %3884 = vrot.lane.b32.xlu0 %v3373, 12
        %v3885 = vpop.permute.xlu0 %3884
        %3886 = vrot.lane.b32.xlu0 %v3374, 12
        %v3887 = vpop.permute.xlu0 %3886
        %3952 = vrot.lane.b32.xlu0 %v3375, 16
        %v3953 = vpop.permute.xlu0 %3952
        %3954 = vrot.lane.b32.xlu0 %v3376, 16
        %v3955 = vpop.permute.xlu0 %3954
        %3956 = vrot.lane.b32.xlu0 %v3377, 16
        %v3957 = vpop.permute.xlu0 %3956
        %3958 = vrot.lane.b32.xlu0 %v3378, 16
        %v3959 = vpop.permute.xlu0 %3958
        %3960 = vrot.lane.b32.xlu0 %v3379, 16
        %v3961 = vpop.permute.xlu0 %3960
        %3962 = vrot.lane.b32.xlu0 %v3380, 16
        %v3963 = vpop.permute.xlu0 %3962
        %3964 = vrot.lane.b32.xlu0 %v3381, 16
        %v3965 = vpop.permute.xlu0 %3964
        %3966 = vrot.lane.b32.xlu0 %v3382, 16
        %v3967 = vpop.permute.xlu0 %3966
        %3968 = vrot.lane.b32.xlu0 %v3383, 16
        %v3969 = vpop.permute.xlu0 %3968
        %3970 = vrot.lane.b32.xlu0 %v3384, 16
        %v3971 = vpop.permute.xlu0 %3970
        %3972 = vrot.lane.b32.xlu0 %v3385, 16
        %v3973 = vpop.permute.xlu0 %3972
        %3974 = vrot.lane.b32.xlu0 %v3386, 16
        %v3975 = vpop.permute.xlu0 %3974
        %3976 = vrot.lane.b32.xlu0 %v3387, 16
        %v3977 = vpop.permute.xlu0 %3976
        %3978 = vrot.lane.b32.xlu0 %v3388, 16
        %v3979 = vpop.permute.xlu0 %3978
        %3980 = vrot.lane.b32.xlu0 %v3389, 16
        %v3981 = vpop.permute.xlu0 %3980
        %3982 = vrot.lane.b32.xlu0 %v3390, 16
        %v3983 = vpop.permute.xlu0 %3982
        %3984 = vrot.lane.b32.xlu0 %v3391, 16
        %v3985 = vpop.permute.xlu0 %3984
        %3986 = vrot.lane.b32.xlu0 %v3392, 16
        %v3987 = vpop.permute.xlu0 %3986
        %3988 = vrot.lane.b32.xlu0 %v3393, 16
        %v3989 = vpop.permute.xlu0 %3988
        %3990 = vrot.lane.b32.xlu0 %v3394, 16
        %v3991 = vpop.permute.xlu0 %3990
        %3992 = vrot.lane.b32.xlu0 %v3395, 16
        %v3993 = vpop.permute.xlu0 %3992
        %3994 = vrot.lane.b32.xlu0 %v3396, 16
        %v3995 = vpop.permute.xlu0 %3994
        %3996 = vrot.lane.b32.xlu0 %v3397, 16
        %v3997 = vpop.permute.xlu0 %3996
        %3998 = vrot.lane.b32.xlu0 %v3398, 16
        %v3999 = vpop.permute.xlu0 %3998
        %4000 = vrot.lane.b32.xlu0 %v3399, 16
        %v4001 = vpop.permute.xlu0 %4000
        %4002 = vrot.lane.b32.xlu0 %v3400, 16
        %v4003 = vpop.permute.xlu0 %4002
        %4004 = vrot.lane.b32.xlu0 %v3401, 16
        %v4005 = vpop.permute.xlu0 %4004
        %4006 = vrot.lane.b32.xlu0 %v3402, 16
        %v4007 = vpop.permute.xlu0 %4006
        %4008 = vrot.lane.b32.xlu0 %v3403, 16
        %v4009 = vpop.permute.xlu0 %4008
        %4010 = vrot.lane.b32.xlu0 %v3404, 16
        %v4011 = vpop.permute.xlu0 %4010
        %4012 = vrot.lane.b32.xlu0 %v3405, 16
        %v4013 = vpop.permute.xlu0 %4012
        %4014 = vrot.lane.b32.xlu0 %v3406, 16
        %v4015 = vpop.permute.xlu0 %4014
        %4080 = vrot.lane.b32.xlu0 %v3407, 20
        %v4081 = vpop.permute.xlu0 %4080
        %4082 = vrot.lane.b32.xlu0 %v3408, 20
        %v4083 = vpop.permute.xlu0 %4082
        %4084 = vrot.lane.b32.xlu0 %v3409, 20
        %v4085 = vpop.permute.xlu0 %4084
        %4086 = vrot.lane.b32.xlu0 %v3410, 20
        %v4087 = vpop.permute.xlu0 %4086
        %4088 = vrot.lane.b32.xlu0 %v3411, 20
        %v4089 = vpop.permute.xlu0 %4088
        %4090 = vrot.lane.b32.xlu0 %v3412, 20
        %v4091 = vpop.permute.xlu0 %4090
        %4092 = vrot.lane.b32.xlu0 %v3413, 20
        %v4093 = vpop.permute.xlu0 %4092
        %4094 = vrot.lane.b32.xlu0 %v3414, 20
        %v4095 = vpop.permute.xlu0 %4094
        %4096 = vrot.lane.b32.xlu0 %v3415, 20
        %v4097 = vpop.permute.xlu0 %4096
        %4098 = vrot.lane.b32.xlu0 %v3416, 20
        %v4099 = vpop.permute.xlu0 %4098
        %4100 = vrot.lane.b32.xlu0 %v3417, 20
        %v4101 = vpop.permute.xlu0 %4100
        %4102 = vrot.lane.b32.xlu0 %v3418, 20
        %v4103 = vpop.permute.xlu0 %4102
        %4104 = vrot.lane.b32.xlu0 %v3419, 20
        %v4105 = vpop.permute.xlu0 %4104
        %4106 = vrot.lane.b32.xlu0 %v3420, 20
        %v4107 = vpop.permute.xlu0 %4106
        %4108 = vrot.lane.b32.xlu0 %v3421, 20
        %v4109 = vpop.permute.xlu0 %4108
        %4110 = vrot.lane.b32.xlu0 %v3422, 20
        %v4111 = vpop.permute.xlu0 %4110
        %4112 = vrot.lane.b32.xlu0 %v3423, 20
        %v4113 = vpop.permute.xlu0 %4112
        %4114 = vrot.lane.b32.xlu0 %v3424, 20
        %v4115 = vpop.permute.xlu0 %4114
        %4116 = vrot.lane.b32.xlu0 %v3425, 20
        %v4117 = vpop.permute.xlu0 %4116
        %4118 = vrot.lane.b32.xlu0 %v3426, 20
        %v4119 = vpop.permute.xlu0 %4118
        %4120 = vrot.lane.b32.xlu0 %v3427, 20
        %v4121 = vpop.permute.xlu0 %4120
        %4122 = vrot.lane.b32.xlu0 %v3428, 20
        %v4123 = vpop.permute.xlu0 %4122
        %4124 = vrot.lane.b32.xlu0 %v3429, 20
        %v4125 = vpop.permute.xlu0 %4124
        %4126 = vrot.lane.b32.xlu0 %v3430, 20
        %v4127 = vpop.permute.xlu0 %4126
        %4128 = vrot.lane.b32.xlu0 %v3431, 20
        %v4129 = vpop.permute.xlu0 %4128
        %4130 = vrot.lane.b32.xlu0 %v3432, 20
        %v4131 = vpop.permute.xlu0 %4130
        %4132 = vrot.lane.b32.xlu0 %v3433, 20
        %v4133 = vpop.permute.xlu0 %4132
        %4134 = vrot.lane.b32.xlu0 %v3434, 20
        %v4135 = vpop.permute.xlu0 %4134
        %4136 = vrot.lane.b32.xlu0 %v3435, 20
        %v4137 = vpop.permute.xlu0 %4136
        %4138 = vrot.lane.b32.xlu0 %v3436, 20
        %v4139 = vpop.permute.xlu0 %4138
        %4140 = vrot.lane.b32.xlu0 %v3437, 20
        %v4141 = vpop.permute.xlu0 %4140
        %4142 = vrot.lane.b32.xlu0 %v3438, 20
        %v4143 = vpop.permute.xlu0 %4142
        %4208 = vrot.lane.b32.xlu0 %v3440, 24
        %v4209 = vpop.permute.xlu0 %4208
        %4210 = vrot.lane.b32.xlu0 %v3441, 24
        %v4211 = vpop.permute.xlu0 %4210
        %4212 = vrot.lane.b32.xlu0 %v3442, 24
        %v4213 = vpop.permute.xlu0 %4212
        %4214 = vrot.lane.b32.xlu0 %v3443, 24
        %v4215 = vpop.permute.xlu0 %4214
        %4216 = vrot.lane.b32.xlu0 %v3444, 24
        %v4217 = vpop.permute.xlu0 %4216
        %4218 = vrot.lane.b32.xlu0 %v3445, 24
        %v4219 = vpop.permute.xlu0 %4218
        %4220 = vrot.lane.b32.xlu0 %v3446, 24
        %v4221 = vpop.permute.xlu0 %4220
        %4222 = vrot.lane.b32.xlu0 %v3447, 24
        %v4223 = vpop.permute.xlu0 %4222
        %4224 = vrot.lane.b32.xlu0 %v3448, 24
        %v4225 = vpop.permute.xlu0 %4224
        %4226 = vrot.lane.b32.xlu0 %v3449, 24
        %v4227 = vpop.permute.xlu0 %4226
        %4228 = vrot.lane.b32.xlu0 %v3450, 24
        %v4229 = vpop.permute.xlu0 %4228
        %4230 = vrot.lane.b32.xlu0 %v3451, 24
        %v4231 = vpop.permute.xlu0 %4230
        %4232 = vrot.lane.b32.xlu0 %v3452, 24
        %v4233 = vpop.permute.xlu0 %4232
        %4234 = vrot.lane.b32.xlu0 %v3453, 24
        %v4235 = vpop.permute.xlu0 %4234
        %4236 = vrot.lane.b32.xlu0 %v3454, 24
        %v4237 = vpop.permute.xlu0 %4236
        %4238 = vrot.lane.b32.xlu0 %v3455, 24
        %v4239 = vpop.permute.xlu0 %4238
        %4240 = vrot.lane.b32.xlu0 %v3456, 24
        %v4241 = vpop.permute.xlu0 %4240
        %4242 = vrot.lane.b32.xlu0 %v3457, 24
        %v4243 = vpop.permute.xlu0 %4242
        %4244 = vrot.lane.b32.xlu0 %v3458, 24
        %v4245 = vpop.permute.xlu0 %4244
        %4246 = vrot.lane.b32.xlu0 %v3459, 24
        %v4247 = vpop.permute.xlu0 %4246
        %4248 = vrot.lane.b32.xlu0 %v3460, 24
        %v4249 = vpop.permute.xlu0 %4248
        %4250 = vrot.lane.b32.xlu0 %v3461, 24
        %v4251 = vpop.permute.xlu0 %4250
        %4252 = vrot.lane.b32.xlu0 %v3462, 24
        %v4253 = vpop.permute.xlu0 %4252
        %4254 = vrot.lane.b32.xlu0 %v3463, 24
        %v4255 = vpop.permute.xlu0 %4254
        %4256 = vrot.lane.b32.xlu0 %v3464, 24
        %v4257 = vpop.permute.xlu0 %4256
        %4258 = vrot.lane.b32.xlu0 %v3465, 24
        %v4259 = vpop.permute.xlu0 %4258
        %4260 = vrot.lane.b32.xlu0 %v3466, 24
        %v4261 = vpop.permute.xlu0 %4260
        %4262 = vrot.lane.b32.xlu0 %v3467, 24
        %v4263 = vpop.permute.xlu0 %4262
        %4264 = vrot.lane.b32.xlu0 %v3468, 24
        %v4265 = vpop.permute.xlu0 %4264
        %4266 = vrot.lane.b32.xlu0 %v3469, 24
        %v4267 = vpop.permute.xlu0 %4266
        %4268 = vrot.lane.b32.xlu0 %v3470, 24
        %v4269 = vpop.permute.xlu0 %4268
        %4270 = vrot.lane.b32.xlu0 %v3471, 24
        %v4271 = vpop.permute.xlu0 %4270
        %4336 = vrot.lane.b32.xlu0 %v3472, 28
        %v4337 = vpop.permute.xlu0 %4336
        %4338 = vrot.lane.b32.xlu0 %v3473, 28
        %v4339 = vpop.permute.xlu0 %4338
        %4340 = vrot.lane.b32.xlu0 %v3474, 28
        %v4341 = vpop.permute.xlu0 %4340
        %4342 = vrot.lane.b32.xlu0 %v3475, 28
        %v4343 = vpop.permute.xlu0 %4342
        %4344 = vrot.lane.b32.xlu0 %v3476, 28
        %v4345 = vpop.permute.xlu0 %4344
        %4346 = vrot.lane.b32.xlu0 %v3477, 28
        %v4347 = vpop.permute.xlu0 %4346
        %4348 = vrot.lane.b32.xlu0 %v3478, 28
        %v4349 = vpop.permute.xlu0 %4348
        %4350 = vrot.lane.b32.xlu0 %v3479, 28
        %v4351 = vpop.permute.xlu0 %4350
        %4352 = vrot.lane.b32.xlu0 %v3480, 28
        %v4353 = vpop.permute.xlu0 %4352
        %4354 = vrot.lane.b32.xlu0 %v3481, 28
        %v4355 = vpop.permute.xlu0 %4354
        %4356 = vrot.lane.b32.xlu0 %v3482, 28
        %v4357 = vpop.permute.xlu0 %4356
        %4358 = vrot.lane.b32.xlu0 %v3483, 28
        %v4359 = vpop.permute.xlu0 %4358
        %4360 = vrot.lane.b32.xlu0 %v3484, 28
        %v4361 = vpop.permute.xlu0 %4360
        %4362 = vrot.lane.b32.xlu0 %v3485, 28
        %v4363 = vpop.permute.xlu0 %4362
        %4364 = vrot.lane.b32.xlu0 %v3486, 28
        %v4365 = vpop.permute.xlu0 %4364
        %4366 = vrot.lane.b32.xlu0 %v3487, 28
        %v4367 = vpop.permute.xlu0 %4366
        %4368 = vrot.lane.b32.xlu0 %v3488, 28
        %v4369 = vpop.permute.xlu0 %4368
        %4370 = vrot.lane.b32.xlu0 %v3489, 28
        %v4371 = vpop.permute.xlu0 %4370
        %4372 = vrot.lane.b32.xlu0 %v3490, 28
        %v4373 = vpop.permute.xlu0 %4372
        %4374 = vrot.lane.b32.xlu0 %v3491, 28
        %v4375 = vpop.permute.xlu0 %4374
        %4376 = vrot.lane.b32.xlu0 %v3492, 28
        %v4377 = vpop.permute.xlu0 %4376
        %4378 = vrot.lane.b32.xlu0 %v3493, 28
        %v4379 = vpop.permute.xlu0 %4378
        %4380 = vrot.lane.b32.xlu0 %v3494, 28
        %v4381 = vpop.permute.xlu0 %4380
        %4382 = vrot.lane.b32.xlu0 %v3495, 28
        %v4383 = vpop.permute.xlu0 %4382
        %4384 = vrot.lane.b32.xlu0 %v3496, 28
        %v4385 = vpop.permute.xlu0 %4384
        %4386 = vrot.lane.b32.xlu0 %v3497, 28
        %v4387 = vpop.permute.xlu0 %4386
        %4388 = vrot.lane.b32.xlu0 %v3498, 28
        %v4389 = vpop.permute.xlu0 %4388
        %4390 = vrot.lane.b32.xlu0 %v3499, 28
        %v4391 = vpop.permute.xlu0 %4390
        %4392 = vrot.lane.b32.xlu0 %v3500, 28
        %v4393 = vpop.permute.xlu0 %4392
        %4394 = vrot.lane.b32.xlu0 %v3501, 28
        %v4395 = vpop.permute.xlu0 %4394
        %4396 = vrot.lane.b32.xlu0 %v3502, 28
        %v4397 = vpop.permute.xlu0 %4396
        %4398 = vrot.lane.b32.xlu0 %v3503, 28
        %v4399 = vpop.permute.xlu0 %4398
        %4464 = vrot.lane.b32.xlu0 %v3504, 32
        %v4465 = vpop.permute.xlu0 %4464
        %4466 = vrot.lane.b32.xlu0 %v3505, 32
        %v4467 = vpop.permute.xlu0 %4466
        %4468 = vrot.lane.b32.xlu0 %v3506, 32
        %v4469 = vpop.permute.xlu0 %4468
        %4470 = vrot.lane.b32.xlu0 %v3507, 32
        %v4471 = vpop.permute.xlu0 %4470
        %4472 = vrot.lane.b32.xlu0 %v3508, 32
        %v4473 = vpop.permute.xlu0 %4472
        %4474 = vrot.lane.b32.xlu0 %v3509, 32
        %v4475 = vpop.permute.xlu0 %4474
        %4476 = vrot.lane.b32.xlu0 %v3510, 32
        %v4477 = vpop.permute.xlu0 %4476
        %4478 = vrot.lane.b32.xlu0 %v3511, 32
        %v4479 = vpop.permute.xlu0 %4478
        %4480 = vrot.lane.b32.xlu0 %v3512, 32
        %v4481 = vpop.permute.xlu0 %4480
        %4482 = vrot.lane.b32.xlu0 %v3513, 32
        %v4483 = vpop.permute.xlu0 %4482
        %4484 = vrot.lane.b32.xlu0 %v3514, 32
        %v4485 = vpop.permute.xlu0 %4484
        %4486 = vrot.lane.b32.xlu0 %v3515, 32
        %v4487 = vpop.permute.xlu0 %4486
        %4488 = vrot.lane.b32.xlu0 %v3516, 32
        %v4489 = vpop.permute.xlu0 %4488
        %4490 = vrot.lane.b32.xlu0 %v3517, 32
        %v4491 = vpop.permute.xlu0 %4490
        %4492 = vrot.lane.b32.xlu0 %v3518, 32
        %v4493 = vpop.permute.xlu0 %4492
        %4494 = vrot.lane.b32.xlu0 %v3519, 32
        %v4495 = vpop.permute.xlu0 %4494
        %4496 = vrot.lane.b32.xlu0 %v3520, 32
        %v4497 = vpop.permute.xlu0 %4496
        %4498 = vrot.lane.b32.xlu0 %v3521, 32
        %v4499 = vpop.permute.xlu0 %4498
        %4500 = vrot.lane.b32.xlu0 %v3522, 32
        %v4501 = vpop.permute.xlu0 %4500
        %4502 = vrot.lane.b32.xlu0 %v3523, 32
        %v4503 = vpop.permute.xlu0 %4502
        %4504 = vrot.lane.b32.xlu0 %v3524, 32
        %v4505 = vpop.permute.xlu0 %4504
        %4506 = vrot.lane.b32.xlu0 %v3525, 32
        %v4507 = vpop.permute.xlu0 %4506
        %4508 = vrot.lane.b32.xlu0 %v3526, 32
        %v4509 = vpop.permute.xlu0 %4508
        %4510 = vrot.lane.b32.xlu0 %v3527, 32
        %v4511 = vpop.permute.xlu0 %4510
        %4512 = vrot.lane.b32.xlu0 %v3528, 32
        %v4513 = vpop.permute.xlu0 %4512
        %4514 = vrot.lane.b32.xlu0 %v3529, 32
        %v4515 = vpop.permute.xlu0 %4514
        %4516 = vrot.lane.b32.xlu0 %v3530, 32
        %v4517 = vpop.permute.xlu0 %4516
        %4518 = vrot.lane.b32.xlu0 %v3531, 32
        %v4519 = vpop.permute.xlu0 %4518
        %4520 = vrot.lane.b32.xlu0 %v3532, 32
        %v4521 = vpop.permute.xlu0 %4520
        %4522 = vrot.lane.b32.xlu0 %v3533, 32
        %v4523 = vpop.permute.xlu0 %4522
        %4524 = vrot.lane.b32.xlu0 %v3534, 32
        %v4525 = vpop.permute.xlu0 %4524
        %4526 = vrot.lane.b32.xlu0 %v3535, 32
        %v4527 = vpop.permute.xlu0 %4526
        %v4560 = vsel %vm381, %v3247, %v3569
        %v4561 = vsel %vm381, %v3248, %v3571
        %v4562 = vsel %vm381, %v3249, %v3573
        %v4563 = vsel %vm381, %v3250, %v3575
        %v4564 = vsel %vm381, %v3251, %v3577
        %v4565 = vsel %vm381, %v3252, %v3579
        %v4566 = vsel %vm381, %v3253, %v3581
        %v4567 = vsel %vm381, %v3254, %v3583
        %v4568 = vsel %vm381, %v3255, %v3585
        %v4569 = vsel %vm381, %v3256, %v3587
        %v4570 = vsel %vm381, %v3257, %v3589
        %v4571 = vsel %vm381, %v3258, %v3591
        %v4572 = vsel %vm381, %v3259, %v3593
        %v4573 = vsel %vm381, %v3260, %v3595
        %v4574 = vsel %vm381, %v3261, %v3597
        %v4575 = vsel %vm381, %v3262, %v3599
        %v4576 = vsel %vm381, %v3263, %v3601
        %v4577 = vsel %vm381, %v3264, %v3603
        %v4578 = vsel %vm381, %v3265, %v3605
        %v4579 = vsel %vm381, %v3266, %v3607
        %v4580 = vsel %vm381, %v3267, %v3609
        %v4581 = vsel %vm381, %v3268, %v3611
        %v4582 = vsel %vm381, %v3269, %v3613
        %v4583 = vsel %vm381, %v3270, %v3615
        %v4584 = vsel %vm381, %v3271, %v3617
        %v4585 = vsel %vm381, %v3272, %v3619
        %v4586 = vsel %vm381, %v3273, %v3621
        %v4587 = vsel %vm381, %v3274, %v3623
        %v4588 = vsel %vm381, %v3275, %v3625
        %v4589 = vsel %vm381, %v3276, %v3627
        %v4590 = vsel %vm381, %v3277, %v3629
        %v4591 = vsel %vm381, %v3278, %v3631
        %vm4592 = vcmask 64512
        %v4593 = vsel %vm4592, %v4560, %v3697
        %v4594 = vsel %vm4592, %v4561, %v3699
        %v4595 = vsel %vm4592, %v4562, %v3701
        %v4596 = vsel %vm4592, %v4563, %v3703
        %v4597 = vsel %vm4592, %v4564, %v3705
        %v4598 = vsel %vm4592, %v4565, %v3707
        %v4599 = vsel %vm4592, %v4566, %v3709
        %v4600 = vsel %vm4592, %v4567, %v3711
        %v4601 = vsel %vm4592, %v4568, %v3713
        %v4602 = vsel %vm4592, %v4569, %v3715
        %v4603 = vsel %vm4592, %v4570, %v3717
        %v4604 = vsel %vm4592, %v4571, %v3719
        %v4605 = vsel %vm4592, %v4572, %v3721
        %v4606 = vsel %vm4592, %v4573, %v3723
        %v4607 = vsel %vm4592, %v4574, %v3725
        %v4608 = vsel %vm4592, %v4575, %v3727
        %v4609 = vsel %vm4592, %v4576, %v3729
        %v4610 = vsel %vm4592, %v4577, %v3731
        %v4611 = vsel %vm4592, %v4578, %v3733
        %v4612 = vsel %vm4592, %v4579, %v3735
        %v4613 = vsel %vm4592, %v4580, %v3737
        %v4614 = vsel %vm4592, %v4581, %v3739
        %v4615 = vsel %vm4592, %v4582, %v3741
        %v4616 = vsel %vm4592, %v4583, %v3743
        %v4617 = vsel %vm4592, %v4584, %v3745
        %v4618 = vsel %vm4592, %v4585, %v3747
        %v4619 = vsel %vm4592, %v4586, %v3749
        %v4620 = vsel %vm4592, %v4587, %v3751
        %v4621 = vsel %vm4592, %v4588, %v3753
        %v4622 = vsel %vm4592, %v4589, %v3755
        %v4623 = vsel %vm4592, %v4590, %v3757
        %v4624 = vsel %vm4592, %v4591, %v3759
        %vm4625 = vcmask 97280
        %v4626 = vsel %vm4625, %v4593, %v3825
        %v4627 = vsel %vm4625, %v4594, %v3827
        %v4628 = vsel %vm4625, %v4595, %v3829
        %v4629 = vsel %vm4625, %v4596, %v3831
        %v4630 = vsel %vm4625, %v4597, %v3833
        %v4631 = vsel %vm4625, %v4598, %v3835
        %v4632 = vsel %vm4625, %v4599, %v3837
        %v4633 = vsel %vm4625, %v4600, %v3839
        %v4634 = vsel %vm4625, %v4601, %v3841
        %v4635 = vsel %vm4625, %v4602, %v3843
        %v4636 = vsel %vm4625, %v4603, %v3845
        %v4637 = vsel %vm4625, %v4604, %v3847
        %v4638 = vsel %vm4625, %v4605, %v3849
        %v4639 = vsel %vm4625, %v4606, %v3851
        %v4640 = vsel %vm4625, %v4607, %v3853
        %v4641 = vsel %vm4625, %v4608, %v3855
        %v4642 = vsel %vm4625, %v4609, %v3857
        %v4643 = vsel %vm4625, %v4610, %v3859
        %v4644 = vsel %vm4625, %v4611, %v3861
        %v4645 = vsel %vm4625, %v4612, %v3863
        %v4646 = vsel %vm4625, %v4613, %v3865
        %v4647 = vsel %vm4625, %v4614, %v3867
        %v4648 = vsel %vm4625, %v4615, %v3869
        %v4649 = vsel %vm4625, %v4616, %v3871
        %v4650 = vsel %vm4625, %v4617, %v3873
        %v4651 = vsel %vm4625, %v4618, %v3875
        %v4652 = vsel %vm4625, %v4619, %v3877
        %v4653 = vsel %vm4625, %v4620, %v3879
        %v4654 = vsel %vm4625, %v4621, %v3881
        %v4655 = vsel %vm4625, %v4622, %v3883
        %v4656 = vsel %vm4625, %v4623, %v3885
        %v4657 = vsel %vm4625, %v4624, %v3887
        %vm4658 = vcmask 130048
        %v4659 = vsel %vm4658, %v4626, %v3953
        %v4660 = vsel %vm4658, %v4627, %v3955
        %v4661 = vsel %vm4658, %v4628, %v3957
        %v4662 = vsel %vm4658, %v4629, %v3959
        %v4663 = vsel %vm4658, %v4630, %v3961
        %v4664 = vsel %vm4658, %v4631, %v3963
        %v4665 = vsel %vm4658, %v4632, %v3965
        %v4666 = vsel %vm4658, %v4633, %v3967
        %v4667 = vsel %vm4658, %v4634, %v3969
        %v4668 = vsel %vm4658, %v4635, %v3971
        %v4669 = vsel %vm4658, %v4636, %v3973
        %v4670 = vsel %vm4658, %v4637, %v3975
        %v4671 = vsel %vm4658, %v4638, %v3977
        %v4672 = vsel %vm4658, %v4639, %v3979
        %v4673 = vsel %vm4658, %v4640, %v3981
        %v4674 = vsel %vm4658, %v4641, %v3983
        %v4675 = vsel %vm4658, %v4642, %v3985
        %v4676 = vsel %vm4658, %v4643, %v3987
        %v4677 = vsel %vm4658, %v4644, %v3989
        %v4678 = vsel %vm4658, %v4645, %v3991
        %v4679 = vsel %vm4658, %v4646, %v3993
        %v4680 = vsel %vm4658, %v4647, %v3995
        %v4681 = vsel %vm4658, %v4648, %v3997
        %v4682 = vsel %vm4658, %v4649, %v3999
        %v4683 = vsel %vm4658, %v4650, %v4001
        %v4684 = vsel %vm4658, %v4651, %v4003
        %v4685 = vsel %vm4658, %v4652, %v4005
        %v4686 = vsel %vm4658, %v4653, %v4007
        %v4687 = vsel %vm4658, %v4654, %v4009
        %v4688 = vsel %vm4658, %v4655, %v4011
        %v4689 = vsel %vm4658, %v4656, %v4013
        %v4690 = vsel %vm4658, %v4657, %v4015
        %vm4691 = vcmask 162816
        %v4692 = vsel %vm4691, %v4659, %v4081
        %v4693 = vsel %vm4691, %v4660, %v4083
        %v4694 = vsel %vm4691, %v4661, %v4085
        %v4695 = vsel %vm4691, %v4662, %v4087
        %v4696 = vsel %vm4691, %v4663, %v4089
        %v4697 = vsel %vm4691, %v4664, %v4091
        %v4698 = vsel %vm4691, %v4665, %v4093
        %v4699 = vsel %vm4691, %v4666, %v4095
        %v4700 = vsel %vm4691, %v4667, %v4097
        %v4701 = vsel %vm4691, %v4668, %v4099
        %v4702 = vsel %vm4691, %v4669, %v4101
        %v4703 = vsel %vm4691, %v4670, %v4103
        %v4704 = vsel %vm4691, %v4671, %v4105
        %v4705 = vsel %vm4691, %v4672, %v4107
        %v4706 = vsel %vm4691, %v4673, %v4109
        %v4707 = vsel %vm4691, %v4674, %v4111
        %v4708 = vsel %vm4691, %v4675, %v4113
        %v4709 = vsel %vm4691, %v4676, %v4115
        %v4710 = vsel %vm4691, %v4677, %v4117
        %v4711 = vsel %vm4691, %v4678, %v4119
        %v4712 = vsel %vm4691, %v4679, %v4121
        %v4713 = vsel %vm4691, %v4680, %v4123
        %v4714 = vsel %vm4691, %v4681, %v4125
        %v4715 = vsel %vm4691, %v4682, %v4127
        %v4716 = vsel %vm4691, %v4683, %v4129
        %v4717 = vsel %vm4691, %v4684, %v4131
        %v4718 = vsel %vm4691, %v4685, %v4133
        %v4719 = vsel %vm4691, %v4686, %v4135
        %v4720 = vsel %vm4691, %v4687, %v4137
        %v4721 = vsel %vm4691, %v4688, %v4139
        %v4722 = vsel %vm4691, %v4689, %v4141
        %v4723 = vsel %vm4691, %v4690, %v4143
        %vm4724 = vcmask 195584
        %v4725 = vsel %vm4724, %v4692, %v4209
        %v4726 = vsel %vm4724, %v4693, %v4211
        %v4727 = vsel %vm4724, %v4694, %v4213
        %v4728 = vsel %vm4724, %v4695, %v4215
        %v4729 = vsel %vm4724, %v4696, %v4217
        %v4730 = vsel %vm4724, %v4697, %v4219
        %v4731 = vsel %vm4724, %v4698, %v4221
        %v4732 = vsel %vm4724, %v4699, %v4223
        %v4733 = vsel %vm4724, %v4700, %v4225
        %v4734 = vsel %vm4724, %v4701, %v4227
        %v4735 = vsel %vm4724, %v4702, %v4229
        %v4736 = vsel %vm4724, %v4703, %v4231
        %v4737 = vsel %vm4724, %v4704, %v4233
        %v4738 = vsel %vm4724, %v4705, %v4235
        %v4739 = vsel %vm4724, %v4706, %v4237
        %v4740 = vsel %vm4724, %v4707, %v4239
        %v4741 = vsel %vm4724, %v4708, %v4241
        %v4742 = vsel %vm4724, %v4709, %v4243
        %v4743 = vsel %vm4724, %v4710, %v4245
        %v4744 = vsel %vm4724, %v4711, %v4247
        %v4745 = vsel %vm4724, %v4712, %v4249
        %v4746 = vsel %vm4724, %v4713, %v4251
        %v4747 = vsel %vm4724, %v4714, %v4253
        %v4748 = vsel %vm4724, %v4715, %v4255
        %v4749 = vsel %vm4724, %v4716, %v4257
        %v4750 = vsel %vm4724, %v4717, %v4259
        %v4751 = vsel %vm4724, %v4718, %v4261
        %v4752 = vsel %vm4724, %v4719, %v4263
        %v4753 = vsel %vm4724, %v4720, %v4265
        %v4754 = vsel %vm4724, %v4721, %v4267
        %v4755 = vsel %vm4724, %v4722, %v4269
        %v4756 = vsel %vm4724, %v4723, %v4271
        %vm4757 = vcmask 228352
        %v4758 = vsel %vm4757, %v4725, %v4337
        %v4759 = vsel %vm4757, %v4726, %v4339
        %v4760 = vsel %vm4757, %v4727, %v4341
        %v4761 = vsel %vm4757, %v4728, %v4343
        %v4762 = vsel %vm4757, %v4729, %v4345
        %v4763 = vsel %vm4757, %v4730, %v4347
        %v4764 = vsel %vm4757, %v4731, %v4349
        %v4765 = vsel %vm4757, %v4732, %v4351
        %v4766 = vsel %vm4757, %v4733, %v4353
        %v4767 = vsel %vm4757, %v4734, %v4355
        %v4768 = vsel %vm4757, %v4735, %v4357
        %v4769 = vsel %vm4757, %v4736, %v4359
        %v4770 = vsel %vm4757, %v4737, %v4361
        %v4771 = vsel %vm4757, %v4738, %v4363
        %v4772 = vsel %vm4757, %v4739, %v4365
        %v4773 = vsel %vm4757, %v4740, %v4367
        %v4774 = vsel %vm4757, %v4741, %v4369
        %v4775 = vsel %vm4757, %v4742, %v4371
        %v4776 = vsel %vm4757, %v4743, %v4373
        %v4777 = vsel %vm4757, %v4744, %v4375
        %v4778 = vsel %vm4757, %v4745, %v4377
        %v4779 = vsel %vm4757, %v4746, %v4379
        %v4780 = vsel %vm4757, %v4747, %v4381
        %v4781 = vsel %vm4757, %v4748, %v4383
        %v4782 = vsel %vm4757, %v4749, %v4385
        %v4783 = vsel %vm4757, %v4750, %v4387
        %v4784 = vsel %vm4757, %v4751, %v4389
        %v4785 = vsel %vm4757, %v4752, %v4391
        %v4786 = vsel %vm4757, %v4753, %v4393
        %v4787 = vsel %vm4757, %v4754, %v4395
        %v4788 = vsel %vm4757, %v4755, %v4397
        %v4789 = vsel %vm4757, %v4756, %v4399
        %vm4790 = vcmask 261120
        %v4791 = vsel %vm4790, %v4758, %v4465
        %v4792 = vsel %vm4790, %v4759, %v4467
        %v4793 = vsel %vm4790, %v4760, %v4469
        %v4794 = vsel %vm4790, %v4761, %v4471
        %v4795 = vsel %vm4790, %v4762, %v4473
        %v4796 = vsel %vm4790, %v4763, %v4475
        %v4797 = vsel %vm4790, %v4764, %v4477
        %v4798 = vsel %vm4790, %v4765, %v4479
        %v4799 = vsel %vm4790, %v4766, %v4481
        %v4800 = vsel %vm4790, %v4767, %v4483
        %v4801 = vsel %vm4790, %v4768, %v4485
        %v4802 = vsel %vm4790, %v4769, %v4487
        %v4803 = vsel %vm4790, %v4770, %v4489
        %v4804 = vsel %vm4790, %v4771, %v4491
        %v4805 = vsel %vm4790, %v4772, %v4493
        %v4806 = vsel %vm4790, %v4773, %v4495
        %v4807 = vsel %vm4790, %v4774, %v4497
        %v4808 = vsel %vm4790, %v4775, %v4499
        %v4809 = vsel %vm4790, %v4776, %v4501
        %v4810 = vsel %vm4790, %v4777, %v4503
        %v4811 = vsel %vm4790, %v4778, %v4505
        %v4812 = vsel %vm4790, %v4779, %v4507
        %v4813 = vsel %vm4790, %v4780, %v4509
        %v4814 = vsel %vm4790, %v4781, %v4511
        %v4815 = vsel %vm4790, %v4782, %v4513
        %v4816 = vsel %vm4790, %v4783, %v4515
        %v4817 = vsel %vm4790, %v4784, %v4517
        %v4818 = vsel %vm4790, %v4785, %v4519
        %v4819 = vsel %vm4790, %v4786, %v4521
        %v4820 = vsel %vm4790, %v4787, %v4523
        %v4821 = vsel %vm4790, %v4788, %v4525
        %v4822 = vsel %vm4790, %v4789, %v4527
        %v4823 = vpack.c.bf16 %v4792, %v4791
        %v4824 = vpack.c.bf16 %v4794, %v4793
        %v4825 = vpack.c.bf16 %v4796, %v4795
        %v4826 = vpack.c.bf16 %v4798, %v4797
        %v4827 = vpack.c.bf16 %v4800, %v4799
        %v4828 = vpack.c.bf16 %v4802, %v4801
        %v4829 = vpack.c.bf16 %v4804, %v4803
        %v4830 = vpack.c.bf16 %v4806, %v4805
        %v4831 = vpack.c.bf16 %v4808, %v4807
        %v4832 = vpack.c.bf16 %v4810, %v4809
        %v4833 = vpack.c.bf16 %v4812, %v4811
        %v4834 = vpack.c.bf16 %v4814, %v4813
        %v4835 = vpack.c.bf16 %v4816, %v4815
        %v4836 = vpack.c.bf16 %v4818, %v4817
        %v4837 = vpack.c.bf16 %v4820, %v4819
        %v4838 = vpack.c.bf16 %v4822, %v4821
        %v4839 = vld [vmem:[%s4] sm:$0xf]
        %v4840 = vld [vmem:[%s4 + $0x4] sm:$0xf]
        %v4841 = vld [vmem:[%s4 + $0x8] sm:$0xf]
        %v4842 = vld [vmem:[%s4 + $0xc] sm:$0xf]
        %v4843 = vld [vmem:[%s4 + $0x10] sm:$0x3]
        %v4844 = vld [vmem:[%s5] sm:$0x1]
        %v4846 = vperm.slane %v4844, 0
        %v4853 = vunpack.c.l.b16 %v4839
        %v4854 = vunpack.c.l.b16 %v4840
        %v4855 = vunpack.c.l.b16 %v4841
        %v4856 = vunpack.c.l.b16 %v4842
        %v4857 = vunpack.c.l.b16 %v4843
        %v4858 = vpack.c.b16 %v4854, %v4853
        %v4859 = vpack.c.b16 %v4856, %v4855
        %v4860 = vpack.c.b16 %v4857, %v4857
        %vm4863 = vcmask 293888
        %v4865 = vsel %vm4863, %v4823, 0
        %v4868 = vsel %vm4863, %v4824, 0
        %v4871 = vsel %vm4863, %v4825, 0
        %v4874 = vsel %vm4863, %v4826, 0
        %v4877 = vsel %vm4863, %v4827, 0
        %v4880 = vsel %vm4863, %v4828, 0
        %v4883 = vsel %vm4863, %v4829, 0
        %v4886 = vsel %vm4863, %v4830, 0
        %v4889 = vsel %vm4863, %v4831, 0
        %v4892 = vsel %vm4863, %v4832, 0
        %v4895 = vsel %vm4863, %v4833, 0
        %v4898 = vsel %vm4863, %v4834, 0
        %v4901 = vsel %vm4863, %v4835, 0
        %v4904 = vsel %vm4863, %v4836, 0
        %v4907 = vsel %vm4863, %v4837, 0
        %v4910 = vsel %vm4863, %v4838, 0
        %vm4912 = vcmask 1041408
        %v4914 = vsel %vm4912, %v4860, 0
        %4916 = vmatpush.bf16.msra.mxu0 0
        %4917 = vmatpush.bf16.msra.mxu0 0
        %4918 = vmatpush.bf16.msra.mxu0 0
        %4919 = vmatpush.bf16.msra.mxu0 0
        %4920 = vmatpush.bf16.msra.mxu0 0
        %4921 = vmatpush.bf16.msra.mxu0 %v4914
        %4922 = vmatpush.bf16.msra.mxu0 %v4859
        %4923 = vmatpush.bf16.msra.mxu0 %v4858
        %4924 = vmatmul.bf16.gmra.mxu0 %v4865
        %v4925 = vpop.f32.mrf.mxu0
        %v4926 = vadd.f32 %v4846, %v4925
        %v4927 = vpop.f32.mrf.mxu0
        %v4928 = vadd.f32 %v4846, %v4927
        %4929 = vmatmul.bf16.gmra.mxu0 %v4868
        %v4930 = vpop.f32.mrf.mxu0
        %v4931 = vadd.f32 %v4846, %v4930
        %v4932 = vpop.f32.mrf.mxu0
        %v4933 = vadd.f32 %v4846, %v4932
        %4934 = vmatmul.bf16.gmra.mxu0 %v4871
        %v4935 = vpop.f32.mrf.mxu0
        %v4936 = vadd.f32 %v4846, %v4935
        %v4937 = vpop.f32.mrf.mxu0
        %v4938 = vadd.f32 %v4846, %v4937
        %4939 = vmatmul.bf16.gmra.mxu0 %v4874
        %v4940 = vpop.f32.mrf.mxu0
        %v4941 = vadd.f32 %v4846, %v4940
        %v4942 = vpop.f32.mrf.mxu0
        %v4943 = vadd.f32 %v4846, %v4942
        %4944 = vmatmul.bf16.gmra.mxu0 %v4877
        %v4945 = vpop.f32.mrf.mxu0
        %v4946 = vadd.f32 %v4846, %v4945
        %v4947 = vpop.f32.mrf.mxu0
        %v4948 = vadd.f32 %v4846, %v4947
        %4949 = vmatmul.bf16.gmra.mxu0 %v4880
        %v4950 = vpop.f32.mrf.mxu0
        %v4951 = vadd.f32 %v4846, %v4950
        %v4952 = vpop.f32.mrf.mxu0
        %v4953 = vadd.f32 %v4846, %v4952
        %4954 = vmatmul.bf16.gmra.mxu0 %v4883
        %v4955 = vpop.f32.mrf.mxu0
        %v4956 = vadd.f32 %v4846, %v4955
        %v4957 = vpop.f32.mrf.mxu0
        %v4958 = vadd.f32 %v4846, %v4957
        %4959 = vmatmul.bf16.gmra.mxu0 %v4886
        %v4960 = vpop.f32.mrf.mxu0
        %v4961 = vadd.f32 %v4846, %v4960
        %v4962 = vpop.f32.mrf.mxu0
        %v4963 = vadd.f32 %v4846, %v4962
        %4964 = vmatmul.bf16.gmra.mxu0 %v4889
        %v4965 = vpop.f32.mrf.mxu0
        %v4966 = vadd.f32 %v4846, %v4965
        %v4967 = vpop.f32.mrf.mxu0
        %v4968 = vadd.f32 %v4846, %v4967
        %4969 = vmatmul.bf16.gmra.mxu0 %v4892
        %v4970 = vpop.f32.mrf.mxu0
        %v4971 = vadd.f32 %v4846, %v4970
        %v4972 = vpop.f32.mrf.mxu0
        %v4973 = vadd.f32 %v4846, %v4972
        %4974 = vmatmul.bf16.gmra.mxu0 %v4895
        %v4975 = vpop.f32.mrf.mxu0
        %v4976 = vadd.f32 %v4846, %v4975
        %v4977 = vpop.f32.mrf.mxu0
        %v4978 = vadd.f32 %v4846, %v4977
        %4979 = vmatmul.bf16.gmra.mxu0 %v4898
        %v4980 = vpop.f32.mrf.mxu0
        %v4981 = vadd.f32 %v4846, %v4980
        %v4982 = vpop.f32.mrf.mxu0
        %v4983 = vadd.f32 %v4846, %v4982
        %4984 = vmatmul.bf16.gmra.mxu0 %v4901
        %v4985 = vpop.f32.mrf.mxu0
        %v4986 = vadd.f32 %v4846, %v4985
        %v4987 = vpop.f32.mrf.mxu0
        %v4988 = vadd.f32 %v4846, %v4987
        %4989 = vmatmul.bf16.gmra.mxu0 %v4904
        %v4990 = vpop.f32.mrf.mxu0
        %v4991 = vadd.f32 %v4846, %v4990
        %v4992 = vpop.f32.mrf.mxu0
        %v4993 = vadd.f32 %v4846, %v4992
        %4994 = vmatmul.bf16.gmra.mxu0 %v4907
        %v4995 = vpop.f32.mrf.mxu0
        %v4996 = vadd.f32 %v4846, %v4995
        %v4997 = vpop.f32.mrf.mxu0
        %v4998 = vadd.f32 %v4846, %v4997
        %4999 = vmatmul.bf16.gmra.mxu0 %v4910
        %v5000 = vpop.f32.mrf.mxu0
        %v5001 = vadd.f32 %v4846, %v5000
        %v5002 = vpop.f32.mrf.mxu0
        %v5003 = vadd.f32 %v4846, %v5002
        %5004 = vdwg.mxu0
        %v5005 = vmax.f32 %v4926, 0.0
        %v5006 = vmax.f32 %v4928, 0.0
        %v5007 = vmax.f32 %v4931, 0.0
        %v5008 = vmax.f32 %v4933, 0.0
        %v5009 = vmax.f32 %v4936, 0.0
        %v5010 = vmax.f32 %v4938, 0.0
        %v5011 = vmax.f32 %v4941, 0.0
        %v5012 = vmax.f32 %v4943, 0.0
        %v5013 = vmax.f32 %v4946, 0.0
        %v5014 = vmax.f32 %v4948, 0.0
        %v5015 = vmax.f32 %v4951, 0.0
        %v5016 = vmax.f32 %v4953, 0.0
        %v5017 = vmax.f32 %v4956, 0.0
        %v5018 = vmax.f32 %v4958, 0.0
        %v5019 = vmax.f32 %v4961, 0.0
        %v5020 = vmax.f32 %v4963, 0.0
        %v5021 = vmax.f32 %v4966, 0.0
        %v5022 = vmax.f32 %v4968, 0.0
        %v5023 = vmax.f32 %v4971, 0.0
        %v5024 = vmax.f32 %v4973, 0.0
        %v5025 = vmax.f32 %v4976, 0.0
        %v5026 = vmax.f32 %v4978, 0.0
        %v5027 = vmax.f32 %v4981, 0.0
        %v5028 = vmax.f32 %v4983, 0.0
        %v5029 = vmax.f32 %v4986, 0.0
        %v5030 = vmax.f32 %v4988, 0.0
        %v5031 = vmax.f32 %v4991, 0.0
        %v5032 = vmax.f32 %v4993, 0.0
        %v5033 = vmax.f32 %v4996, 0.0
        %v5034 = vmax.f32 %v4998, 0.0
        %v5035 = vmax.f32 %v5001, 0.0
        %v5036 = vmax.f32 %v5003, 0.0
        %s5037 = scalar_lea.vmem [#allocation4], 24
        %5038 = vst.msk [vmem:[%s5037 + $0x1] sm:$0xff] %vm381, %v5005
        %5039 = vst.msk [vmem:[%s5037 + $0x9] sm:$0xff] %vm381, %v5006
        %5040 = vst.msk [vmem:[%s5037 + $0x19] sm:$0xff] %vm381, %v5007
        %5041 = vst.msk [vmem:[%s5037 + $0x21] sm:$0xff] %vm381, %v5008
        %5042 = vst.msk [vmem:[%s5037 + $0x31] sm:$0xff] %vm381, %v5009
        %5043 = vst.msk [vmem:[%s5037 + $0x39] sm:$0xff] %vm381, %v5010
        %5044 = vst.msk [vmem:[%s5037 + $0x49] sm:$0xff] %vm381, %v5011
        %5045 = vst.msk [vmem:[%s5037 + $0x51] sm:$0xff] %vm381, %v5012
        %5046 = vst.msk [vmem:[%s5037 + $0x61] sm:$0xff] %vm381, %v5013
        %5047 = vst.msk [vmem:[%s5037 + $0x69] sm:$0xff] %vm381, %v5014
        %5048 = vst.msk [vmem:[%s5037 + $0x79] sm:$0xff] %vm381, %v5015
        %5049 = vst.msk [vmem:[%s5037 + $0x81] sm:$0xff] %vm381, %v5016
        %5050 = vst.msk [vmem:[%s5037 + $0x91] sm:$0xff] %vm381, %v5017
        %5051 = vst.msk [vmem:[%s5037 + $0x99] sm:$0xff] %vm381, %v5018
        %5052 = vst.msk [vmem:[%s5037 + $0xa9] sm:$0xff] %vm381, %v5019
        %5053 = vst.msk [vmem:[%s5037 + $0xb1] sm:$0xff] %vm381, %v5020
        %5054 = vst.msk [vmem:[%s5037 + $0xc1] sm:$0xff] %vm381, %v5021
        %5055 = vst.msk [vmem:[%s5037 + $0xc9] sm:$0xff] %vm381, %v5022
        %5056 = vst.msk [vmem:[%s5037 + $0xd9] sm:$0xff] %vm381, %v5023
        %5057 = vst.msk [vmem:[%s5037 + $0xe1] sm:$0xff] %vm381, %v5024
        %5058 = vst.msk [vmem:[%s5037 + $0xf1] sm:$0xff] %vm381, %v5025
        %5059 = vst.msk [vmem:[%s5037 + $0xf9] sm:$0xff] %vm381, %v5026
        %5060 = vst.msk [vmem:[%s5037 + $0x109] sm:$0xff] %vm381, %v5027
        %5061 = vst.msk [vmem:[%s5037 + $0x111] sm:$0xff] %vm381, %v5028
        %5062 = vst.msk [vmem:[%s5037 + $0x121] sm:$0xff] %vm381, %v5029
        %5063 = vst.msk [vmem:[%s5037 + $0x129] sm:$0xff] %vm381, %v5030
        %5064 = vst.msk [vmem:[%s5037 + $0x139] sm:$0xff] %vm381, %v5031
        %5065 = vst.msk [vmem:[%s5037 + $0x141] sm:$0xff] %vm381, %v5032
        %5066 = vst.msk [vmem:[%s5037 + $0x151] sm:$0xff] %vm381, %v5033
        %5067 = vst.msk [vmem:[%s5037 + $0x159] sm:$0xff] %vm381, %v5034
        %5068 = vst.msk [vmem:[%s5037 + $0x169] sm:$0xff] %vm381, %v5035
        %5069 = vst.msk [vmem:[%s5037 + $0x171] sm:$0xff] %vm381, %v5036
        %v5070 = vld [vmem:[#allocation4] sm:$0xff]
        %v5071 = vld [vmem:[#allocation4 + $0x8] sm:$0xff]
        %v5072 = vld [vmem:[#allocation4 + $0x18] sm:$0xff]
        %v5073 = vld [vmem:[#allocation4 + $0x20] sm:$0xff]
        %v5074 = vld [vmem:[#allocation4 + $0x30] sm:$0xff]
        %v5075 = vld [vmem:[#allocation4 + $0x38] sm:$0xff]
        %v5076 = vld [vmem:[#allocation4 + $0x48] sm:$0xff]
        %v5077 = vld [vmem:[#allocation4 + $0x50] sm:$0xff]
        %v5078 = vld [vmem:[#allocation4 + $0x60] sm:$0xff]
        %v5079 = vld [vmem:[#allocation4 + $0x68] sm:$0xff]
        %v5080 = vld [vmem:[#allocation4 + $0x78] sm:$0xff]
        %v5081 = vld [vmem:[#allocation4 + $0x80] sm:$0xff]
        %v5082 = vld [vmem:[#allocation4 + $0x90] sm:$0xff]
        %v5083 = vld [vmem:[#allocation4 + $0x98] sm:$0xff]
        %v5084 = vld [vmem:[#allocation4 + $0xa8] sm:$0xff]
        %v5085 = vld [vmem:[#allocation4 + $0xb0] sm:$0xff]
        %v5086 = vld [vmem:[#allocation4 + $0xc0] sm:$0xff]
        %v5087 = vld [vmem:[#allocation4 + $0xc8] sm:$0xff]
        %v5088 = vld [vmem:[#allocation4 + $0xd8] sm:$0xff]
        %v5089 = vld [vmem:[#allocation4 + $0xe0] sm:$0xff]
        %v5090 = vld [vmem:[#allocation4 + $0xf0] sm:$0xff]
        %v5091 = vld [vmem:[#allocation4 + $0xf8] sm:$0xff]
        %v5092 = vld [vmem:[#allocation4 + $0x108] sm:$0xff]
        %v5093 = vld [vmem:[#allocation4 + $0x110] sm:$0xff]
        %v5094 = vld [vmem:[#allocation4 + $0x120] sm:$0xff]
        %v5095 = vld [vmem:[#allocation4 + $0x128] sm:$0xff]
        %v5096 = vld [vmem:[#allocation4 + $0x138] sm:$0xff]
        %v5097 = vld [vmem:[#allocation4 + $0x140] sm:$0xff]
        %v5098 = vld [vmem:[#allocation4 + $0x150] sm:$0xff]
        %v5099 = vld [vmem:[#allocation4 + $0x158] sm:$0xff]
        %v5100 = vld [vmem:[#allocation4 + $0x168] sm:$0xff]
        %v5101 = vld [vmem:[#allocation4 + $0x170] sm:$0xff]
        %v5102 = vld [vmem:[#allocation4 + $0x1] sm:$0xff]
        %v5103 = vld [vmem:[#allocation4 + $0x9] sm:$0xff]
        %v5104 = vld [vmem:[#allocation4 + $0x19] sm:$0xff]
        %v5105 = vld [vmem:[#allocation4 + $0x21] sm:$0xff]
        %v5106 = vld [vmem:[#allocation4 + $0x31] sm:$0xff]
        %v5107 = vld [vmem:[#allocation4 + $0x39] sm:$0xff]
        %v5108 = vld [vmem:[#allocation4 + $0x49] sm:$0xff]
        %v5109 = vld [vmem:[#allocation4 + $0x51] sm:$0xff]
        %v5110 = vld [vmem:[#allocation4 + $0x61] sm:$0xff]
        %v5111 = vld [vmem:[#allocation4 + $0x69] sm:$0xff]
        %v5112 = vld [vmem:[#allocation4 + $0x79] sm:$0xff]
        %v5113 = vld [vmem:[#allocation4 + $0x81] sm:$0xff]
        %v5114 = vld [vmem:[#allocation4 + $0x91] sm:$0xff]
        %v5115 = vld [vmem:[#allocation4 + $0x99] sm:$0xff]
        %v5116 = vld [vmem:[#allocation4 + $0xa9] sm:$0xff]
        %v5117 = vld [vmem:[#allocation4 + $0xb1] sm:$0xff]
        %v5118 = vld [vmem:[#allocation4 + $0xc1] sm:$0xff]
        %v5119 = vld [vmem:[#allocation4 + $0xc9] sm:$0xff]
        %v5120 = vld [vmem:[#allocation4 + $0xd9] sm:$0xff]
        %v5121 = vld [vmem:[#allocation4 + $0xe1] sm:$0xff]
        %v5122 = vld [vmem:[#allocation4 + $0xf1] sm:$0xff]
        %v5123 = vld [vmem:[#allocation4 + $0xf9] sm:$0xff]
        %v5124 = vld [vmem:[#allocation4 + $0x109] sm:$0xff]
        %v5125 = vld [vmem:[#allocation4 + $0x111] sm:$0xff]
        %v5126 = vld [vmem:[#allocation4 + $0x121] sm:$0xff]
        %v5127 = vld [vmem:[#allocation4 + $0x129] sm:$0xff]
        %v5128 = vld [vmem:[#allocation4 + $0x139] sm:$0xff]
        %v5129 = vld [vmem:[#allocation4 + $0x141] sm:$0xff]
        %v5130 = vld [vmem:[#allocation4 + $0x151] sm:$0xff]
        %v5131 = vld [vmem:[#allocation4 + $0x159] sm:$0xff]
        %v5132 = vld [vmem:[#allocation4 + $0x169] sm:$0xff]
        %v5133 = vld [vmem:[#allocation4 + $0x171] sm:$0xff]
        %v5134 = vld [vmem:[#allocation4 + $0x2] sm:$0xff]
        %v5135 = vld [vmem:[#allocation4 + $0xa] sm:$0xff]
        %v5136 = vld [vmem:[#allocation4 + $0x1a] sm:$0xff]
        %v5137 = vld [vmem:[#allocation4 + $0x22] sm:$0xff]
        %v5138 = vld [vmem:[#allocation4 + $0x32] sm:$0xff]
        %v5139 = vld [vmem:[#allocation4 + $0x3a] sm:$0xff]
        %v5140 = vld [vmem:[#allocation4 + $0x4a] sm:$0xff]
        %v5141 = vld [vmem:[#allocation4 + $0x52] sm:$0xff]
        %v5142 = vld [vmem:[#allocation4 + $0x62] sm:$0xff]
        %v5143 = vld [vmem:[#allocation4 + $0x6a] sm:$0xff]
        %v5144 = vld [vmem:[#allocation4 + $0x7a] sm:$0xff]
        %v5145 = vld [vmem:[#allocation4 + $0x82] sm:$0xff]
        %v5146 = vld [vmem:[#allocation4 + $0x92] sm:$0xff]
        %v5147 = vld [vmem:[#allocation4 + $0x9a] sm:$0xff]
        %v5148 = vld [vmem:[#allocation4 + $0xaa] sm:$0xff]
        %v5149 = vld [vmem:[#allocation4 + $0xb2] sm:$0xff]
        %v5150 = vld [vmem:[#allocation4 + $0xc2] sm:$0xff]
        %v5151 = vld [vmem:[#allocation4 + $0xca] sm:$0xff]
        %v5152 = vld [vmem:[#allocation4 + $0xda] sm:$0xff]
        %v5153 = vld [vmem:[#allocation4 + $0xe2] sm:$0xff]
        %v5154 = vld [vmem:[#allocation4 + $0xf2] sm:$0xff]
        %v5155 = vld [vmem:[#allocation4 + $0xfa] sm:$0xff]
        %v5156 = vld [vmem:[#allocation4 + $0x10a] sm:$0xff]
        %v5157 = vld [vmem:[#allocation4 + $0x112] sm:$0xff]
        %v5158 = vld [vmem:[#allocation4 + $0x122] sm:$0xff]
        %v5159 = vld [vmem:[#allocation4 + $0x12a] sm:$0xff]
        %v5160 = vld [vmem:[#allocation4 + $0x13a] sm:$0xff]
        %v5161 = vld [vmem:[#allocation4 + $0x142] sm:$0xff]
        %v5162 = vld [vmem:[#allocation4 + $0x152] sm:$0xff]
        %v5163 = vld [vmem:[#allocation4 + $0x15a] sm:$0xff]
        %v5164 = vld [vmem:[#allocation4 + $0x16a] sm:$0xff]
        %v5165 = vld [vmem:[#allocation4 + $0x172] sm:$0xff]
        %v5166 = vld [vmem:[%s5037] sm:$0xff]
        %v5167 = vld [vmem:[%s5037 + $0x8] sm:$0xff]
        %v5168 = vld [vmem:[%s5037 + $0x18] sm:$0xff]
        %v5169 = vld [vmem:[%s5037 + $0x20] sm:$0xff]
        %v5170 = vld [vmem:[%s5037 + $0x30] sm:$0xff]
        %v5171 = vld [vmem:[%s5037 + $0x38] sm:$0xff]
        %v5172 = vld [vmem:[%s5037 + $0x48] sm:$0xff]
        %v5173 = vld [vmem:[%s5037 + $0x50] sm:$0xff]
        %v5174 = vld [vmem:[%s5037 + $0x60] sm:$0xff]
        %v5175 = vld [vmem:[%s5037 + $0x68] sm:$0xff]
        %v5176 = vld [vmem:[%s5037 + $0x78] sm:$0xff]
        %v5177 = vld [vmem:[%s5037 + $0x80] sm:$0xff]
        %v5178 = vld [vmem:[%s5037 + $0x90] sm:$0xff]
        %v5179 = vld [vmem:[%s5037 + $0x98] sm:$0xff]
        %v5180 = vld [vmem:[%s5037 + $0xa8] sm:$0xff]
        %v5181 = vld [vmem:[%s5037 + $0xb0] sm:$0xff]
        %v5182 = vld [vmem:[%s5037 + $0xc0] sm:$0xff]
        %v5183 = vld [vmem:[%s5037 + $0xc8] sm:$0xff]
        %v5184 = vld [vmem:[%s5037 + $0xd8] sm:$0xff]
        %v5185 = vld [vmem:[%s5037 + $0xe0] sm:$0xff]
        %v5186 = vld [vmem:[%s5037 + $0xf0] sm:$0xff]
        %v5187 = vld [vmem:[%s5037 + $0xf8] sm:$0xff]
        %v5188 = vld [vmem:[%s5037 + $0x108] sm:$0xff]
        %v5189 = vld [vmem:[%s5037 + $0x110] sm:$0xff]
        %v5190 = vld [vmem:[%s5037 + $0x120] sm:$0xff]
        %v5191 = vld [vmem:[%s5037 + $0x128] sm:$0xff]
        %v5192 = vld [vmem:[%s5037 + $0x138] sm:$0xff]
        %v5193 = vld [vmem:[%s5037 + $0x140] sm:$0xff]
        %v5194 = vld [vmem:[%s5037 + $0x150] sm:$0xff]
        %v5195 = vld [vmem:[%s5037 + $0x158] sm:$0xff]
        %v5196 = vld [vmem:[%s5037 + $0x168] sm:$0xff]
        %v5197 = vld [vmem:[%s5037 + $0x170] sm:$0xff]
        %v5198 = vld [vmem:[%s5037 + $0x1] sm:$0xff]
        %v5199 = vld [vmem:[%s5037 + $0x9] sm:$0xff]
        %v5200 = vld [vmem:[%s5037 + $0x19] sm:$0xff]
        %v5201 = vld [vmem:[%s5037 + $0x21] sm:$0xff]
        %v5202 = vld [vmem:[%s5037 + $0x31] sm:$0xff]
        %v5203 = vld [vmem:[%s5037 + $0x39] sm:$0xff]
        %v5204 = vld [vmem:[%s5037 + $0x49] sm:$0xff]
        %v5205 = vld [vmem:[%s5037 + $0x51] sm:$0xff]
        %v5206 = vld [vmem:[%s5037 + $0x61] sm:$0xff]
        %v5207 = vld [vmem:[%s5037 + $0x69] sm:$0xff]
        %v5208 = vld [vmem:[%s5037 + $0x79] sm:$0xff]
        %v5209 = vld [vmem:[%s5037 + $0x81] sm:$0xff]
        %v5210 = vld [vmem:[%s5037 + $0x91] sm:$0xff]
        %v5211 = vld [vmem:[%s5037 + $0x99] sm:$0xff]
        %v5212 = vld [vmem:[%s5037 + $0xa9] sm:$0xff]
        %v5213 = vld [vmem:[%s5037 + $0xb1] sm:$0xff]
        %v5214 = vld [vmem:[%s5037 + $0xc1] sm:$0xff]
        %v5215 = vld [vmem:[%s5037 + $0xc9] sm:$0xff]
        %v5216 = vld [vmem:[%s5037 + $0xd9] sm:$0xff]
        %v5217 = vld [vmem:[%s5037 + $0xe1] sm:$0xff]
        %v5218 = vld [vmem:[%s5037 + $0xf1] sm:$0xff]
        %v5219 = vld [vmem:[%s5037 + $0xf9] sm:$0xff]
        %v5220 = vld [vmem:[%s5037 + $0x109] sm:$0xff]
        %v5221 = vld [vmem:[%s5037 + $0x111] sm:$0xff]
        %v5222 = vld [vmem:[%s5037 + $0x121] sm:$0xff]
        %v5223 = vld [vmem:[%s5037 + $0x129] sm:$0xff]
        %v5224 = vld [vmem:[%s5037 + $0x139] sm:$0xff]
        %v5225 = vld [vmem:[%s5037 + $0x141] sm:$0xff]
        %v5226 = vld [vmem:[%s5037 + $0x151] sm:$0xff]
        %v5227 = vld [vmem:[%s5037 + $0x159] sm:$0xff]
        %v5228 = vld [vmem:[%s5037 + $0x169] sm:$0xff]
        %v5229 = vld [vmem:[%s5037 + $0x171] sm:$0xff]
        %v5230 = vld [vmem:[%s5037 + $0x2] sm:$0xff]
        %v5231 = vld [vmem:[%s5037 + $0xa] sm:$0xff]
        %v5232 = vld [vmem:[%s5037 + $0x1a] sm:$0xff]
        %v5233 = vld [vmem:[%s5037 + $0x22] sm:$0xff]
        %v5234 = vld [vmem:[%s5037 + $0x32] sm:$0xff]
        %v5235 = vld [vmem:[%s5037 + $0x3a] sm:$0xff]
        %v5236 = vld [vmem:[%s5037 + $0x4a] sm:$0xff]
        %v5237 = vld [vmem:[%s5037 + $0x52] sm:$0xff]
        %v5238 = vld [vmem:[%s5037 + $0x62] sm:$0xff]
        %v5239 = vld [vmem:[%s5037 + $0x6a] sm:$0xff]
        %v5240 = vld [vmem:[%s5037 + $0x7a] sm:$0xff]
        %v5241 = vld [vmem:[%s5037 + $0x82] sm:$0xff]
        %v5242 = vld [vmem:[%s5037 + $0x92] sm:$0xff]
        %v5243 = vld [vmem:[%s5037 + $0x9a] sm:$0xff]
        %v5244 = vld [vmem:[%s5037 + $0xaa] sm:$0xff]
        %v5245 = vld [vmem:[%s5037 + $0xb2] sm:$0xff]
        %v5246 = vld [vmem:[%s5037 + $0xc2] sm:$0xff]
        %v5247 = vld [vmem:[%s5037 + $0xca] sm:$0xff]
        %v5248 = vld [vmem:[%s5037 + $0xda] sm:$0xff]
        %v5249 = vld [vmem:[%s5037 + $0xe2] sm:$0xff]
        %v5250 = vld [vmem:[%s5037 + $0xf2] sm:$0xff]
        %v5251 = vld [vmem:[%s5037 + $0xfa] sm:$0xff]
        %v5252 = vld [vmem:[%s5037 + $0x10a] sm:$0xff]
        %v5253 = vld [vmem:[%s5037 + $0x112] sm:$0xff]
        %v5254 = vld [vmem:[%s5037 + $0x122] sm:$0xff]
        %v5255 = vld [vmem:[%s5037 + $0x12a] sm:$0xff]
        %v5256 = vld [vmem:[%s5037 + $0x13a] sm:$0xff]
        %v5257 = vld [vmem:[%s5037 + $0x142] sm:$0xff]
        %v5258 = vld [vmem:[%s5037 + $0x152] sm:$0xff]
        %v5259 = vld [vmem:[%s5037 + $0x15a] sm:$0xff]
        %v5260 = vld [vmem:[%s5037 + $0x16a] sm:$0xff]
        %v5261 = vld [vmem:[%s5037 + $0x172] sm:$0xff]
        %s5262 = scalar_lea.vmem [#allocation4], 48
        %v5263 = vld [vmem:[%s5262] sm:$0xff]
        %v5264 = vld [vmem:[%s5262 + $0x8] sm:$0xff]
        %v5265 = vld [vmem:[%s5262 + $0x18] sm:$0xff]
        %v5266 = vld [vmem:[%s5262 + $0x20] sm:$0xff]
        %v5267 = vld [vmem:[%s5262 + $0x30] sm:$0xff]
        %v5268 = vld [vmem:[%s5262 + $0x38] sm:$0xff]
        %v5269 = vld [vmem:[%s5262 + $0x48] sm:$0xff]
        %v5270 = vld [vmem:[%s5262 + $0x50] sm:$0xff]
        %v5271 = vld [vmem:[%s5262 + $0x60] sm:$0xff]
        %v5272 = vld [vmem:[%s5262 + $0x68] sm:$0xff]
        %v5273 = vld [vmem:[%s5262 + $0x78] sm:$0xff]
        %v5274 = vld [vmem:[%s5262 + $0x80] sm:$0xff]
        %v5275 = vld [vmem:[%s5262 + $0x90] sm:$0xff]
        %v5276 = vld [vmem:[%s5262 + $0x98] sm:$0xff]
        %v5277 = vld [vmem:[%s5262 + $0xa8] sm:$0xff]
        %v5278 = vld [vmem:[%s5262 + $0xb0] sm:$0xff]
        %v5279 = vld [vmem:[%s5262 + $0xc0] sm:$0xff]
        %v5280 = vld [vmem:[%s5262 + $0xc8] sm:$0xff]
        %v5281 = vld [vmem:[%s5262 + $0xd8] sm:$0xff]
        %v5282 = vld [vmem:[%s5262 + $0xe0] sm:$0xff]
        %v5283 = vld [vmem:[%s5262 + $0xf0] sm:$0xff]
        %v5284 = vld [vmem:[%s5262 + $0xf8] sm:$0xff]
        %v5285 = vld [vmem:[%s5262 + $0x108] sm:$0xff]
        %v5286 = vld [vmem:[%s5262 + $0x110] sm:$0xff]
        %v5287 = vld [vmem:[%s5262 + $0x120] sm:$0xff]
        %v5288 = vld [vmem:[%s5262 + $0x128] sm:$0xff]
        %v5289 = vld [vmem:[%s5262 + $0x138] sm:$0xff]
        %v5290 = vld [vmem:[%s5262 + $0x140] sm:$0xff]
        %v5291 = vld [vmem:[%s5262 + $0x150] sm:$0xff]
        %v5292 = vld [vmem:[%s5262 + $0x158] sm:$0xff]
        %v5293 = vld [vmem:[%s5262 + $0x168] sm:$0xff]
        %v5294 = vld [vmem:[%s5262 + $0x170] sm:$0xff]
        %v5295 = vld [vmem:[%s5262 + $0x1] sm:$0xff]
        %v5296 = vld [vmem:[%s5262 + $0x9] sm:$0xff]
        %v5297 = vld [vmem:[%s5262 + $0x19] sm:$0xff]
        %v5298 = vld [vmem:[%s5262 + $0x21] sm:$0xff]
        %v5299 = vld [vmem:[%s5262 + $0x31] sm:$0xff]
        %v5300 = vld [vmem:[%s5262 + $0x39] sm:$0xff]
        %v5301 = vld [vmem:[%s5262 + $0x49] sm:$0xff]
        %v5302 = vld [vmem:[%s5262 + $0x51] sm:$0xff]
        %v5303 = vld [vmem:[%s5262 + $0x61] sm:$0xff]
        %v5304 = vld [vmem:[%s5262 + $0x69] sm:$0xff]
        %v5305 = vld [vmem:[%s5262 + $0x79] sm:$0xff]
        %v5306 = vld [vmem:[%s5262 + $0x81] sm:$0xff]
        %v5307 = vld [vmem:[%s5262 + $0x91] sm:$0xff]
        %v5308 = vld [vmem:[%s5262 + $0x99] sm:$0xff]
        %v5309 = vld [vmem:[%s5262 + $0xa9] sm:$0xff]
        %v5310 = vld [vmem:[%s5262 + $0xb1] sm:$0xff]
        %v5311 = vld [vmem:[%s5262 + $0xc1] sm:$0xff]
        %v5312 = vld [vmem:[%s5262 + $0xc9] sm:$0xff]
        %v5313 = vld [vmem:[%s5262 + $0xd9] sm:$0xff]
        %v5314 = vld [vmem:[%s5262 + $0xe1] sm:$0xff]
        %v5315 = vld [vmem:[%s5262 + $0xf1] sm:$0xff]
        %v5316 = vld [vmem:[%s5262 + $0xf9] sm:$0xff]
        %v5317 = vld [vmem:[%s5262 + $0x109] sm:$0xff]
        %v5318 = vld [vmem:[%s5262 + $0x111] sm:$0xff]
        %v5319 = vld [vmem:[%s5262 + $0x121] sm:$0xff]
        %v5320 = vld [vmem:[%s5262 + $0x129] sm:$0xff]
        %v5321 = vld [vmem:[%s5262 + $0x139] sm:$0xff]
        %v5322 = vld [vmem:[%s5262 + $0x141] sm:$0xff]
        %v5323 = vld [vmem:[%s5262 + $0x151] sm:$0xff]
        %v5324 = vld [vmem:[%s5262 + $0x159] sm:$0xff]
        %v5325 = vld [vmem:[%s5262 + $0x169] sm:$0xff]
        %v5326 = vld [vmem:[%s5262 + $0x171] sm:$0xff]
        %v5327 = vld [vmem:[%s5262 + $0x2] sm:$0xff]
        %v5328 = vld [vmem:[%s5262 + $0xa] sm:$0xff]
        %v5329 = vld [vmem:[%s5262 + $0x1a] sm:$0xff]
        %v5330 = vld [vmem:[%s5262 + $0x22] sm:$0xff]
        %v5331 = vld [vmem:[%s5262 + $0x32] sm:$0xff]
        %v5332 = vld [vmem:[%s5262 + $0x3a] sm:$0xff]
        %v5333 = vld [vmem:[%s5262 + $0x4a] sm:$0xff]
        %v5334 = vld [vmem:[%s5262 + $0x52] sm:$0xff]
        %v5335 = vld [vmem:[%s5262 + $0x62] sm:$0xff]
        %v5336 = vld [vmem:[%s5262 + $0x6a] sm:$0xff]
        %v5337 = vld [vmem:[%s5262 + $0x7a] sm:$0xff]
        %v5338 = vld [vmem:[%s5262 + $0x82] sm:$0xff]
        %v5339 = vld [vmem:[%s5262 + $0x92] sm:$0xff]
        %v5340 = vld [vmem:[%s5262 + $0x9a] sm:$0xff]
        %v5341 = vld [vmem:[%s5262 + $0xaa] sm:$0xff]
        %v5342 = vld [vmem:[%s5262 + $0xb2] sm:$0xff]
        %v5343 = vld [vmem:[%s5262 + $0xc2] sm:$0xff]
        %v5344 = vld [vmem:[%s5262 + $0xca] sm:$0xff]
        %v5345 = vld [vmem:[%s5262 + $0xda] sm:$0xff]
        %v5346 = vld [vmem:[%s5262 + $0xe2] sm:$0xff]
        %v5347 = vld [vmem:[%s5262 + $0xf2] sm:$0xff]
        %v5348 = vld [vmem:[%s5262 + $0xfa] sm:$0xff]
        %v5349 = vld [vmem:[%s5262 + $0x10a] sm:$0xff]
        %v5350 = vld [vmem:[%s5262 + $0x112] sm:$0xff]
        %v5351 = vld [vmem:[%s5262 + $0x122] sm:$0xff]
        %v5352 = vld [vmem:[%s5262 + $0x12a] sm:$0xff]
        %v5353 = vld [vmem:[%s5262 + $0x13a] sm:$0xff]
        %v5354 = vld [vmem:[%s5262 + $0x142] sm:$0xff]
        %v5355 = vld [vmem:[%s5262 + $0x152] sm:$0xff]
        %v5356 = vld [vmem:[%s5262 + $0x15a] sm:$0xff]
        %v5357 = vld [vmem:[%s5262 + $0x16a] sm:$0xff]
        %v5358 = vld [vmem:[%s5262 + $0x172] sm:$0xff]
        %5391 = vrot.lane.b32.xlu0 %v5102, 4
        %v5392 = vpop.permute.xlu0 %5391
        %5393 = vrot.lane.b32.xlu0 %v5103, 4
        %v5394 = vpop.permute.xlu0 %5393
        %5395 = vrot.lane.b32.xlu0 %v5104, 4
        %v5396 = vpop.permute.xlu0 %5395
        %5397 = vrot.lane.b32.xlu0 %v5105, 4
        %v5398 = vpop.permute.xlu0 %5397
        %5399 = vrot.lane.b32.xlu0 %v5106, 4
        %v5400 = vpop.permute.xlu0 %5399
        %5401 = vrot.lane.b32.xlu0 %v5107, 4
        %v5402 = vpop.permute.xlu0 %5401
        %5403 = vrot.lane.b32.xlu0 %v5108, 4
        %v5404 = vpop.permute.xlu0 %5403
        %5405 = vrot.lane.b32.xlu0 %v5109, 4
        %v5406 = vpop.permute.xlu0 %5405
        %5407 = vrot.lane.b32.xlu0 %v5110, 4
        %v5408 = vpop.permute.xlu0 %5407
        %5409 = vrot.lane.b32.xlu0 %v5111, 4
        %v5410 = vpop.permute.xlu0 %5409
        %5411 = vrot.lane.b32.xlu0 %v5112, 4
        %v5412 = vpop.permute.xlu0 %5411
        %5413 = vrot.lane.b32.xlu0 %v5113, 4
        %v5414 = vpop.permute.xlu0 %5413
        %5415 = vrot.lane.b32.xlu0 %v5114, 4
        %v5416 = vpop.permute.xlu0 %5415
        %5417 = vrot.lane.b32.xlu0 %v5115, 4
        %v5418 = vpop.permute.xlu0 %5417
        %5419 = vrot.lane.b32.xlu0 %v5116, 4
        %v5420 = vpop.permute.xlu0 %5419
        %5421 = vrot.lane.b32.xlu0 %v5117, 4
        %v5422 = vpop.permute.xlu0 %5421
        %5423 = vrot.lane.b32.xlu0 %v5118, 4
        %v5424 = vpop.permute.xlu0 %5423
        %5425 = vrot.lane.b32.xlu0 %v5119, 4
        %v5426 = vpop.permute.xlu0 %5425
        %5427 = vrot.lane.b32.xlu0 %v5120, 4
        %v5428 = vpop.permute.xlu0 %5427
        %5429 = vrot.lane.b32.xlu0 %v5121, 4
        %v5430 = vpop.permute.xlu0 %5429
        %5431 = vrot.lane.b32.xlu0 %v5122, 4
        %v5432 = vpop.permute.xlu0 %5431
        %5433 = vrot.lane.b32.xlu0 %v5123, 4
        %v5434 = vpop.permute.xlu0 %5433
        %5435 = vrot.lane.b32.xlu0 %v5124, 4
        %v5436 = vpop.permute.xlu0 %5435
        %5437 = vrot.lane.b32.xlu0 %v5125, 4
        %v5438 = vpop.permute.xlu0 %5437
        %5439 = vrot.lane.b32.xlu0 %v5126, 4
        %v5440 = vpop.permute.xlu0 %5439
        %5441 = vrot.lane.b32.xlu0 %v5127, 4
        %v5442 = vpop.permute.xlu0 %5441
        %5443 = vrot.lane.b32.xlu0 %v5128, 4
        %v5444 = vpop.permute.xlu0 %5443
        %5445 = vrot.lane.b32.xlu0 %v5129, 4
        %v5446 = vpop.permute.xlu0 %5445
        %5447 = vrot.lane.b32.xlu0 %v5130, 4
        %v5448 = vpop.permute.xlu0 %5447
        %5449 = vrot.lane.b32.xlu0 %v5131, 4
        %v5450 = vpop.permute.xlu0 %5449
        %5451 = vrot.lane.b32.xlu0 %v5132, 4
        %v5452 = vpop.permute.xlu0 %5451
        %5453 = vrot.lane.b32.xlu0 %v5133, 4
        %v5454 = vpop.permute.xlu0 %5453
        %5519 = vrot.lane.b32.xlu0 %v5134, 8
        %v5520 = vpop.permute.xlu0 %5519
        %5521 = vrot.lane.b32.xlu0 %v5135, 8
        %v5522 = vpop.permute.xlu0 %5521
        %5523 = vrot.lane.b32.xlu0 %v5136, 8
        %v5524 = vpop.permute.xlu0 %5523
        %5525 = vrot.lane.b32.xlu0 %v5137, 8
        %v5526 = vpop.permute.xlu0 %5525
        %5527 = vrot.lane.b32.xlu0 %v5138, 8
        %v5528 = vpop.permute.xlu0 %5527
        %5529 = vrot.lane.b32.xlu0 %v5139, 8
        %v5530 = vpop.permute.xlu0 %5529
        %5531 = vrot.lane.b32.xlu0 %v5140, 8
        %v5532 = vpop.permute.xlu0 %5531
        %5533 = vrot.lane.b32.xlu0 %v5141, 8
        %v5534 = vpop.permute.xlu0 %5533
        %5535 = vrot.lane.b32.xlu0 %v5142, 8
        %v5536 = vpop.permute.xlu0 %5535
        %5537 = vrot.lane.b32.xlu0 %v5143, 8
        %v5538 = vpop.permute.xlu0 %5537
        %5539 = vrot.lane.b32.xlu0 %v5144, 8
        %v5540 = vpop.permute.xlu0 %5539
        %5541 = vrot.lane.b32.xlu0 %v5145, 8
        %v5542 = vpop.permute.xlu0 %5541
        %5543 = vrot.lane.b32.xlu0 %v5146, 8
        %v5544 = vpop.permute.xlu0 %5543
        %5545 = vrot.lane.b32.xlu0 %v5147, 8
        %v5546 = vpop.permute.xlu0 %5545
        %5547 = vrot.lane.b32.xlu0 %v5148, 8
        %v5548 = vpop.permute.xlu0 %5547
        %5549 = vrot.lane.b32.xlu0 %v5149, 8
        %v5550 = vpop.permute.xlu0 %5549
        %5551 = vrot.lane.b32.xlu0 %v5150, 8
        %v5552 = vpop.permute.xlu0 %5551
        %5553 = vrot.lane.b32.xlu0 %v5151, 8
        %v5554 = vpop.permute.xlu0 %5553
        %5555 = vrot.lane.b32.xlu0 %v5152, 8
        %v5556 = vpop.permute.xlu0 %5555
        %5557 = vrot.lane.b32.xlu0 %v5153, 8
        %v5558 = vpop.permute.xlu0 %5557
        %5559 = vrot.lane.b32.xlu0 %v5154, 8
        %v5560 = vpop.permute.xlu0 %5559
        %5561 = vrot.lane.b32.xlu0 %v5155, 8
        %v5562 = vpop.permute.xlu0 %5561
        %5563 = vrot.lane.b32.xlu0 %v5156, 8
        %v5564 = vpop.permute.xlu0 %5563
        %5565 = vrot.lane.b32.xlu0 %v5157, 8
        %v5566 = vpop.permute.xlu0 %5565
        %5567 = vrot.lane.b32.xlu0 %v5158, 8
        %v5568 = vpop.permute.xlu0 %5567
        %5569 = vrot.lane.b32.xlu0 %v5159, 8
        %v5570 = vpop.permute.xlu0 %5569
        %5571 = vrot.lane.b32.xlu0 %v5160, 8
        %v5572 = vpop.permute.xlu0 %5571
        %5573 = vrot.lane.b32.xlu0 %v5161, 8
        %v5574 = vpop.permute.xlu0 %5573
        %5575 = vrot.lane.b32.xlu0 %v5162, 8
        %v5576 = vpop.permute.xlu0 %5575
        %5577 = vrot.lane.b32.xlu0 %v5163, 8
        %v5578 = vpop.permute.xlu0 %5577
        %5579 = vrot.lane.b32.xlu0 %v5164, 8
        %v5580 = vpop.permute.xlu0 %5579
        %5581 = vrot.lane.b32.xlu0 %v5165, 8
        %v5582 = vpop.permute.xlu0 %5581
        %5647 = vrot.lane.b32.xlu0 %v5166, 12
        %v5648 = vpop.permute.xlu0 %5647
        %5649 = vrot.lane.b32.xlu0 %v5167, 12
        %v5650 = vpop.permute.xlu0 %5649
        %5651 = vrot.lane.b32.xlu0 %v5168, 12
        %v5652 = vpop.permute.xlu0 %5651
        %5653 = vrot.lane.b32.xlu0 %v5169, 12
        %v5654 = vpop.permute.xlu0 %5653
        %5655 = vrot.lane.b32.xlu0 %v5170, 12
        %v5656 = vpop.permute.xlu0 %5655
        %5657 = vrot.lane.b32.xlu0 %v5171, 12
        %v5658 = vpop.permute.xlu0 %5657
        %5659 = vrot.lane.b32.xlu0 %v5172, 12
        %v5660 = vpop.permute.xlu0 %5659
        %5661 = vrot.lane.b32.xlu0 %v5173, 12
        %v5662 = vpop.permute.xlu0 %5661
        %5663 = vrot.lane.b32.xlu0 %v5174, 12
        %v5664 = vpop.permute.xlu0 %5663
        %5665 = vrot.lane.b32.xlu0 %v5175, 12
        %v5666 = vpop.permute.xlu0 %5665
        %5667 = vrot.lane.b32.xlu0 %v5176, 12
        %v5668 = vpop.permute.xlu0 %5667
        %5669 = vrot.lane.b32.xlu0 %v5177, 12
        %v5670 = vpop.permute.xlu0 %5669
        %5671 = vrot.lane.b32.xlu0 %v5178, 12
        %v5672 = vpop.permute.xlu0 %5671
        %5673 = vrot.lane.b32.xlu0 %v5179, 12
        %v5674 = vpop.permute.xlu0 %5673
        %5675 = vrot.lane.b32.xlu0 %v5180, 12
        %v5676 = vpop.permute.xlu0 %5675
        %5677 = vrot.lane.b32.xlu0 %v5181, 12
        %v5678 = vpop.permute.xlu0 %5677
        %5679 = vrot.lane.b32.xlu0 %v5182, 12
        %v5680 = vpop.permute.xlu0 %5679
        %5681 = vrot.lane.b32.xlu0 %v5183, 12
        %v5682 = vpop.permute.xlu0 %5681
        %5683 = vrot.lane.b32.xlu0 %v5184, 12
        %v5684 = vpop.permute.xlu0 %5683
        %5685 = vrot.lane.b32.xlu0 %v5185, 12
        %v5686 = vpop.permute.xlu0 %5685
        %5687 = vrot.lane.b32.xlu0 %v5186, 12
        %v5688 = vpop.permute.xlu0 %5687
        %5689 = vrot.lane.b32.xlu0 %v5187, 12
        %v5690 = vpop.permute.xlu0 %5689
        %5691 = vrot.lane.b32.xlu0 %v5188, 12
        %v5692 = vpop.permute.xlu0 %5691
        %5693 = vrot.lane.b32.xlu0 %v5189, 12
        %v5694 = vpop.permute.xlu0 %5693
        %5695 = vrot.lane.b32.xlu0 %v5190, 12
        %v5696 = vpop.permute.xlu0 %5695
        %5697 = vrot.lane.b32.xlu0 %v5191, 12
        %v5698 = vpop.permute.xlu0 %5697
        %5699 = vrot.lane.b32.xlu0 %v5192, 12
        %v5700 = vpop.permute.xlu0 %5699
        %5701 = vrot.lane.b32.xlu0 %v5193, 12
        %v5702 = vpop.permute.xlu0 %5701
        %5703 = vrot.lane.b32.xlu0 %v5194, 12
        %v5704 = vpop.permute.xlu0 %5703
        %5705 = vrot.lane.b32.xlu0 %v5195, 12
        %v5706 = vpop.permute.xlu0 %5705
        %5707 = vrot.lane.b32.xlu0 %v5196, 12
        %v5708 = vpop.permute.xlu0 %5707
        %5709 = vrot.lane.b32.xlu0 %v5197, 12
        %v5710 = vpop.permute.xlu0 %5709
        %5775 = vrot.lane.b32.xlu0 %v5198, 16
        %v5776 = vpop.permute.xlu0 %5775
        %5777 = vrot.lane.b32.xlu0 %v5199, 16
        %v5778 = vpop.permute.xlu0 %5777
        %5779 = vrot.lane.b32.xlu0 %v5200, 16
        %v5780 = vpop.permute.xlu0 %5779
        %5781 = vrot.lane.b32.xlu0 %v5201, 16
        %v5782 = vpop.permute.xlu0 %5781
        %5783 = vrot.lane.b32.xlu0 %v5202, 16
        %v5784 = vpop.permute.xlu0 %5783
        %5785 = vrot.lane.b32.xlu0 %v5203, 16
        %v5786 = vpop.permute.xlu0 %5785
        %5787 = vrot.lane.b32.xlu0 %v5204, 16
        %v5788 = vpop.permute.xlu0 %5787
        %5789 = vrot.lane.b32.xlu0 %v5205, 16
        %v5790 = vpop.permute.xlu0 %5789
        %5791 = vrot.lane.b32.xlu0 %v5206, 16
        %v5792 = vpop.permute.xlu0 %5791
        %5793 = vrot.lane.b32.xlu0 %v5207, 16
        %v5794 = vpop.permute.xlu0 %5793
        %5795 = vrot.lane.b32.xlu0 %v5208, 16
        %v5796 = vpop.permute.xlu0 %5795
        %5797 = vrot.lane.b32.xlu0 %v5209, 16
        %v5798 = vpop.permute.xlu0 %5797
        %5799 = vrot.lane.b32.xlu0 %v5210, 16
        %v5800 = vpop.permute.xlu0 %5799
        %5801 = vrot.lane.b32.xlu0 %v5211, 16
        %v5802 = vpop.permute.xlu0 %5801
        %5803 = vrot.lane.b32.xlu0 %v5212, 16
        %v5804 = vpop.permute.xlu0 %5803
        %5805 = vrot.lane.b32.xlu0 %v5213, 16
        %v5806 = vpop.permute.xlu0 %5805
        %5807 = vrot.lane.b32.xlu0 %v5214, 16
        %v5808 = vpop.permute.xlu0 %5807
        %5809 = vrot.lane.b32.xlu0 %v5215, 16
        %v5810 = vpop.permute.xlu0 %5809
        %5811 = vrot.lane.b32.xlu0 %v5216, 16
        %v5812 = vpop.permute.xlu0 %5811
        %5813 = vrot.lane.b32.xlu0 %v5217, 16
        %v5814 = vpop.permute.xlu0 %5813
        %5815 = vrot.lane.b32.xlu0 %v5218, 16
        %v5816 = vpop.permute.xlu0 %5815
        %5817 = vrot.lane.b32.xlu0 %v5219, 16
        %v5818 = vpop.permute.xlu0 %5817
        %5819 = vrot.lane.b32.xlu0 %v5220, 16
        %v5820 = vpop.permute.xlu0 %5819
        %5821 = vrot.lane.b32.xlu0 %v5221, 16
        %v5822 = vpop.permute.xlu0 %5821
        %5823 = vrot.lane.b32.xlu0 %v5222, 16
        %v5824 = vpop.permute.xlu0 %5823
        %5825 = vrot.lane.b32.xlu0 %v5223, 16
        %v5826 = vpop.permute.xlu0 %5825
        %5827 = vrot.lane.b32.xlu0 %v5224, 16
        %v5828 = vpop.permute.xlu0 %5827
        %5829 = vrot.lane.b32.xlu0 %v5225, 16
        %v5830 = vpop.permute.xlu0 %5829
        %5831 = vrot.lane.b32.xlu0 %v5226, 16
        %v5832 = vpop.permute.xlu0 %5831
        %5833 = vrot.lane.b32.xlu0 %v5227, 16
        %v5834 = vpop.permute.xlu0 %5833
        %5835 = vrot.lane.b32.xlu0 %v5228, 16
        %v5836 = vpop.permute.xlu0 %5835
        %5837 = vrot.lane.b32.xlu0 %v5229, 16
        %v5838 = vpop.permute.xlu0 %5837
        %5903 = vrot.lane.b32.xlu0 %v5230, 20
        %v5904 = vpop.permute.xlu0 %5903
        %5905 = vrot.lane.b32.xlu0 %v5231, 20
        %v5906 = vpop.permute.xlu0 %5905
        %5907 = vrot.lane.b32.xlu0 %v5232, 20
        %v5908 = vpop.permute.xlu0 %5907
        %5909 = vrot.lane.b32.xlu0 %v5233, 20
        %v5910 = vpop.permute.xlu0 %5909
        %5911 = vrot.lane.b32.xlu0 %v5234, 20
        %v5912 = vpop.permute.xlu0 %5911
        %5913 = vrot.lane.b32.xlu0 %v5235, 20
        %v5914 = vpop.permute.xlu0 %5913
        %5915 = vrot.lane.b32.xlu0 %v5236, 20
        %v5916 = vpop.permute.xlu0 %5915
        %5917 = vrot.lane.b32.xlu0 %v5237, 20
        %v5918 = vpop.permute.xlu0 %5917
        %5919 = vrot.lane.b32.xlu0 %v5238, 20
        %v5920 = vpop.permute.xlu0 %5919
        %5921 = vrot.lane.b32.xlu0 %v5239, 20
        %v5922 = vpop.permute.xlu0 %5921
        %5923 = vrot.lane.b32.xlu0 %v5240, 20
        %v5924 = vpop.permute.xlu0 %5923
        %5925 = vrot.lane.b32.xlu0 %v5241, 20
        %v5926 = vpop.permute.xlu0 %5925
        %5927 = vrot.lane.b32.xlu0 %v5242, 20
        %v5928 = vpop.permute.xlu0 %5927
        %5929 = vrot.lane.b32.xlu0 %v5243, 20
        %v5930 = vpop.permute.xlu0 %5929
        %5931 = vrot.lane.b32.xlu0 %v5244, 20
        %v5932 = vpop.permute.xlu0 %5931
        %5933 = vrot.lane.b32.xlu0 %v5245, 20
        %v5934 = vpop.permute.xlu0 %5933
        %5935 = vrot.lane.b32.xlu0 %v5246, 20
        %v5936 = vpop.permute.xlu0 %5935
        %5937 = vrot.lane.b32.xlu0 %v5247, 20
        %v5938 = vpop.permute.xlu0 %5937
        %5939 = vrot.lane.b32.xlu0 %v5248, 20
        %v5940 = vpop.permute.xlu0 %5939
        %5941 = vrot.lane.b32.xlu0 %v5249, 20
        %v5942 = vpop.permute.xlu0 %5941
        %5943 = vrot.lane.b32.xlu0 %v5250, 20
        %v5944 = vpop.permute.xlu0 %5943
        %5945 = vrot.lane.b32.xlu0 %v5251, 20
        %v5946 = vpop.permute.xlu0 %5945
        %5947 = vrot.lane.b32.xlu0 %v5252, 20
        %v5948 = vpop.permute.xlu0 %5947
        %5949 = vrot.lane.b32.xlu0 %v5253, 20
        %v5950 = vpop.permute.xlu0 %5949
        %5951 = vrot.lane.b32.xlu0 %v5254, 20
        %v5952 = vpop.permute.xlu0 %5951
        %5953 = vrot.lane.b32.xlu0 %v5255, 20
        %v5954 = vpop.permute.xlu0 %5953
        %5955 = vrot.lane.b32.xlu0 %v5256, 20
        %v5956 = vpop.permute.xlu0 %5955
        %5957 = vrot.lane.b32.xlu0 %v5257, 20
        %v5958 = vpop.permute.xlu0 %5957
        %5959 = vrot.lane.b32.xlu0 %v5258, 20
        %v5960 = vpop.permute.xlu0 %5959
        %5961 = vrot.lane.b32.xlu0 %v5259, 20
        %v5962 = vpop.permute.xlu0 %5961
        %5963 = vrot.lane.b32.xlu0 %v5260, 20
        %v5964 = vpop.permute.xlu0 %5963
        %5965 = vrot.lane.b32.xlu0 %v5261, 20
        %v5966 = vpop.permute.xlu0 %5965
        %6031 = vrot.lane.b32.xlu0 %v5263, 24
        %v6032 = vpop.permute.xlu0 %6031
        %6033 = vrot.lane.b32.xlu0 %v5264, 24
        %v6034 = vpop.permute.xlu0 %6033
        %6035 = vrot.lane.b32.xlu0 %v5265, 24
        %v6036 = vpop.permute.xlu0 %6035
        %6037 = vrot.lane.b32.xlu0 %v5266, 24
        %v6038 = vpop.permute.xlu0 %6037
        %6039 = vrot.lane.b32.xlu0 %v5267, 24
        %v6040 = vpop.permute.xlu0 %6039
        %6041 = vrot.lane.b32.xlu0 %v5268, 24
        %v6042 = vpop.permute.xlu0 %6041
        %6043 = vrot.lane.b32.xlu0 %v5269, 24
        %v6044 = vpop.permute.xlu0 %6043
        %6045 = vrot.lane.b32.xlu0 %v5270, 24
        %v6046 = vpop.permute.xlu0 %6045
        %6047 = vrot.lane.b32.xlu0 %v5271, 24
        %v6048 = vpop.permute.xlu0 %6047
        %6049 = vrot.lane.b32.xlu0 %v5272, 24
        %v6050 = vpop.permute.xlu0 %6049
        %6051 = vrot.lane.b32.xlu0 %v5273, 24
        %v6052 = vpop.permute.xlu0 %6051
        %6053 = vrot.lane.b32.xlu0 %v5274, 24
        %v6054 = vpop.permute.xlu0 %6053
        %6055 = vrot.lane.b32.xlu0 %v5275, 24
        %v6056 = vpop.permute.xlu0 %6055
        %6057 = vrot.lane.b32.xlu0 %v5276, 24
        %v6058 = vpop.permute.xlu0 %6057
        %6059 = vrot.lane.b32.xlu0 %v5277, 24
        %v6060 = vpop.permute.xlu0 %6059
        %6061 = vrot.lane.b32.xlu0 %v5278, 24
        %v6062 = vpop.permute.xlu0 %6061
        %6063 = vrot.lane.b32.xlu0 %v5279, 24
        %v6064 = vpop.permute.xlu0 %6063
        %6065 = vrot.lane.b32.xlu0 %v5280, 24
        %v6066 = vpop.permute.xlu0 %6065
        %6067 = vrot.lane.b32.xlu0 %v5281, 24
        %v6068 = vpop.permute.xlu0 %6067
        %6069 = vrot.lane.b32.xlu0 %v5282, 24
        %v6070 = vpop.permute.xlu0 %6069
        %6071 = vrot.lane.b32.xlu0 %v5283, 24
        %v6072 = vpop.permute.xlu0 %6071
        %6073 = vrot.lane.b32.xlu0 %v5284, 24
        %v6074 = vpop.permute.xlu0 %6073
        %6075 = vrot.lane.b32.xlu0 %v5285, 24
        %v6076 = vpop.permute.xlu0 %6075
        %6077 = vrot.lane.b32.xlu0 %v5286, 24
        %v6078 = vpop.permute.xlu0 %6077
        %6079 = vrot.lane.b32.xlu0 %v5287, 24
        %v6080 = vpop.permute.xlu0 %6079
        %6081 = vrot.lane.b32.xlu0 %v5288, 24
        %v6082 = vpop.permute.xlu0 %6081
        %6083 = vrot.lane.b32.xlu0 %v5289, 24
        %v6084 = vpop.permute.xlu0 %6083
        %6085 = vrot.lane.b32.xlu0 %v5290, 24
        %v6086 = vpop.permute.xlu0 %6085
        %6087 = vrot.lane.b32.xlu0 %v5291, 24
        %v6088 = vpop.permute.xlu0 %6087
        %6089 = vrot.lane.b32.xlu0 %v5292, 24
        %v6090 = vpop.permute.xlu0 %6089
        %6091 = vrot.lane.b32.xlu0 %v5293, 24
        %v6092 = vpop.permute.xlu0 %6091
        %6093 = vrot.lane.b32.xlu0 %v5294, 24
        %v6094 = vpop.permute.xlu0 %6093
        %6159 = vrot.lane.b32.xlu0 %v5295, 28
        %v6160 = vpop.permute.xlu0 %6159
        %6161 = vrot.lane.b32.xlu0 %v5296, 28
        %v6162 = vpop.permute.xlu0 %6161
        %6163 = vrot.lane.b32.xlu0 %v5297, 28
        %v6164 = vpop.permute.xlu0 %6163
        %6165 = vrot.lane.b32.xlu0 %v5298, 28
        %v6166 = vpop.permute.xlu0 %6165
        %6167 = vrot.lane.b32.xlu0 %v5299, 28
        %v6168 = vpop.permute.xlu0 %6167
        %6169 = vrot.lane.b32.xlu0 %v5300, 28
        %v6170 = vpop.permute.xlu0 %6169
        %6171 = vrot.lane.b32.xlu0 %v5301, 28
        %v6172 = vpop.permute.xlu0 %6171
        %6173 = vrot.lane.b32.xlu0 %v5302, 28
        %v6174 = vpop.permute.xlu0 %6173
        %6175 = vrot.lane.b32.xlu0 %v5303, 28
        %v6176 = vpop.permute.xlu0 %6175
        %6177 = vrot.lane.b32.xlu0 %v5304, 28
        %v6178 = vpop.permute.xlu0 %6177
        %6179 = vrot.lane.b32.xlu0 %v5305, 28
        %v6180 = vpop.permute.xlu0 %6179
        %6181 = vrot.lane.b32.xlu0 %v5306, 28
        %v6182 = vpop.permute.xlu0 %6181
        %6183 = vrot.lane.b32.xlu0 %v5307, 28
        %v6184 = vpop.permute.xlu0 %6183
        %6185 = vrot.lane.b32.xlu0 %v5308, 28
        %v6186 = vpop.permute.xlu0 %6185
        %6187 = vrot.lane.b32.xlu0 %v5309, 28
        %v6188 = vpop.permute.xlu0 %6187
        %6189 = vrot.lane.b32.xlu0 %v5310, 28
        %v6190 = vpop.permute.xlu0 %6189
        %6191 = vrot.lane.b32.xlu0 %v5311, 28
        %v6192 = vpop.permute.xlu0 %6191
        %6193 = vrot.lane.b32.xlu0 %v5312, 28
        %v6194 = vpop.permute.xlu0 %6193
        %6195 = vrot.lane.b32.xlu0 %v5313, 28
        %v6196 = vpop.permute.xlu0 %6195
        %6197 = vrot.lane.b32.xlu0 %v5314, 28
        %v6198 = vpop.permute.xlu0 %6197
        %6199 = vrot.lane.b32.xlu0 %v5315, 28
        %v6200 = vpop.permute.xlu0 %6199
        %6201 = vrot.lane.b32.xlu0 %v5316, 28
        %v6202 = vpop.permute.xlu0 %6201
        %6203 = vrot.lane.b32.xlu0 %v5317, 28
        %v6204 = vpop.permute.xlu0 %6203
        %6205 = vrot.lane.b32.xlu0 %v5318, 28
        %v6206 = vpop.permute.xlu0 %6205
        %6207 = vrot.lane.b32.xlu0 %v5319, 28
        %v6208 = vpop.permute.xlu0 %6207
        %6209 = vrot.lane.b32.xlu0 %v5320, 28
        %v6210 = vpop.permute.xlu0 %6209
        %6211 = vrot.lane.b32.xlu0 %v5321, 28
        %v6212 = vpop.permute.xlu0 %6211
        %6213 = vrot.lane.b32.xlu0 %v5322, 28
        %v6214 = vpop.permute.xlu0 %6213
        %6215 = vrot.lane.b32.xlu0 %v5323, 28
        %v6216 = vpop.permute.xlu0 %6215
        %6217 = vrot.lane.b32.xlu0 %v5324, 28
        %v6218 = vpop.permute.xlu0 %6217
        %6219 = vrot.lane.b32.xlu0 %v5325, 28
        %v6220 = vpop.permute.xlu0 %6219
        %6221 = vrot.lane.b32.xlu0 %v5326, 28
        %v6222 = vpop.permute.xlu0 %6221
        %6287 = vrot.lane.b32.xlu0 %v5327, 32
        %v6288 = vpop.permute.xlu0 %6287
        %6289 = vrot.lane.b32.xlu0 %v5328, 32
        %v6290 = vpop.permute.xlu0 %6289
        %6291 = vrot.lane.b32.xlu0 %v5329, 32
        %v6292 = vpop.permute.xlu0 %6291
        %6293 = vrot.lane.b32.xlu0 %v5330, 32
        %v6294 = vpop.permute.xlu0 %6293
        %6295 = vrot.lane.b32.xlu0 %v5331, 32
        %v6296 = vpop.permute.xlu0 %6295
        %6297 = vrot.lane.b32.xlu0 %v5332, 32
        %v6298 = vpop.permute.xlu0 %6297
        %6299 = vrot.lane.b32.xlu0 %v5333, 32
        %v6300 = vpop.permute.xlu0 %6299
        %6301 = vrot.lane.b32.xlu0 %v5334, 32
        %v6302 = vpop.permute.xlu0 %6301
        %6303 = vrot.lane.b32.xlu0 %v5335, 32
        %v6304 = vpop.permute.xlu0 %6303
        %6305 = vrot.lane.b32.xlu0 %v5336, 32
        %v6306 = vpop.permute.xlu0 %6305
        %6307 = vrot.lane.b32.xlu0 %v5337, 32
        %v6308 = vpop.permute.xlu0 %6307
        %6309 = vrot.lane.b32.xlu0 %v5338, 32
        %v6310 = vpop.permute.xlu0 %6309
        %6311 = vrot.lane.b32.xlu0 %v5339, 32
        %v6312 = vpop.permute.xlu0 %6311
        %6313 = vrot.lane.b32.xlu0 %v5340, 32
        %v6314 = vpop.permute.xlu0 %6313
        %6315 = vrot.lane.b32.xlu0 %v5341, 32
        %v6316 = vpop.permute.xlu0 %6315
        %6317 = vrot.lane.b32.xlu0 %v5342, 32
        %v6318 = vpop.permute.xlu0 %6317
        %6319 = vrot.lane.b32.xlu0 %v5343, 32
        %v6320 = vpop.permute.xlu0 %6319
        %6321 = vrot.lane.b32.xlu0 %v5344, 32
        %v6322 = vpop.permute.xlu0 %6321
        %6323 = vrot.lane.b32.xlu0 %v5345, 32
        %v6324 = vpop.permute.xlu0 %6323
        %6325 = vrot.lane.b32.xlu0 %v5346, 32
        %v6326 = vpop.permute.xlu0 %6325
        %6327 = vrot.lane.b32.xlu0 %v5347, 32
        %v6328 = vpop.permute.xlu0 %6327
        %6329 = vrot.lane.b32.xlu0 %v5348, 32
        %v6330 = vpop.permute.xlu0 %6329
        %6331 = vrot.lane.b32.xlu0 %v5349, 32
        %v6332 = vpop.permute.xlu0 %6331
        %6333 = vrot.lane.b32.xlu0 %v5350, 32
        %v6334 = vpop.permute.xlu0 %6333
        %6335 = vrot.lane.b32.xlu0 %v5351, 32
        %v6336 = vpop.permute.xlu0 %6335
        %6337 = vrot.lane.b32.xlu0 %v5352, 32
        %v6338 = vpop.permute.xlu0 %6337
        %6339 = vrot.lane.b32.xlu0 %v5353, 32
        %v6340 = vpop.permute.xlu0 %6339
        %6341 = vrot.lane.b32.xlu0 %v5354, 32
        %v6342 = vpop.permute.xlu0 %6341
        %6343 = vrot.lane.b32.xlu0 %v5355, 32
        %v6344 = vpop.permute.xlu0 %6343
        %6345 = vrot.lane.b32.xlu0 %v5356, 32
        %v6346 = vpop.permute.xlu0 %6345
        %6347 = vrot.lane.b32.xlu0 %v5357, 32
        %v6348 = vpop.permute.xlu0 %6347
        %6349 = vrot.lane.b32.xlu0 %v5358, 32
        %v6350 = vpop.permute.xlu0 %6349
        %v6383 = vsel %vm381, %v5070, %v5392
        %v6384 = vsel %vm381, %v5071, %v5394
        %v6385 = vsel %vm381, %v5072, %v5396
        %v6386 = vsel %vm381, %v5073, %v5398
        %v6387 = vsel %vm381, %v5074, %v5400
        %v6388 = vsel %vm381, %v5075, %v5402
        %v6389 = vsel %vm381, %v5076, %v5404
        %v6390 = vsel %vm381, %v5077, %v5406
        %v6391 = vsel %vm381, %v5078, %v5408
        %v6392 = vsel %vm381, %v5079, %v5410
        %v6393 = vsel %vm381, %v5080, %v5412
        %v6394 = vsel %vm381, %v5081, %v5414
        %v6395 = vsel %vm381, %v5082, %v5416
        %v6396 = vsel %vm381, %v5083, %v5418
        %v6397 = vsel %vm381, %v5084, %v5420
        %v6398 = vsel %vm381, %v5085, %v5422
        %v6399 = vsel %vm381, %v5086, %v5424
        %v6400 = vsel %vm381, %v5087, %v5426
        %v6401 = vsel %vm381, %v5088, %v5428
        %v6402 = vsel %vm381, %v5089, %v5430
        %v6403 = vsel %vm381, %v5090, %v5432
        %v6404 = vsel %vm381, %v5091, %v5434
        %v6405 = vsel %vm381, %v5092, %v5436
        %v6406 = vsel %vm381, %v5093, %v5438
        %v6407 = vsel %vm381, %v5094, %v5440
        %v6408 = vsel %vm381, %v5095, %v5442
        %v6409 = vsel %vm381, %v5096, %v5444
        %v6410 = vsel %vm381, %v5097, %v5446
        %v6411 = vsel %vm381, %v5098, %v5448
        %v6412 = vsel %vm381, %v5099, %v5450
        %v6413 = vsel %vm381, %v5100, %v5452
        %v6414 = vsel %vm381, %v5101, %v5454
        %v6415 = vsel %vm4592, %v6383, %v5520
        %v6416 = vsel %vm4592, %v6384, %v5522
        %v6417 = vsel %vm4592, %v6385, %v5524
        %v6418 = vsel %vm4592, %v6386, %v5526
        %v6419 = vsel %vm4592, %v6387, %v5528
        %v6420 = vsel %vm4592, %v6388, %v5530
        %v6421 = vsel %vm4592, %v6389, %v5532
        %v6422 = vsel %vm4592, %v6390, %v5534
        %v6423 = vsel %vm4592, %v6391, %v5536
        %v6424 = vsel %vm4592, %v6392, %v5538
        %v6425 = vsel %vm4592, %v6393, %v5540
        %v6426 = vsel %vm4592, %v6394, %v5542
        %v6427 = vsel %vm4592, %v6395, %v5544
        %v6428 = vsel %vm4592, %v6396, %v5546
        %v6429 = vsel %vm4592, %v6397, %v5548
        %v6430 = vsel %vm4592, %v6398, %v5550
        %v6431 = vsel %vm4592, %v6399, %v5552
        %v6432 = vsel %vm4592, %v6400, %v5554
        %v6433 = vsel %vm4592, %v6401, %v5556
        %v6434 = vsel %vm4592, %v6402, %v5558
        %v6435 = vsel %vm4592, %v6403, %v5560
        %v6436 = vsel %vm4592, %v6404, %v5562
        %v6437 = vsel %vm4592, %v6405, %v5564
        %v6438 = vsel %vm4592, %v6406, %v5566
        %v6439 = vsel %vm4592, %v6407, %v5568
        %v6440 = vsel %vm4592, %v6408, %v5570
        %v6441 = vsel %vm4592, %v6409, %v5572
        %v6442 = vsel %vm4592, %v6410, %v5574
        %v6443 = vsel %vm4592, %v6411, %v5576
        %v6444 = vsel %vm4592, %v6412, %v5578
        %v6445 = vsel %vm4592, %v6413, %v5580
        %v6446 = vsel %vm4592, %v6414, %v5582
        %v6447 = vsel %vm4625, %v6415, %v5648
        %v6448 = vsel %vm4625, %v6416, %v5650
        %v6449 = vsel %vm4625, %v6417, %v5652
        %v6450 = vsel %vm4625, %v6418, %v5654
        %v6451 = vsel %vm4625, %v6419, %v5656
        %v6452 = vsel %vm4625, %v6420, %v5658
        %v6453 = vsel %vm4625, %v6421, %v5660
        %v6454 = vsel %vm4625, %v6422, %v5662
        %v6455 = vsel %vm4625, %v6423, %v5664
        %v6456 = vsel %vm4625, %v6424, %v5666
        %v6457 = vsel %vm4625, %v6425, %v5668
        %v6458 = vsel %vm4625, %v6426, %v5670
        %v6459 = vsel %vm4625, %v6427, %v5672
        %v6460 = vsel %vm4625, %v6428, %v5674
        %v6461 = vsel %vm4625, %v6429, %v5676
        %v6462 = vsel %vm4625, %v6430, %v5678
        %v6463 = vsel %vm4625, %v6431, %v5680
        %v6464 = vsel %vm4625, %v6432, %v5682
        %v6465 = vsel %vm4625, %v6433, %v5684
        %v6466 = vsel %vm4625, %v6434, %v5686
        %v6467 = vsel %vm4625, %v6435, %v5688
        %v6468 = vsel %vm4625, %v6436, %v5690
        %v6469 = vsel %vm4625, %v6437, %v5692
        %v6470 = vsel %vm4625, %v6438, %v5694
        %v6471 = vsel %vm4625, %v6439, %v5696
        %v6472 = vsel %vm4625, %v6440, %v5698
        %v6473 = vsel %vm4625, %v6441, %v5700
        %v6474 = vsel %vm4625, %v6442, %v5702
        %v6475 = vsel %vm4625, %v6443, %v5704
        %v6476 = vsel %vm4625, %v6444, %v5706
        %v6477 = vsel %vm4625, %v6445, %v5708
        %v6478 = vsel %vm4625, %v6446, %v5710
        %v6479 = vsel %vm4658, %v6447, %v5776
        %v6480 = vsel %vm4658, %v6448, %v5778
        %v6481 = vsel %vm4658, %v6449, %v5780
        %v6482 = vsel %vm4658, %v6450, %v5782
        %v6483 = vsel %vm4658, %v6451, %v5784
        %v6484 = vsel %vm4658, %v6452, %v5786
        %v6485 = vsel %vm4658, %v6453, %v5788
        %v6486 = vsel %vm4658, %v6454, %v5790
        %v6487 = vsel %vm4658, %v6455, %v5792
        %v6488 = vsel %vm4658, %v6456, %v5794
        %v6489 = vsel %vm4658, %v6457, %v5796
        %v6490 = vsel %vm4658, %v6458, %v5798
        %v6491 = vsel %vm4658, %v6459, %v5800
        %v6492 = vsel %vm4658, %v6460, %v5802
        %v6493 = vsel %vm4658, %v6461, %v5804
        %v6494 = vsel %vm4658, %v6462, %v5806
        %v6495 = vsel %vm4658, %v6463, %v5808
        %v6496 = vsel %vm4658, %v6464, %v5810
        %v6497 = vsel %vm4658, %v6465, %v5812
        %v6498 = vsel %vm4658, %v6466, %v5814
        %v6499 = vsel %vm4658, %v6467, %v5816
        %v6500 = vsel %vm4658, %v6468, %v5818
        %v6501 = vsel %vm4658, %v6469, %v5820
        %v6502 = vsel %vm4658, %v6470, %v5822
        %v6503 = vsel %vm4658, %v6471, %v5824
        %v6504 = vsel %vm4658, %v6472, %v5826
        %v6505 = vsel %vm4658, %v6473, %v5828
        %v6506 = vsel %vm4658, %v6474, %v5830
        %v6507 = vsel %vm4658, %v6475, %v5832
        %v6508 = vsel %vm4658, %v6476, %v5834
        %v6509 = vsel %vm4658, %v6477, %v5836
        %v6510 = vsel %vm4658, %v6478, %v5838
        %v6511 = vsel %vm4691, %v6479, %v5904
        %v6512 = vsel %vm4691, %v6480, %v5906
        %v6513 = vsel %vm4691, %v6481, %v5908
        %v6514 = vsel %vm4691, %v6482, %v5910
        %v6515 = vsel %vm4691, %v6483, %v5912
        %v6516 = vsel %vm4691, %v6484, %v5914
        %v6517 = vsel %vm4691, %v6485, %v5916
        %v6518 = vsel %vm4691, %v6486, %v5918
        %v6519 = vsel %vm4691, %v6487, %v5920
        %v6520 = vsel %vm4691, %v6488, %v5922
        %v6521 = vsel %vm4691, %v6489, %v5924
        %v6522 = vsel %vm4691, %v6490, %v5926
        %v6523 = vsel %vm4691, %v6491, %v5928
        %v6524 = vsel %vm4691, %v6492, %v5930
        %v6525 = vsel %vm4691, %v6493, %v5932
        %v6526 = vsel %vm4691, %v6494, %v5934
        %v6527 = vsel %vm4691, %v6495, %v5936
        %v6528 = vsel %vm4691, %v6496, %v5938
        %v6529 = vsel %vm4691, %v6497, %v5940
        %v6530 = vsel %vm4691, %v6498, %v5942
        %v6531 = vsel %vm4691, %v6499, %v5944
        %v6532 = vsel %vm4691, %v6500, %v5946
        %v6533 = vsel %vm4691, %v6501, %v5948
        %v6534 = vsel %vm4691, %v6502, %v5950
        %v6535 = vsel %vm4691, %v6503, %v5952
        %v6536 = vsel %vm4691, %v6504, %v5954
        %v6537 = vsel %vm4691, %v6505, %v5956
        %v6538 = vsel %vm4691, %v6506, %v5958
        %v6539 = vsel %vm4691, %v6507, %v5960
        %v6540 = vsel %vm4691, %v6508, %v5962
        %v6541 = vsel %vm4691, %v6509, %v5964
        %v6542 = vsel %vm4691, %v6510, %v5966
        %v6543 = vsel %vm4724, %v6511, %v6032
        %v6544 = vsel %vm4724, %v6512, %v6034
        %v6545 = vsel %vm4724, %v6513, %v6036
        %v6546 = vsel %vm4724, %v6514, %v6038
        %v6547 = vsel %vm4724, %v6515, %v6040
        %v6548 = vsel %vm4724, %v6516, %v6042
        %v6549 = vsel %vm4724, %v6517, %v6044
        %v6550 = vsel %vm4724, %v6518, %v6046
        %v6551 = vsel %vm4724, %v6519, %v6048
        %v6552 = vsel %vm4724, %v6520, %v6050
        %v6553 = vsel %vm4724, %v6521, %v6052
        %v6554 = vsel %vm4724, %v6522, %v6054
        %v6555 = vsel %vm4724, %v6523, %v6056
        %v6556 = vsel %vm4724, %v6524, %v6058
        %v6557 = vsel %vm4724, %v6525, %v6060
        %v6558 = vsel %vm4724, %v6526, %v6062
        %v6559 = vsel %vm4724, %v6527, %v6064
        %v6560 = vsel %vm4724, %v6528, %v6066
        %v6561 = vsel %vm4724, %v6529, %v6068
        %v6562 = vsel %vm4724, %v6530, %v6070
        %v6563 = vsel %vm4724, %v6531, %v6072
        %v6564 = vsel %vm4724, %v6532, %v6074
        %v6565 = vsel %vm4724, %v6533, %v6076
        %v6566 = vsel %vm4724, %v6534, %v6078
        %v6567 = vsel %vm4724, %v6535, %v6080
        %v6568 = vsel %vm4724, %v6536, %v6082
        %v6569 = vsel %vm4724, %v6537, %v6084
        %v6570 = vsel %vm4724, %v6538, %v6086
        %v6571 = vsel %vm4724, %v6539, %v6088
        %v6572 = vsel %vm4724, %v6540, %v6090
        %v6573 = vsel %vm4724, %v6541, %v6092
        %v6574 = vsel %vm4724, %v6542, %v6094
        %v6575 = vsel %vm4757, %v6543, %v6160
        %v6576 = vsel %vm4757, %v6544, %v6162
        %v6577 = vsel %vm4757, %v6545, %v6164
        %v6578 = vsel %vm4757, %v6546, %v6166
        %v6579 = vsel %vm4757, %v6547, %v6168
        %v6580 = vsel %vm4757, %v6548, %v6170
        %v6581 = vsel %vm4757, %v6549, %v6172
        %v6582 = vsel %vm4757, %v6550, %v6174
        %v6583 = vsel %vm4757, %v6551, %v6176
        %v6584 = vsel %vm4757, %v6552, %v6178
        %v6585 = vsel %vm4757, %v6553, %v6180
        %v6586 = vsel %vm4757, %v6554, %v6182
        %v6587 = vsel %vm4757, %v6555, %v6184
        %v6588 = vsel %vm4757, %v6556, %v6186
        %v6589 = vsel %vm4757, %v6557, %v6188
        %v6590 = vsel %vm4757, %v6558, %v6190
        %v6591 = vsel %vm4757, %v6559, %v6192
        %v6592 = vsel %vm4757, %v6560, %v6194
        %v6593 = vsel %vm4757, %v6561, %v6196
        %v6594 = vsel %vm4757, %v6562, %v6198
        %v6595 = vsel %vm4757, %v6563, %v6200
        %v6596 = vsel %vm4757, %v6564, %v6202
        %v6597 = vsel %vm4757, %v6565, %v6204
        %v6598 = vsel %vm4757, %v6566, %v6206
        %v6599 = vsel %vm4757, %v6567, %v6208
        %v6600 = vsel %vm4757, %v6568, %v6210
        %v6601 = vsel %vm4757, %v6569, %v6212
        %v6602 = vsel %vm4757, %v6570, %v6214
        %v6603 = vsel %vm4757, %v6571, %v6216
        %v6604 = vsel %vm4757, %v6572, %v6218
        %v6605 = vsel %vm4757, %v6573, %v6220
        %v6606 = vsel %vm4757, %v6574, %v6222
        %v6607 = vsel %vm4790, %v6575, %v6288
        %v6608 = vsel %vm4790, %v6576, %v6290
        %v6609 = vsel %vm4790, %v6577, %v6292
        %v6610 = vsel %vm4790, %v6578, %v6294
        %v6611 = vsel %vm4790, %v6579, %v6296
        %v6612 = vsel %vm4790, %v6580, %v6298
        %v6613 = vsel %vm4790, %v6581, %v6300
        %v6614 = vsel %vm4790, %v6582, %v6302
        %v6615 = vsel %vm4790, %v6583, %v6304
        %v6616 = vsel %vm4790, %v6584, %v6306
        %v6617 = vsel %vm4790, %v6585, %v6308
        %v6618 = vsel %vm4790, %v6586, %v6310
        %v6619 = vsel %vm4790, %v6587, %v6312
        %v6620 = vsel %vm4790, %v6588, %v6314
        %v6621 = vsel %vm4790, %v6589, %v6316
        %v6622 = vsel %vm4790, %v6590, %v6318
        %v6623 = vsel %vm4790, %v6591, %v6320
        %v6624 = vsel %vm4790, %v6592, %v6322
        %v6625 = vsel %vm4790, %v6593, %v6324
        %v6626 = vsel %vm4790, %v6594, %v6326
        %v6627 = vsel %vm4790, %v6595, %v6328
        %v6628 = vsel %vm4790, %v6596, %v6330
        %v6629 = vsel %vm4790, %v6597, %v6332
        %v6630 = vsel %vm4790, %v6598, %v6334
        %v6631 = vsel %vm4790, %v6599, %v6336
        %v6632 = vsel %vm4790, %v6600, %v6338
        %v6633 = vsel %vm4790, %v6601, %v6340
        %v6634 = vsel %vm4790, %v6602, %v6342
        %v6635 = vsel %vm4790, %v6603, %v6344
        %v6636 = vsel %vm4790, %v6604, %v6346
        %v6637 = vsel %vm4790, %v6605, %v6348
        %v6638 = vsel %vm4790, %v6606, %v6350
        %v6639 = vpack.c.bf16 %v6608, %v6607
        %v6640 = vpack.c.bf16 %v6610, %v6609
        %v6641 = vpack.c.bf16 %v6612, %v6611
        %v6642 = vpack.c.bf16 %v6614, %v6613
        %v6643 = vpack.c.bf16 %v6616, %v6615
        %v6644 = vpack.c.bf16 %v6618, %v6617
        %v6645 = vpack.c.bf16 %v6620, %v6619
        %v6646 = vpack.c.bf16 %v6622, %v6621
        %v6647 = vpack.c.bf16 %v6624, %v6623
        %v6648 = vpack.c.bf16 %v6626, %v6625
        %v6649 = vpack.c.bf16 %v6628, %v6627
        %v6650 = vpack.c.bf16 %v6630, %v6629
        %v6651 = vpack.c.bf16 %v6632, %v6631
        %v6652 = vpack.c.bf16 %v6634, %v6633
        %v6653 = vpack.c.bf16 %v6636, %v6635
        %v6654 = vpack.c.bf16 %v6638, %v6637
        %v6655 = vld [vmem:[%s6] sm:$0xf]
        %v6656 = vld [vmem:[%s6 + $0x4] sm:$0xf]
        %v6657 = vld [vmem:[%s6 + $0x8] sm:$0xf]
        %v6658 = vld [vmem:[%s6 + $0xc] sm:$0xf]
        %v6659 = vld [vmem:[%s6 + $0x10] sm:$0x3]
        %v6660 = vld [vmem:[%s7] sm:$0x1]
        %v6662 = vperm.slane %v6660, 0
        %v6669 = vunpack.c.l.b16 %v6655
        %v6670 = vunpack.c.l.b16 %v6656
        %v6671 = vunpack.c.l.b16 %v6657
        %v6672 = vunpack.c.l.b16 %v6658
        %v6673 = vunpack.c.l.b16 %v6659
        %v6674 = vpack.c.b16 %v6670, %v6669
        %v6675 = vpack.c.b16 %v6672, %v6671
        %v6676 = vpack.c.b16 %v6673, %v6673
        %v6680 = vsel %vm4863, %v6639, 0
        %v6683 = vsel %vm4863, %v6640, 0
        %v6686 = vsel %vm4863, %v6641, 0
        %v6689 = vsel %vm4863, %v6642, 0
        %v6692 = vsel %vm4863, %v6643, 0
        %v6695 = vsel %vm4863, %v6644, 0
        %v6698 = vsel %vm4863, %v6645, 0
        %v6701 = vsel %vm4863, %v6646, 0
        %v6704 = vsel %vm4863, %v6647, 0
        %v6707 = vsel %vm4863, %v6648, 0
        %v6710 = vsel %vm4863, %v6649, 0
        %v6713 = vsel %vm4863, %v6650, 0
        %v6716 = vsel %vm4863, %v6651, 0
        %v6719 = vsel %vm4863, %v6652, 0
        %v6722 = vsel %vm4863, %v6653, 0
        %v6725 = vsel %vm4863, %v6654, 0
        %v6728 = vsel %vm4912, %v6676, 0
        %6730 = vmatpush.bf16.msra.mxu0 0
        %6731 = vmatpush.bf16.msra.mxu0 0
        %6732 = vmatpush.bf16.msra.mxu0 0
        %6733 = vmatpush.bf16.msra.mxu0 0
        %6734 = vmatpush.bf16.msra.mxu0 0
        %6735 = vmatpush.bf16.msra.mxu0 %v6728
        %6736 = vmatpush.bf16.msra.mxu0 %v6675
        %6737 = vmatpush.bf16.msra.mxu0 %v6674
        %6738 = vmatmul.bf16.gmra.mxu0 %v6680
        %v6739 = vpop.f32.mrf.mxu0
        %v6740 = vadd.f32 %v6662, %v6739
        %v6741 = vpop.f32.mrf.mxu0
        %v6742 = vadd.f32 %v6662, %v6741
        %6743 = vmatmul.bf16.gmra.mxu0 %v6683
        %v6744 = vpop.f32.mrf.mxu0
        %v6745 = vadd.f32 %v6662, %v6744
        %v6746 = vpop.f32.mrf.mxu0
        %v6747 = vadd.f32 %v6662, %v6746
        %6748 = vmatmul.bf16.gmra.mxu0 %v6686
        %v6749 = vpop.f32.mrf.mxu0
        %v6750 = vadd.f32 %v6662, %v6749
        %v6751 = vpop.f32.mrf.mxu0
        %v6752 = vadd.f32 %v6662, %v6751
        %6753 = vmatmul.bf16.gmra.mxu0 %v6689
        %v6754 = vpop.f32.mrf.mxu0
        %v6755 = vadd.f32 %v6662, %v6754
        %v6756 = vpop.f32.mrf.mxu0
        %v6757 = vadd.f32 %v6662, %v6756
        %6758 = vmatmul.bf16.gmra.mxu0 %v6692
        %v6759 = vpop.f32.mrf.mxu0
        %v6760 = vadd.f32 %v6662, %v6759
        %v6761 = vpop.f32.mrf.mxu0
        %v6762 = vadd.f32 %v6662, %v6761
        %6763 = vmatmul.bf16.gmra.mxu0 %v6695
        %v6764 = vpop.f32.mrf.mxu0
        %v6765 = vadd.f32 %v6662, %v6764
        %v6766 = vpop.f32.mrf.mxu0
        %v6767 = vadd.f32 %v6662, %v6766
        %6768 = vmatmul.bf16.gmra.mxu0 %v6698
        %v6769 = vpop.f32.mrf.mxu0
        %v6770 = vadd.f32 %v6662, %v6769
        %v6771 = vpop.f32.mrf.mxu0
        %v6772 = vadd.f32 %v6662, %v6771
        %6773 = vmatmul.bf16.gmra.mxu0 %v6701
        %v6774 = vpop.f32.mrf.mxu0
        %v6775 = vadd.f32 %v6662, %v6774
        %v6776 = vpop.f32.mrf.mxu0
        %v6777 = vadd.f32 %v6662, %v6776
        %6778 = vmatmul.bf16.gmra.mxu0 %v6704
        %v6779 = vpop.f32.mrf.mxu0
        %v6780 = vadd.f32 %v6662, %v6779
        %v6781 = vpop.f32.mrf.mxu0
        %v6782 = vadd.f32 %v6662, %v6781
        %6783 = vmatmul.bf16.gmra.mxu0 %v6707
        %v6784 = vpop.f32.mrf.mxu0
        %v6785 = vadd.f32 %v6662, %v6784
        %v6786 = vpop.f32.mrf.mxu0
        %v6787 = vadd.f32 %v6662, %v6786
        %6788 = vmatmul.bf16.gmra.mxu0 %v6710
        %v6789 = vpop.f32.mrf.mxu0
        %v6790 = vadd.f32 %v6662, %v6789
        %v6791 = vpop.f32.mrf.mxu0
        %v6792 = vadd.f32 %v6662, %v6791
        %6793 = vmatmul.bf16.gmra.mxu0 %v6713
        %v6794 = vpop.f32.mrf.mxu0
        %v6795 = vadd.f32 %v6662, %v6794
        %v6796 = vpop.f32.mrf.mxu0
        %v6797 = vadd.f32 %v6662, %v6796
        %6798 = vmatmul.bf16.gmra.mxu0 %v6716
        %v6799 = vpop.f32.mrf.mxu0
        %v6800 = vadd.f32 %v6662, %v6799
        %v6801 = vpop.f32.mrf.mxu0
        %v6802 = vadd.f32 %v6662, %v6801
        %6803 = vmatmul.bf16.gmra.mxu0 %v6719
        %v6804 = vpop.f32.mrf.mxu0
        %v6805 = vadd.f32 %v6662, %v6804
        %v6806 = vpop.f32.mrf.mxu0
        %v6807 = vadd.f32 %v6662, %v6806
        %6808 = vmatmul.bf16.gmra.mxu0 %v6722
        %v6809 = vpop.f32.mrf.mxu0
        %v6810 = vadd.f32 %v6662, %v6809
        %v6811 = vpop.f32.mrf.mxu0
        %v6812 = vadd.f32 %v6662, %v6811
        %6813 = vmatmul.bf16.gmra.mxu0 %v6725
        %v6814 = vpop.f32.mrf.mxu0
        %v6815 = vadd.f32 %v6662, %v6814
        %v6816 = vpop.f32.mrf.mxu0
        %v6817 = vadd.f32 %v6662, %v6816
        %6818 = vdwg.mxu0
        %v6819 = vxor.u32 %v6740, 2147483648
        %v6820 = vxor.u32 %v6742, 2147483648
        %v6821 = vxor.u32 %v6745, 2147483648
        %v6822 = vxor.u32 %v6747, 2147483648
        %v6823 = vxor.u32 %v6750, 2147483648
        %v6824 = vxor.u32 %v6752, 2147483648
        %v6825 = vxor.u32 %v6755, 2147483648
        %v6826 = vxor.u32 %v6757, 2147483648
        %v6827 = vxor.u32 %v6760, 2147483648
        %v6828 = vxor.u32 %v6762, 2147483648
        %v6829 = vxor.u32 %v6765, 2147483648
        %v6830 = vxor.u32 %v6767, 2147483648
        %v6831 = vxor.u32 %v6770, 2147483648
        %v6832 = vxor.u32 %v6772, 2147483648
        %v6833 = vxor.u32 %v6775, 2147483648
        %v6834 = vxor.u32 %v6777, 2147483648
        %v6835 = vxor.u32 %v6780, 2147483648
        %v6836 = vxor.u32 %v6782, 2147483648
        %v6837 = vxor.u32 %v6785, 2147483648
        %v6838 = vxor.u32 %v6787, 2147483648
        %v6839 = vxor.u32 %v6790, 2147483648
        %v6840 = vxor.u32 %v6792, 2147483648
        %v6841 = vxor.u32 %v6795, 2147483648
        %v6842 = vxor.u32 %v6797, 2147483648
        %v6843 = vxor.u32 %v6800, 2147483648
        %v6844 = vxor.u32 %v6802, 2147483648
        %v6845 = vxor.u32 %v6805, 2147483648
        %v6846 = vxor.u32 %v6807, 2147483648
        %v6847 = vxor.u32 %v6810, 2147483648
        %v6848 = vxor.u32 %v6812, 2147483648
        %v6849 = vxor.u32 %v6815, 2147483648
        %v6850 = vxor.u32 %v6817, 2147483648
        %v6851 = vmul.f32 %v6819, 1.442695
        %v6852 = vpow.pop %v6851
        %v6853 = vmul.f32 %v6820, 1.442695
        %v6854 = vpow.pop %v6853
        %v6855 = vmul.f32 %v6821, 1.442695
        %v6856 = vpow.pop %v6855
        %v6857 = vmul.f32 %v6822, 1.442695
        %v6858 = vpow.pop %v6857
        %v6859 = vmul.f32 %v6823, 1.442695
        %v6860 = vpow.pop %v6859
        %v6861 = vmul.f32 %v6824, 1.442695
        %v6862 = vpow.pop %v6861
        %v6863 = vmul.f32 %v6825, 1.442695
        %v6864 = vpow.pop %v6863
        %v6865 = vmul.f32 %v6826, 1.442695
        %v6866 = vpow.pop %v6865
        %v6867 = vmul.f32 %v6827, 1.442695
        %v6868 = vpow.pop %v6867
        %v6869 = vmul.f32 %v6828, 1.442695
        %v6870 = vpow.pop %v6869
        %v6871 = vmul.f32 %v6829, 1.442695
        %v6872 = vpow.pop %v6871
        %v6873 = vmul.f32 %v6830, 1.442695
        %v6874 = vpow.pop %v6873
        %v6875 = vmul.f32 %v6831, 1.442695
        %v6876 = vpow.pop %v6875
        %v6877 = vmul.f32 %v6832, 1.442695
        %v6878 = vpow.pop %v6877
        %v6879 = vmul.f32 %v6833, 1.442695
        %v6880 = vpow.pop %v6879
        %v6881 = vmul.f32 %v6834, 1.442695
        %v6882 = vpow.pop %v6881
        %v6883 = vmul.f32 %v6835, 1.442695
        %v6884 = vpow.pop %v6883
        %v6885 = vmul.f32 %v6836, 1.442695
        %v6886 = vpow.pop %v6885
        %v6887 = vmul.f32 %v6837, 1.442695
        %v6888 = vpow.pop %v6887
        %v6889 = vmul.f32 %v6838, 1.442695
        %v6890 = vpow.pop %v6889
        %v6891 = vmul.f32 %v6839, 1.442695
        %v6892 = vpow.pop %v6891
        %v6893 = vmul.f32 %v6840, 1.442695
        %v6894 = vpow.pop %v6893
        %v6895 = vmul.f32 %v6841, 1.442695
        %v6896 = vpow.pop %v6895
        %v6897 = vmul.f32 %v6842, 1.442695
        %v6898 = vpow.pop %v6897
        %v6899 = vmul.f32 %v6843, 1.442695
        %v6900 = vpow.pop %v6899
        %v6901 = vmul.f32 %v6844, 1.442695
        %v6902 = vpow.pop %v6901
        %v6903 = vmul.f32 %v6845, 1.442695
        %v6904 = vpow.pop %v6903
        %v6905 = vmul.f32 %v6846, 1.442695
        %v6906 = vpow.pop %v6905
        %v6907 = vmul.f32 %v6847, 1.442695
        %v6908 = vpow.pop %v6907
        %v6909 = vmul.f32 %v6848, 1.442695
        %v6910 = vpow.pop %v6909
        %v6911 = vmul.f32 %v6849, 1.442695
        %v6912 = vpow.pop %v6911
        %v6913 = vmul.f32 %v6850, 1.442695
        %v6914 = vpow.pop %v6913
        %v6915 = vadd.f32 %v6852, 1.0
        %v6916 = vadd.f32 %v6854, 1.0
        %v6917 = vadd.f32 %v6856, 1.0
        %v6918 = vadd.f32 %v6858, 1.0
        %v6919 = vadd.f32 %v6860, 1.0
        %v6920 = vadd.f32 %v6862, 1.0
        %v6921 = vadd.f32 %v6864, 1.0
        %v6922 = vadd.f32 %v6866, 1.0
        %v6923 = vadd.f32 %v6868, 1.0
        %v6924 = vadd.f32 %v6870, 1.0
        %v6925 = vadd.f32 %v6872, 1.0
        %v6926 = vadd.f32 %v6874, 1.0
        %v6927 = vadd.f32 %v6876, 1.0
        %v6928 = vadd.f32 %v6878, 1.0
        %v6929 = vadd.f32 %v6880, 1.0
        %v6930 = vadd.f32 %v6882, 1.0
        %v6931 = vadd.f32 %v6884, 1.0
        %v6932 = vadd.f32 %v6886, 1.0
        %v6933 = vadd.f32 %v6888, 1.0
        %v6934 = vadd.f32 %v6890, 1.0
        %v6935 = vadd.f32 %v6892, 1.0
        %v6936 = vadd.f32 %v6894, 1.0
        %v6937 = vadd.f32 %v6896, 1.0
        %v6938 = vadd.f32 %v6898, 1.0
        %v6939 = vadd.f32 %v6900, 1.0
        %v6940 = vadd.f32 %v6902, 1.0
        %v6941 = vadd.f32 %v6904, 1.0
        %v6942 = vadd.f32 %v6906, 1.0
        %v6943 = vadd.f32 %v6908, 1.0
        %v6944 = vadd.f32 %v6910, 1.0
        %v6945 = vadd.f32 %v6912, 1.0
        %v6946 = vadd.f32 %v6914, 1.0
        %v6947 = vrcp.pop %v6915
        %v6948 = vmul.f32 %v6915, %v6947
        %v6949 = vsub.f32 1.0, %v6948
        %v6950 = vmul.f32 %v6947, %v6949
        %v6951 = vadd.f32 %v6947, %v6950
        %vm6952 = vweird.f32 %v6915
        %vm6953 = vweird.f32 %v6947
        %vm6954 = vmor %vm6952, %vm6953
        %v6955 = vsel %vm6954, %v6947, %v6951
        %v6956 = vand.u32 2147483647, %v6915
        %vm6957 = vcmp.eq.f32.partialorder %v6956, 8.507059e+37
        %v6958 = vand.u32 %v6915, 2147483648
        %v6959 = vor.u32 1.1754944e-38, %v6958
        %v6960 = vsel %vm6957, %v6959, %v6955
        %v6961 = vmul.f32 1.0, %v6960
        %v6962 = vrcp.pop %v6916
        %v6963 = vmul.f32 %v6916, %v6962
        %v6964 = vsub.f32 1.0, %v6963
        %v6965 = vmul.f32 %v6962, %v6964
        %v6966 = vadd.f32 %v6962, %v6965
        %vm6967 = vweird.f32 %v6916
        %vm6968 = vweird.f32 %v6962
        %vm6969 = vmor %vm6967, %vm6968
        %v6970 = vsel %vm6969, %v6962, %v6966
        %v6971 = vand.u32 2147483647, %v6916
        %vm6972 = vcmp.eq.f32.partialorder %v6971, 8.507059e+37
        %v6973 = vand.u32 %v6916, 2147483648
        %v6974 = vor.u32 1.1754944e-38, %v6973
        %v6975 = vsel %vm6972, %v6974, %v6970
        %v6976 = vmul.f32 1.0, %v6975
        %v6977 = vrcp.pop %v6917
        %v6978 = vmul.f32 %v6917, %v6977
        %v6979 = vsub.f32 1.0, %v6978
        %v6980 = vmul.f32 %v6977, %v6979
        %v6981 = vadd.f32 %v6977, %v6980
        %vm6982 = vweird.f32 %v6917
        %vm6983 = vweird.f32 %v6977
        %vm6984 = vmor %vm6982, %vm6983
        %v6985 = vsel %vm6984, %v6977, %v6981
        %v6986 = vand.u32 2147483647, %v6917
        %vm6987 = vcmp.eq.f32.partialorder %v6986, 8.507059e+37
        %v6988 = vand.u32 %v6917, 2147483648
        %v6989 = vor.u32 1.1754944e-38, %v6988
        %v6990 = vsel %vm6987, %v6989, %v6985
        %v6991 = vmul.f32 1.0, %v6990
        %v6992 = vrcp.pop %v6918
        %v6993 = vmul.f32 %v6918, %v6992
        %v6994 = vsub.f32 1.0, %v6993
        %v6995 = vmul.f32 %v6992, %v6994
        %v6996 = vadd.f32 %v6992, %v6995
        %vm6997 = vweird.f32 %v6918
        %vm6998 = vweird.f32 %v6992
        %vm6999 = vmor %vm6997, %vm6998
        %v7000 = vsel %vm6999, %v6992, %v6996
        %v7001 = vand.u32 2147483647, %v6918
        %vm7002 = vcmp.eq.f32.partialorder %v7001, 8.507059e+37
        %v7003 = vand.u32 %v6918, 2147483648
        %v7004 = vor.u32 1.1754944e-38, %v7003
        %v7005 = vsel %vm7002, %v7004, %v7000
        %v7006 = vmul.f32 1.0, %v7005
        %v7007 = vrcp.pop %v6919
        %v7008 = vmul.f32 %v6919, %v7007
        %v7009 = vsub.f32 1.0, %v7008
        %v7010 = vmul.f32 %v7007, %v7009
        %v7011 = vadd.f32 %v7007, %v7010
        %vm7012 = vweird.f32 %v6919
        %vm7013 = vweird.f32 %v7007
        %vm7014 = vmor %vm7012, %vm7013
        %v7015 = vsel %vm7014, %v7007, %v7011
        %v7016 = vand.u32 2147483647, %v6919
        %vm7017 = vcmp.eq.f32.partialorder %v7016, 8.507059e+37
        %v7018 = vand.u32 %v6919, 2147483648
        %v7019 = vor.u32 1.1754944e-38, %v7018
        %v7020 = vsel %vm7017, %v7019, %v7015
        %v7021 = vmul.f32 1.0, %v7020
        %v7022 = vrcp.pop %v6920
        %v7023 = vmul.f32 %v6920, %v7022
        %v7024 = vsub.f32 1.0, %v7023
        %v7025 = vmul.f32 %v7022, %v7024
        %v7026 = vadd.f32 %v7022, %v7025
        %vm7027 = vweird.f32 %v6920
        %vm7028 = vweird.f32 %v7022
        %vm7029 = vmor %vm7027, %vm7028
        %v7030 = vsel %vm7029, %v7022, %v7026
        %v7031 = vand.u32 2147483647, %v6920
        %vm7032 = vcmp.eq.f32.partialorder %v7031, 8.507059e+37
        %v7033 = vand.u32 %v6920, 2147483648
        %v7034 = vor.u32 1.1754944e-38, %v7033
        %v7035 = vsel %vm7032, %v7034, %v7030
        %v7036 = vmul.f32 1.0, %v7035
        %v7037 = vrcp.pop %v6921
        %v7038 = vmul.f32 %v6921, %v7037
        %v7039 = vsub.f32 1.0, %v7038
        %v7040 = vmul.f32 %v7037, %v7039
        %v7041 = vadd.f32 %v7037, %v7040
        %vm7042 = vweird.f32 %v6921
        %vm7043 = vweird.f32 %v7037
        %vm7044 = vmor %vm7042, %vm7043
        %v7045 = vsel %vm7044, %v7037, %v7041
        %v7046 = vand.u32 2147483647, %v6921
        %vm7047 = vcmp.eq.f32.partialorder %v7046, 8.507059e+37
        %v7048 = vand.u32 %v6921, 2147483648
        %v7049 = vor.u32 1.1754944e-38, %v7048
        %v7050 = vsel %vm7047, %v7049, %v7045
        %v7051 = vmul.f32 1.0, %v7050
        %v7052 = vrcp.pop %v6922
        %v7053 = vmul.f32 %v6922, %v7052
        %v7054 = vsub.f32 1.0, %v7053
        %v7055 = vmul.f32 %v7052, %v7054
        %v7056 = vadd.f32 %v7052, %v7055
        %vm7057 = vweird.f32 %v6922
        %vm7058 = vweird.f32 %v7052
        %vm7059 = vmor %vm7057, %vm7058
        %v7060 = vsel %vm7059, %v7052, %v7056
        %v7061 = vand.u32 2147483647, %v6922
        %vm7062 = vcmp.eq.f32.partialorder %v7061, 8.507059e+37
        %v7063 = vand.u32 %v6922, 2147483648
        %v7064 = vor.u32 1.1754944e-38, %v7063
        %v7065 = vsel %vm7062, %v7064, %v7060
        %v7066 = vmul.f32 1.0, %v7065
        %v7067 = vrcp.pop %v6923
        %v7068 = vmul.f32 %v6923, %v7067
        %v7069 = vsub.f32 1.0, %v7068
        %v7070 = vmul.f32 %v7067, %v7069
        %v7071 = vadd.f32 %v7067, %v7070
        %vm7072 = vweird.f32 %v6923
        %vm7073 = vweird.f32 %v7067
        %vm7074 = vmor %vm7072, %vm7073
        %v7075 = vsel %vm7074, %v7067, %v7071
        %v7076 = vand.u32 2147483647, %v6923
        %vm7077 = vcmp.eq.f32.partialorder %v7076, 8.507059e+37
        %v7078 = vand.u32 %v6923, 2147483648
        %v7079 = vor.u32 1.1754944e-38, %v7078
        %v7080 = vsel %vm7077, %v7079, %v7075
        %v7081 = vmul.f32 1.0, %v7080
        %v7082 = vrcp.pop %v6924
        %v7083 = vmul.f32 %v6924, %v7082
        %v7084 = vsub.f32 1.0, %v7083
        %v7085 = vmul.f32 %v7082, %v7084
        %v7086 = vadd.f32 %v7082, %v7085
        %vm7087 = vweird.f32 %v6924
        %vm7088 = vweird.f32 %v7082
        %vm7089 = vmor %vm7087, %vm7088
        %v7090 = vsel %vm7089, %v7082, %v7086
        %v7091 = vand.u32 2147483647, %v6924
        %vm7092 = vcmp.eq.f32.partialorder %v7091, 8.507059e+37
        %v7093 = vand.u32 %v6924, 2147483648
        %v7094 = vor.u32 1.1754944e-38, %v7093
        %v7095 = vsel %vm7092, %v7094, %v7090
        %v7096 = vmul.f32 1.0, %v7095
        %v7097 = vrcp.pop %v6925
        %v7098 = vmul.f32 %v6925, %v7097
        %v7099 = vsub.f32 1.0, %v7098
        %v7100 = vmul.f32 %v7097, %v7099
        %v7101 = vadd.f32 %v7097, %v7100
        %vm7102 = vweird.f32 %v6925
        %vm7103 = vweird.f32 %v7097
        %vm7104 = vmor %vm7102, %vm7103
        %v7105 = vsel %vm7104, %v7097, %v7101
        %v7106 = vand.u32 2147483647, %v6925
        %vm7107 = vcmp.eq.f32.partialorder %v7106, 8.507059e+37
        %v7108 = vand.u32 %v6925, 2147483648
        %v7109 = vor.u32 1.1754944e-38, %v7108
        %v7110 = vsel %vm7107, %v7109, %v7105
        %v7111 = vmul.f32 1.0, %v7110
        %v7112 = vrcp.pop %v6926
        %v7113 = vmul.f32 %v6926, %v7112
        %v7114 = vsub.f32 1.0, %v7113
        %v7115 = vmul.f32 %v7112, %v7114
        %v7116 = vadd.f32 %v7112, %v7115
        %vm7117 = vweird.f32 %v6926
        %vm7118 = vweird.f32 %v7112
        %vm7119 = vmor %vm7117, %vm7118
        %v7120 = vsel %vm7119, %v7112, %v7116
        %v7121 = vand.u32 2147483647, %v6926
        %vm7122 = vcmp.eq.f32.partialorder %v7121, 8.507059e+37
        %v7123 = vand.u32 %v6926, 2147483648
        %v7124 = vor.u32 1.1754944e-38, %v7123
        %v7125 = vsel %vm7122, %v7124, %v7120
        %v7126 = vmul.f32 1.0, %v7125
        %v7127 = vrcp.pop %v6927
        %v7128 = vmul.f32 %v6927, %v7127
        %v7129 = vsub.f32 1.0, %v7128
        %v7130 = vmul.f32 %v7127, %v7129
        %v7131 = vadd.f32 %v7127, %v7130
        %vm7132 = vweird.f32 %v6927
        %vm7133 = vweird.f32 %v7127
        %vm7134 = vmor %vm7132, %vm7133
        %v7135 = vsel %vm7134, %v7127, %v7131
        %v7136 = vand.u32 2147483647, %v6927
        %vm7137 = vcmp.eq.f32.partialorder %v7136, 8.507059e+37
        %v7138 = vand.u32 %v6927, 2147483648
        %v7139 = vor.u32 1.1754944e-38, %v7138
        %v7140 = vsel %vm7137, %v7139, %v7135
        %v7141 = vmul.f32 1.0, %v7140
        %v7142 = vrcp.pop %v6928
        %v7143 = vmul.f32 %v6928, %v7142
        %v7144 = vsub.f32 1.0, %v7143
        %v7145 = vmul.f32 %v7142, %v7144
        %v7146 = vadd.f32 %v7142, %v7145
        %vm7147 = vweird.f32 %v6928
        %vm7148 = vweird.f32 %v7142
        %vm7149 = vmor %vm7147, %vm7148
        %v7150 = vsel %vm7149, %v7142, %v7146
        %v7151 = vand.u32 2147483647, %v6928
        %vm7152 = vcmp.eq.f32.partialorder %v7151, 8.507059e+37
        %v7153 = vand.u32 %v6928, 2147483648
        %v7154 = vor.u32 1.1754944e-38, %v7153
        %v7155 = vsel %vm7152, %v7154, %v7150
        %v7156 = vmul.f32 1.0, %v7155
        %v7157 = vrcp.pop %v6929
        %v7158 = vmul.f32 %v6929, %v7157
        %v7159 = vsub.f32 1.0, %v7158
        %v7160 = vmul.f32 %v7157, %v7159
        %v7161 = vadd.f32 %v7157, %v7160
        %vm7162 = vweird.f32 %v6929
        %vm7163 = vweird.f32 %v7157
        %vm7164 = vmor %vm7162, %vm7163
        %v7165 = vsel %vm7164, %v7157, %v7161
        %v7166 = vand.u32 2147483647, %v6929
        %vm7167 = vcmp.eq.f32.partialorder %v7166, 8.507059e+37
        %v7168 = vand.u32 %v6929, 2147483648
        %v7169 = vor.u32 1.1754944e-38, %v7168
        %v7170 = vsel %vm7167, %v7169, %v7165
        %v7171 = vmul.f32 1.0, %v7170
        %v7172 = vrcp.pop %v6930
        %v7173 = vmul.f32 %v6930, %v7172
        %v7174 = vsub.f32 1.0, %v7173
        %v7175 = vmul.f32 %v7172, %v7174
        %v7176 = vadd.f32 %v7172, %v7175
        %vm7177 = vweird.f32 %v6930
        %vm7178 = vweird.f32 %v7172
        %vm7179 = vmor %vm7177, %vm7178
        %v7180 = vsel %vm7179, %v7172, %v7176
        %v7181 = vand.u32 2147483647, %v6930
        %vm7182 = vcmp.eq.f32.partialorder %v7181, 8.507059e+37
        %v7183 = vand.u32 %v6930, 2147483648
        %v7184 = vor.u32 1.1754944e-38, %v7183
        %v7185 = vsel %vm7182, %v7184, %v7180
        %v7186 = vmul.f32 1.0, %v7185
        %v7187 = vrcp.pop %v6931
        %v7188 = vmul.f32 %v6931, %v7187
        %v7189 = vsub.f32 1.0, %v7188
        %v7190 = vmul.f32 %v7187, %v7189
        %v7191 = vadd.f32 %v7187, %v7190
        %vm7192 = vweird.f32 %v6931
        %vm7193 = vweird.f32 %v7187
        %vm7194 = vmor %vm7192, %vm7193
        %v7195 = vsel %vm7194, %v7187, %v7191
        %v7196 = vand.u32 2147483647, %v6931
        %vm7197 = vcmp.eq.f32.partialorder %v7196, 8.507059e+37
        %v7198 = vand.u32 %v6931, 2147483648
        %v7199 = vor.u32 1.1754944e-38, %v7198
        %v7200 = vsel %vm7197, %v7199, %v7195
        %v7201 = vmul.f32 1.0, %v7200
        %v7202 = vrcp.pop %v6932
        %v7203 = vmul.f32 %v6932, %v7202
        %v7204 = vsub.f32 1.0, %v7203
        %v7205 = vmul.f32 %v7202, %v7204
        %v7206 = vadd.f32 %v7202, %v7205
        %vm7207 = vweird.f32 %v6932
        %vm7208 = vweird.f32 %v7202
        %vm7209 = vmor %vm7207, %vm7208
        %v7210 = vsel %vm7209, %v7202, %v7206
        %v7211 = vand.u32 2147483647, %v6932
        %vm7212 = vcmp.eq.f32.partialorder %v7211, 8.507059e+37
        %v7213 = vand.u32 %v6932, 2147483648
        %v7214 = vor.u32 1.1754944e-38, %v7213
        %v7215 = vsel %vm7212, %v7214, %v7210
        %v7216 = vmul.f32 1.0, %v7215
        %v7217 = vrcp.pop %v6933
        %v7218 = vmul.f32 %v6933, %v7217
        %v7219 = vsub.f32 1.0, %v7218
        %v7220 = vmul.f32 %v7217, %v7219
        %v7221 = vadd.f32 %v7217, %v7220
        %vm7222 = vweird.f32 %v6933
        %vm7223 = vweird.f32 %v7217
        %vm7224 = vmor %vm7222, %vm7223
        %v7225 = vsel %vm7224, %v7217, %v7221
        %v7226 = vand.u32 2147483647, %v6933
        %vm7227 = vcmp.eq.f32.partialorder %v7226, 8.507059e+37
        %v7228 = vand.u32 %v6933, 2147483648
        %v7229 = vor.u32 1.1754944e-38, %v7228
        %v7230 = vsel %vm7227, %v7229, %v7225
        %v7231 = vmul.f32 1.0, %v7230
        %v7232 = vrcp.pop %v6934
        %v7233 = vmul.f32 %v6934, %v7232
        %v7234 = vsub.f32 1.0, %v7233
        %v7235 = vmul.f32 %v7232, %v7234
        %v7236 = vadd.f32 %v7232, %v7235
        %vm7237 = vweird.f32 %v6934
        %vm7238 = vweird.f32 %v7232
        %vm7239 = vmor %vm7237, %vm7238
        %v7240 = vsel %vm7239, %v7232, %v7236
        %v7241 = vand.u32 2147483647, %v6934
        %vm7242 = vcmp.eq.f32.partialorder %v7241, 8.507059e+37
        %v7243 = vand.u32 %v6934, 2147483648
        %v7244 = vor.u32 1.1754944e-38, %v7243
        %v7245 = vsel %vm7242, %v7244, %v7240
        %v7246 = vmul.f32 1.0, %v7245
        %v7247 = vrcp.pop %v6935
        %v7248 = vmul.f32 %v6935, %v7247
        %v7249 = vsub.f32 1.0, %v7248
        %v7250 = vmul.f32 %v7247, %v7249
        %v7251 = vadd.f32 %v7247, %v7250
        %vm7252 = vweird.f32 %v6935
        %vm7253 = vweird.f32 %v7247
        %vm7254 = vmor %vm7252, %vm7253
        %v7255 = vsel %vm7254, %v7247, %v7251
        %v7256 = vand.u32 2147483647, %v6935
        %vm7257 = vcmp.eq.f32.partialorder %v7256, 8.507059e+37
        %v7258 = vand.u32 %v6935, 2147483648
        %v7259 = vor.u32 1.1754944e-38, %v7258
        %v7260 = vsel %vm7257, %v7259, %v7255
        %v7261 = vmul.f32 1.0, %v7260
        %v7262 = vrcp.pop %v6936
        %v7263 = vmul.f32 %v6936, %v7262
        %v7264 = vsub.f32 1.0, %v7263
        %v7265 = vmul.f32 %v7262, %v7264
        %v7266 = vadd.f32 %v7262, %v7265
        %vm7267 = vweird.f32 %v6936
        %vm7268 = vweird.f32 %v7262
        %vm7269 = vmor %vm7267, %vm7268
        %v7270 = vsel %vm7269, %v7262, %v7266
        %v7271 = vand.u32 2147483647, %v6936
        %vm7272 = vcmp.eq.f32.partialorder %v7271, 8.507059e+37
        %v7273 = vand.u32 %v6936, 2147483648
        %v7274 = vor.u32 1.1754944e-38, %v7273
        %v7275 = vsel %vm7272, %v7274, %v7270
        %v7276 = vmul.f32 1.0, %v7275
        %v7277 = vrcp.pop %v6937
        %v7278 = vmul.f32 %v6937, %v7277
        %v7279 = vsub.f32 1.0, %v7278
        %v7280 = vmul.f32 %v7277, %v7279
        %v7281 = vadd.f32 %v7277, %v7280
        %vm7282 = vweird.f32 %v6937
        %vm7283 = vweird.f32 %v7277
        %vm7284 = vmor %vm7282, %vm7283
        %v7285 = vsel %vm7284, %v7277, %v7281
        %v7286 = vand.u32 2147483647, %v6937
        %vm7287 = vcmp.eq.f32.partialorder %v7286, 8.507059e+37
        %v7288 = vand.u32 %v6937, 2147483648
        %v7289 = vor.u32 1.1754944e-38, %v7288
        %v7290 = vsel %vm7287, %v7289, %v7285
        %v7291 = vmul.f32 1.0, %v7290
        %v7292 = vrcp.pop %v6938
        %v7293 = vmul.f32 %v6938, %v7292
        %v7294 = vsub.f32 1.0, %v7293
        %v7295 = vmul.f32 %v7292, %v7294
        %v7296 = vadd.f32 %v7292, %v7295
        %vm7297 = vweird.f32 %v6938
        %vm7298 = vweird.f32 %v7292
        %vm7299 = vmor %vm7297, %vm7298
        %v7300 = vsel %vm7299, %v7292, %v7296
        %v7301 = vand.u32 2147483647, %v6938
        %vm7302 = vcmp.eq.f32.partialorder %v7301, 8.507059e+37
        %v7303 = vand.u32 %v6938, 2147483648
        %v7304 = vor.u32 1.1754944e-38, %v7303
        %v7305 = vsel %vm7302, %v7304, %v7300
        %v7306 = vmul.f32 1.0, %v7305
        %v7307 = vrcp.pop %v6939
        %v7308 = vmul.f32 %v6939, %v7307
        %v7309 = vsub.f32 1.0, %v7308
        %v7310 = vmul.f32 %v7307, %v7309
        %v7311 = vadd.f32 %v7307, %v7310
        %vm7312 = vweird.f32 %v6939
        %vm7313 = vweird.f32 %v7307
        %vm7314 = vmor %vm7312, %vm7313
        %v7315 = vsel %vm7314, %v7307, %v7311
        %v7316 = vand.u32 2147483647, %v6939
        %vm7317 = vcmp.eq.f32.partialorder %v7316, 8.507059e+37
        %v7318 = vand.u32 %v6939, 2147483648
        %v7319 = vor.u32 1.1754944e-38, %v7318
        %v7320 = vsel %vm7317, %v7319, %v7315
        %v7321 = vmul.f32 1.0, %v7320
        %v7322 = vrcp.pop %v6940
        %v7323 = vmul.f32 %v6940, %v7322
        %v7324 = vsub.f32 1.0, %v7323
        %v7325 = vmul.f32 %v7322, %v7324
        %v7326 = vadd.f32 %v7322, %v7325
        %vm7327 = vweird.f32 %v6940
        %vm7328 = vweird.f32 %v7322
        %vm7329 = vmor %vm7327, %vm7328
        %v7330 = vsel %vm7329, %v7322, %v7326
        %v7331 = vand.u32 2147483647, %v6940
        %vm7332 = vcmp.eq.f32.partialorder %v7331, 8.507059e+37
        %v7333 = vand.u32 %v6940, 2147483648
        %v7334 = vor.u32 1.1754944e-38, %v7333
        %v7335 = vsel %vm7332, %v7334, %v7330
        %v7336 = vmul.f32 1.0, %v7335
        %v7337 = vrcp.pop %v6941
        %v7338 = vmul.f32 %v6941, %v7337
        %v7339 = vsub.f32 1.0, %v7338
        %v7340 = vmul.f32 %v7337, %v7339
        %v7341 = vadd.f32 %v7337, %v7340
        %vm7342 = vweird.f32 %v6941
        %vm7343 = vweird.f32 %v7337
        %vm7344 = vmor %vm7342, %vm7343
        %v7345 = vsel %vm7344, %v7337, %v7341
        %v7346 = vand.u32 2147483647, %v6941
        %vm7347 = vcmp.eq.f32.partialorder %v7346, 8.507059e+37
        %v7348 = vand.u32 %v6941, 2147483648
        %v7349 = vor.u32 1.1754944e-38, %v7348
        %v7350 = vsel %vm7347, %v7349, %v7345
        %v7351 = vmul.f32 1.0, %v7350
        %v7352 = vrcp.pop %v6942
        %v7353 = vmul.f32 %v6942, %v7352
        %v7354 = vsub.f32 1.0, %v7353
        %v7355 = vmul.f32 %v7352, %v7354
        %v7356 = vadd.f32 %v7352, %v7355
        %vm7357 = vweird.f32 %v6942
        %vm7358 = vweird.f32 %v7352
        %vm7359 = vmor %vm7357, %vm7358
        %v7360 = vsel %vm7359, %v7352, %v7356
        %v7361 = vand.u32 2147483647, %v6942
        %vm7362 = vcmp.eq.f32.partialorder %v7361, 8.507059e+37
        %v7363 = vand.u32 %v6942, 2147483648
        %v7364 = vor.u32 1.1754944e-38, %v7363
        %v7365 = vsel %vm7362, %v7364, %v7360
        %v7366 = vmul.f32 1.0, %v7365
        %v7367 = vrcp.pop %v6943
        %v7368 = vmul.f32 %v6943, %v7367
        %v7369 = vsub.f32 1.0, %v7368
        %v7370 = vmul.f32 %v7367, %v7369
        %v7371 = vadd.f32 %v7367, %v7370
        %vm7372 = vweird.f32 %v6943
        %vm7373 = vweird.f32 %v7367
        %vm7374 = vmor %vm7372, %vm7373
        %v7375 = vsel %vm7374, %v7367, %v7371
        %v7376 = vand.u32 2147483647, %v6943
        %vm7377 = vcmp.eq.f32.partialorder %v7376, 8.507059e+37
        %v7378 = vand.u32 %v6943, 2147483648
        %v7379 = vor.u32 1.1754944e-38, %v7378
        %v7380 = vsel %vm7377, %v7379, %v7375
        %v7381 = vmul.f32 1.0, %v7380
        %v7382 = vrcp.pop %v6944
        %v7383 = vmul.f32 %v6944, %v7382
        %v7384 = vsub.f32 1.0, %v7383
        %v7385 = vmul.f32 %v7382, %v7384
        %v7386 = vadd.f32 %v7382, %v7385
        %vm7387 = vweird.f32 %v6944
        %vm7388 = vweird.f32 %v7382
        %vm7389 = vmor %vm7387, %vm7388
        %v7390 = vsel %vm7389, %v7382, %v7386
        %v7391 = vand.u32 2147483647, %v6944
        %vm7392 = vcmp.eq.f32.partialorder %v7391, 8.507059e+37
        %v7393 = vand.u32 %v6944, 2147483648
        %v7394 = vor.u32 1.1754944e-38, %v7393
        %v7395 = vsel %vm7392, %v7394, %v7390
        %v7396 = vmul.f32 1.0, %v7395
        %v7397 = vrcp.pop %v6945
        %v7398 = vmul.f32 %v6945, %v7397
        %v7399 = vsub.f32 1.0, %v7398
        %v7400 = vmul.f32 %v7397, %v7399
        %v7401 = vadd.f32 %v7397, %v7400
        %vm7402 = vweird.f32 %v6945
        %vm7403 = vweird.f32 %v7397
        %vm7404 = vmor %vm7402, %vm7403
        %v7405 = vsel %vm7404, %v7397, %v7401
        %v7406 = vand.u32 2147483647, %v6945
        %vm7407 = vcmp.eq.f32.partialorder %v7406, 8.507059e+37
        %v7408 = vand.u32 %v6945, 2147483648
        %v7409 = vor.u32 1.1754944e-38, %v7408
        %v7410 = vsel %vm7407, %v7409, %v7405
        %v7411 = vmul.f32 1.0, %v7410
        %v7412 = vrcp.pop %v6946
        %v7413 = vmul.f32 %v6946, %v7412
        %v7414 = vsub.f32 1.0, %v7413
        %v7415 = vmul.f32 %v7412, %v7414
        %v7416 = vadd.f32 %v7412, %v7415
        %vm7417 = vweird.f32 %v6946
        %vm7418 = vweird.f32 %v7412
        %vm7419 = vmor %vm7417, %vm7418
        %v7420 = vsel %vm7419, %v7412, %v7416
        %v7421 = vand.u32 2147483647, %v6946
        %vm7422 = vcmp.eq.f32.partialorder %v7421, 8.507059e+37
        %v7423 = vand.u32 %v6946, 2147483648
        %v7424 = vor.u32 1.1754944e-38, %v7423
        %v7425 = vsel %vm7422, %v7424, %v7420
        %v7426 = vmul.f32 1.0, %v7425
        %7427 = vxpose.xlu0.b32.start [1/16] %v6961, 128
        %7428 = vxpose.xlu0.b32.cont [2/16] %v6976, 128
        %7429 = vxpose.xlu0.b32.cont [3/16] %v6991, 128
        %7430 = vxpose.xlu0.b32.cont [4/16] %v7006, 128
        %7431 = vxpose.xlu0.b32.cont [5/16] %v7021, 128
        %7432 = vxpose.xlu0.b32.cont [6/16] %v7036, 128
        %7433 = vxpose.xlu0.b32.cont [7/16] %v7051, 128
        %7434 = vxpose.xlu0.b32.cont [8/16] %v7066, 128
        %7435 = vxpose.xlu0.b32.cont [9/16] %v7081, 128
        %7436 = vxpose.xlu0.b32.cont [10/16] %v7096, 128
        %7437 = vxpose.xlu0.b32.cont [11/16] %v7111, 128
        %7438 = vxpose.xlu0.b32.cont [12/16] %v7126, 128
        %7439 = vxpose.xlu0.b32.cont [13/16] %v7141, 128
        %7440 = vxpose.xlu0.b32.cont [14/16] %v7156, 128
        %7441 = vxpose.xlu0.b32.cont [15/16] %v7171, 128
        %7442 = vxpose.xlu0.b32.end [16/16] %v7186, 128
        %v7443 = vpop.trf.xlu0
        %v7444 = vpop.trf.xlu0
        %v7445 = vpop.trf.xlu0
        %v7446 = vpop.trf.xlu0
        %v7447 = vpop.trf.xlu0
        %v7448 = vpop.trf.xlu0
        %v7449 = vpop.trf.xlu0
        %v7450 = vpop.trf.xlu0
        %v7451 = vpop.trf.xlu0
        %v7452 = vpop.trf.xlu0
        %v7453 = vpop.trf.xlu0
        %v7454 = vpop.trf.xlu0
        %v7455 = vpop.trf.xlu0
        %v7456 = vpop.trf.xlu0
        %v7457 = vpop.trf.xlu0
        %v7458 = vpop.trf.xlu0
        %7459 = vxpose.xlu0.b32.start [1/16] %v7201, 128
        %7460 = vxpose.xlu0.b32.cont [2/16] %v7216, 128
        %7461 = vxpose.xlu0.b32.cont [3/16] %v7231, 128
        %7462 = vxpose.xlu0.b32.cont [4/16] %v7246, 128
        %7463 = vxpose.xlu0.b32.cont [5/16] %v7261, 128
        %7464 = vxpose.xlu0.b32.cont [6/16] %v7276, 128
        %7465 = vxpose.xlu0.b32.cont [7/16] %v7291, 128
        %7466 = vxpose.xlu0.b32.cont [8/16] %v7306, 128
        %7467 = vxpose.xlu0.b32.cont [9/16] %v7321, 128
        %7468 = vxpose.xlu0.b32.cont [10/16] %v7336, 128
        %7469 = vxpose.xlu0.b32.cont [11/16] %v7351, 128
        %7470 = vxpose.xlu0.b32.cont [12/16] %v7366, 128
        %7471 = vxpose.xlu0.b32.cont [13/16] %v7381, 128
        %7472 = vxpose.xlu0.b32.cont [14/16] %v7396, 128
        %7473 = vxpose.xlu0.b32.cont [15/16] %v7411, 128
        %7474 = vxpose.xlu0.b32.end [16/16] %v7426, 128
        %v7475 = vpop.trf.xlu0
        %v7476 = vpop.trf.xlu0
        %v7477 = vpop.trf.xlu0
        %v7478 = vpop.trf.xlu0
        %v7479 = vpop.trf.xlu0
        %v7480 = vpop.trf.xlu0
        %v7481 = vpop.trf.xlu0
        %v7482 = vpop.trf.xlu0
        %v7483 = vpop.trf.xlu0
        %v7484 = vpop.trf.xlu0
        %v7485 = vpop.trf.xlu0
        %v7486 = vpop.trf.xlu0
        %v7487 = vpop.trf.xlu0
        %v7488 = vpop.trf.xlu0
        %v7489 = vpop.trf.xlu0
        %v7490 = vpop.trf.xlu0
        %v7491 = vld [vmem:[%s323] sm:$0xff]
        %7493 = vst [vmem:[#allocation1] ss:$2 sm:$0xff] %v7491
        %v7494 = vld.sshfl [vmem:[#allocation1] sm:$0xff pattern:$0x75316420]
        %v7495 = vld.sshfl [vmem:[#allocation1 + $0x8] sm:$0xff pattern:$0x75316420]
        %v7498 = vsub.f32 %v7443, %v7494
        %v7499 = vsub.f32 %v7475, %v7495
        %v7500 = vadd.f32 %v7498, %v3166
        %v7501 = vadd.f32 %v7499, %v3198
        %v7502 = vadd.f32 %v7500, 1e-07
        %v7503 = vadd.f32 %v7501, 1e-07
        %v7504 = vmul.f32 %v3166, %v7443
        %v7505 = vmul.f32 %v3198, %v7475
        %v7506 = vrcp.pop %v7502
        %v7507 = vrcp.pop %v7503
        %v7508 = vmul.f32 %v7504, %v7506
        %v7509 = vmul.f32 %v7505, %v7507
        %v7510 = vmax.f32 %v7508, 0.0
        %v7511 = vmax.f32 %v7509, 0.0
        %v7512 = vmin.f32 %v7510, 1.0
        %v7513 = vmin.f32 %v7511, 1.0
        %v7516 = vrot.slane %v7513, 4
        %vm7517 = vcmask 1043456
        %v7518 = vsel %vm7517, %v7512, %v7516
        %7520 = vst [vmem:[%s313] sm:$0xff] %v7518
        %s7521 = sand.u32 %s208, 1
        %s7522 = scalar_lea.sflag [#allocation6], %s7521
        %s7523 = sand.u32 %s208, 1
        %s7524 = smul.addr %s7523, 8
        %s7525 = scalar_lea.vmem [#allocation5], %s7524
        // Predicated region
        $region53: #{tpu_custom_call.1} parent=51 // pred_check
          %p7526 = pneg %p218
        $region54: #{tpu_custom_call.1} parent=51 // pred_check_branch
          %7528 = sbr.rel (%p7526) target = $region56
        $region55: #{tpu_custom_call.1} parent=51 // pred_region
          %7530 = vsyncadd %s7522, 0
          %s7531 = smul.addr %s22, 2
          %s7532 = smul.addr %s7531, 4
          %s7533 = scalar_lea.hbm %s8, %s7532
          %s7535 = sshll.u32 %s7525, 4
          %s7536 = int_to_ptr.vmem [resolvable:$true] %s7535
          %s7537 = sshll.u32 %s7533, 4
          %s7538 = int_to_ptr.hbm [resolvable:$true] %s7537
          %7540 = dma.vmem_to_hbm [thread:$0]  %s7536, 128, %s7538, %s7522
        $region56: #{tpu_custom_call.1} parent=51 // pred_fallthru
          _
      $region52: #{tpu_custom_call.1} parent=5 // pred_fallthru
        _
      %p7541 = scmp.le.s32.totalorder 2, %s17
      // Predicated region
      $region57: #{tpu_custom_call.1} parent=5 // pred_check
        %p7542 = pneg %p7541
      $region58: #{tpu_custom_call.1} parent=5 // pred_check_branch
        %7544 = sbr.rel (%p7542) target = $region60
      $region59: #{tpu_custom_call.1} parent=5 // pred_region
        %s7545 = ssub.s32 %s17, 2
        // Predicated region
        $region61: #{tpu_custom_call.1} parent=59 // pred_check
          %p7546 = pneg %p224
        $region62: #{tpu_custom_call.1} parent=59 // pred_check_branch
          %7548 = sbr.rel (%p7546) target = $region64
        $region63: #{tpu_custom_call.1} parent=59 // pred_region
          %s7549 = sand.u32 %s209, 1
          %s7550 = scalar_lea.sflag [#allocation6], %s7549
          %s7551 = sand.u32 %s209, 1
          %s7552 = smul.addr %s7551, 8
          %s7553 = scalar_lea.vmem [#allocation5], %s7552
          %7555 = dma.done %s7550, 128
        $region64: #{tpu_custom_call.1} parent=59 // pred_fallthru
          _
      $region60: #{tpu_custom_call.1} parent=5 // pred_fallthru
        _
    $region6: #{tpu_custom_call.1} parent=1 // loop_footer
      %s21 = sadd.s32 1, %s17
    $region7: #{tpu_custom_call.1} parent=1 // loop_footer_branch
      %16 = sbr.rel target = $region3
    $region8: #{tpu_custom_call.1} parent=1 // loop_exit
      _
    %7556 = vsyncpa [#allocation6], 1
    %s7557 = scalar_lea.sflag [#allocation6], 1
    %7558 = vsyncpa %s7557, 1

</llo_original>
